<compile_context>
chip_gen: v7x
topology: tpu7x:2x2x1
jax: 0.10.0
libtpu: 0.0.40
codegen_flags: <defaults>
</compile_context>

<pallas_src>
import functools

import jax
import jax.numpy as jnp
from jax import lax
from jax.experimental import pallas as pl
from jax.experimental.pallas import tpu as pltpu


def _round_up(x, m):
    return (x + m - 1) // m * m


# --------------------- fused conv1/conv2/conv3 kernel --------------------- #
# Canvas layout (per batch element): the padded feature map is a (Rpad, C) slab
# enumerating a padded image with row stride S = W + 8: one top padding row and
# 8 left padding columns, so image pixel (0, 0) sits at canvas row R0 = S + 8
# (a multiple of 8).  Right / bottom padding is supplied by the next row's left
# pad and the zero tail.  Conv outputs are computed for L = H*S slab rows; rows
# with (u % S) >= W are padding positions and are zeroed by `mask` before being
# re-packed into the next layer's canvas.

def _conv_stack_kernel(x_ref, w1_ref, b1_ref, w2_ref, b2_ref, w3_ref, b3_ref,
                       mask_ref, o_ref, *, H, W):
    S = W + 8                    # padded row stride
    R0 = S + 8                   # canvas row of image pixel (0, 0)
    L = H * S                    # conv output rows (incl. masked pad columns)
    Rpad = x_ref.shape[0]
    base = R0 - S - 1            # canvas row read by tap (dh=0, dw=0) at u=0
    offs = [base + dh * S + dw for dh in range(3) for dw in range(3)]

    mask = mask_ref[...]         # (L, 1): 1.0 at real pixels, 0.0 at pad cols

    def im2col(canvas):          # (Rpad, C) -> (L, 9*C) patch matrix
        c = canvas.shape[1]
        return jnp.concatenate(
            [lax.slice(canvas, (o, 0), (o + L, c)) for o in offs], axis=1)

    def conv_relu(canvas, w_ref, b_ref, scale=None):
        patches = im2col(canvas)
        if scale is not None:
            patches = patches * scale
        y = jnp.dot(patches, w_ref[...], preferred_element_type=jnp.float32)
        return jnp.maximum(y + b_ref[...], 0.0)

    def to_canvas(act):          # (L, C) activations -> (Rpad, C) canvas
        c = act.shape[1]
        return jnp.concatenate(
            [jnp.zeros((R0, c), jnp.float32),
             act * mask,
             jnp.zeros((Rpad - R0 - L, c), jnp.float32)],
            axis=0)

    # conv1 folds the uint8 -> [0, 1] scaling into its patch matrix.
    a1 = conv_relu(x_ref[...], w1_ref, b1_ref, scale=1.0 / 255.0)
    a2 = conv_relu(to_canvas(a1), w2_ref, b2_ref)
    a3 = conv_relu(to_canvas(a2), w3_ref, b3_ref)
    o_ref[...] = a3              # pad columns are dropped by the wrapper


def conv_stack(xc, w1, b1, w2, b2, w3, b3, mask, *, H, W):
    B, Rpad, Cin = xc.shape
    S = W + 8
    L = H * S
    Cout = w3.shape[1]
    kernel = functools.partial(_conv_stack_kernel, H=H, W=W)
    return pl.pallas_call(
        kernel,
        out_shape=jax.ShapeDtypeStruct((B, L, Cout), jnp.float32),
        grid=(B,),
        in_specs=[
            pl.BlockSpec((None, Rpad, Cin), lambda b: (b, 0, 0)),
            pl.BlockSpec(w1.shape, lambda b: (0, 0)),
            pl.BlockSpec(b1.shape, lambda b: (0, 0)),
            pl.BlockSpec(w2.shape, lambda b: (0, 0)),
            pl.BlockSpec(b2.shape, lambda b: (0, 0)),
            pl.BlockSpec(w3.shape, lambda b: (0, 0)),
            pl.BlockSpec(b3.shape, lambda b: (0, 0)),
            pl.BlockSpec(mask.shape, lambda b: (0, 0)),
        ],
        out_specs=pl.BlockSpec((None, L, Cout), lambda b: (b, 0, 0)),
        compiler_params=pltpu.CompilerParams(
            dimension_semantics=("parallel",)),
    )(xc, w1, b1, w2, b2, w3, b3, mask)


# --------------------------- fused fc1+fc2 kernel -------------------------- #

def _fc_kernel(x_ref, w1_ref, b1_ref, w2_ref, b2_ref, o_ref, acc_ref):
    k = pl.program_id(0)

    @pl.when(k == 0)
    def _():
        acc_ref[...] = jnp.zeros_like(acc_ref)

    acc_ref[...] += jnp.dot(x_ref[...], w1_ref[...],
                            preferred_element_type=jnp.float32)

    @pl.when(k == pl.num_programs(0) - 1)
    def _():
        h = jnp.maximum(acc_ref[...] + b1_ref[...], 0.0)
        # TODO(synk): nn.Dropout(0.2) is identity here (inference semantics).
        o_ref[...] = jnp.dot(h, w2_ref[...],
                             preferred_element_type=jnp.float32) + b2_ref[...]


def fc_fused(x, w1, b1, w2, b2, *, block_k=1024):
    B, Din = x.shape
    Dh = w1.shape[1]
    Apad = w2.shape[1]
    if Din % block_k != 0:
        block_k = Din
    nk = Din // block_k
    return pl.pallas_call(
        _fc_kernel,
        out_shape=jax.ShapeDtypeStruct((B, Apad), jnp.float32),
        grid=(nk,),
        in_specs=[
            pl.BlockSpec((B, block_k), lambda k: (0, k)),
            pl.BlockSpec((block_k, Dh), lambda k: (k, 0)),
            pl.BlockSpec((1, Dh), lambda k: (0, 0)),
            pl.BlockSpec((Dh, Apad), lambda k: (0, 0)),
            pl.BlockSpec((1, Apad), lambda k: (0, 0)),
        ],
        out_specs=pl.BlockSpec((B, Apad), lambda k: (0, 0)),
        scratch_shapes=[pltpu.VMEM((B, Dh), jnp.float32)],
        compiler_params=pltpu.CompilerParams(
            dimension_semantics=("arbitrary",)),
    )(x, w1, b1, w2, b2)


# --------------------------- params / forward ------------------------------ #

def init_params(key, state_shape, action_size):
    """Kaiming-normal (fan_out, relu) weights, zero biases — matches _init_weights."""
    H, W, C = state_shape
    ks = jax.random.split(key, 5)

    def conv_w(k, cin, cout):
        fan_out = cout * 3 * 3
        return (jax.random.normal(k, (3, 3, cin, cout), jnp.float32)
                * jnp.sqrt(2.0 / fan_out))

    def lin_w(k, din, dout):
        fan_out = dout
        return (jax.random.normal(k, (din, dout), jnp.float32)
                * jnp.sqrt(2.0 / fan_out))

    return {
        "conv1": (conv_w(ks[0], C, 16), jnp.zeros((16,), jnp.float32)),
        "conv2": (conv_w(ks[1], 16, 32), jnp.zeros((32,), jnp.float32)),
        "conv3": (conv_w(ks[2], 32, 32), jnp.zeros((32,), jnp.float32)),
        "fc1": (lin_w(ks[3], H * W * 32, 256), jnp.zeros((256,), jnp.float32)),
        "fc2": (lin_w(ks[4], 256, action_size),
                jnp.zeros((action_size,), jnp.float32)),
    }


def prepare_params(params, state_shape, action_size):
    """One-time repack of the torch-layout params into kernel-friendly layouts."""
    H, W, C = state_shape
    S = W + 8
    L = H * S
    n_hidden = params["fc1"][0].shape[1]
    c3 = params["conv3"][0].shape[3]

    def conv_wb(name):
        w, b = params[name]
        cin, cout = w.shape[2], w.shape[3]
        # (3,3,cin,cout) -> (9*cin, cout), tap-major rows (dh*3 + dw).
        return w.reshape(9 * cin, cout), b.reshape(1, cout)

    w1, b1 = conv_wb("conv1")
    w2, b2 = conv_wb("conv2")
    w3, b3 = conv_wb("conv3")

    # fc1 rows: torch NCHW-flatten order (c, h, w) -> NHWC-flatten order
    # (h, w, c); done once here so no device-side transpose is needed per call.
    wf1, bf1 = params["fc1"]
    wf1p = (wf1.reshape(c3, H, W, n_hidden)
            .transpose(1, 2, 0, 3)
            .reshape(H * W * c3, n_hidden))

    # fc2: zero-pad Dout to a lane-dense multiple of 128 (sliced afterwards).
    wf2, bf2 = params["fc2"]
    a_pad = _round_up(action_size, 128)
    wf2p = jnp.pad(wf2, ((0, 0), (0, a_pad - action_size)))
    bf2p = jnp.pad(bf2, (0, a_pad - action_size)).reshape(1, a_pad)

    # mask of real-pixel rows in the conv slab layout: (u % S) < W.
    cols = jnp.arange(L, dtype=jnp.int32) % S
    mask = (cols < W).astype(jnp.float32).reshape(L, 1)

    return {
        "conv1": (w1, b1), "conv2": (w2, b2), "conv3": (w3, b3),
        "fc1": (wf1p, bf1.reshape(1, n_hidden)), "fc2": (wf2p, bf2p),
        "mask": mask,
    }


def dqn_forward(x, pp, action_size):
    """x: (B, H, W, C) uint8-valued NHWC states."""
    B, H, W, C = x.shape
    S = W + 8
    R0 = S + 8
    L = H * S
    Rpad = _round_up(R0 + L + S + 1, 8)
    c3 = pp["conv3"][0].shape[1]

    # Tiny XLA glue on the 2 KiB input: cast + lay out the zero-padded canvas
    # (1 top pad row, 8 left pad cols, row stride S).  /255 runs in-kernel.
    xf = x.astype(jnp.float32)
    xc = jnp.pad(xf, ((0, 0), (1, 1), (8, 0), (0, 0))).reshape(B, (H + 2) * S, C)
    xc = jnp.pad(xc, ((0, 0), (0, Rpad - (H + 2) * S), (0, 0)))

    conv_out = conv_stack(xc, *pp["conv1"], *pp["conv2"], *pp["conv3"],
                          pp["mask"], H=H, W=W)                   # (B, L, 32)

    # Drop pad columns; contiguous NHWC flatten (fc1 rows were pre-permuted).
    flat = conv_out.reshape(B, H, S, c3)[:, :, :W, :].reshape(B, H * W * c3)

    out = fc_fused(flat, *pp["fc1"], *pp["fc2"])                  # (B, Apad)
    return out[:, :action_size]


def reference_forward(x, params):
    """Pure-JAX reference of the same forward pass (correctness check)."""
    x = x.astype(jnp.float32) / 255.0
    for name in ("conv1", "conv2", "conv3"):
        w, b = params[name]
        x = jax.nn.relu(
            lax.conv_general_dilated(
                x, w, (1, 1), "SAME",
                dimension_numbers=("NHWC", "HWIO", "NHWC")) + b)
    B = x.shape[0]
    x = jnp.transpose(x, (0, 3, 1, 2)).reshape(B, -1)
    w1, b1 = params["fc1"]
    w2, b2 = params["fc2"]
    x = jax.nn.relu(x @ w1 + b1)
    return x @ w2 + b2


# ---------------------------------- main ----------------------------------- #

if __name__ == "__main__":
    state_shape = (16, 16, 4)   # (H, W, C)
    action_size = 6
    batch = 2

    key = jax.random.PRNGKey(0)
    k_params, k_x = jax.random.split(key)
    params = init_params(k_params, state_shape, action_size)
    pparams = prepare_params(params, state_shape, action_size)

    x = jax.random.randint(
        k_x, (batch,) + state_shape, 0, 256, dtype=jnp.int32).astype(jnp.uint8)

    fwd = jax.jit(dqn_forward, static_argnums=(2,))
    out = jax.block_until_ready(fwd(x, pparams, action_size))
    ref = jax.block_until_ready(reference_forward(x, params))

    assert out.shape == (batch, action_size), out.shape
    max_err = float(jnp.max(jnp.abs(out - ref)))
    if not jnp.allclose(out, ref, atol=1e-3, rtol=1e-3):
        raise AssertionError(f"Pallas output mismatch, max abs err={max_err}")
    print("KERNEL_OK")
</pallas_src>

<mosaic_0001>
module attributes {stable_mosaic.version = 11 : i64} {
  func.func @_conv_stack_kernel(%arg0: i32, %arg1: memref<1x448x4xf32, #tpu.memory_space<vmem>>, %arg2: memref<36x16xf32, #tpu.memory_space<vmem>>, %arg3: memref<1x16xf32, #tpu.memory_space<vmem>>, %arg4: memref<144x32xf32, #tpu.memory_space<vmem>>, %arg5: memref<1x32xf32, #tpu.memory_space<vmem>>, %arg6: memref<288x32xf32, #tpu.memory_space<vmem>>, %arg7: memref<1x32xf32, #tpu.memory_space<vmem>>, %arg8: memref<384x1xf32, #tpu.memory_space<vmem>>, %arg9: memref<1x384x32xf32, #tpu.memory_space<vmem>>) attributes {dimension_semantics = [#tpu.dimension_semantics<parallel>], iteration_bounds = array<i64: 2>, scalar_prefetch = 0 : i64, scratch_operands = 0 : i64, tpu.core_type = #tpu.core_type<tc>, window_params = [{transform_indices = @transform_0, window_bounds = array<i64: 1, 448, 4>}, {pipeline_mode = #tpu.pipeline_mode<synchronous>, transform_indices = @transform_1, window_bounds = array<i64: 36, 16>}, {pipeline_mode = #tpu.pipeline_mode<synchronous>, transform_indices = @transform_2, window_bounds = array<i64: 1, 16>}, {pipeline_mode = #tpu.pipeline_mode<synchronous>, transform_indices = @transform_3, window_bounds = array<i64: 144, 32>}, {pipeline_mode = #tpu.pipeline_mode<synchronous>, transform_indices = @transform_4, window_bounds = array<i64: 1, 32>}, {pipeline_mode = #tpu.pipeline_mode<synchronous>, transform_indices = @transform_5, window_bounds = array<i64: 288, 32>}, {pipeline_mode = #tpu.pipeline_mode<synchronous>, transform_indices = @transform_6, window_bounds = array<i64: 1, 32>}, {pipeline_mode = #tpu.pipeline_mode<synchronous>, transform_indices = @transform_7, window_bounds = array<i64: 384, 1>}, {transform_indices = @transform_8, window_bounds = array<i64: 1, 384, 32>}]} {
    %c0 = arith.constant 0 : index
    %c0_0 = arith.constant 0 : index
    %0 = vector.load %arg8[%c0, %c0_0] : memref<384x1xf32, #tpu.memory_space<vmem>>, vector<384x1xf32>
    %c0_1 = arith.constant 0 : index
    %c0_2 = arith.constant 0 : index
    %c0_3 = arith.constant 0 : index
    %1 = vector.load %arg1[%c0_1, %c0_2, %c0_3] : memref<1x448x4xf32, #tpu.memory_space<vmem>>, vector<1x448x4xf32>
    %2 = vector.shape_cast %1 : vector<1x448x4xf32> to vector<448x4xf32>
    %3 = vector.extract_strided_slice %2 {offsets = [7, 0], sizes = [384, 4], strides = [1, 1]} : vector<448x4xf32> to vector<384x4xf32>
    %4 = vector.extract_strided_slice %2 {offsets = [8, 0], sizes = [384, 4], strides = [1, 1]} : vector<448x4xf32> to vector<384x4xf32>
    %5 = vector.extract_strided_slice %2 {offsets = [9, 0], sizes = [384, 4], strides = [1, 1]} : vector<448x4xf32> to vector<384x4xf32>
    %6 = vector.extract_strided_slice %2 {offsets = [31, 0], sizes = [384, 4], strides = [1, 1]} : vector<448x4xf32> to vector<384x4xf32>
    %7 = vector.extract_strided_slice %2 {offsets = [32, 0], sizes = [384, 4], strides = [1, 1]} : vector<448x4xf32> to vector<384x4xf32>
    %8 = vector.extract_strided_slice %2 {offsets = [33, 0], sizes = [384, 4], strides = [1, 1]} : vector<448x4xf32> to vector<384x4xf32>
    %9 = vector.extract_strided_slice %2 {offsets = [55, 0], sizes = [384, 4], strides = [1, 1]} : vector<448x4xf32> to vector<384x4xf32>
    %10 = vector.extract_strided_slice %2 {offsets = [56, 0], sizes = [384, 4], strides = [1, 1]} : vector<448x4xf32> to vector<384x4xf32>
    %11 = vector.extract_strided_slice %2 {offsets = [57, 0], sizes = [384, 4], strides = [1, 1]} : vector<448x4xf32> to vector<384x4xf32>
    %12 = tpu.concatenate %3, %4, %5, %6, %7, %8, %9, %10, %11 in 1 : vector<384x4xf32>, vector<384x4xf32>, vector<384x4xf32>, vector<384x4xf32>, vector<384x4xf32>, vector<384x4xf32>, vector<384x4xf32>, vector<384x4xf32>, vector<384x4xf32> -> vector<384x36xf32>
    %cst = arith.constant 0.00392156886 : f32
    %13 = vector.broadcast %cst : f32 to vector<384x36xf32>
    %14 = arith.mulf %12, %13 : vector<384x36xf32>
    %c0_4 = arith.constant 0 : index
    %c0_5 = arith.constant 0 : index
    %15 = vector.load %arg2[%c0_4, %c0_5] : memref<36x16xf32, #tpu.memory_space<vmem>>, vector<36x16xf32>
    %cst_6 = arith.constant dense<0.000000e+00> : vector<384x16xf32>
    %16 = tpu.matmul %14, %15, %cst_6 {dimension_numbers = #tpu.dot_dimension_numbers<[1], [0], [0], [1], [0, 0, 1, 1], [], []>} : vector<384x36xf32>, vector<36x16xf32>, vector<384x16xf32> -> vector<384x16xf32>
    %c0_7 = arith.constant 0 : index
    %c0_8 = arith.constant 0 : index
    %17 = vector.load %arg3[%c0_7, %c0_8] : memref<1x16xf32, #tpu.memory_space<vmem>>, vector<1x16xf32>
    %18 = vector.broadcast %17 : vector<1x16xf32> to vector<384x16xf32>
    %19 = arith.addf %16, %18 : vector<384x16xf32>
    %cst_9 = arith.constant 0.000000e+00 : f32
    %20 = vector.broadcast %cst_9 : f32 to vector<384x16xf32>
    %21 = arith.maximumf %19, %20 : vector<384x16xf32>
    %cst_10 = arith.constant 0.000000e+00 : f32
    %22 = vector.broadcast %cst_10 : f32 to vector<32x16xf32>
    %23 = vector.broadcast %0 : vector<384x1xf32> to vector<384x16xf32>
    %24 = arith.mulf %21, %23 : vector<384x16xf32>
    %cst_11 = arith.constant 0.000000e+00 : f32
    %25 = vector.broadcast %cst_11 : f32 to vector<32x16xf32>
    %26 = tpu.concatenate %22, %24, %25 in 0 : vector<32x16xf32>, vector<384x16xf32>, vector<32x16xf32> -> vector<448x16xf32>
    %27 = vector.extract_strided_slice %26 {offsets = [7, 0], sizes = [384, 16], strides = [1, 1]} : vector<448x16xf32> to vector<384x16xf32>
    %28 = vector.extract_strided_slice %26 {offsets = [8, 0], sizes = [384, 16], strides = [1, 1]} : vector<448x16xf32> to vector<384x16xf32>
    %29 = vector.extract_strided_slice %26 {offsets = [9, 0], sizes = [384, 16], strides = [1, 1]} : vector<448x16xf32> to vector<384x16xf32>
    %30 = vector.extract_strided_slice %26 {offsets = [31, 0], sizes = [384, 16], strides = [1, 1]} : vector<448x16xf32> to vector<384x16xf32>
    %31 = vector.extract_strided_slice %26 {offsets = [32, 0], sizes = [384, 16], strides = [1, 1]} : vector<448x16xf32> to vector<384x16xf32>
    %32 = vector.extract_strided_slice %26 {offsets = [33, 0], sizes = [384, 16], strides = [1, 1]} : vector<448x16xf32> to vector<384x16xf32>
    %33 = vector.extract_strided_slice %26 {offsets = [55, 0], sizes = [384, 16], strides = [1, 1]} : vector<448x16xf32> to vector<384x16xf32>
    %34 = vector.extract_strided_slice %26 {offsets = [56, 0], sizes = [384, 16], strides = [1, 1]} : vector<448x16xf32> to vector<384x16xf32>
    %35 = vector.extract_strided_slice %26 {offsets = [57, 0], sizes = [384, 16], strides = [1, 1]} : vector<448x16xf32> to vector<384x16xf32>
    %36 = tpu.concatenate %27, %28, %29, %30, %31, %32, %33, %34, %35 in 1 : vector<384x16xf32>, vector<384x16xf32>, vector<384x16xf32>, vector<384x16xf32>, vector<384x16xf32>, vector<384x16xf32>, vector<384x16xf32>, vector<384x16xf32>, vector<384x16xf32> -> vector<384x144xf32>
    %c0_12 = arith.constant 0 : index
    %c0_13 = arith.constant 0 : index
    %37 = vector.load %arg4[%c0_12, %c0_13] : memref<144x32xf32, #tpu.memory_space<vmem>>, vector<144x32xf32>
    %cst_14 = arith.constant dense<0.000000e+00> : vector<384x32xf32>
    %38 = tpu.matmul %36, %37, %cst_14 {dimension_numbers = #tpu.dot_dimension_numbers<[1], [0], [0], [1], [0, 0, 1, 1], [], []>} : vector<384x144xf32>, vector<144x32xf32>, vector<384x32xf32> -> vector<384x32xf32>
    %c0_15 = arith.constant 0 : index
    %c0_16 = arith.constant 0 : index
    %39 = vector.load %arg5[%c0_15, %c0_16] : memref<1x32xf32, #tpu.memory_space<vmem>>, vector<1x32xf32>
    %40 = vector.broadcast %39 : vector<1x32xf32> to vector<384x32xf32>
    %41 = arith.addf %38, %40 : vector<384x32xf32>
    %cst_17 = arith.constant 0.000000e+00 : f32
    %42 = vector.broadcast %cst_17 : f32 to vector<384x32xf32>
    %43 = arith.maximumf %41, %42 : vector<384x32xf32>
    %cst_18 = arith.constant 0.000000e+00 : f32
    %44 = vector.broadcast %cst_18 : f32 to vector<32x32xf32>
    %45 = vector.broadcast %0 : vector<384x1xf32> to vector<384x32xf32>
    %46 = arith.mulf %43, %45 : vector<384x32xf32>
    %cst_19 = arith.constant 0.000000e+00 : f32
    %47 = vector.broadcast %cst_19 : f32 to vector<32x32xf32>
    %48 = tpu.concatenate %44, %46, %47 in 0 : vector<32x32xf32>, vector<384x32xf32>, vector<32x32xf32> -> vector<448x32xf32>
    %49 = vector.extract_strided_slice %48 {offsets = [7, 0], sizes = [384, 32], strides = [1, 1]} : vector<448x32xf32> to vector<384x32xf32>
    %50 = vector.extract_strided_slice %48 {offsets = [8, 0], sizes = [384, 32], strides = [1, 1]} : vector<448x32xf32> to vector<384x32xf32>
    %51 = vector.extract_strided_slice %48 {offsets = [9, 0], sizes = [384, 32], strides = [1, 1]} : vector<448x32xf32> to vector<384x32xf32>
    %52 = vector.extract_strided_slice %48 {offsets = [31, 0], sizes = [384, 32], strides = [1, 1]} : vector<448x32xf32> to vector<384x32xf32>
    %53 = vector.extract_strided_slice %48 {offsets = [32, 0], sizes = [384, 32], strides = [1, 1]} : vector<448x32xf32> to vector<384x32xf32>
    %54 = vector.extract_strided_slice %48 {offsets = [33, 0], sizes = [384, 32], strides = [1, 1]} : vector<448x32xf32> to vector<384x32xf32>
    %55 = vector.extract_strided_slice %48 {offsets = [55, 0], sizes = [384, 32], strides = [1, 1]} : vector<448x32xf32> to vector<384x32xf32>
    %56 = vector.extract_strided_slice %48 {offsets = [56, 0], sizes = [384, 32], strides = [1, 1]} : vector<448x32xf32> to vector<384x32xf32>
    %57 = vector.extract_strided_slice %48 {offsets = [57, 0], sizes = [384, 32], strides = [1, 1]} : vector<448x32xf32> to vector<384x32xf32>
    %58 = tpu.concatenate %49, %50, %51, %52, %53, %54, %55, %56, %57 in 1 : vector<384x32xf32>, vector<384x32xf32>, vector<384x32xf32>, vector<384x32xf32>, vector<384x32xf32>, vector<384x32xf32>, vector<384x32xf32>, vector<384x32xf32>, vector<384x32xf32> -> vector<384x288xf32>
    %c0_20 = arith.constant 0 : index
    %c0_21 = arith.constant 0 : index
    %59 = vector.load %arg6[%c0_20, %c0_21] : memref<288x32xf32, #tpu.memory_space<vmem>>, vector<288x32xf32>
    %cst_22 = arith.constant dense<0.000000e+00> : vector<384x32xf32>
    %60 = tpu.matmul %58, %59, %cst_22 {dimension_numbers = #tpu.dot_dimension_numbers<[1], [0], [0], [1], [0, 0, 1, 1], [], []>} : vector<384x288xf32>, vector<288x32xf32>, vector<384x32xf32> -> vector<384x32xf32>
    %c0_23 = arith.constant 0 : index
    %c0_24 = arith.constant 0 : index
    %61 = vector.load %arg7[%c0_23, %c0_24] : memref<1x32xf32, #tpu.memory_space<vmem>>, vector<1x32xf32>
    %62 = vector.broadcast %61 : vector<1x32xf32> to vector<384x32xf32>
    %63 = arith.addf %60, %62 : vector<384x32xf32>
    %cst_25 = arith.constant 0.000000e+00 : f32
    %64 = vector.broadcast %cst_25 : f32 to vector<384x32xf32>
    %65 = arith.maximumf %63, %64 : vector<384x32xf32>
    %c0_26 = arith.constant 0 : index
    %c0_27 = arith.constant 0 : index
    %c0_28 = arith.constant 0 : index
    %66 = vector.load %arg9[%c0_26, %c0_27, %c0_28] : memref<1x384x32xf32, #tpu.memory_space<vmem>>, vector<1x384x32xf32>
    %67 = vector.shape_cast %66 : vector<1x384x32xf32> to vector<384x32xf32>
    %68 = vector.shape_cast %65 : vector<384x32xf32> to vector<1x384x32xf32>
    tpu.vector_store %arg9[%c0_26, %c0_27, %c0_28], %68 {strides = array<i32>} : memref<1x384x32xf32, #tpu.memory_space<vmem>>, vector<1x384x32xf32>,
    return
  }
  func.func @transform_0(%arg0: i32) -> (i32, i32, i32) {
    %c0_i32 = arith.constant 0 : i32
    %c0_i32_0 = arith.constant 0 : i32
    %c0_i32_1 = arith.constant 0 : i32
    return %arg0, %c0_i32, %c0_i32_0 : i32, i32, i32
  }
  func.func @transform_1(%arg0: i32) -> (i32, i32) {
    %c0_i32 = arith.constant 0 : i32
    %c0_i32_0 = arith.constant 0 : i32
    %c0_i32_1 = arith.constant 0 : i32
    return %c0_i32, %c0_i32_0 : i32, i32
  }
  func.func @transform_2(%arg0: i32) -> (i32, i32) {
    %c0_i32 = arith.constant 0 : i32
    %c0_i32_0 = arith.constant 0 : i32
    %c0_i32_1 = arith.constant 0 : i32
    return %c0_i32, %c0_i32_0 : i32, i32
  }
  func.func @transform_3(%arg0: i32) -> (i32, i32) {
    %c0_i32 = arith.constant 0 : i32
    %c0_i32_0 = arith.constant 0 : i32
    %c0_i32_1 = arith.constant 0 : i32
    return %c0_i32, %c0_i32_0 : i32, i32
  }
  func.func @transform_4(%arg0: i32) -> (i32, i32) {
    %c0_i32 = arith.constant 0 : i32
    %c0_i32_0 = arith.constant 0 : i32
    %c0_i32_1 = arith.constant 0 : i32
    return %c0_i32, %c0_i32_0 : i32, i32
  }
  func.func @transform_5(%arg0: i32) -> (i32, i32) {
    %c0_i32 = arith.constant 0 : i32
    %c0_i32_0 = arith.constant 0 : i32
    %c0_i32_1 = arith.constant 0 : i32
    return %c0_i32, %c0_i32_0 : i32, i32
  }
  func.func @transform_6(%arg0: i32) -> (i32, i32) {
    %c0_i32 = arith.constant 0 : i32
    %c0_i32_0 = arith.constant 0 : i32
    %c0_i32_1 = arith.constant 0 : i32
    return %c0_i32, %c0_i32_0 : i32, i32
  }
  func.func @transform_7(%arg0: i32) -> (i32, i32) {
    %c0_i32 = arith.constant 0 : i32
    %c0_i32_0 = arith.constant 0 : i32
    %c0_i32_1 = arith.constant 0 : i32
    return %c0_i32, %c0_i32_0 : i32, i32
  }
  func.func @transform_8(%arg0: i32) -> (i32, i32, i32) {
    %c0_i32 = arith.constant 0 : i32
    %c0_i32_0 = arith.constant 0 : i32
    %c0_i32_1 = arith.constant 0 : i32
    return %arg0, %c0_i32, %c0_i32_0 : i32, i32, i32
  }
}

module attributes {stable_mosaic.version = 11 : i64} {
  func.func @_fc_kernel(%arg0: i32, %arg1: memref<2x1024xf32, #tpu.memory_space<vmem>>, %arg2: memref<1024x256xf32, #tpu.memory_space<vmem>>, %arg3: memref<1x256xf32, #tpu.memory_space<vmem>>, %arg4: memref<256x128xf32, #tpu.memory_space<vmem>>, %arg5: memref<1x128xf32, #tpu.memory_space<vmem>>, %arg6: memref<2x128xf32, #tpu.memory_space<vmem>>, %arg7: memref<2x256xf32, #tpu.memory_space<vmem>>) attributes {dimension_semantics = [#tpu.dimension_semantics<arbitrary>], iteration_bounds = array<i64: 8>, scalar_prefetch = 0 : i64, scratch_operands = 1 : i64, tpu.core_type = #tpu.core_type<tc>, window_params = [{transform_indices = @transform_0, window_bounds = array<i64: 2, 1024>}, {transform_indices = @transform_1, window_bounds = array<i64: 1024, 256>}, {pipeline_mode = #tpu.pipeline_mode<synchronous>, transform_indices = @transform_2, window_bounds = array<i64: 1, 256>}, {pipeline_mode = #tpu.pipeline_mode<synchronous>, transform_indices = @transform_3, window_bounds = array<i64: 256, 128>}, {pipeline_mode = #tpu.pipeline_mode<synchronous>, transform_indices = @transform_4, window_bounds = array<i64: 1, 128>}, {pipeline_mode = #tpu.pipeline_mode<synchronous>, transform_indices = @transform_5, window_bounds = array<i64: 2, 128>}]} {
    %c0_i32 = arith.constant 0 : i32
    %0 = arith.cmpi eq, %arg0, %c0_i32 : i32
    %1 = arith.extui %0 : i1 to i32
    %c0_i32_0 = arith.constant 0 : i32
    %2 = arith.cmpi ne, %1, %c0_i32_0 : i32
    scf.if %2 {
      %cst_9 = arith.constant 0.000000e+00 : f32
      %12 = vector.broadcast %cst_9 : f32 to vector<2x256xf32>
      %c0_10 = arith.constant 0 : index
      %c0_11 = arith.constant 0 : index
      %13 = vector.load %arg7[%c0_10, %c0_11] : memref<2x256xf32, #tpu.memory_space<vmem>>, vector<2x256xf32>
      tpu.vector_store %arg7[%c0_10, %c0_11], %12 {strides = array<i32>} : memref<2x256xf32, #tpu.memory_space<vmem>>, vector<2x256xf32>,
    } else {
    }
    %c0 = arith.constant 0 : index
    %c0_1 = arith.constant 0 : index
    %3 = vector.load %arg7[%c0, %c0_1] : memref<2x256xf32, #tpu.memory_space<vmem>>, vector<2x256xf32>
    %c0_2 = arith.constant 0 : index
    %c0_3 = arith.constant 0 : index
    %4 = vector.load %arg1[%c0_2, %c0_3] : memref<2x1024xf32, #tpu.memory_space<vmem>>, vector<2x1024xf32>
    %c0_4 = arith.constant 0 : index
    %c0_5 = arith.constant 0 : index
    %5 = vector.load %arg2[%c0_4, %c0_5] : memref<1024x256xf32, #tpu.memory_space<vmem>>, vector<1024x256xf32>
    %cst = arith.constant dense<0.000000e+00> : vector<2x256xf32>
    %6 = tpu.matmul %4, %5, %cst {dimension_numbers = #tpu.dot_dimension_numbers<[1], [0], [0], [1], [0, 0, 1, 1], [], []>} : vector<2x1024xf32>, vector<1024x256xf32>, vector<2x256xf32> -> vector<2x256xf32>
    %7 = arith.addf %3, %6 : vector<2x256xf32>
    %c0_6 = arith.constant 0 : index
    %c0_7 = arith.constant 0 : index
    %8 = vector.load %arg7[%c0_6, %c0_7] : memref<2x256xf32, #tpu.memory_space<vmem>>, vector<2x256xf32>
    tpu.vector_store %arg7[%c0_6, %c0_7], %7 {strides = array<i32>} : memref<2x256xf32, #tpu.memory_space<vmem>>, vector<2x256xf32>,
    %c7_i32 = arith.constant 7 : i32
    %9 = arith.cmpi eq, %arg0, %c7_i32 : i32
    %10 = arith.extui %9 : i1 to i32
    %c0_i32_8 = arith.constant 0 : i32
    %11 = arith.cmpi ne, %10, %c0_i32_8 : i32
    scf.if %11 {
      %c0_9 = arith.constant 0 : index
      %c0_10 = arith.constant 0 : index
      %12 = vector.load %arg7[%c0_9, %c0_10] : memref<2x256xf32, #tpu.memory_space<vmem>>, vector<2x256xf32>
      %c0_11 = arith.constant 0 : index
      %c0_12 = arith.constant 0 : index
      %13 = vector.load %arg3[%c0_11, %c0_12] : memref<1x256xf32, #tpu.memory_space<vmem>>, vector<1x256xf32>
      %14 = vector.broadcast %13 : vector<1x256xf32> to vector<2x256xf32>
      %15 = arith.addf %12, %14 : vector<2x256xf32>
      %cst_13 = arith.constant 0.000000e+00 : f32
      %16 = vector.broadcast %cst_13 : f32 to vector<2x256xf32>
      %17 = arith.maximumf %15, %16 : vector<2x256xf32>
      %c0_14 = arith.constant 0 : index
      %c0_15 = arith.constant 0 : index
      %18 = vector.load %arg4[%c0_14, %c0_15] : memref<256x128xf32, #tpu.memory_space<vmem>>, vector<256x128xf32>
      %cst_16 = arith.constant dense<0.000000e+00> : vector<2x128xf32>
      %19 = tpu.matmul %17, %18, %cst_16 {dimension_numbers = #tpu.dot_dimension_numbers<[1], [0], [0], [1], [0, 0, 1, 1], [], []>} : vector<2x256xf32>, vector<256x128xf32>, vector<2x128xf32> -> vector<2x128xf32>
      %c0_17 = arith.constant 0 : index
      %c0_18 = arith.constant 0 : index
      %20 = vector.load %arg5[%c0_17, %c0_18] : memref<1x128xf32, #tpu.memory_space<vmem>>, vector<1x128xf32>
      %21 = vector.broadcast %20 : vector<1x128xf32> to vector<2x128xf32>
      %22 = arith.addf %19, %21 : vector<2x128xf32>
      %c0_19 = arith.constant 0 : index
      %c0_20 = arith.constant 0 : index
      %23 = vector.load %arg6[%c0_19, %c0_20] : memref<2x128xf32, #tpu.memory_space<vmem>>, vector<2x128xf32>
      tpu.vector_store %arg6[%c0_19, %c0_20], %22 {strides = array<i32>} : memref<2x128xf32, #tpu.memory_space<vmem>>, vector<2x128xf32>,
    } else {
    }
    return
  }
  func.func @transform_0(%arg0: i32) -> (i32, i32) {
    %c0_i32 = arith.constant 0 : i32
    %c0_i32_0 = arith.constant 0 : i32
    return %c0_i32, %arg0 : i32, i32
  }
  func.func @transform_1(%arg0: i32) -> (i32, i32) {
    %c0_i32 = arith.constant 0 : i32
    %c0_i32_0 = arith.constant 0 : i32
    return %arg0, %c0_i32 : i32, i32
  }
  func.func @transform_2(%arg0: i32) -> (i32, i32) {
    %c0_i32 = arith.constant 0 : i32
    %c0_i32_0 = arith.constant 0 : i32
    %c0_i32_1 = arith.constant 0 : i32
    return %c0_i32, %c0_i32_0 : i32, i32
  }
  func.func @transform_3(%arg0: i32) -> (i32, i32) {
    %c0_i32 = arith.constant 0 : i32
    %c0_i32_0 = arith.constant 0 : i32
    %c0_i32_1 = arith.constant 0 : i32
    return %c0_i32, %c0_i32_0 : i32, i32
  }
  func.func @transform_4(%arg0: i32) -> (i32, i32) {
    %c0_i32 = arith.constant 0 : i32
    %c0_i32_0 = arith.constant 0 : i32
    %c0_i32_1 = arith.constant 0 : i32
    return %c0_i32, %c0_i32_0 : i32, i32
  }
  func.func @transform_5(%arg0: i32) -> (i32, i32) {
    %c0_i32 = arith.constant 0 : i32
    %c0_i32_0 = arith.constant 0 : i32
    %c0_i32_1 = arith.constant 0 : i32
    return %c0_i32, %c0_i32_0 : i32, i32
  }
}

</mosaic_0001>

<llo_original>
// kernel: dqn_forward.3
$region0: #{dqn_forward.3}
  #allocation0 [shape = 'u32[]', space=smem, size = 0x4, offset = 0x4, fixed_abs, tag = 'smem constant byte address 0x4 - core index']
  #allocation1 [shape = 'u32[144,128]{1,0:T(1,128)}', space=vmem, size = 0x12000, scoped, tag = 'internal scratch']
  #allocation2 [shape = 'f32[2,256]{1,0:T(2,128)}', space=vmem, size = 0x800, scoped, tag = 'scratch operand']
  %s0 = inlined_call_operand.vmem [shape: f32[2,8192], index: 0, kind: input, shape index: {}]
  %s1 = inlined_call_operand.hbm [shape: f32[8192,256], index: 1, kind: input, shape index: {}]
  %s2 = inlined_call_operand.hbm [shape: f32[1,256], index: 2, kind: input, shape index: {}]
  %s3 = inlined_call_operand.hbm [shape: f32[256,128], index: 3, kind: input, shape index: {}]
  %s4 = inlined_call_operand.hbm [shape: f32[1,128], index: 4, kind: input, shape index: {}]
  %s5 = inlined_call_operand.hbm [shape: f32[2,128], index: 5, kind: output, shape index: {}]
  %s6 = sld [smem:[#allocation0]]
  $region77: #{dqn_forward.3} parent=0
    _
  %s8 = ssub.s32 1, %s6
  %s9 = scalar_select 0, %s8, %s6
  $region1: #{dqn_forward.3} parent=0
    #allocation3 [shape = 'u8[2097152]{0}', space=vmem, size = 0x200000, scoped, tag = 'input window, operand 1']
    #allocation4 [shape = 's32[2]{0}', space=sflag, size = 0x8, scoped, tag = 'scoped memory for dqn_forward.3']
    #allocation5 [shape = 's32[2]{0}', space=sflag, size = 0x8, scoped, tag = 'scoped memory for dqn_forward.3']
    #allocation6 [shape = 'u8[1024]{0}', space=vmem, size = 0x400, scoped, tag = 'input window, operand 2, single buffered']
    #allocation7 [shape = 's32[1]{0}', space=sflag, size = 0x4, scoped, tag = 'scoped memory for dqn_forward.3']
    #allocation8 [shape = 'u8[131072]{0}', space=vmem, size = 0x20000, scoped, tag = 'input window, operand 3, single buffered']
    #allocation9 [shape = 'u8[512]{0}', space=vmem, size = 0x400, scoped, tag = 'input window, operand 4, single buffered']
    #allocation10 [shape = 's32[1]{0}', space=sflag, size = 0x4, scoped, tag = 'scoped memory for dqn_forward.3']
    #allocation11 [shape = 'u8[1024]{0}', space=vmem, size = 0x400, scoped, tag = 'output window, operand 0, single buffered']
    %10 = vsyncpa [#allocation4], 0
    %s11 = scalar_lea.sflag [#allocation4], 1
    %12 = vsyncpa %s11, 0
    %13 = vsyncpa [#allocation7], 0
    %14 = vsyncpa [#allocation10], 0
    %15 = vsyncpa [#allocation5], 0
    loop: start=0, step=1, limit=10
    $region2: #{dqn_forward.3} parent=1 // loop_pre_header
      _
    $region3: #{dqn_forward.3} parent=1 // loop_header
      %s17 = sphi 0, %s21
      %p18 = scmp.ge.s32.totalorder %s17, 10
      %s27 = sphi 0, %s29
      %s30 = sphi 0, %s27
      %s31 = sphi 0, %s30
      %s47 = sphi 0, %s31
      %s53 = sphi 0, %s55
      %s56 = sphi 0, %s53
      %s57 = sphi 0, %s56
      %s73 = sphi 0, %s57
      %s77 = sphi 0, %s77
      %s79 = sphi 0, %s77
      %s80 = sphi 0, %s79
      %s94 = sphi 0, %s80
      %s98 = sphi 0, %s98
      %s100 = sphi 0, %s98
      %s101 = sphi 0, %s100
      %s115 = sphi 0, %s101
      %s119 = sphi 0, %s119
      %s121 = sphi 0, %s119
      %s122 = sphi 0, %s121
      %s136 = sphi 0, %s122
      %s140 = sphi 0, %s140
      %s142 = sphi 0, %s140
      %s143 = sphi 0, %s142
      %s157 = sphi 0, %s143
    $region4: #{dqn_forward.3} parent=1 // loop_header_branch
      %20 = sbr.rel (%p18) target = $region8
    $region5: #{dqn_forward.3} parent=1 // loop_body
      %s22 = ssub.s32 %s17, 1
      %s23 = ssub.s32 %s17, 2
      %s24 = sadd.s32 %s17, 1
      %s25 = ssub.s32 %s17, %s24
      %p26 = scmp.eq.s32.totalorder %s25, 0
      %s28 = sadd.s32 %s27, 1
      %s29 = scalar_select %p26, %s27, %s28
      %p32 = pneg %p26
      %p33 = scmp.eq.s32.totalorder %s17, 7
      %p34 = por %p32, %p33
      %p35 = scmp.ne.s32.totalorder %s27, %s30
      %p36 = scmp.eq.s32.totalorder %s17, 0
      %p37 = por %p35, %p36
      %p38 = scmp.ne.s32.totalorder %s27, %s30
      %p39 = scmp.eq.s32.totalorder %s22, 7
      %p40 = por %p38, %p39
      %p41 = scmp.ne.s32.totalorder %s30, %s31
      %p42 = scmp.eq.s32.totalorder %s22, 0
      %p43 = por %p41, %p42
      %p44 = scmp.ne.s32.totalorder %s30, %s31
      %p45 = scmp.eq.s32.totalorder %s23, 7
      %p46 = por %p44, %p45
      %p48 = scmp.ne.s32.totalorder %s31, %s47
      %p49 = scmp.eq.s32.totalorder %s23, 0
      %p50 = por %p48, %p49
      %s51 = ssub.s32 %s17, %s24
      %p52 = scmp.eq.s32.totalorder %s51, 0
      %s54 = sadd.s32 %s53, 1
      %s55 = scalar_select %p52, %s53, %s54
      %p58 = pneg %p52
      %p59 = scmp.eq.s32.totalorder %s17, 7
      %p60 = por %p58, %p59
      %p61 = scmp.ne.s32.totalorder %s53, %s56
      %p62 = scmp.eq.s32.totalorder %s17, 0
      %p63 = por %p61, %p62
      %p64 = scmp.ne.s32.totalorder %s53, %s56
      %p65 = scmp.eq.s32.totalorder %s22, 7
      %p66 = por %p64, %p65
      %p67 = scmp.ne.s32.totalorder %s56, %s57
      %p68 = scmp.eq.s32.totalorder %s22, 0
      %p69 = por %p67, %p68
      %p70 = scmp.ne.s32.totalorder %s56, %s57
      %p71 = scmp.eq.s32.totalorder %s23, 7
      %p72 = por %p70, %p71
      %p74 = scmp.ne.s32.totalorder %s57, %s73
      %p75 = scmp.eq.s32.totalorder %s23, 0
      %p76 = por %p74, %p75
      %s78 = sadd.s32 %s77, 1
      %p81 = scmp.eq.s32.totalorder %s17, 7
      %p82 = scmp.ne.s32.totalorder %s77, %s79
      %p83 = scmp.eq.s32.totalorder %s17, 0
      %p84 = por %p82, %p83
      %p85 = scmp.ne.s32.totalorder %s77, %s79
      %p86 = scmp.eq.s32.totalorder %s22, 7
      %p87 = por %p85, %p86
      %p88 = scmp.ne.s32.totalorder %s79, %s80
      %p89 = scmp.eq.s32.totalorder %s22, 0
      %p90 = por %p88, %p89
      %p91 = scmp.ne.s32.totalorder %s79, %s80
      %p92 = scmp.eq.s32.totalorder %s23, 7
      %p93 = por %p91, %p92
      %p95 = scmp.ne.s32.totalorder %s80, %s94
      %p96 = scmp.eq.s32.totalorder %s23, 0
      %p97 = por %p95, %p96
      %s99 = sadd.s32 %s98, 1
      %p102 = scmp.eq.s32.totalorder %s17, 7
      %p103 = scmp.ne.s32.totalorder %s98, %s100
      %p104 = scmp.eq.s32.totalorder %s17, 0
      %p105 = por %p103, %p104
      %p106 = scmp.ne.s32.totalorder %s98, %s100
      %p107 = scmp.eq.s32.totalorder %s22, 7
      %p108 = por %p106, %p107
      %p109 = scmp.ne.s32.totalorder %s100, %s101
      %p110 = scmp.eq.s32.totalorder %s22, 0
      %p111 = por %p109, %p110
      %p112 = scmp.ne.s32.totalorder %s100, %s101
      %p113 = scmp.eq.s32.totalorder %s23, 7
      %p114 = por %p112, %p113
      %p116 = scmp.ne.s32.totalorder %s101, %s115
      %p117 = scmp.eq.s32.totalorder %s23, 0
      %p118 = por %p116, %p117
      %s120 = sadd.s32 %s119, 1
      %p123 = scmp.eq.s32.totalorder %s17, 7
      %p124 = scmp.ne.s32.totalorder %s119, %s121
      %p125 = scmp.eq.s32.totalorder %s17, 0
      %p126 = por %p124, %p125
      %p127 = scmp.ne.s32.totalorder %s119, %s121
      %p128 = scmp.eq.s32.totalorder %s22, 7
      %p129 = por %p127, %p128
      %p130 = scmp.ne.s32.totalorder %s121, %s122
      %p131 = scmp.eq.s32.totalorder %s22, 0
      %p132 = por %p130, %p131
      %p133 = scmp.ne.s32.totalorder %s121, %s122
      %p134 = scmp.eq.s32.totalorder %s23, 7
      %p135 = por %p133, %p134
      %p137 = scmp.ne.s32.totalorder %s122, %s136
      %p138 = scmp.eq.s32.totalorder %s23, 0
      %p139 = por %p137, %p138
      %s141 = sadd.s32 %s140, 1
      %p144 = scmp.eq.s32.totalorder %s17, 7
      %p145 = scmp.ne.s32.totalorder %s140, %s142
      %p146 = scmp.eq.s32.totalorder %s17, 0
      %p147 = por %p145, %p146
      %p148 = scmp.ne.s32.totalorder %s140, %s142
      %p149 = scmp.eq.s32.totalorder %s22, 7
      %p150 = por %p148, %p149
      %p151 = scmp.ne.s32.totalorder %s142, %s143
      %p152 = scmp.eq.s32.totalorder %s22, 0
      %p153 = por %p151, %p152
      %p154 = scmp.ne.s32.totalorder %s142, %s143
      %p155 = scmp.eq.s32.totalorder %s23, 7
      %p156 = por %p154, %p155
      %p158 = scmp.ne.s32.totalorder %s143, %s157
      %p159 = scmp.eq.s32.totalorder %s23, 0
      %p160 = por %p158, %p159
      %p161 = scmp.le.s32.totalorder 1, %s17
      %p162 = scmp.lt.s32.totalorder %s17, 9
      %p163 = pnand %p161, %p162
      %p164 = pneg %p163
      // Predicated region
      $region9: #{dqn_forward.3} parent=5 // pred_check
        _
      $region10: #{dqn_forward.3} parent=5 // pred_check_branch
        %166 = sbr.rel (%p163) target = $region12
      $region11: #{dqn_forward.3} parent=5 // pred_region
        %s167 = ssub.s32 %s17, 1
        // Predicated region
        $region13: #{dqn_forward.3} parent=11 // pred_check
          %p168 = pneg %p90
        $region14: #{dqn_forward.3} parent=11 // pred_check_branch
          %170 = sbr.rel (%p168) target = $region16
        $region15: #{dqn_forward.3} parent=11 // pred_region
          %s172 = ssub.s32 32, 32
          %173 = vsyncadd [#allocation7], %s172
          %s175 = sshll.u32 [#allocation6], 4
          %s176 = int_to_ptr.vmem [resolvable:$true] %s175
          %178 = dma.hbm_to_vmem [thread:$0]  %s2, 32, %s176, [#allocation7]
        $region16: #{dqn_forward.3} parent=11 // pred_fallthru
          _
        // Predicated region
        $region17: #{dqn_forward.3} parent=11 // pred_check
          %p179 = pneg %p111
        $region18: #{dqn_forward.3} parent=11 // pred_check_branch
          %181 = sbr.rel (%p179) target = $region20
        $region19: #{dqn_forward.3} parent=11 // pred_region
          %s183 = ssub.s32 4096, 4096
          %184 = vsyncadd [#allocation7], %s183
          %s185 = sshll.u32 [#allocation8], 4
          %s186 = int_to_ptr.vmem [resolvable:$true] %s185
          %191 = dma.hbm_to_vmem [thread:$0]  %s3, 4096, %s186, [#allocation7], 128, 128, 8
        $region20: #{dqn_forward.3} parent=11 // pred_fallthru
          _
        // Predicated region
        $region21: #{dqn_forward.3} parent=11 // pred_check
          %p192 = pneg %p132
        $region22: #{dqn_forward.3} parent=11 // pred_check_branch
          %194 = sbr.rel (%p192) target = $region24
        $region23: #{dqn_forward.3} parent=11 // pred_region
          %s196 = ssub.s32 16, 16
          %197 = vsyncadd [#allocation10], %s196
          %s199 = sshll.u32 [#allocation9], 4
          %s200 = int_to_ptr.vmem [resolvable:$true] %s199
          %202 = dma.hbm_to_vmem [thread:$0]  %s4, 16, %s200, [#allocation10]
        $region24: #{dqn_forward.3} parent=11 // pred_fallthru
          _
      $region12: #{dqn_forward.3} parent=5 // pred_fallthru
        _
      %p203 = scmp.lt.s32.totalorder %s17, 8
      // Predicated region
      $region25: #{dqn_forward.3} parent=5 // pred_check
        %p204 = pneg %p203
      $region26: #{dqn_forward.3} parent=5 // pred_check_branch
        %206 = sbr.rel (%p204) target = $region28
      $region27: #{dqn_forward.3} parent=5 // pred_region
        // Predicated region
        $region29: #{dqn_forward.3} parent=27 // pred_check
          %p207 = pneg %p37
        $region30: #{dqn_forward.3} parent=27 // pred_check_branch
          %209 = sbr.rel (%p207) target = $region32
        $region31: #{dqn_forward.3} parent=27 // pred_region
          %s210 = smul.u32 8, %s17
          %p211 = scmp.lt.s32.totalorder %s210, 63
          %s212 = scalar_select %p211, %s210, 63
          %s213 = smul.addr %s212, 2
          %s214 = scalar_lea.vmem %s0, %s213
          %s215 = smul.u32 8, %s17
        $region32: #{dqn_forward.3} parent=27 // pred_fallthru
          _
        // Predicated region
        $region33: #{dqn_forward.3} parent=27 // pred_check
          %p216 = pneg %p63
        $region34: #{dqn_forward.3} parent=27 // pred_check_branch
          %218 = sbr.rel (%p216) target = $region36
        $region35: #{dqn_forward.3} parent=27 // pred_region
          %s219 = sand.u32 %s53, 1
          %s220 = scalar_lea.sflag [#allocation4], %s219
          %s221 = sand.u32 %s53, 1
          %s222 = smul.addr %s221, 2048
          %s223 = scalar_lea.vmem [#allocation3], %s222
          %s224 = smul.u32 128, %s17
          %s226 = ssub.s32 32768, 32768
          %227 = vsyncadd %s220, %s226
          %s228 = smul.addr %s224, 2
          %s229 = smul.addr %s228, 128
          %s230 = scalar_lea.hbm %s1, %s229
          %s231 = sshll.u32 %s223, 4
          %s232 = int_to_ptr.vmem [resolvable:$true] %s231
          %237 = dma.hbm_to_vmem [thread:$0]  %s230, 32768, %s232, %s220, 256, 256, 16
        $region36: #{dqn_forward.3} parent=27 // pred_fallthru
          _
      $region28: #{dqn_forward.3} parent=5 // pred_fallthru
        _
      %p238 = scmp.le.s32.totalorder 1, %s17
      %p239 = scmp.lt.s32.totalorder %s17, 9
      %p240 = pnand %p238, %p239
      %p241 = pneg %p240
      // Predicated region
      $region37: #{dqn_forward.3} parent=5 // pred_check
        _
      $region38: #{dqn_forward.3} parent=5 // pred_check_branch
        %243 = sbr.rel (%p240) target = $region40
      $region39: #{dqn_forward.3} parent=5 // pred_region
        %s244 = ssub.s32 %s17, 1
        %s245 = sand.u32 %s56, 1
        %s246 = scalar_lea.sflag [#allocation4], %s245
        %s247 = sand.u32 %s56, 1
        %s248 = smul.addr %s247, 2048
        %s249 = scalar_lea.vmem [#allocation3], %s248
        // Predicated region
        $region41: #{dqn_forward.3} parent=39 // pred_check
          %p250 = pneg %p69
        $region42: #{dqn_forward.3} parent=39 // pred_check_branch
          %252 = sbr.rel (%p250) target = $region44
        $region43: #{dqn_forward.3} parent=39 // pred_region
          %253 = dma.done %s246, 32768
        $region44: #{dqn_forward.3} parent=39 // pred_fallthru
          _
        // Predicated region
        $region45: #{dqn_forward.3} parent=39 // pred_check
          %p254 = pneg %p90
        $region46: #{dqn_forward.3} parent=39 // pred_check_branch
          %256 = sbr.rel (%p254) target = $region48
        $region47: #{dqn_forward.3} parent=39 // pred_region
          %257 = dma.done [#allocation7], 32
        $region48: #{dqn_forward.3} parent=39 // pred_fallthru
          _
        // Predicated region
        $region49: #{dqn_forward.3} parent=39 // pred_check
          %p258 = pneg %p111
        $region50: #{dqn_forward.3} parent=39 // pred_check_branch
          %260 = sbr.rel (%p258) target = $region52
        $region51: #{dqn_forward.3} parent=39 // pred_region
          %261 = dma.done [#allocation7], 4096
        $region52: #{dqn_forward.3} parent=39 // pred_fallthru
          _
        // Predicated region
        $region53: #{dqn_forward.3} parent=39 // pred_check
          %p262 = pneg %p132
        $region54: #{dqn_forward.3} parent=39 // pred_check_branch
          %264 = sbr.rel (%p262) target = $region56
        $region55: #{dqn_forward.3} parent=39 // pred_region
          %265 = dma.done [#allocation10], 16
        $region56: #{dqn_forward.3} parent=39 // pred_fallthru
          _
        %s266 = smul.u32 8, %s22
        %p267 = scmp.lt.s32.totalorder %s266, 63
        %s268 = scalar_select %p267, %s266, 63
        %s269 = smul.addr %s268, 2
        %s270 = scalar_lea.vmem %s0, %s269
        %p271 = pneg %p43
        %p272 = pneg %p40
        %s273 = sand.u32 %s56, 1
        %s274 = scalar_lea.sflag [#allocation4], %s273
        %s275 = sand.u32 %s56, 1
        %s276 = smul.addr %s275, 2048
        %s277 = scalar_lea.vmem [#allocation3], %s276
        %p278 = pneg %p69
        %p279 = pneg %p66
        %p280 = pneg %p90
        %p281 = pneg %p87
        %p282 = pneg %p111
        %p283 = pneg %p108
        %p284 = pneg %p132
        %p285 = pneg %p129
        %p286 = pneg %p153
        %p287 = pneg %p150
        %s288 = smul.u32 8, %s22
        %p289 = scmp.lt.s32.totalorder %s288, 63
        %s290 = scalar_select %p289, %s288, 63
        %s291 = smul.addr %s290, 2
        %s292 = scalar_lea.vmem %s0, %s291
        %s293 = smul.u32 8, %s22
        %s294 = smul.u32 128, %s22
        %p295 = scmp.eq.s32.totalorder %s22, 0
        // Predicated region
        $region57: #{dqn_forward.3} parent=39 // pred_check
          %p296 = pneg %p295
        $region58: #{dqn_forward.3} parent=39 // pred_check_branch
          %298 = sbr.rel (%p296) target = $region60
        $region59: #{dqn_forward.3} parent=39 // pred_region
          %299 = vst [vmem:[#allocation2] sm:$0xf] 0.0
        $region60: #{dqn_forward.3} parent=39 // pred_fallthru
          _
        %v300 = vld [vmem:[#allocation2] sm:$0xf]
        %v301 = vld [vmem:[%s292] sm:$0xff]
        %v302 = vld [vmem:[%s292 + $0x8] sm:$0xff]
        %v303 = vld [vmem:[%s249] sm:$0xff]
        %v304 = vld [vmem:[%s249 + $0x8] sm:$0xff]
        %v305 = vld [vmem:[%s249 + $0x10] sm:$0xff]
        %v306 = vld [vmem:[%s249 + $0x18] sm:$0xff]
        %v307 = vld [vmem:[%s249 + $0x20] sm:$0xff]
        %v308 = vld [vmem:[%s249 + $0x28] sm:$0xff]
        %v309 = vld [vmem:[%s249 + $0x30] sm:$0xff]
        %v310 = vld [vmem:[%s249 + $0x38] sm:$0xff]
        %v311 = vld [vmem:[%s249 + $0x40] sm:$0xff]
        %v312 = vld [vmem:[%s249 + $0x48] sm:$0xff]
        %v313 = vld [vmem:[%s249 + $0x50] sm:$0xff]
        %v314 = vld [vmem:[%s249 + $0x58] sm:$0xff]
        %v315 = vld [vmem:[%s249 + $0x60] sm:$0xff]
        %v316 = vld [vmem:[%s249 + $0x68] sm:$0xff]
        %v317 = vld [vmem:[%s249 + $0x70] sm:$0xff]
        %v318 = vld [vmem:[%s249 + $0x78] sm:$0xff]
        %v319 = vld [vmem:[%s249 + $0x80] sm:$0xff]
        %v320 = vld [vmem:[%s249 + $0x88] sm:$0xff]
        %v321 = vld [vmem:[%s249 + $0x90] sm:$0xff]
        %v322 = vld [vmem:[%s249 + $0x98] sm:$0xff]
        %v323 = vld [vmem:[%s249 + $0xa0] sm:$0xff]
        %v324 = vld [vmem:[%s249 + $0xa8] sm:$0xff]
        %v325 = vld [vmem:[%s249 + $0xb0] sm:$0xff]
        %v326 = vld [vmem:[%s249 + $0xb8] sm:$0xff]
        %v327 = vld [vmem:[%s249 + $0xc0] sm:$0xff]
        %v328 = vld [vmem:[%s249 + $0xc8] sm:$0xff]
        %v329 = vld [vmem:[%s249 + $0xd0] sm:$0xff]
        %v330 = vld [vmem:[%s249 + $0xd8] sm:$0xff]
        %v331 = vld [vmem:[%s249 + $0xe0] sm:$0xff]
        %v332 = vld [vmem:[%s249 + $0xe8] sm:$0xff]
        %v333 = vld [vmem:[%s249 + $0xf0] sm:$0xff]
        %v334 = vld [vmem:[%s249 + $0xf8] sm:$0xff]
        %v335 = vld [vmem:[%s249 + $0x100] sm:$0xff]
        %v336 = vld [vmem:[%s249 + $0x108] sm:$0xff]
        %v337 = vld [vmem:[%s249 + $0x110] sm:$0xff]
        %v338 = vld [vmem:[%s249 + $0x118] sm:$0xff]
        %v339 = vld [vmem:[%s249 + $0x120] sm:$0xff]
        %v340 = vld [vmem:[%s249 + $0x128] sm:$0xff]
        %v341 = vld [vmem:[%s249 + $0x130] sm:$0xff]
        %v342 = vld [vmem:[%s249 + $0x138] sm:$0xff]
        %v343 = vld [vmem:[%s249 + $0x140] sm:$0xff]
        %v344 = vld [vmem:[%s249 + $0x148] sm:$0xff]
        %v345 = vld [vmem:[%s249 + $0x150] sm:$0xff]
        %v346 = vld [vmem:[%s249 + $0x158] sm:$0xff]
        %v347 = vld [vmem:[%s249 + $0x160] sm:$0xff]
        %v348 = vld [vmem:[%s249 + $0x168] sm:$0xff]
        %v349 = vld [vmem:[%s249 + $0x170] sm:$0xff]
        %v350 = vld [vmem:[%s249 + $0x178] sm:$0xff]
        %v351 = vld [vmem:[%s249 + $0x180] sm:$0xff]
        %v352 = vld [vmem:[%s249 + $0x188] sm:$0xff]
        %v353 = vld [vmem:[%s249 + $0x190] sm:$0xff]
        %v354 = vld [vmem:[%s249 + $0x198] sm:$0xff]
        %v355 = vld [vmem:[%s249 + $0x1a0] sm:$0xff]
        %v356 = vld [vmem:[%s249 + $0x1a8] sm:$0xff]
        %v357 = vld [vmem:[%s249 + $0x1b0] sm:$0xff]
        %v358 = vld [vmem:[%s249 + $0x1b8] sm:$0xff]
        %v359 = vld [vmem:[%s249 + $0x1c0] sm:$0xff]
        %v360 = vld [vmem:[%s249 + $0x1c8] sm:$0xff]
        %v361 = vld [vmem:[%s249 + $0x1d0] sm:$0xff]
        %v362 = vld [vmem:[%s249 + $0x1d8] sm:$0xff]
        %v363 = vld [vmem:[%s249 + $0x1e0] sm:$0xff]
        %v364 = vld [vmem:[%s249 + $0x1e8] sm:$0xff]
        %v365 = vld [vmem:[%s249 + $0x1f0] sm:$0xff]
        %v366 = vld [vmem:[%s249 + $0x1f8] sm:$0xff]
        %v367 = vld [vmem:[%s249 + $0x200] sm:$0xff]
        %v368 = vld [vmem:[%s249 + $0x208] sm:$0xff]
        %v369 = vld [vmem:[%s249 + $0x210] sm:$0xff]
        %v370 = vld [vmem:[%s249 + $0x218] sm:$0xff]
        %v371 = vld [vmem:[%s249 + $0x220] sm:$0xff]
        %v372 = vld [vmem:[%s249 + $0x228] sm:$0xff]
        %v373 = vld [vmem:[%s249 + $0x230] sm:$0xff]
        %v374 = vld [vmem:[%s249 + $0x238] sm:$0xff]
        %v375 = vld [vmem:[%s249 + $0x240] sm:$0xff]
        %v376 = vld [vmem:[%s249 + $0x248] sm:$0xff]
        %v377 = vld [vmem:[%s249 + $0x250] sm:$0xff]
        %v378 = vld [vmem:[%s249 + $0x258] sm:$0xff]
        %v379 = vld [vmem:[%s249 + $0x260] sm:$0xff]
        %v380 = vld [vmem:[%s249 + $0x268] sm:$0xff]
        %v381 = vld [vmem:[%s249 + $0x270] sm:$0xff]
        %v382 = vld [vmem:[%s249 + $0x278] sm:$0xff]
        %v383 = vld [vmem:[%s249 + $0x280] sm:$0xff]
        %v384 = vld [vmem:[%s249 + $0x288] sm:$0xff]
        %v385 = vld [vmem:[%s249 + $0x290] sm:$0xff]
        %v386 = vld [vmem:[%s249 + $0x298] sm:$0xff]
        %v387 = vld [vmem:[%s249 + $0x2a0] sm:$0xff]
        %v388 = vld [vmem:[%s249 + $0x2a8] sm:$0xff]
        %v389 = vld [vmem:[%s249 + $0x2b0] sm:$0xff]
        %v390 = vld [vmem:[%s249 + $0x2b8] sm:$0xff]
        %v391 = vld [vmem:[%s249 + $0x2c0] sm:$0xff]
        %v392 = vld [vmem:[%s249 + $0x2c8] sm:$0xff]
        %v393 = vld [vmem:[%s249 + $0x2d0] sm:$0xff]
        %v394 = vld [vmem:[%s249 + $0x2d8] sm:$0xff]
        %v395 = vld [vmem:[%s249 + $0x2e0] sm:$0xff]
        %v396 = vld [vmem:[%s249 + $0x2e8] sm:$0xff]
        %v397 = vld [vmem:[%s249 + $0x2f0] sm:$0xff]
        %v398 = vld [vmem:[%s249 + $0x2f8] sm:$0xff]
        %v399 = vld [vmem:[%s249 + $0x300] sm:$0xff]
        %v400 = vld [vmem:[%s249 + $0x308] sm:$0xff]
        %v401 = vld [vmem:[%s249 + $0x310] sm:$0xff]
        %v402 = vld [vmem:[%s249 + $0x318] sm:$0xff]
        %v403 = vld [vmem:[%s249 + $0x320] sm:$0xff]
        %v404 = vld [vmem:[%s249 + $0x328] sm:$0xff]
        %v405 = vld [vmem:[%s249 + $0x330] sm:$0xff]
        %v406 = vld [vmem:[%s249 + $0x338] sm:$0xff]
        %v407 = vld [vmem:[%s249 + $0x340] sm:$0xff]
        %v408 = vld [vmem:[%s249 + $0x348] sm:$0xff]
        %v409 = vld [vmem:[%s249 + $0x350] sm:$0xff]
        %v410 = vld [vmem:[%s249 + $0x358] sm:$0xff]
        %v411 = vld [vmem:[%s249 + $0x360] sm:$0xff]
        %v412 = vld [vmem:[%s249 + $0x368] sm:$0xff]
        %v413 = vld [vmem:[%s249 + $0x370] sm:$0xff]
        %v414 = vld [vmem:[%s249 + $0x378] sm:$0xff]
        %v415 = vld [vmem:[%s249 + $0x380] sm:$0xff]
        %v416 = vld [vmem:[%s249 + $0x388] sm:$0xff]
        %v417 = vld [vmem:[%s249 + $0x390] sm:$0xff]
        %v418 = vld [vmem:[%s249 + $0x398] sm:$0xff]
        %v419 = vld [vmem:[%s249 + $0x3a0] sm:$0xff]
        %v420 = vld [vmem:[%s249 + $0x3a8] sm:$0xff]
        %v421 = vld [vmem:[%s249 + $0x3b0] sm:$0xff]
        %v422 = vld [vmem:[%s249 + $0x3b8] sm:$0xff]
        %v423 = vld [vmem:[%s249 + $0x3c0] sm:$0xff]
        %v424 = vld [vmem:[%s249 + $0x3c8] sm:$0xff]
        %v425 = vld [vmem:[%s249 + $0x3d0] sm:$0xff]
        %v426 = vld [vmem:[%s249 + $0x3d8] sm:$0xff]
        %v427 = vld [vmem:[%s249 + $0x3e0] sm:$0xff]
        %v428 = vld [vmem:[%s249 + $0x3e8] sm:$0xff]
        %v429 = vld [vmem:[%s249 + $0x3f0] sm:$0xff]
        %v430 = vld [vmem:[%s249 + $0x3f8] sm:$0xff]
        %v431 = vld [vmem:[%s249 + $0x400] sm:$0xff]
        %v432 = vld [vmem:[%s249 + $0x408] sm:$0xff]
        %v433 = vld [vmem:[%s249 + $0x410] sm:$0xff]
        %v434 = vld [vmem:[%s249 + $0x418] sm:$0xff]
        %v435 = vld [vmem:[%s249 + $0x420] sm:$0xff]
        %v436 = vld [vmem:[%s249 + $0x428] sm:$0xff]
        %v437 = vld [vmem:[%s249 + $0x430] sm:$0xff]
        %v438 = vld [vmem:[%s249 + $0x438] sm:$0xff]
        %v439 = vld [vmem:[%s249 + $0x440] sm:$0xff]
        %v440 = vld [vmem:[%s249 + $0x448] sm:$0xff]
        %v441 = vld [vmem:[%s249 + $0x450] sm:$0xff]
        %v442 = vld [vmem:[%s249 + $0x458] sm:$0xff]
        %v443 = vld [vmem:[%s249 + $0x460] sm:$0xff]
        %v444 = vld [vmem:[%s249 + $0x468] sm:$0xff]
        %v445 = vld [vmem:[%s249 + $0x470] sm:$0xff]
        %v446 = vld [vmem:[%s249 + $0x478] sm:$0xff]
        %v447 = vld [vmem:[%s249 + $0x480] sm:$0xff]
        %v448 = vld [vmem:[%s249 + $0x488] sm:$0xff]
        %v449 = vld [vmem:[%s249 + $0x490] sm:$0xff]
        %v450 = vld [vmem:[%s249 + $0x498] sm:$0xff]
        %v451 = vld [vmem:[%s249 + $0x4a0] sm:$0xff]
        %v452 = vld [vmem:[%s249 + $0x4a8] sm:$0xff]
        %v453 = vld [vmem:[%s249 + $0x4b0] sm:$0xff]
        %v454 = vld [vmem:[%s249 + $0x4b8] sm:$0xff]
        %v455 = vld [vmem:[%s249 + $0x4c0] sm:$0xff]
        %v456 = vld [vmem:[%s249 + $0x4c8] sm:$0xff]
        %v457 = vld [vmem:[%s249 + $0x4d0] sm:$0xff]
        %v458 = vld [vmem:[%s249 + $0x4d8] sm:$0xff]
        %v459 = vld [vmem:[%s249 + $0x4e0] sm:$0xff]
        %v460 = vld [vmem:[%s249 + $0x4e8] sm:$0xff]
        %v461 = vld [vmem:[%s249 + $0x4f0] sm:$0xff]
        %v462 = vld [vmem:[%s249 + $0x4f8] sm:$0xff]
        %v463 = vld [vmem:[%s249 + $0x500] sm:$0xff]
        %v464 = vld [vmem:[%s249 + $0x508] sm:$0xff]
        %v465 = vld [vmem:[%s249 + $0x510] sm:$0xff]
        %v466 = vld [vmem:[%s249 + $0x518] sm:$0xff]
        %v467 = vld [vmem:[%s249 + $0x520] sm:$0xff]
        %v468 = vld [vmem:[%s249 + $0x528] sm:$0xff]
        %v469 = vld [vmem:[%s249 + $0x530] sm:$0xff]
        %v470 = vld [vmem:[%s249 + $0x538] sm:$0xff]
        %v471 = vld [vmem:[%s249 + $0x540] sm:$0xff]
        %v472 = vld [vmem:[%s249 + $0x548] sm:$0xff]
        %v473 = vld [vmem:[%s249 + $0x550] sm:$0xff]
        %v474 = vld [vmem:[%s249 + $0x558] sm:$0xff]
        %v475 = vld [vmem:[%s249 + $0x560] sm:$0xff]
        %v476 = vld [vmem:[%s249 + $0x568] sm:$0xff]
        %v477 = vld [vmem:[%s249 + $0x570] sm:$0xff]
        %v478 = vld [vmem:[%s249 + $0x578] sm:$0xff]
        %v479 = vld [vmem:[%s249 + $0x580] sm:$0xff]
        %v480 = vld [vmem:[%s249 + $0x588] sm:$0xff]
        %v481 = vld [vmem:[%s249 + $0x590] sm:$0xff]
        %v482 = vld [vmem:[%s249 + $0x598] sm:$0xff]
        %v483 = vld [vmem:[%s249 + $0x5a0] sm:$0xff]
        %v484 = vld [vmem:[%s249 + $0x5a8] sm:$0xff]
        %v485 = vld [vmem:[%s249 + $0x5b0] sm:$0xff]
        %v486 = vld [vmem:[%s249 + $0x5b8] sm:$0xff]
        %v487 = vld [vmem:[%s249 + $0x5c0] sm:$0xff]
        %v488 = vld [vmem:[%s249 + $0x5c8] sm:$0xff]
        %v489 = vld [vmem:[%s249 + $0x5d0] sm:$0xff]
        %v490 = vld [vmem:[%s249 + $0x5d8] sm:$0xff]
        %v491 = vld [vmem:[%s249 + $0x5e0] sm:$0xff]
        %v492 = vld [vmem:[%s249 + $0x5e8] sm:$0xff]
        %v493 = vld [vmem:[%s249 + $0x5f0] sm:$0xff]
        %v494 = vld [vmem:[%s249 + $0x5f8] sm:$0xff]
        %v495 = vld [vmem:[%s249 + $0x600] sm:$0xff]
        %v496 = vld [vmem:[%s249 + $0x608] sm:$0xff]
        %v497 = vld [vmem:[%s249 + $0x610] sm:$0xff]
        %v498 = vld [vmem:[%s249 + $0x618] sm:$0xff]
        %v499 = vld [vmem:[%s249 + $0x620] sm:$0xff]
        %v500 = vld [vmem:[%s249 + $0x628] sm:$0xff]
        %v501 = vld [vmem:[%s249 + $0x630] sm:$0xff]
        %v502 = vld [vmem:[%s249 + $0x638] sm:$0xff]
        %v503 = vld [vmem:[%s249 + $0x640] sm:$0xff]
        %v504 = vld [vmem:[%s249 + $0x648] sm:$0xff]
        %v505 = vld [vmem:[%s249 + $0x650] sm:$0xff]
        %v506 = vld [vmem:[%s249 + $0x658] sm:$0xff]
        %v507 = vld [vmem:[%s249 + $0x660] sm:$0xff]
        %v508 = vld [vmem:[%s249 + $0x668] sm:$0xff]
        %v509 = vld [vmem:[%s249 + $0x670] sm:$0xff]
        %v510 = vld [vmem:[%s249 + $0x678] sm:$0xff]
        %v511 = vld [vmem:[%s249 + $0x680] sm:$0xff]
        %v512 = vld [vmem:[%s249 + $0x688] sm:$0xff]
        %v513 = vld [vmem:[%s249 + $0x690] sm:$0xff]
        %v514 = vld [vmem:[%s249 + $0x698] sm:$0xff]
        %v515 = vld [vmem:[%s249 + $0x6a0] sm:$0xff]
        %v516 = vld [vmem:[%s249 + $0x6a8] sm:$0xff]
        %v517 = vld [vmem:[%s249 + $0x6b0] sm:$0xff]
        %v518 = vld [vmem:[%s249 + $0x6b8] sm:$0xff]
        %v519 = vld [vmem:[%s249 + $0x6c0] sm:$0xff]
        %v520 = vld [vmem:[%s249 + $0x6c8] sm:$0xff]
        %v521 = vld [vmem:[%s249 + $0x6d0] sm:$0xff]
        %v522 = vld [vmem:[%s249 + $0x6d8] sm:$0xff]
        %v523 = vld [vmem:[%s249 + $0x6e0] sm:$0xff]
        %v524 = vld [vmem:[%s249 + $0x6e8] sm:$0xff]
        %v525 = vld [vmem:[%s249 + $0x6f0] sm:$0xff]
        %v526 = vld [vmem:[%s249 + $0x6f8] sm:$0xff]
        %v527 = vld [vmem:[%s249 + $0x700] sm:$0xff]
        %v528 = vld [vmem:[%s249 + $0x708] sm:$0xff]
        %v529 = vld [vmem:[%s249 + $0x710] sm:$0xff]
        %v530 = vld [vmem:[%s249 + $0x718] sm:$0xff]
        %v531 = vld [vmem:[%s249 + $0x720] sm:$0xff]
        %v532 = vld [vmem:[%s249 + $0x728] sm:$0xff]
        %v533 = vld [vmem:[%s249 + $0x730] sm:$0xff]
        %v534 = vld [vmem:[%s249 + $0x738] sm:$0xff]
        %v535 = vld [vmem:[%s249 + $0x740] sm:$0xff]
        %v536 = vld [vmem:[%s249 + $0x748] sm:$0xff]
        %v537 = vld [vmem:[%s249 + $0x750] sm:$0xff]
        %v538 = vld [vmem:[%s249 + $0x758] sm:$0xff]
        %v539 = vld [vmem:[%s249 + $0x760] sm:$0xff]
        %v540 = vld [vmem:[%s249 + $0x768] sm:$0xff]
        %v541 = vld [vmem:[%s249 + $0x770] sm:$0xff]
        %v542 = vld [vmem:[%s249 + $0x778] sm:$0xff]
        %v543 = vld [vmem:[%s249 + $0x780] sm:$0xff]
        %v544 = vld [vmem:[%s249 + $0x788] sm:$0xff]
        %v545 = vld [vmem:[%s249 + $0x790] sm:$0xff]
        %v546 = vld [vmem:[%s249 + $0x798] sm:$0xff]
        %v547 = vld [vmem:[%s249 + $0x7a0] sm:$0xff]
        %v548 = vld [vmem:[%s249 + $0x7a8] sm:$0xff]
        %v549 = vld [vmem:[%s249 + $0x7b0] sm:$0xff]
        %v550 = vld [vmem:[%s249 + $0x7b8] sm:$0xff]
        %v551 = vld [vmem:[%s249 + $0x7c0] sm:$0xff]
        %v552 = vld [vmem:[%s249 + $0x7c8] sm:$0xff]
        %v553 = vld [vmem:[%s249 + $0x7d0] sm:$0xff]
        %v554 = vld [vmem:[%s249 + $0x7d8] sm:$0xff]
        %v555 = vld [vmem:[%s249 + $0x7e0] sm:$0xff]
        %v556 = vld [vmem:[%s249 + $0x7e8] sm:$0xff]
        %v557 = vld [vmem:[%s249 + $0x7f0] sm:$0xff]
        %v558 = vld [vmem:[%s249 + $0x7f8] sm:$0xff]
        %v561 = vcombine.high %v301, %v301
        %v563 = vunpack.c.l.s4 1983009808
        %v564 = vunpack.c.0.s8 %v563
        %v565 = vlaneseq
        %v566 = vshrl.u32 %v565, 7
        %v567 = vsub.s32 %v564, %v566
        %v568 = vrot.slane %v301, %v567
        %v570 = vunpack.c.l.s4 1983009808
        %v571 = vunpack.c.0.s8 %v570
        %v572 = vlaneseq
        %v573 = vshrl.u32 %v572, 7
        %v574 = vsub.s32 %v571, %v573
        %v575 = vrot.slane %v561, %v574
        %v576 = vcombine.high %v568, %v568
        %v577 = vcombine.high %v575, %v575
        %v578 = vcombine.high %v302, %v302
        %v580 = vunpack.c.l.s4 1983009808
        %v581 = vunpack.c.0.s8 %v580
        %v582 = vlaneseq
        %v583 = vshrl.u32 %v582, 7
        %v584 = vsub.s32 %v581, %v583
        %v585 = vrot.slane %v302, %v584
        %v587 = vunpack.c.l.s4 1983009808
        %v588 = vunpack.c.0.s8 %v587
        %v589 = vlaneseq
        %v590 = vshrl.u32 %v589, 7
        %v591 = vsub.s32 %v588, %v590
        %v592 = vrot.slane %v578, %v591
        %v593 = vcombine.high %v585, %v585
        %v594 = vcombine.high %v592, %v592
        %603 = vmatprep.subr.mxu0 %v304
        %604 = vmatpush1.msra.mxu0 %v303
        %605 = vmatprep.subr.mxu0 %v306
        %606 = vmatpush1.msra.mxu0 %v305
        %607 = vmatprep.subr.mxu0 %v308
        %608 = vmatpush1.msra.mxu0 %v307
        %609 = vmatprep.subr.mxu0 %v310
        %610 = vmatpush1.msra.mxu0 %v309
        %611 = vmatprep.subr.mxu0 %v312
        %612 = vmatpush1.msra.mxu0 %v311
        %613 = vmatprep.subr.mxu0 %v314
        %614 = vmatpush1.msra.mxu0 %v313
        %615 = vmatprep.subr.mxu0 %v316
        %616 = vmatpush1.msra.mxu0 %v315
        %617 = vmatprep.subr.mxu0 %v318
        %618 = vmatpush1.msra.mxu0 %v317
        %619 = vmatprep.subr.mxu0 %v320
        %620 = vmatpush1.msra.mxu0 %v319
        %621 = vmatprep.subr.mxu0 %v322
        %622 = vmatpush1.msra.mxu0 %v321
        %623 = vmatprep.subr.mxu0 %v324
        %624 = vmatpush1.msra.mxu0 %v323
        %625 = vmatprep.subr.mxu0 %v326
        %626 = vmatpush1.msra.mxu0 %v325
        %627 = vmatprep.subr.mxu0 %v328
        %628 = vmatpush1.msra.mxu0 %v327
        %629 = vmatprep.subr.mxu0 %v330
        %630 = vmatpush1.msra.mxu0 %v329
        %631 = vmatprep.subr.mxu0 %v332
        %632 = vmatpush1.msra.mxu0 %v331
        %633 = vmatprep.subr.mxu0 %v334
        %634 = vmatpush1.msra.mxu0 %v333
        %635 = vmatprep.subr.mxu0 %v336
        %636 = vmatpush1.msra.mxu0 %v335
        %637 = vmatprep.subr.mxu0 %v338
        %638 = vmatpush1.msra.mxu0 %v337
        %639 = vmatprep.subr.mxu0 %v340
        %640 = vmatpush1.msra.mxu0 %v339
        %641 = vmatprep.subr.mxu0 %v342
        %642 = vmatpush1.msra.mxu0 %v341
        %643 = vmatprep.subr.mxu0 %v344
        %644 = vmatpush1.msra.mxu0 %v343
        %645 = vmatprep.subr.mxu0 %v346
        %646 = vmatpush1.msra.mxu0 %v345
        %647 = vmatprep.subr.mxu0 %v348
        %648 = vmatpush1.msra.mxu0 %v347
        %649 = vmatprep.subr.mxu0 %v350
        %650 = vmatpush1.msra.mxu0 %v349
        %651 = vmatprep.subr.mxu0 %v352
        %652 = vmatpush1.msra.mxu0 %v351
        %653 = vmatprep.subr.mxu0 %v354
        %654 = vmatpush1.msra.mxu0 %v353
        %655 = vmatprep.subr.mxu0 %v356
        %656 = vmatpush1.msra.mxu0 %v355
        %657 = vmatprep.subr.mxu0 %v358
        %658 = vmatpush1.msra.mxu0 %v357
        %659 = vmatprep.subr.mxu0 %v360
        %660 = vmatpush1.msra.mxu0 %v359
        %661 = vmatprep.subr.mxu0 %v362
        %662 = vmatpush1.msra.mxu0 %v361
        %663 = vmatprep.subr.mxu0 %v364
        %664 = vmatpush1.msra.mxu0 %v363
        %665 = vmatprep.subr.mxu0 %v366
        %666 = vmatpush1.msra.mxu0 %v365
        %667 = vmatprep.mubr.f32.mxu0 %v576
        %668 = vmatmul.mubr.f32.gmra.mrb[0].mxu0 %v568
        %v669 = vpop.f32.mrb[0].mxu0
        %v670 = vadd.f32 0.0, %v669
        %v671 = vpop.f32.mrb[0].mxu0
        %v672 = vadd.f32 0.0, %v671
        %673 = vdwg.mxu0
        %674 = vmatprep.subr.mxu0 %v368
        %675 = vmatpush1.msra.mxu0 %v367
        %676 = vmatprep.subr.mxu0 %v370
        %677 = vmatpush1.msra.mxu0 %v369
        %678 = vmatprep.subr.mxu0 %v372
        %679 = vmatpush1.msra.mxu0 %v371
        %680 = vmatprep.subr.mxu0 %v374
        %681 = vmatpush1.msra.mxu0 %v373
        %682 = vmatprep.subr.mxu0 %v376
        %683 = vmatpush1.msra.mxu0 %v375
        %684 = vmatprep.subr.mxu0 %v378
        %685 = vmatpush1.msra.mxu0 %v377
        %686 = vmatprep.subr.mxu0 %v380
        %687 = vmatpush1.msra.mxu0 %v379
        %688 = vmatprep.subr.mxu0 %v382
        %689 = vmatpush1.msra.mxu0 %v381
        %690 = vmatprep.subr.mxu0 %v384
        %691 = vmatpush1.msra.mxu0 %v383
        %692 = vmatprep.subr.mxu0 %v386
        %693 = vmatpush1.msra.mxu0 %v385
        %694 = vmatprep.subr.mxu0 %v388
        %695 = vmatpush1.msra.mxu0 %v387
        %696 = vmatprep.subr.mxu0 %v390
        %697 = vmatpush1.msra.mxu0 %v389
        %698 = vmatprep.subr.mxu0 %v392
        %699 = vmatpush1.msra.mxu0 %v391
        %700 = vmatprep.subr.mxu0 %v394
        %701 = vmatpush1.msra.mxu0 %v393
        %702 = vmatprep.subr.mxu0 %v396
        %703 = vmatpush1.msra.mxu0 %v395
        %704 = vmatprep.subr.mxu0 %v398
        %705 = vmatpush1.msra.mxu0 %v397
        %706 = vmatprep.subr.mxu0 %v400
        %707 = vmatpush1.msra.mxu0 %v399
        %708 = vmatprep.subr.mxu0 %v402
        %709 = vmatpush1.msra.mxu0 %v401
        %710 = vmatprep.subr.mxu0 %v404
        %711 = vmatpush1.msra.mxu0 %v403
        %712 = vmatprep.subr.mxu0 %v406
        %713 = vmatpush1.msra.mxu0 %v405
        %714 = vmatprep.subr.mxu0 %v408
        %715 = vmatpush1.msra.mxu0 %v407
        %716 = vmatprep.subr.mxu0 %v410
        %717 = vmatpush1.msra.mxu0 %v409
        %718 = vmatprep.subr.mxu0 %v412
        %719 = vmatpush1.msra.mxu0 %v411
        %720 = vmatprep.subr.mxu0 %v414
        %721 = vmatpush1.msra.mxu0 %v413
        %722 = vmatprep.subr.mxu0 %v416
        %723 = vmatpush1.msra.mxu0 %v415
        %724 = vmatprep.subr.mxu0 %v418
        %725 = vmatpush1.msra.mxu0 %v417
        %726 = vmatprep.subr.mxu0 %v420
        %727 = vmatpush1.msra.mxu0 %v419
        %728 = vmatprep.subr.mxu0 %v422
        %729 = vmatpush1.msra.mxu0 %v421
        %730 = vmatprep.subr.mxu0 %v424
        %731 = vmatpush1.msra.mxu0 %v423
        %732 = vmatprep.subr.mxu0 %v426
        %733 = vmatpush1.msra.mxu0 %v425
        %734 = vmatprep.subr.mxu0 %v428
        %735 = vmatpush1.msra.mxu0 %v427
        %736 = vmatprep.subr.mxu0 %v430
        %737 = vmatpush1.msra.mxu0 %v429
        %738 = vmatprep.mubr.f32.mxu0 %v577
        %739 = vmatmul.mubr.f32.gmra.mrb[0].mxu0 %v575
        %v740 = vpop.f32.mrb[0].mxu0
        %v741 = vadd.f32 %v670, %v740
        %v742 = vpop.f32.mrb[0].mxu0
        %v743 = vadd.f32 %v672, %v742
        %744 = vdwg.mxu0
        %745 = vmatprep.subr.mxu0 %v432
        %746 = vmatpush1.msra.mxu0 %v431
        %747 = vmatprep.subr.mxu0 %v434
        %748 = vmatpush1.msra.mxu0 %v433
        %749 = vmatprep.subr.mxu0 %v436
        %750 = vmatpush1.msra.mxu0 %v435
        %751 = vmatprep.subr.mxu0 %v438
        %752 = vmatpush1.msra.mxu0 %v437
        %753 = vmatprep.subr.mxu0 %v440
        %754 = vmatpush1.msra.mxu0 %v439
        %755 = vmatprep.subr.mxu0 %v442
        %756 = vmatpush1.msra.mxu0 %v441
        %757 = vmatprep.subr.mxu0 %v444
        %758 = vmatpush1.msra.mxu0 %v443
        %759 = vmatprep.subr.mxu0 %v446
        %760 = vmatpush1.msra.mxu0 %v445
        %761 = vmatprep.subr.mxu0 %v448
        %762 = vmatpush1.msra.mxu0 %v447
        %763 = vmatprep.subr.mxu0 %v450
        %764 = vmatpush1.msra.mxu0 %v449
        %765 = vmatprep.subr.mxu0 %v452
        %766 = vmatpush1.msra.mxu0 %v451
        %767 = vmatprep.subr.mxu0 %v454
        %768 = vmatpush1.msra.mxu0 %v453
        %769 = vmatprep.subr.mxu0 %v456
        %770 = vmatpush1.msra.mxu0 %v455
        %771 = vmatprep.subr.mxu0 %v458
        %772 = vmatpush1.msra.mxu0 %v457
        %773 = vmatprep.subr.mxu0 %v460
        %774 = vmatpush1.msra.mxu0 %v459
        %775 = vmatprep.subr.mxu0 %v462
        %776 = vmatpush1.msra.mxu0 %v461
        %777 = vmatprep.subr.mxu0 %v464
        %778 = vmatpush1.msra.mxu0 %v463
        %779 = vmatprep.subr.mxu0 %v466
        %780 = vmatpush1.msra.mxu0 %v465
        %781 = vmatprep.subr.mxu0 %v468
        %782 = vmatpush1.msra.mxu0 %v467
        %783 = vmatprep.subr.mxu0 %v470
        %784 = vmatpush1.msra.mxu0 %v469
        %785 = vmatprep.subr.mxu0 %v472
        %786 = vmatpush1.msra.mxu0 %v471
        %787 = vmatprep.subr.mxu0 %v474
        %788 = vmatpush1.msra.mxu0 %v473
        %789 = vmatprep.subr.mxu0 %v476
        %790 = vmatpush1.msra.mxu0 %v475
        %791 = vmatprep.subr.mxu0 %v478
        %792 = vmatpush1.msra.mxu0 %v477
        %793 = vmatprep.subr.mxu0 %v480
        %794 = vmatpush1.msra.mxu0 %v479
        %795 = vmatprep.subr.mxu0 %v482
        %796 = vmatpush1.msra.mxu0 %v481
        %797 = vmatprep.subr.mxu0 %v484
        %798 = vmatpush1.msra.mxu0 %v483
        %799 = vmatprep.subr.mxu0 %v486
        %800 = vmatpush1.msra.mxu0 %v485
        %801 = vmatprep.subr.mxu0 %v488
        %802 = vmatpush1.msra.mxu0 %v487
        %803 = vmatprep.subr.mxu0 %v490
        %804 = vmatpush1.msra.mxu0 %v489
        %805 = vmatprep.subr.mxu0 %v492
        %806 = vmatpush1.msra.mxu0 %v491
        %807 = vmatprep.subr.mxu0 %v494
        %808 = vmatpush1.msra.mxu0 %v493
        %809 = vmatprep.mubr.f32.mxu0 %v593
        %810 = vmatmul.mubr.f32.gmra.mrb[0].mxu0 %v585
        %v811 = vpop.f32.mrb[0].mxu0
        %v812 = vadd.f32 %v741, %v811
        %v813 = vpop.f32.mrb[0].mxu0
        %v814 = vadd.f32 %v743, %v813
        %815 = vdwg.mxu0
        %816 = vmatprep.subr.mxu0 %v496
        %817 = vmatpush1.msra.mxu0 %v495
        %818 = vmatprep.subr.mxu0 %v498
        %819 = vmatpush1.msra.mxu0 %v497
        %820 = vmatprep.subr.mxu0 %v500
        %821 = vmatpush1.msra.mxu0 %v499
        %822 = vmatprep.subr.mxu0 %v502
        %823 = vmatpush1.msra.mxu0 %v501
        %824 = vmatprep.subr.mxu0 %v504
        %825 = vmatpush1.msra.mxu0 %v503
        %826 = vmatprep.subr.mxu0 %v506
        %827 = vmatpush1.msra.mxu0 %v505
        %828 = vmatprep.subr.mxu0 %v508
        %829 = vmatpush1.msra.mxu0 %v507
        %830 = vmatprep.subr.mxu0 %v510
        %831 = vmatpush1.msra.mxu0 %v509
        %832 = vmatprep.subr.mxu0 %v512
        %833 = vmatpush1.msra.mxu0 %v511
        %834 = vmatprep.subr.mxu0 %v514
        %835 = vmatpush1.msra.mxu0 %v513
        %836 = vmatprep.subr.mxu0 %v516
        %837 = vmatpush1.msra.mxu0 %v515
        %838 = vmatprep.subr.mxu0 %v518
        %839 = vmatpush1.msra.mxu0 %v517
        %840 = vmatprep.subr.mxu0 %v520
        %841 = vmatpush1.msra.mxu0 %v519
        %842 = vmatprep.subr.mxu0 %v522
        %843 = vmatpush1.msra.mxu0 %v521
        %844 = vmatprep.subr.mxu0 %v524
        %845 = vmatpush1.msra.mxu0 %v523
        %846 = vmatprep.subr.mxu0 %v526
        %847 = vmatpush1.msra.mxu0 %v525
        %848 = vmatprep.subr.mxu0 %v528
        %849 = vmatpush1.msra.mxu0 %v527
        %850 = vmatprep.subr.mxu0 %v530
        %851 = vmatpush1.msra.mxu0 %v529
        %852 = vmatprep.subr.mxu0 %v532
        %853 = vmatpush1.msra.mxu0 %v531
        %854 = vmatprep.subr.mxu0 %v534
        %855 = vmatpush1.msra.mxu0 %v533
        %856 = vmatprep.subr.mxu0 %v536
        %857 = vmatpush1.msra.mxu0 %v535
        %858 = vmatprep.subr.mxu0 %v538
        %859 = vmatpush1.msra.mxu0 %v537
        %860 = vmatprep.subr.mxu0 %v540
        %861 = vmatpush1.msra.mxu0 %v539
        %862 = vmatprep.subr.mxu0 %v542
        %863 = vmatpush1.msra.mxu0 %v541
        %864 = vmatprep.subr.mxu0 %v544
        %865 = vmatpush1.msra.mxu0 %v543
        %866 = vmatprep.subr.mxu0 %v546
        %867 = vmatpush1.msra.mxu0 %v545
        %868 = vmatprep.subr.mxu0 %v548
        %869 = vmatpush1.msra.mxu0 %v547
        %870 = vmatprep.subr.mxu0 %v550
        %871 = vmatpush1.msra.mxu0 %v549
        %872 = vmatprep.subr.mxu0 %v552
        %873 = vmatpush1.msra.mxu0 %v551
        %874 = vmatprep.subr.mxu0 %v554
        %875 = vmatpush1.msra.mxu0 %v553
        %876 = vmatprep.subr.mxu0 %v556
        %877 = vmatpush1.msra.mxu0 %v555
        %878 = vmatprep.subr.mxu0 %v558
        %879 = vmatpush1.msra.mxu0 %v557
        %880 = vmatprep.mubr.f32.mxu0 %v594
        %881 = vmatmul.mubr.f32.gmra.mrb[0].mxu0 %v592
        %v882 = vpop.f32.mrb[0].mxu0
        %v883 = vadd.f32 %v812, %v882
        %v884 = vpop.f32.mrb[0].mxu0
        %v885 = vadd.f32 %v814, %v884
        %886 = vdwg.mxu0
        %v889 = vcombine.low %v883, %v885
        %v891 = vunpack.c.l.s4 1983009808
        %v892 = vunpack.c.0.s8 %v891
        %v893 = vlaneseq
        %v894 = vshrl.u32 %v893, 7
        %v895 = vsub.s32 %v892, %v894
        %v896 = vrot.slane %v889, %v895
        %v898 = vadd.f32 %v300, %v896
        %899 = vst [vmem:[#allocation2] sm:$0xf] %v898
        %p900 = scmp.eq.s32.totalorder %s22, 7
        // Predicated region
        $region61: #{dqn_forward.3} parent=39 // pred_check
          %p901 = pneg %p900
        $region62: #{dqn_forward.3} parent=39 // pred_check_branch
          %903 = sbr.rel (%p901) target = $region64
        $region63: #{dqn_forward.3} parent=39 // pred_region
          %v904 = vld [vmem:[#allocation2] sm:$0xf]
          %v905 = vld [vmem:[#allocation6] sm:$0x3]
          %v907 = vlaneseq
          %v908 = vshrl.u32 %v907, 7
          %v909 = vsub.s32 0, %v908
          %v910 = vrot.slane %v905, %v909
          %v911 = vlaneseq
          %v912 = vshrl.u32 %v911, 7
          %v913 = vsub.s32 1, %v912
          %v914 = vrot.slane %v905, %v913
          %v915 = vcombine.low %v910, %v914
          %v917 = vunpack.c.l.s4 1983009808
          %v918 = vunpack.c.0.s8 %v917
          %v919 = vlaneseq
          %v920 = vshrl.u32 %v919, 7
          %v921 = vsub.s32 %v918, %v920
          %v922 = vrot.slane %v915, %v921
          %v924 = vadd.f32 %v904, %v922
          %v925 = vmax.f32 %v924, 0.0
          %v926 = vld [vmem:[#allocation8] sm:$0xff]
          %v927 = vld [vmem:[#allocation8 + $0x8] sm:$0xff]
          %v928 = vld [vmem:[#allocation8 + $0x10] sm:$0xff]
          %v929 = vld [vmem:[#allocation8 + $0x18] sm:$0xff]
          %v930 = vld [vmem:[#allocation8 + $0x20] sm:$0xff]
          %v931 = vld [vmem:[#allocation8 + $0x28] sm:$0xff]
          %v932 = vld [vmem:[#allocation8 + $0x30] sm:$0xff]
          %v933 = vld [vmem:[#allocation8 + $0x38] sm:$0xff]
          %v934 = vld [vmem:[#allocation8 + $0x40] sm:$0xff]
          %v935 = vld [vmem:[#allocation8 + $0x48] sm:$0xff]
          %v936 = vld [vmem:[#allocation8 + $0x50] sm:$0xff]
          %v937 = vld [vmem:[#allocation8 + $0x58] sm:$0xff]
          %v938 = vld [vmem:[#allocation8 + $0x60] sm:$0xff]
          %v939 = vld [vmem:[#allocation8 + $0x68] sm:$0xff]
          %v940 = vld [vmem:[#allocation8 + $0x70] sm:$0xff]
          %v941 = vld [vmem:[#allocation8 + $0x78] sm:$0xff]
          %v942 = vld [vmem:[#allocation8 + $0x80] sm:$0xff]
          %v943 = vld [vmem:[#allocation8 + $0x88] sm:$0xff]
          %v944 = vld [vmem:[#allocation8 + $0x90] sm:$0xff]
          %v945 = vld [vmem:[#allocation8 + $0x98] sm:$0xff]
          %v946 = vld [vmem:[#allocation8 + $0xa0] sm:$0xff]
          %v947 = vld [vmem:[#allocation8 + $0xa8] sm:$0xff]
          %v948 = vld [vmem:[#allocation8 + $0xb0] sm:$0xff]
          %v949 = vld [vmem:[#allocation8 + $0xb8] sm:$0xff]
          %v950 = vld [vmem:[#allocation8 + $0xc0] sm:$0xff]
          %v951 = vld [vmem:[#allocation8 + $0xc8] sm:$0xff]
          %v952 = vld [vmem:[#allocation8 + $0xd0] sm:$0xff]
          %v953 = vld [vmem:[#allocation8 + $0xd8] sm:$0xff]
          %v954 = vld [vmem:[#allocation8 + $0xe0] sm:$0xff]
          %v955 = vld [vmem:[#allocation8 + $0xe8] sm:$0xff]
          %v956 = vld [vmem:[#allocation8 + $0xf0] sm:$0xff]
          %v957 = vld [vmem:[#allocation8 + $0xf8] sm:$0xff]
          %v958 = vld [vmem:[#allocation9] sm:$0x1]
          %v960 = vlaneseq
          %v961 = vshrl.u32 %v960, 7
          %v962 = vsub.s32 0, %v961
          %v963 = vrot.slane %v958, %v962
          %v967 = vunpack.c.l.s4 1983009808
          %v968 = vunpack.c.0.s8 %v967
          %v969 = vlaneseq
          %v970 = vshrl.u32 %v969, 7
          %v971 = vsub.s32 %v968, %v970
          %v972 = vrot.slane %v925, %v971
          %v973 = vcombine.high %v972, %v972
          %976 = vmatprep.subr.mxu0 0.0
          %977 = vmatpush1.msra.mxu0 %v926
          %978 = vmatprep.subr.mxu0 0.0
          %979 = vmatpush1.msra.mxu0 %v927
          %980 = vmatprep.subr.mxu0 0.0
          %981 = vmatpush1.msra.mxu0 %v928
          %982 = vmatprep.subr.mxu0 0.0
          %983 = vmatpush1.msra.mxu0 %v929
          %984 = vmatprep.subr.mxu0 0.0
          %985 = vmatpush1.msra.mxu0 %v930
          %986 = vmatprep.subr.mxu0 0.0
          %987 = vmatpush1.msra.mxu0 %v931
          %988 = vmatprep.subr.mxu0 0.0
          %989 = vmatpush1.msra.mxu0 %v932
          %990 = vmatprep.subr.mxu0 0.0
          %991 = vmatpush1.msra.mxu0 %v933
          %992 = vmatprep.subr.mxu0 0.0
          %993 = vmatpush1.msra.mxu0 %v934
          %994 = vmatprep.subr.mxu0 0.0
          %995 = vmatpush1.msra.mxu0 %v935
          %996 = vmatprep.subr.mxu0 0.0
          %997 = vmatpush1.msra.mxu0 %v936
          %998 = vmatprep.subr.mxu0 0.0
          %999 = vmatpush1.msra.mxu0 %v937
          %1000 = vmatprep.subr.mxu0 0.0
          %1001 = vmatpush1.msra.mxu0 %v938
          %1002 = vmatprep.subr.mxu0 0.0
          %1003 = vmatpush1.msra.mxu0 %v939
          %1004 = vmatprep.subr.mxu0 0.0
          %1005 = vmatpush1.msra.mxu0 %v940
          %1006 = vmatprep.subr.mxu0 0.0
          %1007 = vmatpush1.msra.mxu0 %v941
          %1008 = vmatprep.subr.mxu0 0.0
          %1009 = vmatpush1.msra.mxu0 %v942
          %1010 = vmatprep.subr.mxu0 0.0
          %1011 = vmatpush1.msra.mxu0 %v943
          %1012 = vmatprep.subr.mxu0 0.0
          %1013 = vmatpush1.msra.mxu0 %v944
          %1014 = vmatprep.subr.mxu0 0.0
          %1015 = vmatpush1.msra.mxu0 %v945
          %1016 = vmatprep.subr.mxu0 0.0
          %1017 = vmatpush1.msra.mxu0 %v946
          %1018 = vmatprep.subr.mxu0 0.0
          %1019 = vmatpush1.msra.mxu0 %v947
          %1020 = vmatprep.subr.mxu0 0.0
          %1021 = vmatpush1.msra.mxu0 %v948
          %1022 = vmatprep.subr.mxu0 0.0
          %1023 = vmatpush1.msra.mxu0 %v949
          %1024 = vmatprep.subr.mxu0 0.0
          %1025 = vmatpush1.msra.mxu0 %v950
          %1026 = vmatprep.subr.mxu0 0.0
          %1027 = vmatpush1.msra.mxu0 %v951
          %1028 = vmatprep.subr.mxu0 0.0
          %1029 = vmatpush1.msra.mxu0 %v952
          %1030 = vmatprep.subr.mxu0 0.0
          %1031 = vmatpush1.msra.mxu0 %v953
          %1032 = vmatprep.subr.mxu0 0.0
          %1033 = vmatpush1.msra.mxu0 %v954
          %1034 = vmatprep.subr.mxu0 0.0
          %1035 = vmatpush1.msra.mxu0 %v955
          %1036 = vmatprep.subr.mxu0 0.0
          %1037 = vmatpush1.msra.mxu0 %v956
          %1038 = vmatprep.subr.mxu0 0.0
          %1039 = vmatpush1.msra.mxu0 %v957
          %1040 = vmatprep.mubr.f32.mxu0 %v973
          %1041 = vmatmul.mubr.f32.gmra.mrb[0].mxu0 %v972
          %v1042 = vpop.f32.mrb[0].mxu0
          %v1043 = vadd.f32 %v963, %v1042
          %v1044 = vpop.f32.mrb[0].mxu0
          %1045 = vdwg.mxu0
          %1046 = vst [vmem:[#allocation11] sm:$0x3] %v1043
        $region64: #{dqn_forward.3} parent=39 // pred_fallthru
          _
        // Predicated region
        $region65: #{dqn_forward.3} parent=39 // pred_check
          %p1047 = pneg %p150
        $region66: #{dqn_forward.3} parent=39 // pred_check_branch
          %1049 = sbr.rel (%p1047) target = $region68
        $region67: #{dqn_forward.3} parent=39 // pred_region
          %s1051 = ssub.s32 32, 32
          %1052 = vsyncadd [#allocation5], %s1051
          %s1054 = sshll.u32 [#allocation11], 4
          %s1055 = int_to_ptr.vmem [resolvable:$true] %s1054
          %1057 = dma.vmem_to_hbm [thread:$0]  %s1055, 32, %s5, [#allocation5]
        $region68: #{dqn_forward.3} parent=39 // pred_fallthru
          _
        // Predicated region
        $region69: #{dqn_forward.3} parent=39 // pred_check
          %p1058 = pneg %p150
        $region70: #{dqn_forward.3} parent=39 // pred_check_branch
          %1060 = sbr.rel (%p1058) target = $region72
        $region71: #{dqn_forward.3} parent=39 // pred_region
          %1061 = dma.done [#allocation5], 32
        $region72: #{dqn_forward.3} parent=39 // pred_fallthru
          _
      $region40: #{dqn_forward.3} parent=5 // pred_fallthru
        _
      %p1062 = scmp.le.s32.totalorder 2, %s17
      // Predicated region
      $region73: #{dqn_forward.3} parent=5 // pred_check
        %p1063 = pneg %p1062
      $region74: #{dqn_forward.3} parent=5 // pred_check_branch
        %1065 = sbr.rel (%p1063) target = $region76
      $region75: #{dqn_forward.3} parent=5 // pred_region
        %s1066 = ssub.s32 %s17, 2
      $region76: #{dqn_forward.3} parent=5 // pred_fallthru
        _
    $region6: #{dqn_forward.3} parent=1 // loop_footer
      %s21 = sadd.s32 1, %s17
    $region7: #{dqn_forward.3} parent=1 // loop_footer_branch
      %16 = sbr.rel target = $region3
    $region8: #{dqn_forward.3} parent=1 // loop_exit
      _
    %1067 = vsyncpa [#allocation4], 1
    %s1068 = scalar_lea.sflag [#allocation4], 1
    %1069 = vsyncpa %s1068, 1
    %1070 = vsyncpa [#allocation7], 1
    %1071 = vsyncpa [#allocation10], 1
    %1072 = vsyncpa [#allocation5], 1
    %s1073 = scalar_lea.sflag [#allocation5], 1
    %1074 = vsyncpa %s1073, 1

// kernel: dqn_forward.2
$region0: #{dqn_forward.2}
  #allocation0 [shape = 'u32[]', space=smem, size = 0x4, offset = 0x4, fixed_abs, tag = 'smem constant byte address 0x4 - core index']
  #allocation1 [shape = 'u32[144,128]{1,0:T(1,128)}', space=vmem, size = 0x12000, scoped, tag = 'internal scratch']
  %s0 = inlined_call_operand.vmem [shape: f32[2,448,4], index: 0, kind: input, shape index: {}]
  %s1 = inlined_call_operand.vmem [shape: f32[36,16], index: 1, kind: input, shape index: {}]
  %s2 = inlined_call_operand.hbm [shape: f32[1,16], index: 2, kind: input, shape index: {}]
  %s3 = inlined_call_operand.vmem [shape: f32[144,32], index: 3, kind: input, shape index: {}]
  %s4 = inlined_call_operand.hbm [shape: f32[1,32], index: 4, kind: input, shape index: {}]
  %s5 = inlined_call_operand.vmem [shape: f32[288,32], index: 5, kind: input, shape index: {}]
  %s6 = inlined_call_operand.hbm [shape: f32[1,32], index: 6, kind: input, shape index: {}]
  %s7 = inlined_call_operand.vmem [shape: f32[384,1], index: 7, kind: input, shape index: {}]
  %s8 = inlined_call_operand.vmem [shape: f32[2,384,32], index: 8, kind: output, shape index: {}]
  %s9 = sld [smem:[#allocation0]]
  $region77: #{dqn_forward.2} parent=0
    _
  %s11 = ssub.s32 1, %s9
  %s12 = scalar_select 0, %s11, %s9
  $region1: #{dqn_forward.2} parent=0
    #allocation2 [shape = 'u8[512]{0}', space=vmem, size = 0x400, scoped, tag = 'input window, operand 2, single buffered']
    #allocation3 [shape = 's32[2]{0}', space=sflag, size = 0x8, scoped, tag = 'scoped memory for dqn_forward.2']
    #allocation4 [shape = 'u8[512]{0}', space=vmem, size = 0x400, scoped, tag = 'input window, operand 4, single buffered']
    #allocation5 [shape = 's32[1]{0}', space=sflag, size = 0x4, scoped, tag = 'scoped memory for dqn_forward.2']
    #allocation6 [shape = 'u8[512]{0}', space=vmem, size = 0x400, scoped, tag = 'input window, operand 6, single buffered']
    %13 = vsyncpa [#allocation3], 0
    %14 = vsyncpa [#allocation5], 0
    loop: start=0, step=1, limit=4
    $region2: #{dqn_forward.2} parent=1 // loop_pre_header
      _
    $region3: #{dqn_forward.2} parent=1 // loop_header
      %s16 = sphi 0, %s20
      %p17 = scmp.ge.s32.totalorder %s16, 4
      %s26 = sphi 0, %s28
      %s29 = sphi 0, %s26
      %s30 = sphi 0, %s29
      %s46 = sphi 0, %s30
      %s50 = sphi 0, %s50
      %s52 = sphi 0, %s50
      %s53 = sphi 0, %s52
      %s67 = sphi 0, %s53
      %s71 = sphi 0, %s71
      %s73 = sphi 0, %s71
      %s74 = sphi 0, %s73
      %s88 = sphi 0, %s74
      %s92 = sphi 0, %s92
      %s94 = sphi 0, %s92
      %s95 = sphi 0, %s94
      %s109 = sphi 0, %s95
      %s113 = sphi 0, %s113
      %s115 = sphi 0, %s113
      %s116 = sphi 0, %s115
      %s130 = sphi 0, %s116
      %s134 = sphi 0, %s134
      %s136 = sphi 0, %s134
      %s137 = sphi 0, %s136
      %s151 = sphi 0, %s137
      %s155 = sphi 0, %s155
      %s157 = sphi 0, %s155
      %s158 = sphi 0, %s157
      %s172 = sphi 0, %s158
      %s176 = sphi 0, %s176
      %s178 = sphi 0, %s176
      %s179 = sphi 0, %s178
      %s193 = sphi 0, %s179
      %s199 = sphi 0, %s201
      %s202 = sphi 0, %s199
      %s203 = sphi 0, %s202
      %s219 = sphi 0, %s203
    $region4: #{dqn_forward.2} parent=1 // loop_header_branch
      %19 = sbr.rel (%p17) target = $region8
    $region5: #{dqn_forward.2} parent=1 // loop_body
      %s21 = ssub.s32 %s16, 1
      %s22 = ssub.s32 %s16, 2
      %s23 = sadd.s32 %s16, 1
      %s24 = ssub.s32 %s16, %s23
      %p25 = scmp.eq.s32.totalorder %s24, 0
      %s27 = sadd.s32 %s26, 1
      %s28 = scalar_select %p25, %s26, %s27
      %p31 = pneg %p25
      %p32 = scmp.eq.s32.totalorder %s16, 1
      %p33 = por %p31, %p32
      %p34 = scmp.ne.s32.totalorder %s26, %s29
      %p35 = scmp.eq.s32.totalorder %s16, 0
      %p36 = por %p34, %p35
      %p37 = scmp.ne.s32.totalorder %s26, %s29
      %p38 = scmp.eq.s32.totalorder %s21, 1
      %p39 = por %p37, %p38
      %p40 = scmp.ne.s32.totalorder %s29, %s30
      %p41 = scmp.eq.s32.totalorder %s21, 0
      %p42 = por %p40, %p41
      %p43 = scmp.ne.s32.totalorder %s29, %s30
      %p44 = scmp.eq.s32.totalorder %s22, 1
      %p45 = por %p43, %p44
      %p47 = scmp.ne.s32.totalorder %s30, %s46
      %p48 = scmp.eq.s32.totalorder %s22, 0
      %p49 = por %p47, %p48
      %s51 = sadd.s32 %s50, 1
      %p54 = scmp.eq.s32.totalorder %s16, 1
      %p55 = scmp.ne.s32.totalorder %s50, %s52
      %p56 = scmp.eq.s32.totalorder %s16, 0
      %p57 = por %p55, %p56
      %p58 = scmp.ne.s32.totalorder %s50, %s52
      %p59 = scmp.eq.s32.totalorder %s21, 1
      %p60 = por %p58, %p59
      %p61 = scmp.ne.s32.totalorder %s52, %s53
      %p62 = scmp.eq.s32.totalorder %s21, 0
      %p63 = por %p61, %p62
      %p64 = scmp.ne.s32.totalorder %s52, %s53
      %p65 = scmp.eq.s32.totalorder %s22, 1
      %p66 = por %p64, %p65
      %p68 = scmp.ne.s32.totalorder %s53, %s67
      %p69 = scmp.eq.s32.totalorder %s22, 0
      %p70 = por %p68, %p69
      %s72 = sadd.s32 %s71, 1
      %p75 = scmp.eq.s32.totalorder %s16, 1
      %p76 = scmp.ne.s32.totalorder %s71, %s73
      %p77 = scmp.eq.s32.totalorder %s16, 0
      %p78 = por %p76, %p77
      %p79 = scmp.ne.s32.totalorder %s71, %s73
      %p80 = scmp.eq.s32.totalorder %s21, 1
      %p81 = por %p79, %p80
      %p82 = scmp.ne.s32.totalorder %s73, %s74
      %p83 = scmp.eq.s32.totalorder %s21, 0
      %p84 = por %p82, %p83
      %p85 = scmp.ne.s32.totalorder %s73, %s74
      %p86 = scmp.eq.s32.totalorder %s22, 1
      %p87 = por %p85, %p86
      %p89 = scmp.ne.s32.totalorder %s74, %s88
      %p90 = scmp.eq.s32.totalorder %s22, 0
      %p91 = por %p89, %p90
      %s93 = sadd.s32 %s92, 1
      %p96 = scmp.eq.s32.totalorder %s16, 1
      %p97 = scmp.ne.s32.totalorder %s92, %s94
      %p98 = scmp.eq.s32.totalorder %s16, 0
      %p99 = por %p97, %p98
      %p100 = scmp.ne.s32.totalorder %s92, %s94
      %p101 = scmp.eq.s32.totalorder %s21, 1
      %p102 = por %p100, %p101
      %p103 = scmp.ne.s32.totalorder %s94, %s95
      %p104 = scmp.eq.s32.totalorder %s21, 0
      %p105 = por %p103, %p104
      %p106 = scmp.ne.s32.totalorder %s94, %s95
      %p107 = scmp.eq.s32.totalorder %s22, 1
      %p108 = por %p106, %p107
      %p110 = scmp.ne.s32.totalorder %s95, %s109
      %p111 = scmp.eq.s32.totalorder %s22, 0
      %p112 = por %p110, %p111
      %s114 = sadd.s32 %s113, 1
      %p117 = scmp.eq.s32.totalorder %s16, 1
      %p118 = scmp.ne.s32.totalorder %s113, %s115
      %p119 = scmp.eq.s32.totalorder %s16, 0
      %p120 = por %p118, %p119
      %p121 = scmp.ne.s32.totalorder %s113, %s115
      %p122 = scmp.eq.s32.totalorder %s21, 1
      %p123 = por %p121, %p122
      %p124 = scmp.ne.s32.totalorder %s115, %s116
      %p125 = scmp.eq.s32.totalorder %s21, 0
      %p126 = por %p124, %p125
      %p127 = scmp.ne.s32.totalorder %s115, %s116
      %p128 = scmp.eq.s32.totalorder %s22, 1
      %p129 = por %p127, %p128
      %p131 = scmp.ne.s32.totalorder %s116, %s130
      %p132 = scmp.eq.s32.totalorder %s22, 0
      %p133 = por %p131, %p132
      %s135 = sadd.s32 %s134, 1
      %p138 = scmp.eq.s32.totalorder %s16, 1
      %p139 = scmp.ne.s32.totalorder %s134, %s136
      %p140 = scmp.eq.s32.totalorder %s16, 0
      %p141 = por %p139, %p140
      %p142 = scmp.ne.s32.totalorder %s134, %s136
      %p143 = scmp.eq.s32.totalorder %s21, 1
      %p144 = por %p142, %p143
      %p145 = scmp.ne.s32.totalorder %s136, %s137
      %p146 = scmp.eq.s32.totalorder %s21, 0
      %p147 = por %p145, %p146
      %p148 = scmp.ne.s32.totalorder %s136, %s137
      %p149 = scmp.eq.s32.totalorder %s22, 1
      %p150 = por %p148, %p149
      %p152 = scmp.ne.s32.totalorder %s137, %s151
      %p153 = scmp.eq.s32.totalorder %s22, 0
      %p154 = por %p152, %p153
      %s156 = sadd.s32 %s155, 1
      %p159 = scmp.eq.s32.totalorder %s16, 1
      %p160 = scmp.ne.s32.totalorder %s155, %s157
      %p161 = scmp.eq.s32.totalorder %s16, 0
      %p162 = por %p160, %p161
      %p163 = scmp.ne.s32.totalorder %s155, %s157
      %p164 = scmp.eq.s32.totalorder %s21, 1
      %p165 = por %p163, %p164
      %p166 = scmp.ne.s32.totalorder %s157, %s158
      %p167 = scmp.eq.s32.totalorder %s21, 0
      %p168 = por %p166, %p167
      %p169 = scmp.ne.s32.totalorder %s157, %s158
      %p170 = scmp.eq.s32.totalorder %s22, 1
      %p171 = por %p169, %p170
      %p173 = scmp.ne.s32.totalorder %s158, %s172
      %p174 = scmp.eq.s32.totalorder %s22, 0
      %p175 = por %p173, %p174
      %s177 = sadd.s32 %s176, 1
      %p180 = scmp.eq.s32.totalorder %s16, 1
      %p181 = scmp.ne.s32.totalorder %s176, %s178
      %p182 = scmp.eq.s32.totalorder %s16, 0
      %p183 = por %p181, %p182
      %p184 = scmp.ne.s32.totalorder %s176, %s178
      %p185 = scmp.eq.s32.totalorder %s21, 1
      %p186 = por %p184, %p185
      %p187 = scmp.ne.s32.totalorder %s178, %s179
      %p188 = scmp.eq.s32.totalorder %s21, 0
      %p189 = por %p187, %p188
      %p190 = scmp.ne.s32.totalorder %s178, %s179
      %p191 = scmp.eq.s32.totalorder %s22, 1
      %p192 = por %p190, %p191
      %p194 = scmp.ne.s32.totalorder %s179, %s193
      %p195 = scmp.eq.s32.totalorder %s22, 0
      %p196 = por %p194, %p195
      %s197 = ssub.s32 %s16, %s23
      %p198 = scmp.eq.s32.totalorder %s197, 0
      %s200 = sadd.s32 %s199, 1
      %s201 = scalar_select %p198, %s199, %s200
      %p204 = pneg %p198
      %p205 = scmp.eq.s32.totalorder %s16, 1
      %p206 = por %p204, %p205
      %p207 = scmp.ne.s32.totalorder %s199, %s202
      %p208 = scmp.eq.s32.totalorder %s16, 0
      %p209 = por %p207, %p208
      %p210 = scmp.ne.s32.totalorder %s199, %s202
      %p211 = scmp.eq.s32.totalorder %s21, 1
      %p212 = por %p210, %p211
      %p213 = scmp.ne.s32.totalorder %s202, %s203
      %p214 = scmp.eq.s32.totalorder %s21, 0
      %p215 = por %p213, %p214
      %p216 = scmp.ne.s32.totalorder %s202, %s203
      %p217 = scmp.eq.s32.totalorder %s22, 1
      %p218 = por %p216, %p217
      %p220 = scmp.ne.s32.totalorder %s203, %s219
      %p221 = scmp.eq.s32.totalorder %s22, 0
      %p222 = por %p220, %p221
      %p223 = scmp.le.s32.totalorder 1, %s16
      %p224 = scmp.lt.s32.totalorder %s16, 3
      %p225 = pnand %p223, %p224
      %p226 = pneg %p225
      // Predicated region
      $region9: #{dqn_forward.2} parent=5 // pred_check
        _
      $region10: #{dqn_forward.2} parent=5 // pred_check_branch
        %228 = sbr.rel (%p225) target = $region12
      $region11: #{dqn_forward.2} parent=5 // pred_region
        %s229 = ssub.s32 %s16, 1
        // Predicated region
        $region13: #{dqn_forward.2} parent=11 // pred_check
          %p230 = pneg %p63
        $region14: #{dqn_forward.2} parent=11 // pred_check_branch
          %232 = sbr.rel (%p230) target = $region16
        $region15: #{dqn_forward.2} parent=11 // pred_region
          _
        $region16: #{dqn_forward.2} parent=11 // pred_fallthru
          _
        // Predicated region
        $region17: #{dqn_forward.2} parent=11 // pred_check
          %p233 = pneg %p84
        $region18: #{dqn_forward.2} parent=11 // pred_check_branch
          %235 = sbr.rel (%p233) target = $region20
        $region19: #{dqn_forward.2} parent=11 // pred_region
          %s237 = ssub.s32 16, 16
          %238 = vsyncadd [#allocation3], %s237
          %s240 = sshll.u32 [#allocation2], 4
          %s241 = int_to_ptr.vmem [resolvable:$true] %s240
          %243 = dma.hbm_to_vmem [thread:$0]  %s2, 16, %s241, [#allocation3]
        $region20: #{dqn_forward.2} parent=11 // pred_fallthru
          _
        // Predicated region
        $region21: #{dqn_forward.2} parent=11 // pred_check
          %p244 = pneg %p105
        $region22: #{dqn_forward.2} parent=11 // pred_check_branch
          %246 = sbr.rel (%p244) target = $region24
        $region23: #{dqn_forward.2} parent=11 // pred_region
          _
        $region24: #{dqn_forward.2} parent=11 // pred_fallthru
          _
        // Predicated region
        $region25: #{dqn_forward.2} parent=11 // pred_check
          %p247 = pneg %p126
        $region26: #{dqn_forward.2} parent=11 // pred_check_branch
          %249 = sbr.rel (%p247) target = $region28
        $region27: #{dqn_forward.2} parent=11 // pred_region
          %s251 = ssub.s32 16, 16
          %252 = vsyncadd [#allocation5], %s251
          %s254 = sshll.u32 [#allocation4], 4
          %s255 = int_to_ptr.vmem [resolvable:$true] %s254
          %257 = dma.hbm_to_vmem [thread:$0]  %s4, 16, %s255, [#allocation5]
        $region28: #{dqn_forward.2} parent=11 // pred_fallthru
          _
        // Predicated region
        $region29: #{dqn_forward.2} parent=11 // pred_check
          %p258 = pneg %p147
        $region30: #{dqn_forward.2} parent=11 // pred_check_branch
          %260 = sbr.rel (%p258) target = $region32
        $region31: #{dqn_forward.2} parent=11 // pred_region
          _
        $region32: #{dqn_forward.2} parent=11 // pred_fallthru
          _
        // Predicated region
        $region33: #{dqn_forward.2} parent=11 // pred_check
          %p261 = pneg %p168
        $region34: #{dqn_forward.2} parent=11 // pred_check_branch
          %263 = sbr.rel (%p261) target = $region36
        $region35: #{dqn_forward.2} parent=11 // pred_region
          %s265 = ssub.s32 16, 16
          %266 = vsyncadd [#allocation5], %s265
          %s268 = sshll.u32 [#allocation6], 4
          %s269 = int_to_ptr.vmem [resolvable:$true] %s268
          %271 = dma.hbm_to_vmem [thread:$0]  %s6, 16, %s269, [#allocation5]
        $region36: #{dqn_forward.2} parent=11 // pred_fallthru
          _
        // Predicated region
        $region37: #{dqn_forward.2} parent=11 // pred_check
          %p272 = pneg %p189
        $region38: #{dqn_forward.2} parent=11 // pred_check_branch
          %274 = sbr.rel (%p272) target = $region40
        $region39: #{dqn_forward.2} parent=11 // pred_region
          _
        $region40: #{dqn_forward.2} parent=11 // pred_fallthru
          _
      $region12: #{dqn_forward.2} parent=5 // pred_fallthru
        _
      %p275 = scmp.lt.s32.totalorder %s16, 2
      // Predicated region
      $region41: #{dqn_forward.2} parent=5 // pred_check
        %p276 = pneg %p275
      $region42: #{dqn_forward.2} parent=5 // pred_check_branch
        %278 = sbr.rel (%p276) target = $region44
      $region43: #{dqn_forward.2} parent=5 // pred_region
        // Predicated region
        $region45: #{dqn_forward.2} parent=43 // pred_check
          %p279 = pneg %p36
        $region46: #{dqn_forward.2} parent=43 // pred_check_branch
          %281 = sbr.rel (%p279) target = $region48
        $region47: #{dqn_forward.2} parent=43 // pred_region
          %p282 = scmp.lt.s32.totalorder %s16, 1
          %s283 = scalar_select %p282, %s16, 1
          %s284 = smul.addr %s283, 56
          %s285 = smul.addr %s284, 8
          %s286 = scalar_lea.vmem %s0, %s285
        $region48: #{dqn_forward.2} parent=43 // pred_fallthru
          _
      $region44: #{dqn_forward.2} parent=5 // pred_fallthru
        _
      %p287 = scmp.le.s32.totalorder 1, %s16
      %p288 = scmp.lt.s32.totalorder %s16, 3
      %p289 = pnand %p287, %p288
      %p290 = pneg %p289
      // Predicated region
      $region49: #{dqn_forward.2} parent=5 // pred_check
        _
      $region50: #{dqn_forward.2} parent=5 // pred_check_branch
        %292 = sbr.rel (%p289) target = $region52
      $region51: #{dqn_forward.2} parent=5 // pred_region
        %s293 = ssub.s32 %s16, 1
        // Predicated region
        $region53: #{dqn_forward.2} parent=51 // pred_check
          %p294 = pneg %p84
        $region54: #{dqn_forward.2} parent=51 // pred_check_branch
          %296 = sbr.rel (%p294) target = $region56
        $region55: #{dqn_forward.2} parent=51 // pred_region
          %297 = dma.done [#allocation3], 16
        $region56: #{dqn_forward.2} parent=51 // pred_fallthru
          _
        // Predicated region
        $region57: #{dqn_forward.2} parent=51 // pred_check
          %p298 = pneg %p126
        $region58: #{dqn_forward.2} parent=51 // pred_check_branch
          %300 = sbr.rel (%p298) target = $region60
        $region59: #{dqn_forward.2} parent=51 // pred_region
          %301 = dma.done [#allocation5], 16
        $region60: #{dqn_forward.2} parent=51 // pred_fallthru
          _
        // Predicated region
        $region61: #{dqn_forward.2} parent=51 // pred_check
          %p302 = pneg %p168
        $region62: #{dqn_forward.2} parent=51 // pred_check_branch
          %304 = sbr.rel (%p302) target = $region64
        $region63: #{dqn_forward.2} parent=51 // pred_region
          %305 = dma.done [#allocation5], 16
        $region64: #{dqn_forward.2} parent=51 // pred_fallthru
          _
        %p306 = scmp.lt.s32.totalorder %s21, 1
        %s307 = scalar_select %p306, %s21, 1
        %s308 = smul.addr %s307, 56
        %s309 = smul.addr %s308, 8
        %s310 = scalar_lea.vmem %s0, %s309
        %p311 = pneg %p42
        %p312 = pneg %p39
        %p313 = pneg %p63
        %p314 = pneg %p60
        %p315 = pneg %p84
        %p316 = pneg %p81
        %p317 = pneg %p105
        %p318 = pneg %p102
        %p319 = pneg %p126
        %p320 = pneg %p123
        %p321 = pneg %p147
        %p322 = pneg %p144
        %p323 = pneg %p168
        %p324 = pneg %p165
        %p325 = pneg %p189
        %p326 = pneg %p186
        %p327 = pneg %p215
        %p328 = pneg %p212
        %p329 = scmp.lt.s32.totalorder %s21, 1
        %s330 = scalar_select %p329, %s21, 1
        %s331 = smul.addr %s330, 48
        %s332 = smul.addr %s331, 8
        %s333 = scalar_lea.vmem %s8, %s332
        %p334 = scmp.lt.s32.totalorder %s21, 1
        %s335 = scalar_select %p334, %s21, 1
        %s336 = smul.addr %s335, 56
        %s337 = smul.addr %s336, 8
        %s338 = scalar_lea.vmem %s0, %s337
        %p339 = scmp.lt.s32.totalorder %s21, 1
        %s340 = scalar_select %p339, %s21, 1
        %s341 = smul.addr %s340, 48
        %s342 = smul.addr %s341, 8
        %s343 = scalar_lea.vmem %s8, %s342
        %v344 = vld [vmem:[%s7] sm:$0xff]
        %v345 = vld [vmem:[%s7 + $0x8] sm:$0xff]
        %v346 = vld [vmem:[%s7 + $0x10] sm:$0xff]
        %v347 = vld [vmem:[%s7 + $0x18] sm:$0xff]
        %v348 = vld [vmem:[%s7 + $0x20] sm:$0xff]
        %v349 = vld [vmem:[%s7 + $0x28] sm:$0xff]
        %v350 = vld [vmem:[%s7 + $0x30] sm:$0xff]
        %v351 = vld [vmem:[%s7 + $0x38] sm:$0xff]
        %v352 = vld [vmem:[%s7 + $0x40] sm:$0xff]
        %v353 = vld [vmem:[%s7 + $0x48] sm:$0xff]
        %v354 = vld [vmem:[%s7 + $0x50] sm:$0xff]
        %v355 = vld [vmem:[%s7 + $0x58] sm:$0xff]
        %v356 = vld [vmem:[%s7 + $0x60] sm:$0xff]
        %v357 = vld [vmem:[%s7 + $0x68] sm:$0xff]
        %v358 = vld [vmem:[%s7 + $0x70] sm:$0xff]
        %v359 = vld [vmem:[%s7 + $0x78] sm:$0xff]
        %v360 = vld [vmem:[%s7 + $0x80] sm:$0xff]
        %v361 = vld [vmem:[%s7 + $0x88] sm:$0xff]
        %v362 = vld [vmem:[%s7 + $0x90] sm:$0xff]
        %v363 = vld [vmem:[%s7 + $0x98] sm:$0xff]
        %v364 = vld [vmem:[%s7 + $0xa0] sm:$0xff]
        %v365 = vld [vmem:[%s7 + $0xa8] sm:$0xff]
        %v366 = vld [vmem:[%s7 + $0xb0] sm:$0xff]
        %v367 = vld [vmem:[%s7 + $0xb8] sm:$0xff]
        %v368 = vld [vmem:[%s7 + $0xc0] sm:$0xff]
        %v369 = vld [vmem:[%s7 + $0xc8] sm:$0xff]
        %v370 = vld [vmem:[%s7 + $0xd0] sm:$0xff]
        %v371 = vld [vmem:[%s7 + $0xd8] sm:$0xff]
        %v372 = vld [vmem:[%s7 + $0xe0] sm:$0xff]
        %v373 = vld [vmem:[%s7 + $0xe8] sm:$0xff]
        %v374 = vld [vmem:[%s7 + $0xf0] sm:$0xff]
        %v375 = vld [vmem:[%s7 + $0xf8] sm:$0xff]
        %v376 = vld [vmem:[%s7 + $0x100] sm:$0xff]
        %v377 = vld [vmem:[%s7 + $0x108] sm:$0xff]
        %v378 = vld [vmem:[%s7 + $0x110] sm:$0xff]
        %v379 = vld [vmem:[%s7 + $0x118] sm:$0xff]
        %v380 = vld [vmem:[%s7 + $0x120] sm:$0xff]
        %v381 = vld [vmem:[%s7 + $0x128] sm:$0xff]
        %v382 = vld [vmem:[%s7 + $0x130] sm:$0xff]
        %v383 = vld [vmem:[%s7 + $0x138] sm:$0xff]
        %v384 = vld [vmem:[%s7 + $0x140] sm:$0xff]
        %v385 = vld [vmem:[%s7 + $0x148] sm:$0xff]
        %v386 = vld [vmem:[%s7 + $0x150] sm:$0xff]
        %v387 = vld [vmem:[%s7 + $0x158] sm:$0xff]
        %v388 = vld [vmem:[%s7 + $0x160] sm:$0xff]
        %v389 = vld [vmem:[%s7 + $0x168] sm:$0xff]
        %v390 = vld [vmem:[%s7 + $0x170] sm:$0xff]
        %v391 = vld [vmem:[%s7 + $0x178] sm:$0xff]
        %v392 = vld [vmem:[%s338] sm:$0xff]
        %v393 = vld [vmem:[%s338 + $0x8] sm:$0xff]
        %v394 = vld [vmem:[%s338 + $0x10] sm:$0xff]
        %v395 = vld [vmem:[%s338 + $0x18] sm:$0xff]
        %v396 = vld [vmem:[%s338 + $0x20] sm:$0xff]
        %v397 = vld [vmem:[%s338 + $0x28] sm:$0xff]
        %v398 = vld [vmem:[%s338 + $0x30] sm:$0xff]
        %v399 = vld [vmem:[%s338 + $0x38] sm:$0xff]
        %v400 = vld [vmem:[%s338 + $0x40] sm:$0xff]
        %v401 = vld [vmem:[%s338 + $0x48] sm:$0xff]
        %v402 = vld [vmem:[%s338 + $0x50] sm:$0xff]
        %v403 = vld [vmem:[%s338 + $0x58] sm:$0xff]
        %v404 = vld [vmem:[%s338 + $0x60] sm:$0xff]
        %v405 = vld [vmem:[%s338 + $0x68] sm:$0xff]
        %v406 = vld [vmem:[%s338 + $0x70] sm:$0xff]
        %v407 = vld [vmem:[%s338 + $0x78] sm:$0xff]
        %v408 = vld [vmem:[%s338 + $0x80] sm:$0xff]
        %v409 = vld [vmem:[%s338 + $0x88] sm:$0xff]
        %v410 = vld [vmem:[%s338 + $0x90] sm:$0xff]
        %v411 = vld [vmem:[%s338 + $0x98] sm:$0xff]
        %v412 = vld [vmem:[%s338 + $0xa0] sm:$0xff]
        %v413 = vld [vmem:[%s338 + $0xa8] sm:$0xff]
        %v414 = vld [vmem:[%s338 + $0xb0] sm:$0xff]
        %v415 = vld [vmem:[%s338 + $0xb8] sm:$0xff]
        %v416 = vld [vmem:[%s338 + $0xc0] sm:$0xff]
        %v417 = vld [vmem:[%s338 + $0xc8] sm:$0xff]
        %v418 = vld [vmem:[%s338 + $0xd0] sm:$0xff]
        %v419 = vld [vmem:[%s338 + $0xd8] sm:$0xff]
        %v420 = vld [vmem:[%s338 + $0xe0] sm:$0xff]
        %v421 = vld [vmem:[%s338 + $0xe8] sm:$0xff]
        %v422 = vld [vmem:[%s338 + $0xf0] sm:$0xff]
        %v423 = vld [vmem:[%s338 + $0xf8] sm:$0xff]
        %v424 = vld [vmem:[%s338 + $0x100] sm:$0xff]
        %v425 = vld [vmem:[%s338 + $0x108] sm:$0xff]
        %v426 = vld [vmem:[%s338 + $0x110] sm:$0xff]
        %v427 = vld [vmem:[%s338 + $0x118] sm:$0xff]
        %v428 = vld [vmem:[%s338 + $0x120] sm:$0xff]
        %v429 = vld [vmem:[%s338 + $0x128] sm:$0xff]
        %v430 = vld [vmem:[%s338 + $0x130] sm:$0xff]
        %v431 = vld [vmem:[%s338 + $0x138] sm:$0xff]
        %v432 = vld [vmem:[%s338 + $0x140] sm:$0xff]
        %v433 = vld [vmem:[%s338 + $0x148] sm:$0xff]
        %v434 = vld [vmem:[%s338 + $0x150] sm:$0xff]
        %v435 = vld [vmem:[%s338 + $0x158] sm:$0xff]
        %v436 = vld [vmem:[%s338 + $0x160] sm:$0xff]
        %v437 = vld [vmem:[%s338 + $0x168] sm:$0xff]
        %v438 = vld [vmem:[%s338 + $0x170] sm:$0xff]
        %v439 = vld [vmem:[%s338 + $0x178] sm:$0xff]
        %v440 = vld [vmem:[%s338 + $0x180] sm:$0xff]
        %v441 = vld [vmem:[%s338 + $0x188] sm:$0xff]
        %v442 = vld [vmem:[%s338 + $0x190] sm:$0xff]
        %v443 = vld [vmem:[%s338 + $0x198] sm:$0xff]
        %v444 = vld [vmem:[%s338 + $0x1a0] sm:$0xff]
        %v445 = vld [vmem:[%s338 + $0x1a8] sm:$0xff]
        %v446 = vld [vmem:[%s338 + $0x1b0] sm:$0xff]
        %v447 = vld [vmem:[%s338 + $0x1b8] sm:$0xff]
        %vm496 = vcmask 1046528
        %v497 = vrot.slane %v393, 1
        %v498 = vrot.slane %v394, 1
        %v499 = vsel %vm496, %v497, %v498
        %v500 = vrot.slane %v395, 1
        %v501 = vsel %vm496, %v498, %v500
        %v502 = vrot.slane %v396, 1
        %v503 = vsel %vm496, %v500, %v502
        %v504 = vrot.slane %v397, 1
        %v505 = vsel %vm496, %v502, %v504
        %v506 = vrot.slane %v398, 1
        %v507 = vsel %vm496, %v504, %v506
        %v508 = vrot.slane %v399, 1
        %v509 = vsel %vm496, %v506, %v508
        %v510 = vrot.slane %v400, 1
        %v511 = vsel %vm496, %v508, %v510
        %v512 = vrot.slane %v401, 1
        %v513 = vsel %vm496, %v510, %v512
        %v514 = vrot.slane %v402, 1
        %v515 = vsel %vm496, %v512, %v514
        %v516 = vrot.slane %v403, 1
        %v517 = vsel %vm496, %v514, %v516
        %v518 = vrot.slane %v404, 1
        %v519 = vsel %vm496, %v516, %v518
        %v520 = vrot.slane %v405, 1
        %v521 = vsel %vm496, %v518, %v520
        %v522 = vrot.slane %v406, 1
        %v523 = vsel %vm496, %v520, %v522
        %v524 = vrot.slane %v407, 1
        %v525 = vsel %vm496, %v522, %v524
        %v526 = vrot.slane %v408, 1
        %v527 = vsel %vm496, %v524, %v526
        %v528 = vrot.slane %v409, 1
        %v529 = vsel %vm496, %v526, %v528
        %v530 = vrot.slane %v410, 1
        %v531 = vsel %vm496, %v528, %v530
        %v532 = vrot.slane %v411, 1
        %v533 = vsel %vm496, %v530, %v532
        %v534 = vrot.slane %v412, 1
        %v535 = vsel %vm496, %v532, %v534
        %v536 = vrot.slane %v413, 1
        %v537 = vsel %vm496, %v534, %v536
        %v538 = vrot.slane %v414, 1
        %v539 = vsel %vm496, %v536, %v538
        %v540 = vrot.slane %v415, 1
        %v541 = vsel %vm496, %v538, %v540
        %v542 = vrot.slane %v416, 1
        %v543 = vsel %vm496, %v540, %v542
        %v544 = vrot.slane %v417, 1
        %v545 = vsel %vm496, %v542, %v544
        %v546 = vrot.slane %v418, 1
        %v547 = vsel %vm496, %v544, %v546
        %v548 = vrot.slane %v419, 1
        %v549 = vsel %vm496, %v546, %v548
        %v550 = vrot.slane %v420, 1
        %v551 = vsel %vm496, %v548, %v550
        %v552 = vrot.slane %v421, 1
        %v553 = vsel %vm496, %v550, %v552
        %v554 = vrot.slane %v422, 1
        %v555 = vsel %vm496, %v552, %v554
        %v556 = vrot.slane %v423, 1
        %v557 = vsel %vm496, %v554, %v556
        %v558 = vrot.slane %v424, 1
        %v559 = vsel %vm496, %v556, %v558
        %v560 = vrot.slane %v425, 1
        %v561 = vsel %vm496, %v558, %v560
        %v562 = vrot.slane %v426, 1
        %v563 = vsel %vm496, %v560, %v562
        %v564 = vrot.slane %v427, 1
        %v565 = vsel %vm496, %v562, %v564
        %v566 = vrot.slane %v428, 1
        %v567 = vsel %vm496, %v564, %v566
        %v568 = vrot.slane %v429, 1
        %v569 = vsel %vm496, %v566, %v568
        %v570 = vrot.slane %v430, 1
        %v571 = vsel %vm496, %v568, %v570
        %v572 = vrot.slane %v431, 1
        %v573 = vsel %vm496, %v570, %v572
        %v574 = vrot.slane %v432, 1
        %v575 = vsel %vm496, %v572, %v574
        %v576 = vrot.slane %v433, 1
        %v577 = vsel %vm496, %v574, %v576
        %v578 = vrot.slane %v434, 1
        %v579 = vsel %vm496, %v576, %v578
        %v580 = vrot.slane %v435, 1
        %v581 = vsel %vm496, %v578, %v580
        %v582 = vrot.slane %v436, 1
        %v583 = vsel %vm496, %v580, %v582
        %v584 = vrot.slane %v437, 1
        %v585 = vsel %vm496, %v582, %v584
        %v586 = vrot.slane %v438, 1
        %v587 = vsel %vm496, %v584, %v586
        %v588 = vrot.slane %v439, 1
        %v589 = vsel %vm496, %v586, %v588
        %v590 = vrot.slane %v440, 1
        %v591 = vsel %vm496, %v588, %v590
        %592 = vrot.lane.b32.xlu0 %v497, 4
        %v593 = vpop.permute.xlu0 %592
        %594 = vrot.lane.b32.xlu0 %v499, 4
        %v595 = vpop.permute.xlu0 %594
        %596 = vrot.lane.b32.xlu0 %v501, 4
        %v597 = vpop.permute.xlu0 %596
        %598 = vrot.lane.b32.xlu0 %v503, 4
        %v599 = vpop.permute.xlu0 %598
        %600 = vrot.lane.b32.xlu0 %v505, 4
        %v601 = vpop.permute.xlu0 %600
        %602 = vrot.lane.b32.xlu0 %v507, 4
        %v603 = vpop.permute.xlu0 %602
        %604 = vrot.lane.b32.xlu0 %v509, 4
        %v605 = vpop.permute.xlu0 %604
        %606 = vrot.lane.b32.xlu0 %v511, 4
        %v607 = vpop.permute.xlu0 %606
        %608 = vrot.lane.b32.xlu0 %v513, 4
        %v609 = vpop.permute.xlu0 %608
        %610 = vrot.lane.b32.xlu0 %v515, 4
        %v611 = vpop.permute.xlu0 %610
        %612 = vrot.lane.b32.xlu0 %v517, 4
        %v613 = vpop.permute.xlu0 %612
        %614 = vrot.lane.b32.xlu0 %v519, 4
        %v615 = vpop.permute.xlu0 %614
        %616 = vrot.lane.b32.xlu0 %v521, 4
        %v617 = vpop.permute.xlu0 %616
        %618 = vrot.lane.b32.xlu0 %v523, 4
        %v619 = vpop.permute.xlu0 %618
        %620 = vrot.lane.b32.xlu0 %v525, 4
        %v621 = vpop.permute.xlu0 %620
        %622 = vrot.lane.b32.xlu0 %v527, 4
        %v623 = vpop.permute.xlu0 %622
        %624 = vrot.lane.b32.xlu0 %v529, 4
        %v625 = vpop.permute.xlu0 %624
        %626 = vrot.lane.b32.xlu0 %v531, 4
        %v627 = vpop.permute.xlu0 %626
        %628 = vrot.lane.b32.xlu0 %v533, 4
        %v629 = vpop.permute.xlu0 %628
        %630 = vrot.lane.b32.xlu0 %v535, 4
        %v631 = vpop.permute.xlu0 %630
        %632 = vrot.lane.b32.xlu0 %v537, 4
        %v633 = vpop.permute.xlu0 %632
        %634 = vrot.lane.b32.xlu0 %v539, 4
        %v635 = vpop.permute.xlu0 %634
        %636 = vrot.lane.b32.xlu0 %v541, 4
        %v637 = vpop.permute.xlu0 %636
        %638 = vrot.lane.b32.xlu0 %v543, 4
        %v639 = vpop.permute.xlu0 %638
        %640 = vrot.lane.b32.xlu0 %v545, 4
        %v641 = vpop.permute.xlu0 %640
        %642 = vrot.lane.b32.xlu0 %v547, 4
        %v643 = vpop.permute.xlu0 %642
        %644 = vrot.lane.b32.xlu0 %v549, 4
        %v645 = vpop.permute.xlu0 %644
        %646 = vrot.lane.b32.xlu0 %v551, 4
        %v647 = vpop.permute.xlu0 %646
        %648 = vrot.lane.b32.xlu0 %v553, 4
        %v649 = vpop.permute.xlu0 %648
        %650 = vrot.lane.b32.xlu0 %v555, 4
        %v651 = vpop.permute.xlu0 %650
        %652 = vrot.lane.b32.xlu0 %v557, 4
        %v653 = vpop.permute.xlu0 %652
        %654 = vrot.lane.b32.xlu0 %v559, 4
        %v655 = vpop.permute.xlu0 %654
        %656 = vrot.lane.b32.xlu0 %v561, 4
        %v657 = vpop.permute.xlu0 %656
        %658 = vrot.lane.b32.xlu0 %v563, 4
        %v659 = vpop.permute.xlu0 %658
        %660 = vrot.lane.b32.xlu0 %v565, 4
        %v661 = vpop.permute.xlu0 %660
        %662 = vrot.lane.b32.xlu0 %v567, 4
        %v663 = vpop.permute.xlu0 %662
        %664 = vrot.lane.b32.xlu0 %v569, 4
        %v665 = vpop.permute.xlu0 %664
        %666 = vrot.lane.b32.xlu0 %v571, 4
        %v667 = vpop.permute.xlu0 %666
        %668 = vrot.lane.b32.xlu0 %v573, 4
        %v669 = vpop.permute.xlu0 %668
        %670 = vrot.lane.b32.xlu0 %v575, 4
        %v671 = vpop.permute.xlu0 %670
        %672 = vrot.lane.b32.xlu0 %v577, 4
        %v673 = vpop.permute.xlu0 %672
        %674 = vrot.lane.b32.xlu0 %v579, 4
        %v675 = vpop.permute.xlu0 %674
        %676 = vrot.lane.b32.xlu0 %v581, 4
        %v677 = vpop.permute.xlu0 %676
        %678 = vrot.lane.b32.xlu0 %v583, 4
        %v679 = vpop.permute.xlu0 %678
        %680 = vrot.lane.b32.xlu0 %v585, 4
        %v681 = vpop.permute.xlu0 %680
        %682 = vrot.lane.b32.xlu0 %v587, 4
        %v683 = vpop.permute.xlu0 %682
        %684 = vrot.lane.b32.xlu0 %v589, 4
        %v685 = vpop.permute.xlu0 %684
        %686 = vrot.lane.b32.xlu0 %v591, 4
        %v687 = vpop.permute.xlu0 %686
        %688 = vrot.lane.b32.xlu0 %v590, 4
        %v689 = vpop.permute.xlu0 %688
        %vm740 = vcmask 1045504
        %v741 = vrot.slane %v393, 2
        %v742 = vrot.slane %v394, 2
        %v743 = vsel %vm740, %v741, %v742
        %v744 = vrot.slane %v395, 2
        %v745 = vsel %vm740, %v742, %v744
        %v746 = vrot.slane %v396, 2
        %v747 = vsel %vm740, %v744, %v746
        %v748 = vrot.slane %v397, 2
        %v749 = vsel %vm740, %v746, %v748
        %v750 = vrot.slane %v398, 2
        %v751 = vsel %vm740, %v748, %v750
        %v752 = vrot.slane %v399, 2
        %v753 = vsel %vm740, %v750, %v752
        %v754 = vrot.slane %v400, 2
        %v755 = vsel %vm740, %v752, %v754
        %v756 = vrot.slane %v401, 2
        %v757 = vsel %vm740, %v754, %v756
        %v758 = vrot.slane %v402, 2
        %v759 = vsel %vm740, %v756, %v758
        %v760 = vrot.slane %v403, 2
        %v761 = vsel %vm740, %v758, %v760
        %v762 = vrot.slane %v404, 2
        %v763 = vsel %vm740, %v760, %v762
        %v764 = vrot.slane %v405, 2
        %v765 = vsel %vm740, %v762, %v764
        %v766 = vrot.slane %v406, 2
        %v767 = vsel %vm740, %v764, %v766
        %v768 = vrot.slane %v407, 2
        %v769 = vsel %vm740, %v766, %v768
        %v770 = vrot.slane %v408, 2
        %v771 = vsel %vm740, %v768, %v770
        %v772 = vrot.slane %v409, 2
        %v773 = vsel %vm740, %v770, %v772
        %v774 = vrot.slane %v410, 2
        %v775 = vsel %vm740, %v772, %v774
        %v776 = vrot.slane %v411, 2
        %v777 = vsel %vm740, %v774, %v776
        %v778 = vrot.slane %v412, 2
        %v779 = vsel %vm740, %v776, %v778
        %v780 = vrot.slane %v413, 2
        %v781 = vsel %vm740, %v778, %v780
        %v782 = vrot.slane %v414, 2
        %v783 = vsel %vm740, %v780, %v782
        %v784 = vrot.slane %v415, 2
        %v785 = vsel %vm740, %v782, %v784
        %v786 = vrot.slane %v416, 2
        %v787 = vsel %vm740, %v784, %v786
        %v788 = vrot.slane %v417, 2
        %v789 = vsel %vm740, %v786, %v788
        %v790 = vrot.slane %v418, 2
        %v791 = vsel %vm740, %v788, %v790
        %v792 = vrot.slane %v419, 2
        %v793 = vsel %vm740, %v790, %v792
        %v794 = vrot.slane %v420, 2
        %v795 = vsel %vm740, %v792, %v794
        %v796 = vrot.slane %v421, 2
        %v797 = vsel %vm740, %v794, %v796
        %v798 = vrot.slane %v422, 2
        %v799 = vsel %vm740, %v796, %v798
        %v800 = vrot.slane %v423, 2
        %v801 = vsel %vm740, %v798, %v800
        %v802 = vrot.slane %v424, 2
        %v803 = vsel %vm740, %v800, %v802
        %v804 = vrot.slane %v425, 2
        %v805 = vsel %vm740, %v802, %v804
        %v806 = vrot.slane %v426, 2
        %v807 = vsel %vm740, %v804, %v806
        %v808 = vrot.slane %v427, 2
        %v809 = vsel %vm740, %v806, %v808
        %v810 = vrot.slane %v428, 2
        %v811 = vsel %vm740, %v808, %v810
        %v812 = vrot.slane %v429, 2
        %v813 = vsel %vm740, %v810, %v812
        %v814 = vrot.slane %v430, 2
        %v815 = vsel %vm740, %v812, %v814
        %v816 = vrot.slane %v431, 2
        %v817 = vsel %vm740, %v814, %v816
        %v818 = vrot.slane %v432, 2
        %v819 = vsel %vm740, %v816, %v818
        %v820 = vrot.slane %v433, 2
        %v821 = vsel %vm740, %v818, %v820
        %v822 = vrot.slane %v434, 2
        %v823 = vsel %vm740, %v820, %v822
        %v824 = vrot.slane %v435, 2
        %v825 = vsel %vm740, %v822, %v824
        %v826 = vrot.slane %v436, 2
        %v827 = vsel %vm740, %v824, %v826
        %v828 = vrot.slane %v437, 2
        %v829 = vsel %vm740, %v826, %v828
        %v830 = vrot.slane %v438, 2
        %v831 = vsel %vm740, %v828, %v830
        %v832 = vrot.slane %v439, 2
        %v833 = vsel %vm740, %v830, %v832
        %v834 = vrot.slane %v440, 2
        %v835 = vsel %vm740, %v832, %v834
        %v836 = vrot.slane %v441, 2
        %v837 = vsel %vm740, %v834, %v836
        %838 = vrot.lane.b32.xlu0 %v741, 8
        %v839 = vpop.permute.xlu0 %838
        %840 = vrot.lane.b32.xlu0 %v743, 8
        %v841 = vpop.permute.xlu0 %840
        %842 = vrot.lane.b32.xlu0 %v745, 8
        %v843 = vpop.permute.xlu0 %842
        %844 = vrot.lane.b32.xlu0 %v747, 8
        %v845 = vpop.permute.xlu0 %844
        %846 = vrot.lane.b32.xlu0 %v749, 8
        %v847 = vpop.permute.xlu0 %846
        %848 = vrot.lane.b32.xlu0 %v751, 8
        %v849 = vpop.permute.xlu0 %848
        %850 = vrot.lane.b32.xlu0 %v753, 8
        %v851 = vpop.permute.xlu0 %850
        %852 = vrot.lane.b32.xlu0 %v755, 8
        %v853 = vpop.permute.xlu0 %852
        %854 = vrot.lane.b32.xlu0 %v757, 8
        %v855 = vpop.permute.xlu0 %854
        %856 = vrot.lane.b32.xlu0 %v759, 8
        %v857 = vpop.permute.xlu0 %856
        %858 = vrot.lane.b32.xlu0 %v761, 8
        %v859 = vpop.permute.xlu0 %858
        %860 = vrot.lane.b32.xlu0 %v763, 8
        %v861 = vpop.permute.xlu0 %860
        %862 = vrot.lane.b32.xlu0 %v765, 8
        %v863 = vpop.permute.xlu0 %862
        %864 = vrot.lane.b32.xlu0 %v767, 8
        %v865 = vpop.permute.xlu0 %864
        %866 = vrot.lane.b32.xlu0 %v769, 8
        %v867 = vpop.permute.xlu0 %866
        %868 = vrot.lane.b32.xlu0 %v771, 8
        %v869 = vpop.permute.xlu0 %868
        %870 = vrot.lane.b32.xlu0 %v773, 8
        %v871 = vpop.permute.xlu0 %870
        %872 = vrot.lane.b32.xlu0 %v775, 8
        %v873 = vpop.permute.xlu0 %872
        %874 = vrot.lane.b32.xlu0 %v777, 8
        %v875 = vpop.permute.xlu0 %874
        %876 = vrot.lane.b32.xlu0 %v779, 8
        %v877 = vpop.permute.xlu0 %876
        %878 = vrot.lane.b32.xlu0 %v781, 8
        %v879 = vpop.permute.xlu0 %878
        %880 = vrot.lane.b32.xlu0 %v783, 8
        %v881 = vpop.permute.xlu0 %880
        %882 = vrot.lane.b32.xlu0 %v785, 8
        %v883 = vpop.permute.xlu0 %882
        %884 = vrot.lane.b32.xlu0 %v787, 8
        %v885 = vpop.permute.xlu0 %884
        %886 = vrot.lane.b32.xlu0 %v789, 8
        %v887 = vpop.permute.xlu0 %886
        %888 = vrot.lane.b32.xlu0 %v791, 8
        %v889 = vpop.permute.xlu0 %888
        %890 = vrot.lane.b32.xlu0 %v793, 8
        %v891 = vpop.permute.xlu0 %890
        %892 = vrot.lane.b32.xlu0 %v795, 8
        %v893 = vpop.permute.xlu0 %892
        %894 = vrot.lane.b32.xlu0 %v797, 8
        %v895 = vpop.permute.xlu0 %894
        %896 = vrot.lane.b32.xlu0 %v799, 8
        %v897 = vpop.permute.xlu0 %896
        %898 = vrot.lane.b32.xlu0 %v801, 8
        %v899 = vpop.permute.xlu0 %898
        %900 = vrot.lane.b32.xlu0 %v803, 8
        %v901 = vpop.permute.xlu0 %900
        %902 = vrot.lane.b32.xlu0 %v805, 8
        %v903 = vpop.permute.xlu0 %902
        %904 = vrot.lane.b32.xlu0 %v807, 8
        %v905 = vpop.permute.xlu0 %904
        %906 = vrot.lane.b32.xlu0 %v809, 8
        %v907 = vpop.permute.xlu0 %906
        %908 = vrot.lane.b32.xlu0 %v811, 8
        %v909 = vpop.permute.xlu0 %908
        %910 = vrot.lane.b32.xlu0 %v813, 8
        %v911 = vpop.permute.xlu0 %910
        %912 = vrot.lane.b32.xlu0 %v815, 8
        %v913 = vpop.permute.xlu0 %912
        %914 = vrot.lane.b32.xlu0 %v817, 8
        %v915 = vpop.permute.xlu0 %914
        %916 = vrot.lane.b32.xlu0 %v819, 8
        %v917 = vpop.permute.xlu0 %916
        %918 = vrot.lane.b32.xlu0 %v821, 8
        %v919 = vpop.permute.xlu0 %918
        %920 = vrot.lane.b32.xlu0 %v823, 8
        %v921 = vpop.permute.xlu0 %920
        %922 = vrot.lane.b32.xlu0 %v825, 8
        %v923 = vpop.permute.xlu0 %922
        %924 = vrot.lane.b32.xlu0 %v827, 8
        %v925 = vpop.permute.xlu0 %924
        %926 = vrot.lane.b32.xlu0 %v829, 8
        %v927 = vpop.permute.xlu0 %926
        %928 = vrot.lane.b32.xlu0 %v831, 8
        %v929 = vpop.permute.xlu0 %928
        %930 = vrot.lane.b32.xlu0 %v833, 8
        %v931 = vpop.permute.xlu0 %930
        %932 = vrot.lane.b32.xlu0 %v835, 8
        %v933 = vpop.permute.xlu0 %932
        %934 = vrot.lane.b32.xlu0 %v837, 8
        %v935 = vpop.permute.xlu0 %934
        %987 = vrot.lane.b32.xlu0 %v395, 12
        %v988 = vpop.permute.xlu0 %987
        %989 = vrot.lane.b32.xlu0 %v396, 12
        %v990 = vpop.permute.xlu0 %989
        %991 = vrot.lane.b32.xlu0 %v397, 12
        %v992 = vpop.permute.xlu0 %991
        %993 = vrot.lane.b32.xlu0 %v398, 12
        %v994 = vpop.permute.xlu0 %993
        %995 = vrot.lane.b32.xlu0 %v399, 12
        %v996 = vpop.permute.xlu0 %995
        %997 = vrot.lane.b32.xlu0 %v400, 12
        %v998 = vpop.permute.xlu0 %997
        %999 = vrot.lane.b32.xlu0 %v401, 12
        %v1000 = vpop.permute.xlu0 %999
        %1001 = vrot.lane.b32.xlu0 %v402, 12
        %v1002 = vpop.permute.xlu0 %1001
        %1003 = vrot.lane.b32.xlu0 %v403, 12
        %v1004 = vpop.permute.xlu0 %1003
        %1005 = vrot.lane.b32.xlu0 %v404, 12
        %v1006 = vpop.permute.xlu0 %1005
        %1007 = vrot.lane.b32.xlu0 %v405, 12
        %v1008 = vpop.permute.xlu0 %1007
        %1009 = vrot.lane.b32.xlu0 %v406, 12
        %v1010 = vpop.permute.xlu0 %1009
        %1011 = vrot.lane.b32.xlu0 %v407, 12
        %v1012 = vpop.permute.xlu0 %1011
        %1013 = vrot.lane.b32.xlu0 %v408, 12
        %v1014 = vpop.permute.xlu0 %1013
        %1015 = vrot.lane.b32.xlu0 %v409, 12
        %v1016 = vpop.permute.xlu0 %1015
        %1017 = vrot.lane.b32.xlu0 %v410, 12
        %v1018 = vpop.permute.xlu0 %1017
        %1019 = vrot.lane.b32.xlu0 %v411, 12
        %v1020 = vpop.permute.xlu0 %1019
        %1021 = vrot.lane.b32.xlu0 %v412, 12
        %v1022 = vpop.permute.xlu0 %1021
        %1023 = vrot.lane.b32.xlu0 %v413, 12
        %v1024 = vpop.permute.xlu0 %1023
        %1025 = vrot.lane.b32.xlu0 %v414, 12
        %v1026 = vpop.permute.xlu0 %1025
        %1027 = vrot.lane.b32.xlu0 %v415, 12
        %v1028 = vpop.permute.xlu0 %1027
        %1029 = vrot.lane.b32.xlu0 %v416, 12
        %v1030 = vpop.permute.xlu0 %1029
        %1031 = vrot.lane.b32.xlu0 %v417, 12
        %v1032 = vpop.permute.xlu0 %1031
        %1033 = vrot.lane.b32.xlu0 %v418, 12
        %v1034 = vpop.permute.xlu0 %1033
        %1035 = vrot.lane.b32.xlu0 %v419, 12
        %v1036 = vpop.permute.xlu0 %1035
        %1037 = vrot.lane.b32.xlu0 %v420, 12
        %v1038 = vpop.permute.xlu0 %1037
        %1039 = vrot.lane.b32.xlu0 %v421, 12
        %v1040 = vpop.permute.xlu0 %1039
        %1041 = vrot.lane.b32.xlu0 %v422, 12
        %v1042 = vpop.permute.xlu0 %1041
        %1043 = vrot.lane.b32.xlu0 %v423, 12
        %v1044 = vpop.permute.xlu0 %1043
        %1045 = vrot.lane.b32.xlu0 %v424, 12
        %v1046 = vpop.permute.xlu0 %1045
        %1047 = vrot.lane.b32.xlu0 %v425, 12
        %v1048 = vpop.permute.xlu0 %1047
        %1049 = vrot.lane.b32.xlu0 %v426, 12
        %v1050 = vpop.permute.xlu0 %1049
        %1051 = vrot.lane.b32.xlu0 %v427, 12
        %v1052 = vpop.permute.xlu0 %1051
        %1053 = vrot.lane.b32.xlu0 %v428, 12
        %v1054 = vpop.permute.xlu0 %1053
        %1055 = vrot.lane.b32.xlu0 %v429, 12
        %v1056 = vpop.permute.xlu0 %1055
        %1057 = vrot.lane.b32.xlu0 %v430, 12
        %v1058 = vpop.permute.xlu0 %1057
        %1059 = vrot.lane.b32.xlu0 %v431, 12
        %v1060 = vpop.permute.xlu0 %1059
        %1061 = vrot.lane.b32.xlu0 %v432, 12
        %v1062 = vpop.permute.xlu0 %1061
        %1063 = vrot.lane.b32.xlu0 %v433, 12
        %v1064 = vpop.permute.xlu0 %1063
        %1065 = vrot.lane.b32.xlu0 %v434, 12
        %v1066 = vpop.permute.xlu0 %1065
        %1067 = vrot.lane.b32.xlu0 %v435, 12
        %v1068 = vpop.permute.xlu0 %1067
        %1069 = vrot.lane.b32.xlu0 %v436, 12
        %v1070 = vpop.permute.xlu0 %1069
        %1071 = vrot.lane.b32.xlu0 %v437, 12
        %v1072 = vpop.permute.xlu0 %1071
        %1073 = vrot.lane.b32.xlu0 %v438, 12
        %v1074 = vpop.permute.xlu0 %1073
        %1075 = vrot.lane.b32.xlu0 %v439, 12
        %v1076 = vpop.permute.xlu0 %1075
        %1077 = vrot.lane.b32.xlu0 %v440, 12
        %v1078 = vpop.permute.xlu0 %1077
        %1079 = vrot.lane.b32.xlu0 %v441, 12
        %v1080 = vpop.permute.xlu0 %1079
        %1081 = vrot.lane.b32.xlu0 %v442, 12
        %v1082 = vpop.permute.xlu0 %1081
        %1083 = vrot.lane.b32.xlu0 %v443, 12
        %v1084 = vpop.permute.xlu0 %1083
        %v1134 = vrot.slane %v441, 1
        %v1135 = vsel %vm496, %v590, %v1134
        %v1136 = vrot.slane %v442, 1
        %v1137 = vsel %vm496, %v1134, %v1136
        %v1138 = vrot.slane %v443, 1
        %v1139 = vsel %vm496, %v1136, %v1138
        %1140 = vrot.lane.b32.xlu0 %v502, 16
        %v1141 = vpop.permute.xlu0 %1140
        %1142 = vrot.lane.b32.xlu0 %v505, 16
        %v1143 = vpop.permute.xlu0 %1142
        %1144 = vrot.lane.b32.xlu0 %v507, 16
        %v1145 = vpop.permute.xlu0 %1144
        %1146 = vrot.lane.b32.xlu0 %v509, 16
        %v1147 = vpop.permute.xlu0 %1146
        %1148 = vrot.lane.b32.xlu0 %v511, 16
        %v1149 = vpop.permute.xlu0 %1148
        %1150 = vrot.lane.b32.xlu0 %v513, 16
        %v1151 = vpop.permute.xlu0 %1150
        %1152 = vrot.lane.b32.xlu0 %v515, 16
        %v1153 = vpop.permute.xlu0 %1152
        %1154 = vrot.lane.b32.xlu0 %v517, 16
        %v1155 = vpop.permute.xlu0 %1154
        %1156 = vrot.lane.b32.xlu0 %v519, 16
        %v1157 = vpop.permute.xlu0 %1156
        %1158 = vrot.lane.b32.xlu0 %v521, 16
        %v1159 = vpop.permute.xlu0 %1158
        %1160 = vrot.lane.b32.xlu0 %v523, 16
        %v1161 = vpop.permute.xlu0 %1160
        %1162 = vrot.lane.b32.xlu0 %v525, 16
        %v1163 = vpop.permute.xlu0 %1162
        %1164 = vrot.lane.b32.xlu0 %v527, 16
        %v1165 = vpop.permute.xlu0 %1164
        %1166 = vrot.lane.b32.xlu0 %v529, 16
        %v1167 = vpop.permute.xlu0 %1166
        %1168 = vrot.lane.b32.xlu0 %v531, 16
        %v1169 = vpop.permute.xlu0 %1168
        %1170 = vrot.lane.b32.xlu0 %v533, 16
        %v1171 = vpop.permute.xlu0 %1170
        %1172 = vrot.lane.b32.xlu0 %v535, 16
        %v1173 = vpop.permute.xlu0 %1172
        %1174 = vrot.lane.b32.xlu0 %v537, 16
        %v1175 = vpop.permute.xlu0 %1174
        %1176 = vrot.lane.b32.xlu0 %v539, 16
        %v1177 = vpop.permute.xlu0 %1176
        %1178 = vrot.lane.b32.xlu0 %v541, 16
        %v1179 = vpop.permute.xlu0 %1178
        %1180 = vrot.lane.b32.xlu0 %v543, 16
        %v1181 = vpop.permute.xlu0 %1180
        %1182 = vrot.lane.b32.xlu0 %v545, 16
        %v1183 = vpop.permute.xlu0 %1182
        %1184 = vrot.lane.b32.xlu0 %v547, 16
        %v1185 = vpop.permute.xlu0 %1184
        %1186 = vrot.lane.b32.xlu0 %v549, 16
        %v1187 = vpop.permute.xlu0 %1186
        %1188 = vrot.lane.b32.xlu0 %v551, 16
        %v1189 = vpop.permute.xlu0 %1188
        %1190 = vrot.lane.b32.xlu0 %v553, 16
        %v1191 = vpop.permute.xlu0 %1190
        %1192 = vrot.lane.b32.xlu0 %v555, 16
        %v1193 = vpop.permute.xlu0 %1192
        %1194 = vrot.lane.b32.xlu0 %v557, 16
        %v1195 = vpop.permute.xlu0 %1194
        %1196 = vrot.lane.b32.xlu0 %v559, 16
        %v1197 = vpop.permute.xlu0 %1196
        %1198 = vrot.lane.b32.xlu0 %v561, 16
        %v1199 = vpop.permute.xlu0 %1198
        %1200 = vrot.lane.b32.xlu0 %v563, 16
        %v1201 = vpop.permute.xlu0 %1200
        %1202 = vrot.lane.b32.xlu0 %v565, 16
        %v1203 = vpop.permute.xlu0 %1202
        %1204 = vrot.lane.b32.xlu0 %v567, 16
        %v1205 = vpop.permute.xlu0 %1204
        %1206 = vrot.lane.b32.xlu0 %v569, 16
        %v1207 = vpop.permute.xlu0 %1206
        %1208 = vrot.lane.b32.xlu0 %v571, 16
        %v1209 = vpop.permute.xlu0 %1208
        %1210 = vrot.lane.b32.xlu0 %v573, 16
        %v1211 = vpop.permute.xlu0 %1210
        %1212 = vrot.lane.b32.xlu0 %v575, 16
        %v1213 = vpop.permute.xlu0 %1212
        %1214 = vrot.lane.b32.xlu0 %v577, 16
        %v1215 = vpop.permute.xlu0 %1214
        %1216 = vrot.lane.b32.xlu0 %v579, 16
        %v1217 = vpop.permute.xlu0 %1216
        %1218 = vrot.lane.b32.xlu0 %v581, 16
        %v1219 = vpop.permute.xlu0 %1218
        %1220 = vrot.lane.b32.xlu0 %v583, 16
        %v1221 = vpop.permute.xlu0 %1220
        %1222 = vrot.lane.b32.xlu0 %v585, 16
        %v1223 = vpop.permute.xlu0 %1222
        %1224 = vrot.lane.b32.xlu0 %v587, 16
        %v1225 = vpop.permute.xlu0 %1224
        %1226 = vrot.lane.b32.xlu0 %v589, 16
        %v1227 = vpop.permute.xlu0 %1226
        %1228 = vrot.lane.b32.xlu0 %v591, 16
        %v1229 = vpop.permute.xlu0 %1228
        %1230 = vrot.lane.b32.xlu0 %v1135, 16
        %v1231 = vpop.permute.xlu0 %1230
        %1232 = vrot.lane.b32.xlu0 %v1137, 16
        %v1233 = vpop.permute.xlu0 %1232
        %1234 = vrot.lane.b32.xlu0 %v1139, 16
        %v1235 = vpop.permute.xlu0 %1234
        %1236 = vrot.lane.b32.xlu0 %v1138, 16
        %v1237 = vpop.permute.xlu0 %1236
        %v1288 = vrot.slane %v442, 2
        %v1289 = vsel %vm740, %v836, %v1288
        %v1290 = vrot.slane %v443, 2
        %v1291 = vsel %vm740, %v1288, %v1290
        %v1292 = vrot.slane %v444, 2
        %v1293 = vsel %vm740, %v1290, %v1292
        %1294 = vrot.lane.b32.xlu0 %v746, 20
        %v1295 = vpop.permute.xlu0 %1294
        %1296 = vrot.lane.b32.xlu0 %v749, 20
        %v1297 = vpop.permute.xlu0 %1296
        %1298 = vrot.lane.b32.xlu0 %v751, 20
        %v1299 = vpop.permute.xlu0 %1298
        %1300 = vrot.lane.b32.xlu0 %v753, 20
        %v1301 = vpop.permute.xlu0 %1300
        %1302 = vrot.lane.b32.xlu0 %v755, 20
        %v1303 = vpop.permute.xlu0 %1302
        %1304 = vrot.lane.b32.xlu0 %v757, 20
        %v1305 = vpop.permute.xlu0 %1304
        %1306 = vrot.lane.b32.xlu0 %v759, 20
        %v1307 = vpop.permute.xlu0 %1306
        %1308 = vrot.lane.b32.xlu0 %v761, 20
        %v1309 = vpop.permute.xlu0 %1308
        %1310 = vrot.lane.b32.xlu0 %v763, 20
        %v1311 = vpop.permute.xlu0 %1310
        %1312 = vrot.lane.b32.xlu0 %v765, 20
        %v1313 = vpop.permute.xlu0 %1312
        %1314 = vrot.lane.b32.xlu0 %v767, 20
        %v1315 = vpop.permute.xlu0 %1314
        %1316 = vrot.lane.b32.xlu0 %v769, 20
        %v1317 = vpop.permute.xlu0 %1316
        %1318 = vrot.lane.b32.xlu0 %v771, 20
        %v1319 = vpop.permute.xlu0 %1318
        %1320 = vrot.lane.b32.xlu0 %v773, 20
        %v1321 = vpop.permute.xlu0 %1320
        %1322 = vrot.lane.b32.xlu0 %v775, 20
        %v1323 = vpop.permute.xlu0 %1322
        %1324 = vrot.lane.b32.xlu0 %v777, 20
        %v1325 = vpop.permute.xlu0 %1324
        %1326 = vrot.lane.b32.xlu0 %v779, 20
        %v1327 = vpop.permute.xlu0 %1326
        %1328 = vrot.lane.b32.xlu0 %v781, 20
        %v1329 = vpop.permute.xlu0 %1328
        %1330 = vrot.lane.b32.xlu0 %v783, 20
        %v1331 = vpop.permute.xlu0 %1330
        %1332 = vrot.lane.b32.xlu0 %v785, 20
        %v1333 = vpop.permute.xlu0 %1332
        %1334 = vrot.lane.b32.xlu0 %v787, 20
        %v1335 = vpop.permute.xlu0 %1334
        %1336 = vrot.lane.b32.xlu0 %v789, 20
        %v1337 = vpop.permute.xlu0 %1336
        %1338 = vrot.lane.b32.xlu0 %v791, 20
        %v1339 = vpop.permute.xlu0 %1338
        %1340 = vrot.lane.b32.xlu0 %v793, 20
        %v1341 = vpop.permute.xlu0 %1340
        %1342 = vrot.lane.b32.xlu0 %v795, 20
        %v1343 = vpop.permute.xlu0 %1342
        %1344 = vrot.lane.b32.xlu0 %v797, 20
        %v1345 = vpop.permute.xlu0 %1344
        %1346 = vrot.lane.b32.xlu0 %v799, 20
        %v1347 = vpop.permute.xlu0 %1346
        %1348 = vrot.lane.b32.xlu0 %v801, 20
        %v1349 = vpop.permute.xlu0 %1348
        %1350 = vrot.lane.b32.xlu0 %v803, 20
        %v1351 = vpop.permute.xlu0 %1350
        %1352 = vrot.lane.b32.xlu0 %v805, 20
        %v1353 = vpop.permute.xlu0 %1352
        %1354 = vrot.lane.b32.xlu0 %v807, 20
        %v1355 = vpop.permute.xlu0 %1354
        %1356 = vrot.lane.b32.xlu0 %v809, 20
        %v1357 = vpop.permute.xlu0 %1356
        %1358 = vrot.lane.b32.xlu0 %v811, 20
        %v1359 = vpop.permute.xlu0 %1358
        %1360 = vrot.lane.b32.xlu0 %v813, 20
        %v1361 = vpop.permute.xlu0 %1360
        %1362 = vrot.lane.b32.xlu0 %v815, 20
        %v1363 = vpop.permute.xlu0 %1362
        %1364 = vrot.lane.b32.xlu0 %v817, 20
        %v1365 = vpop.permute.xlu0 %1364
        %1366 = vrot.lane.b32.xlu0 %v819, 20
        %v1367 = vpop.permute.xlu0 %1366
        %1368 = vrot.lane.b32.xlu0 %v821, 20
        %v1369 = vpop.permute.xlu0 %1368
        %1370 = vrot.lane.b32.xlu0 %v823, 20
        %v1371 = vpop.permute.xlu0 %1370
        %1372 = vrot.lane.b32.xlu0 %v825, 20
        %v1373 = vpop.permute.xlu0 %1372
        %1374 = vrot.lane.b32.xlu0 %v827, 20
        %v1375 = vpop.permute.xlu0 %1374
        %1376 = vrot.lane.b32.xlu0 %v829, 20
        %v1377 = vpop.permute.xlu0 %1376
        %1378 = vrot.lane.b32.xlu0 %v831, 20
        %v1379 = vpop.permute.xlu0 %1378
        %1380 = vrot.lane.b32.xlu0 %v833, 20
        %v1381 = vpop.permute.xlu0 %1380
        %1382 = vrot.lane.b32.xlu0 %v835, 20
        %v1383 = vpop.permute.xlu0 %1382
        %1384 = vrot.lane.b32.xlu0 %v837, 20
        %v1385 = vpop.permute.xlu0 %1384
        %1386 = vrot.lane.b32.xlu0 %v1289, 20
        %v1387 = vpop.permute.xlu0 %1386
        %1388 = vrot.lane.b32.xlu0 %v1291, 20
        %v1389 = vpop.permute.xlu0 %1388
        %1390 = vrot.lane.b32.xlu0 %v1293, 20
        %v1391 = vpop.permute.xlu0 %1390
        %1443 = vrot.lane.b32.xlu0 %v398, 24
        %v1444 = vpop.permute.xlu0 %1443
        %1445 = vrot.lane.b32.xlu0 %v399, 24
        %v1446 = vpop.permute.xlu0 %1445
        %1447 = vrot.lane.b32.xlu0 %v400, 24
        %v1448 = vpop.permute.xlu0 %1447
        %1449 = vrot.lane.b32.xlu0 %v401, 24
        %v1450 = vpop.permute.xlu0 %1449
        %1451 = vrot.lane.b32.xlu0 %v402, 24
        %v1452 = vpop.permute.xlu0 %1451
        %1453 = vrot.lane.b32.xlu0 %v403, 24
        %v1454 = vpop.permute.xlu0 %1453
        %1455 = vrot.lane.b32.xlu0 %v404, 24
        %v1456 = vpop.permute.xlu0 %1455
        %1457 = vrot.lane.b32.xlu0 %v405, 24
        %v1458 = vpop.permute.xlu0 %1457
        %1459 = vrot.lane.b32.xlu0 %v406, 24
        %v1460 = vpop.permute.xlu0 %1459
        %1461 = vrot.lane.b32.xlu0 %v407, 24
        %v1462 = vpop.permute.xlu0 %1461
        %1463 = vrot.lane.b32.xlu0 %v408, 24
        %v1464 = vpop.permute.xlu0 %1463
        %1465 = vrot.lane.b32.xlu0 %v409, 24
        %v1466 = vpop.permute.xlu0 %1465
        %1467 = vrot.lane.b32.xlu0 %v410, 24
        %v1468 = vpop.permute.xlu0 %1467
        %1469 = vrot.lane.b32.xlu0 %v411, 24
        %v1470 = vpop.permute.xlu0 %1469
        %1471 = vrot.lane.b32.xlu0 %v412, 24
        %v1472 = vpop.permute.xlu0 %1471
        %1473 = vrot.lane.b32.xlu0 %v413, 24
        %v1474 = vpop.permute.xlu0 %1473
        %1475 = vrot.lane.b32.xlu0 %v414, 24
        %v1476 = vpop.permute.xlu0 %1475
        %1477 = vrot.lane.b32.xlu0 %v415, 24
        %v1478 = vpop.permute.xlu0 %1477
        %1479 = vrot.lane.b32.xlu0 %v416, 24
        %v1480 = vpop.permute.xlu0 %1479
        %1481 = vrot.lane.b32.xlu0 %v417, 24
        %v1482 = vpop.permute.xlu0 %1481
        %1483 = vrot.lane.b32.xlu0 %v418, 24
        %v1484 = vpop.permute.xlu0 %1483
        %1485 = vrot.lane.b32.xlu0 %v419, 24
        %v1486 = vpop.permute.xlu0 %1485
        %1487 = vrot.lane.b32.xlu0 %v420, 24
        %v1488 = vpop.permute.xlu0 %1487
        %1489 = vrot.lane.b32.xlu0 %v421, 24
        %v1490 = vpop.permute.xlu0 %1489
        %1491 = vrot.lane.b32.xlu0 %v422, 24
        %v1492 = vpop.permute.xlu0 %1491
        %1493 = vrot.lane.b32.xlu0 %v423, 24
        %v1494 = vpop.permute.xlu0 %1493
        %1495 = vrot.lane.b32.xlu0 %v424, 24
        %v1496 = vpop.permute.xlu0 %1495
        %1497 = vrot.lane.b32.xlu0 %v425, 24
        %v1498 = vpop.permute.xlu0 %1497
        %1499 = vrot.lane.b32.xlu0 %v426, 24
        %v1500 = vpop.permute.xlu0 %1499
        %1501 = vrot.lane.b32.xlu0 %v427, 24
        %v1502 = vpop.permute.xlu0 %1501
        %1503 = vrot.lane.b32.xlu0 %v428, 24
        %v1504 = vpop.permute.xlu0 %1503
        %1505 = vrot.lane.b32.xlu0 %v429, 24
        %v1506 = vpop.permute.xlu0 %1505
        %1507 = vrot.lane.b32.xlu0 %v430, 24
        %v1508 = vpop.permute.xlu0 %1507
        %1509 = vrot.lane.b32.xlu0 %v431, 24
        %v1510 = vpop.permute.xlu0 %1509
        %1511 = vrot.lane.b32.xlu0 %v432, 24
        %v1512 = vpop.permute.xlu0 %1511
        %1513 = vrot.lane.b32.xlu0 %v433, 24
        %v1514 = vpop.permute.xlu0 %1513
        %1515 = vrot.lane.b32.xlu0 %v434, 24
        %v1516 = vpop.permute.xlu0 %1515
        %1517 = vrot.lane.b32.xlu0 %v435, 24
        %v1518 = vpop.permute.xlu0 %1517
        %1519 = vrot.lane.b32.xlu0 %v436, 24
        %v1520 = vpop.permute.xlu0 %1519
        %1521 = vrot.lane.b32.xlu0 %v437, 24
        %v1522 = vpop.permute.xlu0 %1521
        %1523 = vrot.lane.b32.xlu0 %v438, 24
        %v1524 = vpop.permute.xlu0 %1523
        %1525 = vrot.lane.b32.xlu0 %v439, 24
        %v1526 = vpop.permute.xlu0 %1525
        %1527 = vrot.lane.b32.xlu0 %v440, 24
        %v1528 = vpop.permute.xlu0 %1527
        %1529 = vrot.lane.b32.xlu0 %v441, 24
        %v1530 = vpop.permute.xlu0 %1529
        %1531 = vrot.lane.b32.xlu0 %v442, 24
        %v1532 = vpop.permute.xlu0 %1531
        %1533 = vrot.lane.b32.xlu0 %v443, 24
        %v1534 = vpop.permute.xlu0 %1533
        %1535 = vrot.lane.b32.xlu0 %v444, 24
        %v1536 = vpop.permute.xlu0 %1535
        %1537 = vrot.lane.b32.xlu0 %v445, 24
        %v1538 = vpop.permute.xlu0 %1537
        %1539 = vrot.lane.b32.xlu0 %v446, 24
        %v1540 = vpop.permute.xlu0 %1539
        %v1590 = vrot.slane %v444, 1
        %v1591 = vsel %vm496, %v1138, %v1590
        %v1592 = vrot.slane %v445, 1
        %v1593 = vsel %vm496, %v1590, %v1592
        %v1594 = vrot.slane %v446, 1
        %v1595 = vsel %vm496, %v1592, %v1594
        %1596 = vrot.lane.b32.xlu0 %v508, 28
        %v1597 = vpop.permute.xlu0 %1596
        %1598 = vrot.lane.b32.xlu0 %v511, 28
        %v1599 = vpop.permute.xlu0 %1598
        %1600 = vrot.lane.b32.xlu0 %v513, 28
        %v1601 = vpop.permute.xlu0 %1600
        %1602 = vrot.lane.b32.xlu0 %v515, 28
        %v1603 = vpop.permute.xlu0 %1602
        %1604 = vrot.lane.b32.xlu0 %v517, 28
        %v1605 = vpop.permute.xlu0 %1604
        %1606 = vrot.lane.b32.xlu0 %v519, 28
        %v1607 = vpop.permute.xlu0 %1606
        %1608 = vrot.lane.b32.xlu0 %v521, 28
        %v1609 = vpop.permute.xlu0 %1608
        %1610 = vrot.lane.b32.xlu0 %v523, 28
        %v1611 = vpop.permute.xlu0 %1610
        %1612 = vrot.lane.b32.xlu0 %v525, 28
        %v1613 = vpop.permute.xlu0 %1612
        %1614 = vrot.lane.b32.xlu0 %v527, 28
        %v1615 = vpop.permute.xlu0 %1614
        %1616 = vrot.lane.b32.xlu0 %v529, 28
        %v1617 = vpop.permute.xlu0 %1616
        %1618 = vrot.lane.b32.xlu0 %v531, 28
        %v1619 = vpop.permute.xlu0 %1618
        %1620 = vrot.lane.b32.xlu0 %v533, 28
        %v1621 = vpop.permute.xlu0 %1620
        %1622 = vrot.lane.b32.xlu0 %v535, 28
        %v1623 = vpop.permute.xlu0 %1622
        %1624 = vrot.lane.b32.xlu0 %v537, 28
        %v1625 = vpop.permute.xlu0 %1624
        %1626 = vrot.lane.b32.xlu0 %v539, 28
        %v1627 = vpop.permute.xlu0 %1626
        %1628 = vrot.lane.b32.xlu0 %v541, 28
        %v1629 = vpop.permute.xlu0 %1628
        %1630 = vrot.lane.b32.xlu0 %v543, 28
        %v1631 = vpop.permute.xlu0 %1630
        %1632 = vrot.lane.b32.xlu0 %v545, 28
        %v1633 = vpop.permute.xlu0 %1632
        %1634 = vrot.lane.b32.xlu0 %v547, 28
        %v1635 = vpop.permute.xlu0 %1634
        %1636 = vrot.lane.b32.xlu0 %v549, 28
        %v1637 = vpop.permute.xlu0 %1636
        %1638 = vrot.lane.b32.xlu0 %v551, 28
        %v1639 = vpop.permute.xlu0 %1638
        %1640 = vrot.lane.b32.xlu0 %v553, 28
        %v1641 = vpop.permute.xlu0 %1640
        %1642 = vrot.lane.b32.xlu0 %v555, 28
        %v1643 = vpop.permute.xlu0 %1642
        %1644 = vrot.lane.b32.xlu0 %v557, 28
        %v1645 = vpop.permute.xlu0 %1644
        %1646 = vrot.lane.b32.xlu0 %v559, 28
        %v1647 = vpop.permute.xlu0 %1646
        %1648 = vrot.lane.b32.xlu0 %v561, 28
        %v1649 = vpop.permute.xlu0 %1648
        %1650 = vrot.lane.b32.xlu0 %v563, 28
        %v1651 = vpop.permute.xlu0 %1650
        %1652 = vrot.lane.b32.xlu0 %v565, 28
        %v1653 = vpop.permute.xlu0 %1652
        %1654 = vrot.lane.b32.xlu0 %v567, 28
        %v1655 = vpop.permute.xlu0 %1654
        %1656 = vrot.lane.b32.xlu0 %v569, 28
        %v1657 = vpop.permute.xlu0 %1656
        %1658 = vrot.lane.b32.xlu0 %v571, 28
        %v1659 = vpop.permute.xlu0 %1658
        %1660 = vrot.lane.b32.xlu0 %v573, 28
        %v1661 = vpop.permute.xlu0 %1660
        %1662 = vrot.lane.b32.xlu0 %v575, 28
        %v1663 = vpop.permute.xlu0 %1662
        %1664 = vrot.lane.b32.xlu0 %v577, 28
        %v1665 = vpop.permute.xlu0 %1664
        %1666 = vrot.lane.b32.xlu0 %v579, 28
        %v1667 = vpop.permute.xlu0 %1666
        %1668 = vrot.lane.b32.xlu0 %v581, 28
        %v1669 = vpop.permute.xlu0 %1668
        %1670 = vrot.lane.b32.xlu0 %v583, 28
        %v1671 = vpop.permute.xlu0 %1670
        %1672 = vrot.lane.b32.xlu0 %v585, 28
        %v1673 = vpop.permute.xlu0 %1672
        %1674 = vrot.lane.b32.xlu0 %v587, 28
        %v1675 = vpop.permute.xlu0 %1674
        %1676 = vrot.lane.b32.xlu0 %v589, 28
        %v1677 = vpop.permute.xlu0 %1676
        %1678 = vrot.lane.b32.xlu0 %v591, 28
        %v1679 = vpop.permute.xlu0 %1678
        %1680 = vrot.lane.b32.xlu0 %v1135, 28
        %v1681 = vpop.permute.xlu0 %1680
        %1682 = vrot.lane.b32.xlu0 %v1137, 28
        %v1683 = vpop.permute.xlu0 %1682
        %1684 = vrot.lane.b32.xlu0 %v1139, 28
        %v1685 = vpop.permute.xlu0 %1684
        %1686 = vrot.lane.b32.xlu0 %v1591, 28
        %v1687 = vpop.permute.xlu0 %1686
        %1688 = vrot.lane.b32.xlu0 %v1593, 28
        %v1689 = vpop.permute.xlu0 %1688
        %1690 = vrot.lane.b32.xlu0 %v1595, 28
        %v1691 = vpop.permute.xlu0 %1690
        %1692 = vrot.lane.b32.xlu0 %v1594, 28
        %v1693 = vpop.permute.xlu0 %1692
        %v1744 = vrot.slane %v445, 2
        %v1745 = vsel %vm740, %v1292, %v1744
        %v1746 = vrot.slane %v446, 2
        %v1747 = vsel %vm740, %v1744, %v1746
        %v1748 = vrot.slane %v447, 2
        %v1749 = vsel %vm740, %v1746, %v1748
        %1750 = vrot.lane.b32.xlu0 %v752, 32
        %v1751 = vpop.permute.xlu0 %1750
        %1752 = vrot.lane.b32.xlu0 %v755, 32
        %v1753 = vpop.permute.xlu0 %1752
        %1754 = vrot.lane.b32.xlu0 %v757, 32
        %v1755 = vpop.permute.xlu0 %1754
        %1756 = vrot.lane.b32.xlu0 %v759, 32
        %v1757 = vpop.permute.xlu0 %1756
        %1758 = vrot.lane.b32.xlu0 %v761, 32
        %v1759 = vpop.permute.xlu0 %1758
        %1760 = vrot.lane.b32.xlu0 %v763, 32
        %v1761 = vpop.permute.xlu0 %1760
        %1762 = vrot.lane.b32.xlu0 %v765, 32
        %v1763 = vpop.permute.xlu0 %1762
        %1764 = vrot.lane.b32.xlu0 %v767, 32
        %v1765 = vpop.permute.xlu0 %1764
        %1766 = vrot.lane.b32.xlu0 %v769, 32
        %v1767 = vpop.permute.xlu0 %1766
        %1768 = vrot.lane.b32.xlu0 %v771, 32
        %v1769 = vpop.permute.xlu0 %1768
        %1770 = vrot.lane.b32.xlu0 %v773, 32
        %v1771 = vpop.permute.xlu0 %1770
        %1772 = vrot.lane.b32.xlu0 %v775, 32
        %v1773 = vpop.permute.xlu0 %1772
        %1774 = vrot.lane.b32.xlu0 %v777, 32
        %v1775 = vpop.permute.xlu0 %1774
        %1776 = vrot.lane.b32.xlu0 %v779, 32
        %v1777 = vpop.permute.xlu0 %1776
        %1778 = vrot.lane.b32.xlu0 %v781, 32
        %v1779 = vpop.permute.xlu0 %1778
        %1780 = vrot.lane.b32.xlu0 %v783, 32
        %v1781 = vpop.permute.xlu0 %1780
        %1782 = vrot.lane.b32.xlu0 %v785, 32
        %v1783 = vpop.permute.xlu0 %1782
        %1784 = vrot.lane.b32.xlu0 %v787, 32
        %v1785 = vpop.permute.xlu0 %1784
        %1786 = vrot.lane.b32.xlu0 %v789, 32
        %v1787 = vpop.permute.xlu0 %1786
        %1788 = vrot.lane.b32.xlu0 %v791, 32
        %v1789 = vpop.permute.xlu0 %1788
        %1790 = vrot.lane.b32.xlu0 %v793, 32
        %v1791 = vpop.permute.xlu0 %1790
        %1792 = vrot.lane.b32.xlu0 %v795, 32
        %v1793 = vpop.permute.xlu0 %1792
        %1794 = vrot.lane.b32.xlu0 %v797, 32
        %v1795 = vpop.permute.xlu0 %1794
        %1796 = vrot.lane.b32.xlu0 %v799, 32
        %v1797 = vpop.permute.xlu0 %1796
        %1798 = vrot.lane.b32.xlu0 %v801, 32
        %v1799 = vpop.permute.xlu0 %1798
        %1800 = vrot.lane.b32.xlu0 %v803, 32
        %v1801 = vpop.permute.xlu0 %1800
        %1802 = vrot.lane.b32.xlu0 %v805, 32
        %v1803 = vpop.permute.xlu0 %1802
        %1804 = vrot.lane.b32.xlu0 %v807, 32
        %v1805 = vpop.permute.xlu0 %1804
        %1806 = vrot.lane.b32.xlu0 %v809, 32
        %v1807 = vpop.permute.xlu0 %1806
        %1808 = vrot.lane.b32.xlu0 %v811, 32
        %v1809 = vpop.permute.xlu0 %1808
        %1810 = vrot.lane.b32.xlu0 %v813, 32
        %v1811 = vpop.permute.xlu0 %1810
        %1812 = vrot.lane.b32.xlu0 %v815, 32
        %v1813 = vpop.permute.xlu0 %1812
        %1814 = vrot.lane.b32.xlu0 %v817, 32
        %v1815 = vpop.permute.xlu0 %1814
        %1816 = vrot.lane.b32.xlu0 %v819, 32
        %v1817 = vpop.permute.xlu0 %1816
        %1818 = vrot.lane.b32.xlu0 %v821, 32
        %v1819 = vpop.permute.xlu0 %1818
        %1820 = vrot.lane.b32.xlu0 %v823, 32
        %v1821 = vpop.permute.xlu0 %1820
        %1822 = vrot.lane.b32.xlu0 %v825, 32
        %v1823 = vpop.permute.xlu0 %1822
        %1824 = vrot.lane.b32.xlu0 %v827, 32
        %v1825 = vpop.permute.xlu0 %1824
        %1826 = vrot.lane.b32.xlu0 %v829, 32
        %v1827 = vpop.permute.xlu0 %1826
        %1828 = vrot.lane.b32.xlu0 %v831, 32
        %v1829 = vpop.permute.xlu0 %1828
        %1830 = vrot.lane.b32.xlu0 %v833, 32
        %v1831 = vpop.permute.xlu0 %1830
        %1832 = vrot.lane.b32.xlu0 %v835, 32
        %v1833 = vpop.permute.xlu0 %1832
        %1834 = vrot.lane.b32.xlu0 %v837, 32
        %v1835 = vpop.permute.xlu0 %1834
        %1836 = vrot.lane.b32.xlu0 %v1289, 32
        %v1837 = vpop.permute.xlu0 %1836
        %1838 = vrot.lane.b32.xlu0 %v1291, 32
        %v1839 = vpop.permute.xlu0 %1838
        %1840 = vrot.lane.b32.xlu0 %v1293, 32
        %v1841 = vpop.permute.xlu0 %1840
        %1842 = vrot.lane.b32.xlu0 %v1745, 32
        %v1843 = vpop.permute.xlu0 %1842
        %1844 = vrot.lane.b32.xlu0 %v1747, 32
        %v1845 = vpop.permute.xlu0 %1844
        %1846 = vrot.lane.b32.xlu0 %v1749, 32
        %v1847 = vpop.permute.xlu0 %1846
        %vm1897 = vcmask 31744
        %v1898 = vsel %vm1897, %v392, %v593
        %v1899 = vsel %vm1897, %v393, %v595
        %v1900 = vsel %vm1897, %v394, %v597
        %v1901 = vsel %vm1897, %v395, %v599
        %v1902 = vsel %vm1897, %v396, %v601
        %v1903 = vsel %vm1897, %v397, %v603
        %v1904 = vsel %vm1897, %v398, %v605
        %v1905 = vsel %vm1897, %v399, %v607
        %v1906 = vsel %vm1897, %v400, %v609
        %v1907 = vsel %vm1897, %v401, %v611
        %v1908 = vsel %vm1897, %v402, %v613
        %v1909 = vsel %vm1897, %v403, %v615
        %v1910 = vsel %vm1897, %v404, %v617
        %v1911 = vsel %vm1897, %v405, %v619
        %v1912 = vsel %vm1897, %v406, %v621
        %v1913 = vsel %vm1897, %v407, %v623
        %v1914 = vsel %vm1897, %v408, %v625
        %v1915 = vsel %vm1897, %v409, %v627
        %v1916 = vsel %vm1897, %v410, %v629
        %v1917 = vsel %vm1897, %v411, %v631
        %v1918 = vsel %vm1897, %v412, %v633
        %v1919 = vsel %vm1897, %v413, %v635
        %v1920 = vsel %vm1897, %v414, %v637
        %v1921 = vsel %vm1897, %v415, %v639
        %v1922 = vsel %vm1897, %v416, %v641
        %v1923 = vsel %vm1897, %v417, %v643
        %v1924 = vsel %vm1897, %v418, %v645
        %v1925 = vsel %vm1897, %v419, %v647
        %v1926 = vsel %vm1897, %v420, %v649
        %v1927 = vsel %vm1897, %v421, %v651
        %v1928 = vsel %vm1897, %v422, %v653
        %v1929 = vsel %vm1897, %v423, %v655
        %v1930 = vsel %vm1897, %v424, %v657
        %v1931 = vsel %vm1897, %v425, %v659
        %v1932 = vsel %vm1897, %v426, %v661
        %v1933 = vsel %vm1897, %v427, %v663
        %v1934 = vsel %vm1897, %v428, %v665
        %v1935 = vsel %vm1897, %v429, %v667
        %v1936 = vsel %vm1897, %v430, %v669
        %v1937 = vsel %vm1897, %v431, %v671
        %v1938 = vsel %vm1897, %v432, %v673
        %v1939 = vsel %vm1897, %v433, %v675
        %v1940 = vsel %vm1897, %v434, %v677
        %v1941 = vsel %vm1897, %v435, %v679
        %v1942 = vsel %vm1897, %v436, %v681
        %v1943 = vsel %vm1897, %v437, %v683
        %v1944 = vsel %vm1897, %v438, %v685
        %v1945 = vsel %vm1897, %v439, %v687
        %v1946 = vsel %vm1897, %v440, %v689
        %vm1947 = vcmask 64512
        %v1948 = vsel %vm1947, %v1898, %v839
        %v1949 = vsel %vm1947, %v1899, %v841
        %v1950 = vsel %vm1947, %v1900, %v843
        %v1951 = vsel %vm1947, %v1901, %v845
        %v1952 = vsel %vm1947, %v1902, %v847
        %v1953 = vsel %vm1947, %v1903, %v849
        %v1954 = vsel %vm1947, %v1904, %v851
        %v1955 = vsel %vm1947, %v1905, %v853
        %v1956 = vsel %vm1947, %v1906, %v855
        %v1957 = vsel %vm1947, %v1907, %v857
        %v1958 = vsel %vm1947, %v1908, %v859
        %v1959 = vsel %vm1947, %v1909, %v861
        %v1960 = vsel %vm1947, %v1910, %v863
        %v1961 = vsel %vm1947, %v1911, %v865
        %v1962 = vsel %vm1947, %v1912, %v867
        %v1963 = vsel %vm1947, %v1913, %v869
        %v1964 = vsel %vm1947, %v1914, %v871
        %v1965 = vsel %vm1947, %v1915, %v873
        %v1966 = vsel %vm1947, %v1916, %v875
        %v1967 = vsel %vm1947, %v1917, %v877
        %v1968 = vsel %vm1947, %v1918, %v879
        %v1969 = vsel %vm1947, %v1919, %v881
        %v1970 = vsel %vm1947, %v1920, %v883
        %v1971 = vsel %vm1947, %v1921, %v885
        %v1972 = vsel %vm1947, %v1922, %v887
        %v1973 = vsel %vm1947, %v1923, %v889
        %v1974 = vsel %vm1947, %v1924, %v891
        %v1975 = vsel %vm1947, %v1925, %v893
        %v1976 = vsel %vm1947, %v1926, %v895
        %v1977 = vsel %vm1947, %v1927, %v897
        %v1978 = vsel %vm1947, %v1928, %v899
        %v1979 = vsel %vm1947, %v1929, %v901
        %v1980 = vsel %vm1947, %v1930, %v903
        %v1981 = vsel %vm1947, %v1931, %v905
        %v1982 = vsel %vm1947, %v1932, %v907
        %v1983 = vsel %vm1947, %v1933, %v909
        %v1984 = vsel %vm1947, %v1934, %v911
        %v1985 = vsel %vm1947, %v1935, %v913
        %v1986 = vsel %vm1947, %v1936, %v915
        %v1987 = vsel %vm1947, %v1937, %v917
        %v1988 = vsel %vm1947, %v1938, %v919
        %v1989 = vsel %vm1947, %v1939, %v921
        %v1990 = vsel %vm1947, %v1940, %v923
        %v1991 = vsel %vm1947, %v1941, %v925
        %v1992 = vsel %vm1947, %v1942, %v927
        %v1993 = vsel %vm1947, %v1943, %v929
        %v1994 = vsel %vm1947, %v1944, %v931
        %v1995 = vsel %vm1947, %v1945, %v933
        %v1996 = vsel %vm1947, %v1946, %v935
        %vm1997 = vcmask 97280
        %v1998 = vsel %vm1997, %v1948, %v988
        %v1999 = vsel %vm1997, %v1949, %v990
        %v2000 = vsel %vm1997, %v1950, %v992
        %v2001 = vsel %vm1997, %v1951, %v994
        %v2002 = vsel %vm1997, %v1952, %v996
        %v2003 = vsel %vm1997, %v1953, %v998
        %v2004 = vsel %vm1997, %v1954, %v1000
        %v2005 = vsel %vm1997, %v1955, %v1002
        %v2006 = vsel %vm1997, %v1956, %v1004
        %v2007 = vsel %vm1997, %v1957, %v1006
        %v2008 = vsel %vm1997, %v1958, %v1008
        %v2009 = vsel %vm1997, %v1959, %v1010
        %v2010 = vsel %vm1997, %v1960, %v1012
        %v2011 = vsel %vm1997, %v1961, %v1014
        %v2012 = vsel %vm1997, %v1962, %v1016
        %v2013 = vsel %vm1997, %v1963, %v1018
        %v2014 = vsel %vm1997, %v1964, %v1020
        %v2015 = vsel %vm1997, %v1965, %v1022
        %v2016 = vsel %vm1997, %v1966, %v1024
        %v2017 = vsel %vm1997, %v1967, %v1026
        %v2018 = vsel %vm1997, %v1968, %v1028
        %v2019 = vsel %vm1997, %v1969, %v1030
        %v2020 = vsel %vm1997, %v1970, %v1032
        %v2021 = vsel %vm1997, %v1971, %v1034
        %v2022 = vsel %vm1997, %v1972, %v1036
        %v2023 = vsel %vm1997, %v1973, %v1038
        %v2024 = vsel %vm1997, %v1974, %v1040
        %v2025 = vsel %vm1997, %v1975, %v1042
        %v2026 = vsel %vm1997, %v1976, %v1044
        %v2027 = vsel %vm1997, %v1977, %v1046
        %v2028 = vsel %vm1997, %v1978, %v1048
        %v2029 = vsel %vm1997, %v1979, %v1050
        %v2030 = vsel %vm1997, %v1980, %v1052
        %v2031 = vsel %vm1997, %v1981, %v1054
        %v2032 = vsel %vm1997, %v1982, %v1056
        %v2033 = vsel %vm1997, %v1983, %v1058
        %v2034 = vsel %vm1997, %v1984, %v1060
        %v2035 = vsel %vm1997, %v1985, %v1062
        %v2036 = vsel %vm1997, %v1986, %v1064
        %v2037 = vsel %vm1997, %v1987, %v1066
        %v2038 = vsel %vm1997, %v1988, %v1068
        %v2039 = vsel %vm1997, %v1989, %v1070
        %v2040 = vsel %vm1997, %v1990, %v1072
        %v2041 = vsel %vm1997, %v1991, %v1074
        %v2042 = vsel %vm1997, %v1992, %v1076
        %v2043 = vsel %vm1997, %v1993, %v1078
        %v2044 = vsel %vm1997, %v1994, %v1080
        %v2045 = vsel %vm1997, %v1995, %v1082
        %v2046 = vsel %vm1997, %v1996, %v1084
        %vm2047 = vcmask 130048
        %v2048 = vsel %vm2047, %v1998, %v1141
        %v2049 = vsel %vm2047, %v1999, %v1143
        %v2050 = vsel %vm2047, %v2000, %v1145
        %v2051 = vsel %vm2047, %v2001, %v1147
        %v2052 = vsel %vm2047, %v2002, %v1149
        %v2053 = vsel %vm2047, %v2003, %v1151
        %v2054 = vsel %vm2047, %v2004, %v1153
        %v2055 = vsel %vm2047, %v2005, %v1155
        %v2056 = vsel %vm2047, %v2006, %v1157
        %v2057 = vsel %vm2047, %v2007, %v1159
        %v2058 = vsel %vm2047, %v2008, %v1161
        %v2059 = vsel %vm2047, %v2009, %v1163
        %v2060 = vsel %vm2047, %v2010, %v1165
        %v2061 = vsel %vm2047, %v2011, %v1167
        %v2062 = vsel %vm2047, %v2012, %v1169
        %v2063 = vsel %vm2047, %v2013, %v1171
        %v2064 = vsel %vm2047, %v2014, %v1173
        %v2065 = vsel %vm2047, %v2015, %v1175
        %v2066 = vsel %vm2047, %v2016, %v1177
        %v2067 = vsel %vm2047, %v2017, %v1179
        %v2068 = vsel %vm2047, %v2018, %v1181
        %v2069 = vsel %vm2047, %v2019, %v1183
        %v2070 = vsel %vm2047, %v2020, %v1185
        %v2071 = vsel %vm2047, %v2021, %v1187
        %v2072 = vsel %vm2047, %v2022, %v1189
        %v2073 = vsel %vm2047, %v2023, %v1191
        %v2074 = vsel %vm2047, %v2024, %v1193
        %v2075 = vsel %vm2047, %v2025, %v1195
        %v2076 = vsel %vm2047, %v2026, %v1197
        %v2077 = vsel %vm2047, %v2027, %v1199
        %v2078 = vsel %vm2047, %v2028, %v1201
        %v2079 = vsel %vm2047, %v2029, %v1203
        %v2080 = vsel %vm2047, %v2030, %v1205
        %v2081 = vsel %vm2047, %v2031, %v1207
        %v2082 = vsel %vm2047, %v2032, %v1209
        %v2083 = vsel %vm2047, %v2033, %v1211
        %v2084 = vsel %vm2047, %v2034, %v1213
        %v2085 = vsel %vm2047, %v2035, %v1215
        %v2086 = vsel %vm2047, %v2036, %v1217
        %v2087 = vsel %vm2047, %v2037, %v1219
        %v2088 = vsel %vm2047, %v2038, %v1221
        %v2089 = vsel %vm2047, %v2039, %v1223
        %v2090 = vsel %vm2047, %v2040, %v1225
        %v2091 = vsel %vm2047, %v2041, %v1227
        %v2092 = vsel %vm2047, %v2042, %v1229
        %v2093 = vsel %vm2047, %v2043, %v1231
        %v2094 = vsel %vm2047, %v2044, %v1233
        %v2095 = vsel %vm2047, %v2045, %v1235
        %v2096 = vsel %vm2047, %v2046, %v1237
        %vm2097 = vcmask 162816
        %v2098 = vsel %vm2097, %v2048, %v1295
        %v2099 = vsel %vm2097, %v2049, %v1297
        %v2100 = vsel %vm2097, %v2050, %v1299
        %v2101 = vsel %vm2097, %v2051, %v1301
        %v2102 = vsel %vm2097, %v2052, %v1303
        %v2103 = vsel %vm2097, %v2053, %v1305
        %v2104 = vsel %vm2097, %v2054, %v1307
        %v2105 = vsel %vm2097, %v2055, %v1309
        %v2106 = vsel %vm2097, %v2056, %v1311
        %v2107 = vsel %vm2097, %v2057, %v1313
        %v2108 = vsel %vm2097, %v2058, %v1315
        %v2109 = vsel %vm2097, %v2059, %v1317
        %v2110 = vsel %vm2097, %v2060, %v1319
        %v2111 = vsel %vm2097, %v2061, %v1321
        %v2112 = vsel %vm2097, %v2062, %v1323
        %v2113 = vsel %vm2097, %v2063, %v1325
        %v2114 = vsel %vm2097, %v2064, %v1327
        %v2115 = vsel %vm2097, %v2065, %v1329
        %v2116 = vsel %vm2097, %v2066, %v1331
        %v2117 = vsel %vm2097, %v2067, %v1333
        %v2118 = vsel %vm2097, %v2068, %v1335
        %v2119 = vsel %vm2097, %v2069, %v1337
        %v2120 = vsel %vm2097, %v2070, %v1339
        %v2121 = vsel %vm2097, %v2071, %v1341
        %v2122 = vsel %vm2097, %v2072, %v1343
        %v2123 = vsel %vm2097, %v2073, %v1345
        %v2124 = vsel %vm2097, %v2074, %v1347
        %v2125 = vsel %vm2097, %v2075, %v1349
        %v2126 = vsel %vm2097, %v2076, %v1351
        %v2127 = vsel %vm2097, %v2077, %v1353
        %v2128 = vsel %vm2097, %v2078, %v1355
        %v2129 = vsel %vm2097, %v2079, %v1357
        %v2130 = vsel %vm2097, %v2080, %v1359
        %v2131 = vsel %vm2097, %v2081, %v1361
        %v2132 = vsel %vm2097, %v2082, %v1363
        %v2133 = vsel %vm2097, %v2083, %v1365
        %v2134 = vsel %vm2097, %v2084, %v1367
        %v2135 = vsel %vm2097, %v2085, %v1369
        %v2136 = vsel %vm2097, %v2086, %v1371
        %v2137 = vsel %vm2097, %v2087, %v1373
        %v2138 = vsel %vm2097, %v2088, %v1375
        %v2139 = vsel %vm2097, %v2089, %v1377
        %v2140 = vsel %vm2097, %v2090, %v1379
        %v2141 = vsel %vm2097, %v2091, %v1381
        %v2142 = vsel %vm2097, %v2092, %v1383
        %v2143 = vsel %vm2097, %v2093, %v1385
        %v2144 = vsel %vm2097, %v2094, %v1387
        %v2145 = vsel %vm2097, %v2095, %v1389
        %v2146 = vsel %vm2097, %v2096, %v1391
        %vm2147 = vcmask 195584
        %v2148 = vsel %vm2147, %v2098, %v1444
        %v2149 = vsel %vm2147, %v2099, %v1446
        %v2150 = vsel %vm2147, %v2100, %v1448
        %v2151 = vsel %vm2147, %v2101, %v1450
        %v2152 = vsel %vm2147, %v2102, %v1452
        %v2153 = vsel %vm2147, %v2103, %v1454
        %v2154 = vsel %vm2147, %v2104, %v1456
        %v2155 = vsel %vm2147, %v2105, %v1458
        %v2156 = vsel %vm2147, %v2106, %v1460
        %v2157 = vsel %vm2147, %v2107, %v1462
        %v2158 = vsel %vm2147, %v2108, %v1464
        %v2159 = vsel %vm2147, %v2109, %v1466
        %v2160 = vsel %vm2147, %v2110, %v1468
        %v2161 = vsel %vm2147, %v2111, %v1470
        %v2162 = vsel %vm2147, %v2112, %v1472
        %v2163 = vsel %vm2147, %v2113, %v1474
        %v2164 = vsel %vm2147, %v2114, %v1476
        %v2165 = vsel %vm2147, %v2115, %v1478
        %v2166 = vsel %vm2147, %v2116, %v1480
        %v2167 = vsel %vm2147, %v2117, %v1482
        %v2168 = vsel %vm2147, %v2118, %v1484
        %v2169 = vsel %vm2147, %v2119, %v1486
        %v2170 = vsel %vm2147, %v2120, %v1488
        %v2171 = vsel %vm2147, %v2121, %v1490
        %v2172 = vsel %vm2147, %v2122, %v1492
        %v2173 = vsel %vm2147, %v2123, %v1494
        %v2174 = vsel %vm2147, %v2124, %v1496
        %v2175 = vsel %vm2147, %v2125, %v1498
        %v2176 = vsel %vm2147, %v2126, %v1500
        %v2177 = vsel %vm2147, %v2127, %v1502
        %v2178 = vsel %vm2147, %v2128, %v1504
        %v2179 = vsel %vm2147, %v2129, %v1506
        %v2180 = vsel %vm2147, %v2130, %v1508
        %v2181 = vsel %vm2147, %v2131, %v1510
        %v2182 = vsel %vm2147, %v2132, %v1512
        %v2183 = vsel %vm2147, %v2133, %v1514
        %v2184 = vsel %vm2147, %v2134, %v1516
        %v2185 = vsel %vm2147, %v2135, %v1518
        %v2186 = vsel %vm2147, %v2136, %v1520
        %v2187 = vsel %vm2147, %v2137, %v1522
        %v2188 = vsel %vm2147, %v2138, %v1524
        %v2189 = vsel %vm2147, %v2139, %v1526
        %v2190 = vsel %vm2147, %v2140, %v1528
        %v2191 = vsel %vm2147, %v2141, %v1530
        %v2192 = vsel %vm2147, %v2142, %v1532
        %v2193 = vsel %vm2147, %v2143, %v1534
        %v2194 = vsel %vm2147, %v2144, %v1536
        %v2195 = vsel %vm2147, %v2145, %v1538
        %v2196 = vsel %vm2147, %v2146, %v1540
        %vm2197 = vcmask 228352
        %v2198 = vsel %vm2197, %v2148, %v1597
        %v2199 = vsel %vm2197, %v2149, %v1599
        %v2200 = vsel %vm2197, %v2150, %v1601
        %v2201 = vsel %vm2197, %v2151, %v1603
        %v2202 = vsel %vm2197, %v2152, %v1605
        %v2203 = vsel %vm2197, %v2153, %v1607
        %v2204 = vsel %vm2197, %v2154, %v1609
        %v2205 = vsel %vm2197, %v2155, %v1611
        %v2206 = vsel %vm2197, %v2156, %v1613
        %v2207 = vsel %vm2197, %v2157, %v1615
        %v2208 = vsel %vm2197, %v2158, %v1617
        %v2209 = vsel %vm2197, %v2159, %v1619
        %v2210 = vsel %vm2197, %v2160, %v1621
        %v2211 = vsel %vm2197, %v2161, %v1623
        %v2212 = vsel %vm2197, %v2162, %v1625
        %v2213 = vsel %vm2197, %v2163, %v1627
        %v2214 = vsel %vm2197, %v2164, %v1629
        %v2215 = vsel %vm2197, %v2165, %v1631
        %v2216 = vsel %vm2197, %v2166, %v1633
        %v2217 = vsel %vm2197, %v2167, %v1635
        %v2218 = vsel %vm2197, %v2168, %v1637
        %v2219 = vsel %vm2197, %v2169, %v1639
        %v2220 = vsel %vm2197, %v2170, %v1641
        %v2221 = vsel %vm2197, %v2171, %v1643
        %v2222 = vsel %vm2197, %v2172, %v1645
        %v2223 = vsel %vm2197, %v2173, %v1647
        %v2224 = vsel %vm2197, %v2174, %v1649
        %v2225 = vsel %vm2197, %v2175, %v1651
        %v2226 = vsel %vm2197, %v2176, %v1653
        %v2227 = vsel %vm2197, %v2177, %v1655
        %v2228 = vsel %vm2197, %v2178, %v1657
        %v2229 = vsel %vm2197, %v2179, %v1659
        %v2230 = vsel %vm2197, %v2180, %v1661
        %v2231 = vsel %vm2197, %v2181, %v1663
        %v2232 = vsel %vm2197, %v2182, %v1665
        %v2233 = vsel %vm2197, %v2183, %v1667
        %v2234 = vsel %vm2197, %v2184, %v1669
        %v2235 = vsel %vm2197, %v2185, %v1671
        %v2236 = vsel %vm2197, %v2186, %v1673
        %v2237 = vsel %vm2197, %v2187, %v1675
        %v2238 = vsel %vm2197, %v2188, %v1677
        %v2239 = vsel %vm2197, %v2189, %v1679
        %v2240 = vsel %vm2197, %v2190, %v1681
        %v2241 = vsel %vm2197, %v2191, %v1683
        %v2242 = vsel %vm2197, %v2192, %v1685
        %v2243 = vsel %vm2197, %v2193, %v1687
        %v2244 = vsel %vm2197, %v2194, %v1689
        %v2245 = vsel %vm2197, %v2195, %v1691
        %v2246 = vsel %vm2197, %v2196, %v1693
        %vm2247 = vcmask 261120
        %v2248 = vsel %vm2247, %v2198, %v1751
        %v2249 = vsel %vm2247, %v2199, %v1753
        %v2250 = vsel %vm2247, %v2200, %v1755
        %v2251 = vsel %vm2247, %v2201, %v1757
        %v2252 = vsel %vm2247, %v2202, %v1759
        %v2253 = vsel %vm2247, %v2203, %v1761
        %v2254 = vsel %vm2247, %v2204, %v1763
        %v2255 = vsel %vm2247, %v2205, %v1765
        %v2256 = vsel %vm2247, %v2206, %v1767
        %v2257 = vsel %vm2247, %v2207, %v1769
        %v2258 = vsel %vm2247, %v2208, %v1771
        %v2259 = vsel %vm2247, %v2209, %v1773
        %v2260 = vsel %vm2247, %v2210, %v1775
        %v2261 = vsel %vm2247, %v2211, %v1777
        %v2262 = vsel %vm2247, %v2212, %v1779
        %v2263 = vsel %vm2247, %v2213, %v1781
        %v2264 = vsel %vm2247, %v2214, %v1783
        %v2265 = vsel %vm2247, %v2215, %v1785
        %v2266 = vsel %vm2247, %v2216, %v1787
        %v2267 = vsel %vm2247, %v2217, %v1789
        %v2268 = vsel %vm2247, %v2218, %v1791
        %v2269 = vsel %vm2247, %v2219, %v1793
        %v2270 = vsel %vm2247, %v2220, %v1795
        %v2271 = vsel %vm2247, %v2221, %v1797
        %v2272 = vsel %vm2247, %v2222, %v1799
        %v2273 = vsel %vm2247, %v2223, %v1801
        %v2274 = vsel %vm2247, %v2224, %v1803
        %v2275 = vsel %vm2247, %v2225, %v1805
        %v2276 = vsel %vm2247, %v2226, %v1807
        %v2277 = vsel %vm2247, %v2227, %v1809
        %v2278 = vsel %vm2247, %v2228, %v1811
        %v2279 = vsel %vm2247, %v2229, %v1813
        %v2280 = vsel %vm2247, %v2230, %v1815
        %v2281 = vsel %vm2247, %v2231, %v1817
        %v2282 = vsel %vm2247, %v2232, %v1819
        %v2283 = vsel %vm2247, %v2233, %v1821
        %v2284 = vsel %vm2247, %v2234, %v1823
        %v2285 = vsel %vm2247, %v2235, %v1825
        %v2286 = vsel %vm2247, %v2236, %v1827
        %v2287 = vsel %vm2247, %v2237, %v1829
        %v2288 = vsel %vm2247, %v2238, %v1831
        %v2289 = vsel %vm2247, %v2239, %v1833
        %v2290 = vsel %vm2247, %v2240, %v1835
        %v2291 = vsel %vm2247, %v2241, %v1837
        %v2292 = vsel %vm2247, %v2242, %v1839
        %v2293 = vsel %vm2247, %v2243, %v1841
        %v2294 = vsel %vm2247, %v2244, %v1843
        %v2295 = vsel %vm2247, %v2245, %v1845
        %v2296 = vsel %vm2247, %v2246, %v1847
        %v2297 = vmul.f32 %v2248, 0.003921569
        %v2298 = vmul.f32 %v2249, 0.003921569
        %v2299 = vmul.f32 %v2250, 0.003921569
        %v2300 = vmul.f32 %v2251, 0.003921569
        %v2301 = vmul.f32 %v2252, 0.003921569
        %v2302 = vmul.f32 %v2253, 0.003921569
        %v2303 = vmul.f32 %v2254, 0.003921569
        %v2304 = vmul.f32 %v2255, 0.003921569
        %v2305 = vmul.f32 %v2256, 0.003921569
        %v2306 = vmul.f32 %v2257, 0.003921569
        %v2307 = vmul.f32 %v2258, 0.003921569
        %v2308 = vmul.f32 %v2259, 0.003921569
        %v2309 = vmul.f32 %v2260, 0.003921569
        %v2310 = vmul.f32 %v2261, 0.003921569
        %v2311 = vmul.f32 %v2262, 0.003921569
        %v2312 = vmul.f32 %v2263, 0.003921569
        %v2313 = vmul.f32 %v2264, 0.003921569
        %v2314 = vmul.f32 %v2265, 0.003921569
        %v2315 = vmul.f32 %v2266, 0.003921569
        %v2316 = vmul.f32 %v2267, 0.003921569
        %v2317 = vmul.f32 %v2268, 0.003921569
        %v2318 = vmul.f32 %v2269, 0.003921569
        %v2319 = vmul.f32 %v2270, 0.003921569
        %v2320 = vmul.f32 %v2271, 0.003921569
        %v2321 = vmul.f32 %v2272, 0.003921569
        %v2322 = vmul.f32 %v2273, 0.003921569
        %v2323 = vmul.f32 %v2274, 0.003921569
        %v2324 = vmul.f32 %v2275, 0.003921569
        %v2325 = vmul.f32 %v2276, 0.003921569
        %v2326 = vmul.f32 %v2277, 0.003921569
        %v2327 = vmul.f32 %v2278, 0.003921569
        %v2328 = vmul.f32 %v2279, 0.003921569
        %v2329 = vmul.f32 %v2280, 0.003921569
        %v2330 = vmul.f32 %v2281, 0.003921569
        %v2331 = vmul.f32 %v2282, 0.003921569
        %v2332 = vmul.f32 %v2283, 0.003921569
        %v2333 = vmul.f32 %v2284, 0.003921569
        %v2334 = vmul.f32 %v2285, 0.003921569
        %v2335 = vmul.f32 %v2286, 0.003921569
        %v2336 = vmul.f32 %v2287, 0.003921569
        %v2337 = vmul.f32 %v2288, 0.003921569
        %v2338 = vmul.f32 %v2289, 0.003921569
        %v2339 = vmul.f32 %v2290, 0.003921569
        %v2340 = vmul.f32 %v2291, 0.003921569
        %v2341 = vmul.f32 %v2292, 0.003921569
        %v2342 = vmul.f32 %v2293, 0.003921569
        %v2343 = vmul.f32 %v2294, 0.003921569
        %v2344 = vmul.f32 %v2295, 0.003921569
        %v2345 = vmul.f32 %v2296, 0.003921569
        %v2346 = vld [vmem:[%s1] sm:$0xff]
        %v2347 = vld [vmem:[%s1 + $0x8] sm:$0xff]
        %v2348 = vld [vmem:[%s1 + $0x10] sm:$0xff]
        %v2349 = vld [vmem:[%s1 + $0x18] sm:$0xff]
        %v2350 = vld [vmem:[%s1 + $0x20] sm:$0xf]
        %v2351 = vld [vmem:[#allocation2] sm:$0x1]
        %v2353 = vlaneseq
        %v2354 = vshrl.u32 %v2353, 7
        %v2355 = vsub.s32 0, %v2354
        %v2356 = vrot.slane %v2351, %v2355
        %vm2407 = vcmask 1040384
        %v2408 = vrot.slane %v2297, 7
        %v2409 = vrot.slane %v2298, 7
        %v2410 = vsel %vm2407, %v2408, %v2409
        %v2411 = vrot.slane %v2299, 7
        %v2412 = vsel %vm2407, %v2409, %v2411
        %v2413 = vrot.slane %v2300, 7
        %v2414 = vsel %vm2407, %v2411, %v2413
        %v2415 = vrot.slane %v2301, 7
        %v2416 = vsel %vm2407, %v2413, %v2415
        %v2417 = vrot.slane %v2302, 7
        %v2418 = vsel %vm2407, %v2415, %v2417
        %v2419 = vrot.slane %v2303, 7
        %v2420 = vsel %vm2407, %v2417, %v2419
        %v2421 = vrot.slane %v2304, 7
        %v2422 = vsel %vm2407, %v2419, %v2421
        %v2423 = vrot.slane %v2305, 7
        %v2424 = vsel %vm2407, %v2421, %v2423
        %v2425 = vrot.slane %v2306, 7
        %v2426 = vsel %vm2407, %v2423, %v2425
        %v2427 = vrot.slane %v2307, 7
        %v2428 = vsel %vm2407, %v2425, %v2427
        %v2429 = vrot.slane %v2308, 7
        %v2430 = vsel %vm2407, %v2427, %v2429
        %v2431 = vrot.slane %v2309, 7
        %v2432 = vsel %vm2407, %v2429, %v2431
        %v2433 = vrot.slane %v2310, 7
        %v2434 = vsel %vm2407, %v2431, %v2433
        %v2435 = vrot.slane %v2311, 7
        %v2436 = vsel %vm2407, %v2433, %v2435
        %v2437 = vrot.slane %v2312, 7
        %v2438 = vsel %vm2407, %v2435, %v2437
        %v2439 = vrot.slane %v2313, 7
        %v2440 = vsel %vm2407, %v2437, %v2439
        %v2441 = vrot.slane %v2314, 7
        %v2442 = vsel %vm2407, %v2439, %v2441
        %v2443 = vrot.slane %v2315, 7
        %v2444 = vsel %vm2407, %v2441, %v2443
        %v2445 = vrot.slane %v2316, 7
        %v2446 = vsel %vm2407, %v2443, %v2445
        %v2447 = vrot.slane %v2317, 7
        %v2448 = vsel %vm2407, %v2445, %v2447
        %v2449 = vrot.slane %v2318, 7
        %v2450 = vsel %vm2407, %v2447, %v2449
        %v2451 = vrot.slane %v2319, 7
        %v2452 = vsel %vm2407, %v2449, %v2451
        %v2453 = vrot.slane %v2320, 7
        %v2454 = vsel %vm2407, %v2451, %v2453
        %v2455 = vrot.slane %v2321, 7
        %v2456 = vsel %vm2407, %v2453, %v2455
        %v2457 = vrot.slane %v2322, 7
        %v2458 = vsel %vm2407, %v2455, %v2457
        %v2459 = vrot.slane %v2323, 7
        %v2460 = vsel %vm2407, %v2457, %v2459
        %v2461 = vrot.slane %v2324, 7
        %v2462 = vsel %vm2407, %v2459, %v2461
        %v2463 = vrot.slane %v2325, 7
        %v2464 = vsel %vm2407, %v2461, %v2463
        %v2465 = vrot.slane %v2326, 7
        %v2466 = vsel %vm2407, %v2463, %v2465
        %v2467 = vrot.slane %v2327, 7
        %v2468 = vsel %vm2407, %v2465, %v2467
        %v2469 = vrot.slane %v2328, 7
        %v2470 = vsel %vm2407, %v2467, %v2469
        %v2471 = vrot.slane %v2329, 7
        %v2472 = vsel %vm2407, %v2469, %v2471
        %v2473 = vrot.slane %v2330, 7
        %v2474 = vsel %vm2407, %v2471, %v2473
        %v2475 = vrot.slane %v2331, 7
        %v2476 = vsel %vm2407, %v2473, %v2475
        %v2477 = vrot.slane %v2332, 7
        %v2478 = vsel %vm2407, %v2475, %v2477
        %v2479 = vrot.slane %v2333, 7
        %v2480 = vsel %vm2407, %v2477, %v2479
        %v2481 = vrot.slane %v2334, 7
        %v2482 = vsel %vm2407, %v2479, %v2481
        %v2483 = vrot.slane %v2335, 7
        %v2484 = vsel %vm2407, %v2481, %v2483
        %v2485 = vrot.slane %v2336, 7
        %v2486 = vsel %vm2407, %v2483, %v2485
        %v2487 = vrot.slane %v2337, 7
        %v2488 = vsel %vm2407, %v2485, %v2487
        %v2489 = vrot.slane %v2338, 7
        %v2490 = vsel %vm2407, %v2487, %v2489
        %v2491 = vrot.slane %v2339, 7
        %v2492 = vsel %vm2407, %v2489, %v2491
        %v2493 = vrot.slane %v2340, 7
        %v2494 = vsel %vm2407, %v2491, %v2493
        %v2495 = vrot.slane %v2341, 7
        %v2496 = vsel %vm2407, %v2493, %v2495
        %v2497 = vrot.slane %v2342, 7
        %v2498 = vsel %vm2407, %v2495, %v2497
        %v2499 = vrot.slane %v2343, 7
        %v2500 = vsel %vm2407, %v2497, %v2499
        %v2501 = vrot.slane %v2344, 7
        %v2502 = vsel %vm2407, %v2499, %v2501
        %v2503 = vrot.slane %v2345, 7
        %v2504 = vsel %vm2407, %v2501, %v2503
        %vm2505 = vcmask 293888
        %v2506 = vsel %vm2505, %v2410, 0
        %v2508 = vsel %vm2505, %v2412, 0
        %v2510 = vsel %vm2505, %v2414, 0
        %v2512 = vsel %vm2505, %v2416, 0
        %v2514 = vsel %vm2505, %v2418, 0
        %v2516 = vsel %vm2505, %v2420, 0
        %v2518 = vsel %vm2505, %v2422, 0
        %v2520 = vsel %vm2505, %v2424, 0
        %v2522 = vsel %vm2505, %v2426, 0
        %v2524 = vsel %vm2505, %v2428, 0
        %v2526 = vsel %vm2505, %v2430, 0
        %v2528 = vsel %vm2505, %v2432, 0
        %v2530 = vsel %vm2505, %v2434, 0
        %v2532 = vsel %vm2505, %v2436, 0
        %v2534 = vsel %vm2505, %v2438, 0
        %v2536 = vsel %vm2505, %v2440, 0
        %v2538 = vsel %vm2505, %v2442, 0
        %v2540 = vsel %vm2505, %v2444, 0
        %v2542 = vsel %vm2505, %v2446, 0
        %v2544 = vsel %vm2505, %v2448, 0
        %v2546 = vsel %vm2505, %v2450, 0
        %v2548 = vsel %vm2505, %v2452, 0
        %v2550 = vsel %vm2505, %v2454, 0
        %v2552 = vsel %vm2505, %v2456, 0
        %v2554 = vsel %vm2505, %v2458, 0
        %v2556 = vsel %vm2505, %v2460, 0
        %v2558 = vsel %vm2505, %v2462, 0
        %v2560 = vsel %vm2505, %v2464, 0
        %v2562 = vsel %vm2505, %v2466, 0
        %v2564 = vsel %vm2505, %v2468, 0
        %v2566 = vsel %vm2505, %v2470, 0
        %v2568 = vsel %vm2505, %v2472, 0
        %v2570 = vsel %vm2505, %v2474, 0
        %v2572 = vsel %vm2505, %v2476, 0
        %v2574 = vsel %vm2505, %v2478, 0
        %v2576 = vsel %vm2505, %v2480, 0
        %v2578 = vsel %vm2505, %v2482, 0
        %v2580 = vsel %vm2505, %v2484, 0
        %v2582 = vsel %vm2505, %v2486, 0
        %v2584 = vsel %vm2505, %v2488, 0
        %v2586 = vsel %vm2505, %v2490, 0
        %v2588 = vsel %vm2505, %v2492, 0
        %v2590 = vsel %vm2505, %v2494, 0
        %v2592 = vsel %vm2505, %v2496, 0
        %v2594 = vsel %vm2505, %v2498, 0
        %v2596 = vsel %vm2505, %v2500, 0
        %v2598 = vsel %vm2505, %v2502, 0
        %v2600 = vsel %vm2505, %v2504, 0
        %vm2602 = vcmask 1043456
        %v2604 = vsel %vm2602, %v2350, 0
        %2606 = vmatprep.subr.mxu0 0.0
        %2607 = vmatpush1.msra.mxu0 %v2346
        %2608 = vmatprep.subr.mxu0 0.0
        %2609 = vmatpush1.msra.mxu0 %v2347
        %2610 = vmatprep.subr.mxu0 0.0
        %2611 = vmatpush1.msra.mxu0 %v2348
        %2612 = vmatprep.subr.mxu0 0.0
        %2613 = vmatpush1.msra.mxu0 %v2349
        %2614 = vmatprep.subr.mxu0 0.0
        %2615 = vmatpush1.msra.mxu0 %v2604
        %2616 = vmatprep.subr.mxu0 0.0
        %2617 = vmatpush1.msra.mxu0 0.0
        %2618 = vmatprep.subr.mxu0 0.0
        %2619 = vmatpush1.msra.mxu0 0.0
        %2620 = vmatprep.subr.mxu0 0.0
        %2621 = vmatpush1.msra.mxu0 0.0
        %2622 = vmatprep.subr.mxu0 0.0
        %2623 = vmatpush1.msra.mxu0 0.0
        %2624 = vmatprep.subr.mxu0 0.0
        %2625 = vmatpush1.msra.mxu0 0.0
        %2626 = vmatprep.subr.mxu0 0.0
        %2627 = vmatpush1.msra.mxu0 0.0
        %2628 = vmatprep.subr.mxu0 0.0
        %2629 = vmatpush1.msra.mxu0 0.0
        %2630 = vmatprep.subr.mxu0 0.0
        %2631 = vmatpush1.msra.mxu0 0.0
        %2632 = vmatprep.subr.mxu0 0.0
        %2633 = vmatpush1.msra.mxu0 0.0
        %2634 = vmatprep.subr.mxu0 0.0
        %2635 = vmatpush1.msra.mxu0 0.0
        %2636 = vmatprep.subr.mxu0 0.0
        %2637 = vmatpush1.msra.mxu0 0.0
        %2638 = vmatprep.subr.mxu0 0.0
        %2639 = vmatpush1.msra.mxu0 0.0
        %2640 = vmatprep.subr.mxu0 0.0
        %2641 = vmatpush1.msra.mxu0 0.0
        %2642 = vmatprep.subr.mxu0 0.0
        %2643 = vmatpush1.msra.mxu0 0.0
        %2644 = vmatprep.subr.mxu0 0.0
        %2645 = vmatpush1.msra.mxu0 0.0
        %2646 = vmatprep.subr.mxu0 0.0
        %2647 = vmatpush1.msra.mxu0 0.0
        %2648 = vmatprep.subr.mxu0 0.0
        %2649 = vmatpush1.msra.mxu0 0.0
        %2650 = vmatprep.subr.mxu0 0.0
        %2651 = vmatpush1.msra.mxu0 0.0
        %2652 = vmatprep.subr.mxu0 0.0
        %2653 = vmatpush1.msra.mxu0 0.0
        %2654 = vmatprep.subr.mxu0 0.0
        %2655 = vmatpush1.msra.mxu0 0.0
        %2656 = vmatprep.subr.mxu0 0.0
        %2657 = vmatpush1.msra.mxu0 0.0
        %2658 = vmatprep.subr.mxu0 0.0
        %2659 = vmatpush1.msra.mxu0 0.0
        %2660 = vmatprep.subr.mxu0 0.0
        %2661 = vmatpush1.msra.mxu0 0.0
        %2662 = vmatprep.subr.mxu0 0.0
        %2663 = vmatpush1.msra.mxu0 0.0
        %2664 = vmatprep.subr.mxu0 0.0
        %2665 = vmatpush1.msra.mxu0 0.0
        %2666 = vmatprep.subr.mxu0 0.0
        %2667 = vmatpush1.msra.mxu0 0.0
        %2668 = vmatprep.subr.mxu0 0.0
        %2669 = vmatpush1.msra.mxu0 0.0
        %2670 = vmatprep.mubr.f32.mxu0 0.0
        %2671 = vmatmul.mubr.f32.gmra.mrb[0].mxu0 %v2506
        %v2672 = vpop.f32.mrb[0].mxu0
        %v2673 = vadd.f32 %v2356, %v2672
        %v2674 = vpop.f32.mrb[0].mxu0
        %2675 = vmatprep.mubr.f32.mxu0 0.0
        %2676 = vmatmul.mubr.f32.gmra.mrb[0].mxu0 %v2508
        %v2677 = vpop.f32.mrb[0].mxu0
        %v2678 = vadd.f32 %v2356, %v2677
        %v2679 = vpop.f32.mrb[0].mxu0
        %2680 = vmatprep.mubr.f32.mxu0 0.0
        %2681 = vmatmul.mubr.f32.gmra.mrb[0].mxu0 %v2510
        %v2682 = vpop.f32.mrb[0].mxu0
        %v2683 = vadd.f32 %v2356, %v2682
        %v2684 = vpop.f32.mrb[0].mxu0
        %2685 = vmatprep.mubr.f32.mxu0 0.0
        %2686 = vmatmul.mubr.f32.gmra.mrb[0].mxu0 %v2512
        %v2687 = vpop.f32.mrb[0].mxu0
        %v2688 = vadd.f32 %v2356, %v2687
        %v2689 = vpop.f32.mrb[0].mxu0
        %2690 = vmatprep.mubr.f32.mxu0 0.0
        %2691 = vmatmul.mubr.f32.gmra.mrb[0].mxu0 %v2514
        %v2692 = vpop.f32.mrb[0].mxu0
        %v2693 = vadd.f32 %v2356, %v2692
        %v2694 = vpop.f32.mrb[0].mxu0
        %2695 = vmatprep.mubr.f32.mxu0 0.0
        %2696 = vmatmul.mubr.f32.gmra.mrb[0].mxu0 %v2516
        %v2697 = vpop.f32.mrb[0].mxu0
        %v2698 = vadd.f32 %v2356, %v2697
        %v2699 = vpop.f32.mrb[0].mxu0
        %2700 = vmatprep.mubr.f32.mxu0 0.0
        %2701 = vmatmul.mubr.f32.gmra.mrb[0].mxu0 %v2518
        %v2702 = vpop.f32.mrb[0].mxu0
        %v2703 = vadd.f32 %v2356, %v2702
        %v2704 = vpop.f32.mrb[0].mxu0
        %2705 = vmatprep.mubr.f32.mxu0 0.0
        %2706 = vmatmul.mubr.f32.gmra.mrb[0].mxu0 %v2520
        %v2707 = vpop.f32.mrb[0].mxu0
        %v2708 = vadd.f32 %v2356, %v2707
        %v2709 = vpop.f32.mrb[0].mxu0
        %2710 = vmatprep.mubr.f32.mxu0 0.0
        %2711 = vmatmul.mubr.f32.gmra.mrb[0].mxu0 %v2522
        %v2712 = vpop.f32.mrb[0].mxu0
        %v2713 = vadd.f32 %v2356, %v2712
        %v2714 = vpop.f32.mrb[0].mxu0
        %2715 = vmatprep.mubr.f32.mxu0 0.0
        %2716 = vmatmul.mubr.f32.gmra.mrb[0].mxu0 %v2524
        %v2717 = vpop.f32.mrb[0].mxu0
        %v2718 = vadd.f32 %v2356, %v2717
        %v2719 = vpop.f32.mrb[0].mxu0
        %2720 = vmatprep.mubr.f32.mxu0 0.0
        %2721 = vmatmul.mubr.f32.gmra.mrb[0].mxu0 %v2526
        %v2722 = vpop.f32.mrb[0].mxu0
        %v2723 = vadd.f32 %v2356, %v2722
        %v2724 = vpop.f32.mrb[0].mxu0
        %2725 = vmatprep.mubr.f32.mxu0 0.0
        %2726 = vmatmul.mubr.f32.gmra.mrb[0].mxu0 %v2528
        %v2727 = vpop.f32.mrb[0].mxu0
        %v2728 = vadd.f32 %v2356, %v2727
        %v2729 = vpop.f32.mrb[0].mxu0
        %2730 = vmatprep.mubr.f32.mxu0 0.0
        %2731 = vmatmul.mubr.f32.gmra.mrb[0].mxu0 %v2530
        %v2732 = vpop.f32.mrb[0].mxu0
        %v2733 = vadd.f32 %v2356, %v2732
        %v2734 = vpop.f32.mrb[0].mxu0
        %2735 = vmatprep.mubr.f32.mxu0 0.0
        %2736 = vmatmul.mubr.f32.gmra.mrb[0].mxu0 %v2532
        %v2737 = vpop.f32.mrb[0].mxu0
        %v2738 = vadd.f32 %v2356, %v2737
        %v2739 = vpop.f32.mrb[0].mxu0
        %2740 = vmatprep.mubr.f32.mxu0 0.0
        %2741 = vmatmul.mubr.f32.gmra.mrb[0].mxu0 %v2534
        %v2742 = vpop.f32.mrb[0].mxu0
        %v2743 = vadd.f32 %v2356, %v2742
        %v2744 = vpop.f32.mrb[0].mxu0
        %2745 = vmatprep.mubr.f32.mxu0 0.0
        %2746 = vmatmul.mubr.f32.gmra.mrb[0].mxu0 %v2536
        %v2747 = vpop.f32.mrb[0].mxu0
        %v2748 = vadd.f32 %v2356, %v2747
        %v2749 = vpop.f32.mrb[0].mxu0
        %2750 = vmatprep.mubr.f32.mxu0 0.0
        %2751 = vmatmul.mubr.f32.gmra.mrb[0].mxu0 %v2538
        %v2752 = vpop.f32.mrb[0].mxu0
        %v2753 = vadd.f32 %v2356, %v2752
        %v2754 = vpop.f32.mrb[0].mxu0
        %2755 = vmatprep.mubr.f32.mxu0 0.0
        %2756 = vmatmul.mubr.f32.gmra.mrb[0].mxu0 %v2540
        %v2757 = vpop.f32.mrb[0].mxu0
        %v2758 = vadd.f32 %v2356, %v2757
        %v2759 = vpop.f32.mrb[0].mxu0
        %2760 = vmatprep.mubr.f32.mxu0 0.0
        %2761 = vmatmul.mubr.f32.gmra.mrb[0].mxu0 %v2542
        %v2762 = vpop.f32.mrb[0].mxu0
        %v2763 = vadd.f32 %v2356, %v2762
        %v2764 = vpop.f32.mrb[0].mxu0
        %2765 = vmatprep.mubr.f32.mxu0 0.0
        %2766 = vmatmul.mubr.f32.gmra.mrb[0].mxu0 %v2544
        %v2767 = vpop.f32.mrb[0].mxu0
        %v2768 = vadd.f32 %v2356, %v2767
        %v2769 = vpop.f32.mrb[0].mxu0
        %2770 = vmatprep.mubr.f32.mxu0 0.0
        %2771 = vmatmul.mubr.f32.gmra.mrb[0].mxu0 %v2546
        %v2772 = vpop.f32.mrb[0].mxu0
        %v2773 = vadd.f32 %v2356, %v2772
        %v2774 = vpop.f32.mrb[0].mxu0
        %2775 = vmatprep.mubr.f32.mxu0 0.0
        %2776 = vmatmul.mubr.f32.gmra.mrb[0].mxu0 %v2548
        %v2777 = vpop.f32.mrb[0].mxu0
        %v2778 = vadd.f32 %v2356, %v2777
        %v2779 = vpop.f32.mrb[0].mxu0
        %2780 = vmatprep.mubr.f32.mxu0 0.0
        %2781 = vmatmul.mubr.f32.gmra.mrb[0].mxu0 %v2550
        %v2782 = vpop.f32.mrb[0].mxu0
        %v2783 = vadd.f32 %v2356, %v2782
        %v2784 = vpop.f32.mrb[0].mxu0
        %2785 = vmatprep.mubr.f32.mxu0 0.0
        %2786 = vmatmul.mubr.f32.gmra.mrb[0].mxu0 %v2552
        %v2787 = vpop.f32.mrb[0].mxu0
        %v2788 = vadd.f32 %v2356, %v2787
        %v2789 = vpop.f32.mrb[0].mxu0
        %2790 = vmatprep.mubr.f32.mxu0 0.0
        %2791 = vmatmul.mubr.f32.gmra.mrb[0].mxu0 %v2554
        %v2792 = vpop.f32.mrb[0].mxu0
        %v2793 = vadd.f32 %v2356, %v2792
        %v2794 = vpop.f32.mrb[0].mxu0
        %2795 = vmatprep.mubr.f32.mxu0 0.0
        %2796 = vmatmul.mubr.f32.gmra.mrb[0].mxu0 %v2556
        %v2797 = vpop.f32.mrb[0].mxu0
        %v2798 = vadd.f32 %v2356, %v2797
        %v2799 = vpop.f32.mrb[0].mxu0
        %2800 = vmatprep.mubr.f32.mxu0 0.0
        %2801 = vmatmul.mubr.f32.gmra.mrb[0].mxu0 %v2558
        %v2802 = vpop.f32.mrb[0].mxu0
        %v2803 = vadd.f32 %v2356, %v2802
        %v2804 = vpop.f32.mrb[0].mxu0
        %2805 = vmatprep.mubr.f32.mxu0 0.0
        %2806 = vmatmul.mubr.f32.gmra.mrb[0].mxu0 %v2560
        %v2807 = vpop.f32.mrb[0].mxu0
        %v2808 = vadd.f32 %v2356, %v2807
        %v2809 = vpop.f32.mrb[0].mxu0
        %2810 = vmatprep.mubr.f32.mxu0 0.0
        %2811 = vmatmul.mubr.f32.gmra.mrb[0].mxu0 %v2562
        %v2812 = vpop.f32.mrb[0].mxu0
        %v2813 = vadd.f32 %v2356, %v2812
        %v2814 = vpop.f32.mrb[0].mxu0
        %2815 = vmatprep.mubr.f32.mxu0 0.0
        %2816 = vmatmul.mubr.f32.gmra.mrb[0].mxu0 %v2564
        %v2817 = vpop.f32.mrb[0].mxu0
        %v2818 = vadd.f32 %v2356, %v2817
        %v2819 = vpop.f32.mrb[0].mxu0
        %2820 = vmatprep.mubr.f32.mxu0 0.0
        %2821 = vmatmul.mubr.f32.gmra.mrb[0].mxu0 %v2566
        %v2822 = vpop.f32.mrb[0].mxu0
        %v2823 = vadd.f32 %v2356, %v2822
        %v2824 = vpop.f32.mrb[0].mxu0
        %2825 = vmatprep.mubr.f32.mxu0 0.0
        %2826 = vmatmul.mubr.f32.gmra.mrb[0].mxu0 %v2568
        %v2827 = vpop.f32.mrb[0].mxu0
        %v2828 = vadd.f32 %v2356, %v2827
        %v2829 = vpop.f32.mrb[0].mxu0
        %2830 = vmatprep.mubr.f32.mxu0 0.0
        %2831 = vmatmul.mubr.f32.gmra.mrb[0].mxu0 %v2570
        %v2832 = vpop.f32.mrb[0].mxu0
        %v2833 = vadd.f32 %v2356, %v2832
        %v2834 = vpop.f32.mrb[0].mxu0
        %2835 = vmatprep.mubr.f32.mxu0 0.0
        %2836 = vmatmul.mubr.f32.gmra.mrb[0].mxu0 %v2572
        %v2837 = vpop.f32.mrb[0].mxu0
        %v2838 = vadd.f32 %v2356, %v2837
        %v2839 = vpop.f32.mrb[0].mxu0
        %2840 = vmatprep.mubr.f32.mxu0 0.0
        %2841 = vmatmul.mubr.f32.gmra.mrb[0].mxu0 %v2574
        %v2842 = vpop.f32.mrb[0].mxu0
        %v2843 = vadd.f32 %v2356, %v2842
        %v2844 = vpop.f32.mrb[0].mxu0
        %2845 = vmatprep.mubr.f32.mxu0 0.0
        %2846 = vmatmul.mubr.f32.gmra.mrb[0].mxu0 %v2576
        %v2847 = vpop.f32.mrb[0].mxu0
        %v2848 = vadd.f32 %v2356, %v2847
        %v2849 = vpop.f32.mrb[0].mxu0
        %2850 = vmatprep.mubr.f32.mxu0 0.0
        %2851 = vmatmul.mubr.f32.gmra.mrb[0].mxu0 %v2578
        %v2852 = vpop.f32.mrb[0].mxu0
        %v2853 = vadd.f32 %v2356, %v2852
        %v2854 = vpop.f32.mrb[0].mxu0
        %2855 = vmatprep.mubr.f32.mxu0 0.0
        %2856 = vmatmul.mubr.f32.gmra.mrb[0].mxu0 %v2580
        %v2857 = vpop.f32.mrb[0].mxu0
        %v2858 = vadd.f32 %v2356, %v2857
        %v2859 = vpop.f32.mrb[0].mxu0
        %2860 = vmatprep.mubr.f32.mxu0 0.0
        %2861 = vmatmul.mubr.f32.gmra.mrb[0].mxu0 %v2582
        %v2862 = vpop.f32.mrb[0].mxu0
        %v2863 = vadd.f32 %v2356, %v2862
        %v2864 = vpop.f32.mrb[0].mxu0
        %2865 = vmatprep.mubr.f32.mxu0 0.0
        %2866 = vmatmul.mubr.f32.gmra.mrb[0].mxu0 %v2584
        %v2867 = vpop.f32.mrb[0].mxu0
        %v2868 = vadd.f32 %v2356, %v2867
        %v2869 = vpop.f32.mrb[0].mxu0
        %2870 = vmatprep.mubr.f32.mxu0 0.0
        %2871 = vmatmul.mubr.f32.gmra.mrb[0].mxu0 %v2586
        %v2872 = vpop.f32.mrb[0].mxu0
        %v2873 = vadd.f32 %v2356, %v2872
        %v2874 = vpop.f32.mrb[0].mxu0
        %2875 = vmatprep.mubr.f32.mxu0 0.0
        %2876 = vmatmul.mubr.f32.gmra.mrb[0].mxu0 %v2588
        %v2877 = vpop.f32.mrb[0].mxu0
        %v2878 = vadd.f32 %v2356, %v2877
        %v2879 = vpop.f32.mrb[0].mxu0
        %2880 = vmatprep.mubr.f32.mxu0 0.0
        %2881 = vmatmul.mubr.f32.gmra.mrb[0].mxu0 %v2590
        %v2882 = vpop.f32.mrb[0].mxu0
        %v2883 = vadd.f32 %v2356, %v2882
        %v2884 = vpop.f32.mrb[0].mxu0
        %2885 = vmatprep.mubr.f32.mxu0 0.0
        %2886 = vmatmul.mubr.f32.gmra.mrb[0].mxu0 %v2592
        %v2887 = vpop.f32.mrb[0].mxu0
        %v2888 = vadd.f32 %v2356, %v2887
        %v2889 = vpop.f32.mrb[0].mxu0
        %2890 = vmatprep.mubr.f32.mxu0 0.0
        %2891 = vmatmul.mubr.f32.gmra.mrb[0].mxu0 %v2594
        %v2892 = vpop.f32.mrb[0].mxu0
        %v2893 = vadd.f32 %v2356, %v2892
        %v2894 = vpop.f32.mrb[0].mxu0
        %2895 = vmatprep.mubr.f32.mxu0 0.0
        %2896 = vmatmul.mubr.f32.gmra.mrb[0].mxu0 %v2596
        %v2897 = vpop.f32.mrb[0].mxu0
        %v2898 = vadd.f32 %v2356, %v2897
        %v2899 = vpop.f32.mrb[0].mxu0
        %2900 = vmatprep.mubr.f32.mxu0 0.0
        %2901 = vmatmul.mubr.f32.gmra.mrb[0].mxu0 %v2598
        %v2902 = vpop.f32.mrb[0].mxu0
        %v2903 = vadd.f32 %v2356, %v2902
        %v2904 = vpop.f32.mrb[0].mxu0
        %2905 = vmatprep.mubr.f32.mxu0 0.0
        %2906 = vmatmul.mubr.f32.gmra.mrb[0].mxu0 %v2600
        %v2907 = vpop.f32.mrb[0].mxu0
        %v2908 = vadd.f32 %v2356, %v2907
        %v2909 = vpop.f32.mrb[0].mxu0
        %2910 = vdwg.mxu0
        %v2911 = vmax.f32 %v2673, 0.0
        %v2912 = vmax.f32 %v2678, 0.0
        %v2913 = vmax.f32 %v2683, 0.0
        %v2914 = vmax.f32 %v2688, 0.0
        %v2915 = vmax.f32 %v2693, 0.0
        %v2916 = vmax.f32 %v2698, 0.0
        %v2917 = vmax.f32 %v2703, 0.0
        %v2918 = vmax.f32 %v2708, 0.0
        %v2919 = vmax.f32 %v2713, 0.0
        %v2920 = vmax.f32 %v2718, 0.0
        %v2921 = vmax.f32 %v2723, 0.0
        %v2922 = vmax.f32 %v2728, 0.0
        %v2923 = vmax.f32 %v2733, 0.0
        %v2924 = vmax.f32 %v2738, 0.0
        %v2925 = vmax.f32 %v2743, 0.0
        %v2926 = vmax.f32 %v2748, 0.0
        %v2927 = vmax.f32 %v2753, 0.0
        %v2928 = vmax.f32 %v2758, 0.0
        %v2929 = vmax.f32 %v2763, 0.0
        %v2930 = vmax.f32 %v2768, 0.0
        %v2931 = vmax.f32 %v2773, 0.0
        %v2932 = vmax.f32 %v2778, 0.0
        %v2933 = vmax.f32 %v2783, 0.0
        %v2934 = vmax.f32 %v2788, 0.0
        %v2935 = vmax.f32 %v2793, 0.0
        %v2936 = vmax.f32 %v2798, 0.0
        %v2937 = vmax.f32 %v2803, 0.0
        %v2938 = vmax.f32 %v2808, 0.0
        %v2939 = vmax.f32 %v2813, 0.0
        %v2940 = vmax.f32 %v2818, 0.0
        %v2941 = vmax.f32 %v2823, 0.0
        %v2942 = vmax.f32 %v2828, 0.0
        %v2943 = vmax.f32 %v2833, 0.0
        %v2944 = vmax.f32 %v2838, 0.0
        %v2945 = vmax.f32 %v2843, 0.0
        %v2946 = vmax.f32 %v2848, 0.0
        %v2947 = vmax.f32 %v2853, 0.0
        %v2948 = vmax.f32 %v2858, 0.0
        %v2949 = vmax.f32 %v2863, 0.0
        %v2950 = vmax.f32 %v2868, 0.0
        %v2951 = vmax.f32 %v2873, 0.0
        %v2952 = vmax.f32 %v2878, 0.0
        %v2953 = vmax.f32 %v2883, 0.0
        %v2954 = vmax.f32 %v2888, 0.0
        %v2955 = vmax.f32 %v2893, 0.0
        %v2956 = vmax.f32 %v2898, 0.0
        %v2957 = vmax.f32 %v2903, 0.0
        %v2958 = vmax.f32 %v2908, 0.0
        %2960 = vset.pattern.permute.xlu0 0
        %2961 = vperm.xlu0 %2960, %v344
        %v2962 = vpop.permute.xlu0 %2961
        %2965 = vset.pattern.permute.xlu0 0
        %2966 = vperm.xlu0 %2965, %v345
        %v2967 = vpop.permute.xlu0 %2966
        %2970 = vset.pattern.permute.xlu0 0
        %2971 = vperm.xlu0 %2970, %v346
        %v2972 = vpop.permute.xlu0 %2971
        %2975 = vset.pattern.permute.xlu0 0
        %2976 = vperm.xlu0 %2975, %v347
        %v2977 = vpop.permute.xlu0 %2976
        %2980 = vset.pattern.permute.xlu0 0
        %2981 = vperm.xlu0 %2980, %v348
        %v2982 = vpop.permute.xlu0 %2981
        %2985 = vset.pattern.permute.xlu0 0
        %2986 = vperm.xlu0 %2985, %v349
        %v2987 = vpop.permute.xlu0 %2986
        %2990 = vset.pattern.permute.xlu0 0
        %2991 = vperm.xlu0 %2990, %v350
        %v2992 = vpop.permute.xlu0 %2991
        %2995 = vset.pattern.permute.xlu0 0
        %2996 = vperm.xlu0 %2995, %v351
        %v2997 = vpop.permute.xlu0 %2996
        %3000 = vset.pattern.permute.xlu0 0
        %3001 = vperm.xlu0 %3000, %v352
        %v3002 = vpop.permute.xlu0 %3001
        %3005 = vset.pattern.permute.xlu0 0
        %3006 = vperm.xlu0 %3005, %v353
        %v3007 = vpop.permute.xlu0 %3006
        %3010 = vset.pattern.permute.xlu0 0
        %3011 = vperm.xlu0 %3010, %v354
        %v3012 = vpop.permute.xlu0 %3011
        %3015 = vset.pattern.permute.xlu0 0
        %3016 = vperm.xlu0 %3015, %v355
        %v3017 = vpop.permute.xlu0 %3016
        %3020 = vset.pattern.permute.xlu0 0
        %3021 = vperm.xlu0 %3020, %v356
        %v3022 = vpop.permute.xlu0 %3021
        %3025 = vset.pattern.permute.xlu0 0
        %3026 = vperm.xlu0 %3025, %v357
        %v3027 = vpop.permute.xlu0 %3026
        %3030 = vset.pattern.permute.xlu0 0
        %3031 = vperm.xlu0 %3030, %v358
        %v3032 = vpop.permute.xlu0 %3031
        %3035 = vset.pattern.permute.xlu0 0
        %3036 = vperm.xlu0 %3035, %v359
        %v3037 = vpop.permute.xlu0 %3036
        %3040 = vset.pattern.permute.xlu0 0
        %3041 = vperm.xlu0 %3040, %v360
        %v3042 = vpop.permute.xlu0 %3041
        %3045 = vset.pattern.permute.xlu0 0
        %3046 = vperm.xlu0 %3045, %v361
        %v3047 = vpop.permute.xlu0 %3046
        %3050 = vset.pattern.permute.xlu0 0
        %3051 = vperm.xlu0 %3050, %v362
        %v3052 = vpop.permute.xlu0 %3051
        %3055 = vset.pattern.permute.xlu0 0
        %3056 = vperm.xlu0 %3055, %v363
        %v3057 = vpop.permute.xlu0 %3056
        %3060 = vset.pattern.permute.xlu0 0
        %3061 = vperm.xlu0 %3060, %v364
        %v3062 = vpop.permute.xlu0 %3061
        %3065 = vset.pattern.permute.xlu0 0
        %3066 = vperm.xlu0 %3065, %v365
        %v3067 = vpop.permute.xlu0 %3066
        %3070 = vset.pattern.permute.xlu0 0
        %3071 = vperm.xlu0 %3070, %v366
        %v3072 = vpop.permute.xlu0 %3071
        %3075 = vset.pattern.permute.xlu0 0
        %3076 = vperm.xlu0 %3075, %v367
        %v3077 = vpop.permute.xlu0 %3076
        %3080 = vset.pattern.permute.xlu0 0
        %3081 = vperm.xlu0 %3080, %v368
        %v3082 = vpop.permute.xlu0 %3081
        %3085 = vset.pattern.permute.xlu0 0
        %3086 = vperm.xlu0 %3085, %v369
        %v3087 = vpop.permute.xlu0 %3086
        %3090 = vset.pattern.permute.xlu0 0
        %3091 = vperm.xlu0 %3090, %v370
        %v3092 = vpop.permute.xlu0 %3091
        %3095 = vset.pattern.permute.xlu0 0
        %3096 = vperm.xlu0 %3095, %v371
        %v3097 = vpop.permute.xlu0 %3096
        %3100 = vset.pattern.permute.xlu0 0
        %3101 = vperm.xlu0 %3100, %v372
        %v3102 = vpop.permute.xlu0 %3101
        %3105 = vset.pattern.permute.xlu0 0
        %3106 = vperm.xlu0 %3105, %v373
        %v3107 = vpop.permute.xlu0 %3106
        %3110 = vset.pattern.permute.xlu0 0
        %3111 = vperm.xlu0 %3110, %v374
        %v3112 = vpop.permute.xlu0 %3111
        %3115 = vset.pattern.permute.xlu0 0
        %3116 = vperm.xlu0 %3115, %v375
        %v3117 = vpop.permute.xlu0 %3116
        %3120 = vset.pattern.permute.xlu0 0
        %3121 = vperm.xlu0 %3120, %v376
        %v3122 = vpop.permute.xlu0 %3121
        %3125 = vset.pattern.permute.xlu0 0
        %3126 = vperm.xlu0 %3125, %v377
        %v3127 = vpop.permute.xlu0 %3126
        %3130 = vset.pattern.permute.xlu0 0
        %3131 = vperm.xlu0 %3130, %v378
        %v3132 = vpop.permute.xlu0 %3131
        %3135 = vset.pattern.permute.xlu0 0
        %3136 = vperm.xlu0 %3135, %v379
        %v3137 = vpop.permute.xlu0 %3136
        %3140 = vset.pattern.permute.xlu0 0
        %3141 = vperm.xlu0 %3140, %v380
        %v3142 = vpop.permute.xlu0 %3141
        %3145 = vset.pattern.permute.xlu0 0
        %3146 = vperm.xlu0 %3145, %v381
        %v3147 = vpop.permute.xlu0 %3146
        %3150 = vset.pattern.permute.xlu0 0
        %3151 = vperm.xlu0 %3150, %v382
        %v3152 = vpop.permute.xlu0 %3151
        %3155 = vset.pattern.permute.xlu0 0
        %3156 = vperm.xlu0 %3155, %v383
        %v3157 = vpop.permute.xlu0 %3156
        %3160 = vset.pattern.permute.xlu0 0
        %3161 = vperm.xlu0 %3160, %v384
        %v3162 = vpop.permute.xlu0 %3161
        %3165 = vset.pattern.permute.xlu0 0
        %3166 = vperm.xlu0 %3165, %v385
        %v3167 = vpop.permute.xlu0 %3166
        %3170 = vset.pattern.permute.xlu0 0
        %3171 = vperm.xlu0 %3170, %v386
        %v3172 = vpop.permute.xlu0 %3171
        %3175 = vset.pattern.permute.xlu0 0
        %3176 = vperm.xlu0 %3175, %v387
        %v3177 = vpop.permute.xlu0 %3176
        %3180 = vset.pattern.permute.xlu0 0
        %3181 = vperm.xlu0 %3180, %v388
        %v3182 = vpop.permute.xlu0 %3181
        %3185 = vset.pattern.permute.xlu0 0
        %3186 = vperm.xlu0 %3185, %v389
        %v3187 = vpop.permute.xlu0 %3186
        %3190 = vset.pattern.permute.xlu0 0
        %3191 = vperm.xlu0 %3190, %v390
        %v3192 = vpop.permute.xlu0 %3191
        %3195 = vset.pattern.permute.xlu0 0
        %3196 = vperm.xlu0 %3195, %v391
        %v3197 = vpop.permute.xlu0 %3196
        %v3199 = vmul.f32 %v2911, %v2962
        %v3200 = vmul.f32 %v2912, %v2967
        %v3201 = vmul.f32 %v2913, %v2972
        %v3202 = vmul.f32 %v2914, %v2977
        %v3203 = vmul.f32 %v2915, %v2982
        %v3204 = vmul.f32 %v2916, %v2987
        %v3205 = vmul.f32 %v2917, %v2992
        %v3206 = vmul.f32 %v2918, %v2997
        %v3207 = vmul.f32 %v2919, %v3002
        %v3208 = vmul.f32 %v2920, %v3007
        %v3209 = vmul.f32 %v2921, %v3012
        %v3210 = vmul.f32 %v2922, %v3017
        %v3211 = vmul.f32 %v2923, %v3022
        %v3212 = vmul.f32 %v2924, %v3027
        %v3213 = vmul.f32 %v2925, %v3032
        %v3214 = vmul.f32 %v2926, %v3037
        %v3215 = vmul.f32 %v2927, %v3042
        %v3216 = vmul.f32 %v2928, %v3047
        %v3217 = vmul.f32 %v2929, %v3052
        %v3218 = vmul.f32 %v2930, %v3057
        %v3219 = vmul.f32 %v2931, %v3062
        %v3220 = vmul.f32 %v2932, %v3067
        %v3221 = vmul.f32 %v2933, %v3072
        %v3222 = vmul.f32 %v2934, %v3077
        %v3223 = vmul.f32 %v2935, %v3082
        %v3224 = vmul.f32 %v2936, %v3087
        %v3225 = vmul.f32 %v2937, %v3092
        %v3226 = vmul.f32 %v2938, %v3097
        %v3227 = vmul.f32 %v2939, %v3102
        %v3228 = vmul.f32 %v2940, %v3107
        %v3229 = vmul.f32 %v2941, %v3112
        %v3230 = vmul.f32 %v2942, %v3117
        %v3231 = vmul.f32 %v2943, %v3122
        %v3232 = vmul.f32 %v2944, %v3127
        %v3233 = vmul.f32 %v2945, %v3132
        %v3234 = vmul.f32 %v2946, %v3137
        %v3235 = vmul.f32 %v2947, %v3142
        %v3236 = vmul.f32 %v2948, %v3147
        %v3237 = vmul.f32 %v2949, %v3152
        %v3238 = vmul.f32 %v2950, %v3157
        %v3239 = vmul.f32 %v2951, %v3162
        %v3240 = vmul.f32 %v2952, %v3167
        %v3241 = vmul.f32 %v2953, %v3172
        %v3242 = vmul.f32 %v2954, %v3177
        %v3243 = vmul.f32 %v2955, %v3182
        %v3244 = vmul.f32 %v2956, %v3187
        %v3245 = vmul.f32 %v2957, %v3192
        %v3246 = vmul.f32 %v2958, %v3197
        %v3293 = vrot.slane 0.0, 1
        %v3294 = vsel %vm496, %v3293, %v3293
        %v3295 = vrot.slane %v3199, 1
        %v3296 = vsel %vm496, %v3293, %v3295
        %v3297 = vrot.slane %v3200, 1
        %v3298 = vsel %vm496, %v3295, %v3297
        %v3299 = vrot.slane %v3201, 1
        %v3300 = vsel %vm496, %v3297, %v3299
        %v3301 = vrot.slane %v3202, 1
        %v3302 = vsel %vm496, %v3299, %v3301
        %v3303 = vrot.slane %v3203, 1
        %v3304 = vsel %vm496, %v3301, %v3303
        %v3305 = vrot.slane %v3204, 1
        %v3306 = vsel %vm496, %v3303, %v3305
        %v3307 = vrot.slane %v3205, 1
        %v3308 = vsel %vm496, %v3305, %v3307
        %v3309 = vrot.slane %v3206, 1
        %v3310 = vsel %vm496, %v3307, %v3309
        %v3311 = vrot.slane %v3207, 1
        %v3312 = vsel %vm496, %v3309, %v3311
        %v3313 = vrot.slane %v3208, 1
        %v3314 = vsel %vm496, %v3311, %v3313
        %v3315 = vrot.slane %v3209, 1
        %v3316 = vsel %vm496, %v3313, %v3315
        %v3317 = vrot.slane %v3210, 1
        %v3318 = vsel %vm496, %v3315, %v3317
        %v3319 = vrot.slane %v3211, 1
        %v3320 = vsel %vm496, %v3317, %v3319
        %v3321 = vrot.slane %v3212, 1
        %v3322 = vsel %vm496, %v3319, %v3321
        %v3323 = vrot.slane %v3213, 1
        %v3324 = vsel %vm496, %v3321, %v3323
        %v3325 = vrot.slane %v3214, 1
        %v3326 = vsel %vm496, %v3323, %v3325
        %v3327 = vrot.slane %v3215, 1
        %v3328 = vsel %vm496, %v3325, %v3327
        %v3329 = vrot.slane %v3216, 1
        %v3330 = vsel %vm496, %v3327, %v3329
        %v3331 = vrot.slane %v3217, 1
        %v3332 = vsel %vm496, %v3329, %v3331
        %v3333 = vrot.slane %v3218, 1
        %v3334 = vsel %vm496, %v3331, %v3333
        %v3335 = vrot.slane %v3219, 1
        %v3336 = vsel %vm496, %v3333, %v3335
        %v3337 = vrot.slane %v3220, 1
        %v3338 = vsel %vm496, %v3335, %v3337
        %v3339 = vrot.slane %v3221, 1
        %v3340 = vsel %vm496, %v3337, %v3339
        %v3341 = vrot.slane %v3222, 1
        %v3342 = vsel %vm496, %v3339, %v3341
        %v3343 = vrot.slane %v3223, 1
        %v3344 = vsel %vm496, %v3341, %v3343
        %v3345 = vrot.slane %v3224, 1
        %v3346 = vsel %vm496, %v3343, %v3345
        %v3347 = vrot.slane %v3225, 1
        %v3348 = vsel %vm496, %v3345, %v3347
        %v3349 = vrot.slane %v3226, 1
        %v3350 = vsel %vm496, %v3347, %v3349
        %v3351 = vrot.slane %v3227, 1
        %v3352 = vsel %vm496, %v3349, %v3351
        %v3353 = vrot.slane %v3228, 1
        %v3354 = vsel %vm496, %v3351, %v3353
        %v3355 = vrot.slane %v3229, 1
        %v3356 = vsel %vm496, %v3353, %v3355
        %v3357 = vrot.slane %v3230, 1
        %v3358 = vsel %vm496, %v3355, %v3357
        %v3359 = vrot.slane %v3231, 1
        %v3360 = vsel %vm496, %v3357, %v3359
        %v3361 = vrot.slane %v3232, 1
        %v3362 = vsel %vm496, %v3359, %v3361
        %v3363 = vrot.slane %v3233, 1
        %v3364 = vsel %vm496, %v3361, %v3363
        %v3365 = vrot.slane %v3234, 1
        %v3366 = vsel %vm496, %v3363, %v3365
        %v3367 = vrot.slane %v3235, 1
        %v3368 = vsel %vm496, %v3365, %v3367
        %v3369 = vrot.slane %v3236, 1
        %v3370 = vsel %vm496, %v3367, %v3369
        %v3371 = vrot.slane %v3237, 1
        %v3372 = vsel %vm496, %v3369, %v3371
        %v3373 = vrot.slane %v3238, 1
        %v3374 = vsel %vm496, %v3371, %v3373
        %v3375 = vrot.slane %v3239, 1
        %v3376 = vsel %vm496, %v3373, %v3375
        %v3377 = vrot.slane %v3240, 1
        %v3378 = vsel %vm496, %v3375, %v3377
        %v3379 = vrot.slane %v3241, 1
        %v3380 = vsel %vm496, %v3377, %v3379
        %v3381 = vrot.slane %v3242, 1
        %v3382 = vsel %vm496, %v3379, %v3381
        %v3383 = vrot.slane %v3243, 1
        %v3384 = vsel %vm496, %v3381, %v3383
        %3385 = vrot.lane.b32.xlu0 %v3293, 16
        %v3386 = vpop.permute.xlu0 %3385
        %3387 = vrot.lane.b32.xlu0 %v3294, 16
        %v3388 = vpop.permute.xlu0 %3387
        %3389 = vrot.lane.b32.xlu0 %v3296, 16
        %v3390 = vpop.permute.xlu0 %3389
        %3391 = vrot.lane.b32.xlu0 %v3298, 16
        %v3392 = vpop.permute.xlu0 %3391
        %3393 = vrot.lane.b32.xlu0 %v3300, 16
        %v3394 = vpop.permute.xlu0 %3393
        %3395 = vrot.lane.b32.xlu0 %v3302, 16
        %v3396 = vpop.permute.xlu0 %3395
        %3397 = vrot.lane.b32.xlu0 %v3304, 16
        %v3398 = vpop.permute.xlu0 %3397
        %3399 = vrot.lane.b32.xlu0 %v3306, 16
        %v3400 = vpop.permute.xlu0 %3399
        %3401 = vrot.lane.b32.xlu0 %v3308, 16
        %v3402 = vpop.permute.xlu0 %3401
        %3403 = vrot.lane.b32.xlu0 %v3310, 16
        %v3404 = vpop.permute.xlu0 %3403
        %3405 = vrot.lane.b32.xlu0 %v3312, 16
        %v3406 = vpop.permute.xlu0 %3405
        %3407 = vrot.lane.b32.xlu0 %v3314, 16
        %v3408 = vpop.permute.xlu0 %3407
        %3409 = vrot.lane.b32.xlu0 %v3316, 16
        %v3410 = vpop.permute.xlu0 %3409
        %3411 = vrot.lane.b32.xlu0 %v3318, 16
        %v3412 = vpop.permute.xlu0 %3411
        %3413 = vrot.lane.b32.xlu0 %v3320, 16
        %v3414 = vpop.permute.xlu0 %3413
        %3415 = vrot.lane.b32.xlu0 %v3322, 16
        %v3416 = vpop.permute.xlu0 %3415
        %3417 = vrot.lane.b32.xlu0 %v3324, 16
        %v3418 = vpop.permute.xlu0 %3417
        %3419 = vrot.lane.b32.xlu0 %v3326, 16
        %v3420 = vpop.permute.xlu0 %3419
        %3421 = vrot.lane.b32.xlu0 %v3328, 16
        %v3422 = vpop.permute.xlu0 %3421
        %3423 = vrot.lane.b32.xlu0 %v3330, 16
        %v3424 = vpop.permute.xlu0 %3423
        %3425 = vrot.lane.b32.xlu0 %v3332, 16
        %v3426 = vpop.permute.xlu0 %3425
        %3427 = vrot.lane.b32.xlu0 %v3334, 16
        %v3428 = vpop.permute.xlu0 %3427
        %3429 = vrot.lane.b32.xlu0 %v3336, 16
        %v3430 = vpop.permute.xlu0 %3429
        %3431 = vrot.lane.b32.xlu0 %v3338, 16
        %v3432 = vpop.permute.xlu0 %3431
        %3433 = vrot.lane.b32.xlu0 %v3340, 16
        %v3434 = vpop.permute.xlu0 %3433
        %3435 = vrot.lane.b32.xlu0 %v3342, 16
        %v3436 = vpop.permute.xlu0 %3435
        %3437 = vrot.lane.b32.xlu0 %v3344, 16
        %v3438 = vpop.permute.xlu0 %3437
        %3439 = vrot.lane.b32.xlu0 %v3346, 16
        %v3440 = vpop.permute.xlu0 %3439
        %3441 = vrot.lane.b32.xlu0 %v3348, 16
        %v3442 = vpop.permute.xlu0 %3441
        %3443 = vrot.lane.b32.xlu0 %v3350, 16
        %v3444 = vpop.permute.xlu0 %3443
        %3445 = vrot.lane.b32.xlu0 %v3352, 16
        %v3446 = vpop.permute.xlu0 %3445
        %3447 = vrot.lane.b32.xlu0 %v3354, 16
        %v3448 = vpop.permute.xlu0 %3447
        %3449 = vrot.lane.b32.xlu0 %v3356, 16
        %v3450 = vpop.permute.xlu0 %3449
        %3451 = vrot.lane.b32.xlu0 %v3358, 16
        %v3452 = vpop.permute.xlu0 %3451
        %3453 = vrot.lane.b32.xlu0 %v3360, 16
        %v3454 = vpop.permute.xlu0 %3453
        %3455 = vrot.lane.b32.xlu0 %v3362, 16
        %v3456 = vpop.permute.xlu0 %3455
        %3457 = vrot.lane.b32.xlu0 %v3364, 16
        %v3458 = vpop.permute.xlu0 %3457
        %3459 = vrot.lane.b32.xlu0 %v3366, 16
        %v3460 = vpop.permute.xlu0 %3459
        %3461 = vrot.lane.b32.xlu0 %v3368, 16
        %v3462 = vpop.permute.xlu0 %3461
        %3463 = vrot.lane.b32.xlu0 %v3370, 16
        %v3464 = vpop.permute.xlu0 %3463
        %3465 = vrot.lane.b32.xlu0 %v3372, 16
        %v3466 = vpop.permute.xlu0 %3465
        %3467 = vrot.lane.b32.xlu0 %v3374, 16
        %v3468 = vpop.permute.xlu0 %3467
        %3469 = vrot.lane.b32.xlu0 %v3376, 16
        %v3470 = vpop.permute.xlu0 %3469
        %3471 = vrot.lane.b32.xlu0 %v3378, 16
        %v3472 = vpop.permute.xlu0 %3471
        %3473 = vrot.lane.b32.xlu0 %v3380, 16
        %v3474 = vpop.permute.xlu0 %3473
        %3475 = vrot.lane.b32.xlu0 %v3382, 16
        %v3476 = vpop.permute.xlu0 %3475
        %3477 = vrot.lane.b32.xlu0 %v3384, 16
        %v3478 = vpop.permute.xlu0 %3477
        %3479 = vrot.lane.b32.xlu0 %v3383, 16
        %v3480 = vpop.permute.xlu0 %3479
        %v3530 = vrot.slane 0.0, 2
        %v3531 = vsel %vm740, %v3530, %v3530
        %v3532 = vrot.slane %v3199, 2
        %v3533 = vsel %vm740, %v3530, %v3532
        %v3534 = vrot.slane %v3200, 2
        %v3535 = vsel %vm740, %v3532, %v3534
        %v3536 = vrot.slane %v3201, 2
        %v3537 = vsel %vm740, %v3534, %v3536
        %v3538 = vrot.slane %v3202, 2
        %v3539 = vsel %vm740, %v3536, %v3538
        %v3540 = vrot.slane %v3203, 2
        %v3541 = vsel %vm740, %v3538, %v3540
        %v3542 = vrot.slane %v3204, 2
        %v3543 = vsel %vm740, %v3540, %v3542
        %v3544 = vrot.slane %v3205, 2
        %v3545 = vsel %vm740, %v3542, %v3544
        %v3546 = vrot.slane %v3206, 2
        %v3547 = vsel %vm740, %v3544, %v3546
        %v3548 = vrot.slane %v3207, 2
        %v3549 = vsel %vm740, %v3546, %v3548
        %v3550 = vrot.slane %v3208, 2
        %v3551 = vsel %vm740, %v3548, %v3550
        %v3552 = vrot.slane %v3209, 2
        %v3553 = vsel %vm740, %v3550, %v3552
        %v3554 = vrot.slane %v3210, 2
        %v3555 = vsel %vm740, %v3552, %v3554
        %v3556 = vrot.slane %v3211, 2
        %v3557 = vsel %vm740, %v3554, %v3556
        %v3558 = vrot.slane %v3212, 2
        %v3559 = vsel %vm740, %v3556, %v3558
        %v3560 = vrot.slane %v3213, 2
        %v3561 = vsel %vm740, %v3558, %v3560
        %v3562 = vrot.slane %v3214, 2
        %v3563 = vsel %vm740, %v3560, %v3562
        %v3564 = vrot.slane %v3215, 2
        %v3565 = vsel %vm740, %v3562, %v3564
        %v3566 = vrot.slane %v3216, 2
        %v3567 = vsel %vm740, %v3564, %v3566
        %v3568 = vrot.slane %v3217, 2
        %v3569 = vsel %vm740, %v3566, %v3568
        %v3570 = vrot.slane %v3218, 2
        %v3571 = vsel %vm740, %v3568, %v3570
        %v3572 = vrot.slane %v3219, 2
        %v3573 = vsel %vm740, %v3570, %v3572
        %v3574 = vrot.slane %v3220, 2
        %v3575 = vsel %vm740, %v3572, %v3574
        %v3576 = vrot.slane %v3221, 2
        %v3577 = vsel %vm740, %v3574, %v3576
        %v3578 = vrot.slane %v3222, 2
        %v3579 = vsel %vm740, %v3576, %v3578
        %v3580 = vrot.slane %v3223, 2
        %v3581 = vsel %vm740, %v3578, %v3580
        %v3582 = vrot.slane %v3224, 2
        %v3583 = vsel %vm740, %v3580, %v3582
        %v3584 = vrot.slane %v3225, 2
        %v3585 = vsel %vm740, %v3582, %v3584
        %v3586 = vrot.slane %v3226, 2
        %v3587 = vsel %vm740, %v3584, %v3586
        %v3588 = vrot.slane %v3227, 2
        %v3589 = vsel %vm740, %v3586, %v3588
        %v3590 = vrot.slane %v3228, 2
        %v3591 = vsel %vm740, %v3588, %v3590
        %v3592 = vrot.slane %v3229, 2
        %v3593 = vsel %vm740, %v3590, %v3592
        %v3594 = vrot.slane %v3230, 2
        %v3595 = vsel %vm740, %v3592, %v3594
        %v3596 = vrot.slane %v3231, 2
        %v3597 = vsel %vm740, %v3594, %v3596
        %v3598 = vrot.slane %v3232, 2
        %v3599 = vsel %vm740, %v3596, %v3598
        %v3600 = vrot.slane %v3233, 2
        %v3601 = vsel %vm740, %v3598, %v3600
        %v3602 = vrot.slane %v3234, 2
        %v3603 = vsel %vm740, %v3600, %v3602
        %v3604 = vrot.slane %v3235, 2
        %v3605 = vsel %vm740, %v3602, %v3604
        %v3606 = vrot.slane %v3236, 2
        %v3607 = vsel %vm740, %v3604, %v3606
        %v3608 = vrot.slane %v3237, 2
        %v3609 = vsel %vm740, %v3606, %v3608
        %v3610 = vrot.slane %v3238, 2
        %v3611 = vsel %vm740, %v3608, %v3610
        %v3612 = vrot.slane %v3239, 2
        %v3613 = vsel %vm740, %v3610, %v3612
        %v3614 = vrot.slane %v3240, 2
        %v3615 = vsel %vm740, %v3612, %v3614
        %v3616 = vrot.slane %v3241, 2
        %v3617 = vsel %vm740, %v3614, %v3616
        %v3618 = vrot.slane %v3242, 2
        %v3619 = vsel %vm740, %v3616, %v3618
        %v3620 = vrot.slane %v3243, 2
        %v3621 = vsel %vm740, %v3618, %v3620
        %v3622 = vrot.slane %v3244, 2
        %v3623 = vsel %vm740, %v3620, %v3622
        %3624 = vrot.lane.b32.xlu0 %v3530, 32
        %v3625 = vpop.permute.xlu0 %3624
        %3626 = vrot.lane.b32.xlu0 %v3531, 32
        %v3627 = vpop.permute.xlu0 %3626
        %3628 = vrot.lane.b32.xlu0 %v3533, 32
        %v3629 = vpop.permute.xlu0 %3628
        %3630 = vrot.lane.b32.xlu0 %v3535, 32
        %v3631 = vpop.permute.xlu0 %3630
        %3632 = vrot.lane.b32.xlu0 %v3537, 32
        %v3633 = vpop.permute.xlu0 %3632
        %3634 = vrot.lane.b32.xlu0 %v3539, 32
        %v3635 = vpop.permute.xlu0 %3634
        %3636 = vrot.lane.b32.xlu0 %v3541, 32
        %v3637 = vpop.permute.xlu0 %3636
        %3638 = vrot.lane.b32.xlu0 %v3543, 32
        %v3639 = vpop.permute.xlu0 %3638
        %3640 = vrot.lane.b32.xlu0 %v3545, 32
        %v3641 = vpop.permute.xlu0 %3640
        %3642 = vrot.lane.b32.xlu0 %v3547, 32
        %v3643 = vpop.permute.xlu0 %3642
        %3644 = vrot.lane.b32.xlu0 %v3549, 32
        %v3645 = vpop.permute.xlu0 %3644
        %3646 = vrot.lane.b32.xlu0 %v3551, 32
        %v3647 = vpop.permute.xlu0 %3646
        %3648 = vrot.lane.b32.xlu0 %v3553, 32
        %v3649 = vpop.permute.xlu0 %3648
        %3650 = vrot.lane.b32.xlu0 %v3555, 32
        %v3651 = vpop.permute.xlu0 %3650
        %3652 = vrot.lane.b32.xlu0 %v3557, 32
        %v3653 = vpop.permute.xlu0 %3652
        %3654 = vrot.lane.b32.xlu0 %v3559, 32
        %v3655 = vpop.permute.xlu0 %3654
        %3656 = vrot.lane.b32.xlu0 %v3561, 32
        %v3657 = vpop.permute.xlu0 %3656
        %3658 = vrot.lane.b32.xlu0 %v3563, 32
        %v3659 = vpop.permute.xlu0 %3658
        %3660 = vrot.lane.b32.xlu0 %v3565, 32
        %v3661 = vpop.permute.xlu0 %3660
        %3662 = vrot.lane.b32.xlu0 %v3567, 32
        %v3663 = vpop.permute.xlu0 %3662
        %3664 = vrot.lane.b32.xlu0 %v3569, 32
        %v3665 = vpop.permute.xlu0 %3664
        %3666 = vrot.lane.b32.xlu0 %v3571, 32
        %v3667 = vpop.permute.xlu0 %3666
        %3668 = vrot.lane.b32.xlu0 %v3573, 32
        %v3669 = vpop.permute.xlu0 %3668
        %3670 = vrot.lane.b32.xlu0 %v3575, 32
        %v3671 = vpop.permute.xlu0 %3670
        %3672 = vrot.lane.b32.xlu0 %v3577, 32
        %v3673 = vpop.permute.xlu0 %3672
        %3674 = vrot.lane.b32.xlu0 %v3579, 32
        %v3675 = vpop.permute.xlu0 %3674
        %3676 = vrot.lane.b32.xlu0 %v3581, 32
        %v3677 = vpop.permute.xlu0 %3676
        %3678 = vrot.lane.b32.xlu0 %v3583, 32
        %v3679 = vpop.permute.xlu0 %3678
        %3680 = vrot.lane.b32.xlu0 %v3585, 32
        %v3681 = vpop.permute.xlu0 %3680
        %3682 = vrot.lane.b32.xlu0 %v3587, 32
        %v3683 = vpop.permute.xlu0 %3682
        %3684 = vrot.lane.b32.xlu0 %v3589, 32
        %v3685 = vpop.permute.xlu0 %3684
        %3686 = vrot.lane.b32.xlu0 %v3591, 32
        %v3687 = vpop.permute.xlu0 %3686
        %3688 = vrot.lane.b32.xlu0 %v3593, 32
        %v3689 = vpop.permute.xlu0 %3688
        %3690 = vrot.lane.b32.xlu0 %v3595, 32
        %v3691 = vpop.permute.xlu0 %3690
        %3692 = vrot.lane.b32.xlu0 %v3597, 32
        %v3693 = vpop.permute.xlu0 %3692
        %3694 = vrot.lane.b32.xlu0 %v3599, 32
        %v3695 = vpop.permute.xlu0 %3694
        %3696 = vrot.lane.b32.xlu0 %v3601, 32
        %v3697 = vpop.permute.xlu0 %3696
        %3698 = vrot.lane.b32.xlu0 %v3603, 32
        %v3699 = vpop.permute.xlu0 %3698
        %3700 = vrot.lane.b32.xlu0 %v3605, 32
        %v3701 = vpop.permute.xlu0 %3700
        %3702 = vrot.lane.b32.xlu0 %v3607, 32
        %v3703 = vpop.permute.xlu0 %3702
        %3704 = vrot.lane.b32.xlu0 %v3609, 32
        %v3705 = vpop.permute.xlu0 %3704
        %3706 = vrot.lane.b32.xlu0 %v3611, 32
        %v3707 = vpop.permute.xlu0 %3706
        %3708 = vrot.lane.b32.xlu0 %v3613, 32
        %v3709 = vpop.permute.xlu0 %3708
        %3710 = vrot.lane.b32.xlu0 %v3615, 32
        %v3711 = vpop.permute.xlu0 %3710
        %3712 = vrot.lane.b32.xlu0 %v3617, 32
        %v3713 = vpop.permute.xlu0 %3712
        %3714 = vrot.lane.b32.xlu0 %v3619, 32
        %v3715 = vpop.permute.xlu0 %3714
        %3716 = vrot.lane.b32.xlu0 %v3621, 32
        %v3717 = vpop.permute.xlu0 %3716
        %3718 = vrot.lane.b32.xlu0 %v3623, 32
        %v3719 = vpop.permute.xlu0 %3718
        %3770 = vrot.lane.b32.xlu0 0.0, 48
        %v3771 = vpop.permute.xlu0 %3770
        %3772 = vrot.lane.b32.xlu0 %v3199, 48
        %v3773 = vpop.permute.xlu0 %3772
        %3774 = vrot.lane.b32.xlu0 %v3200, 48
        %v3775 = vpop.permute.xlu0 %3774
        %3776 = vrot.lane.b32.xlu0 %v3201, 48
        %v3777 = vpop.permute.xlu0 %3776
        %3778 = vrot.lane.b32.xlu0 %v3202, 48
        %v3779 = vpop.permute.xlu0 %3778
        %3780 = vrot.lane.b32.xlu0 %v3203, 48
        %v3781 = vpop.permute.xlu0 %3780
        %3782 = vrot.lane.b32.xlu0 %v3204, 48
        %v3783 = vpop.permute.xlu0 %3782
        %3784 = vrot.lane.b32.xlu0 %v3205, 48
        %v3785 = vpop.permute.xlu0 %3784
        %3786 = vrot.lane.b32.xlu0 %v3206, 48
        %v3787 = vpop.permute.xlu0 %3786
        %3788 = vrot.lane.b32.xlu0 %v3207, 48
        %v3789 = vpop.permute.xlu0 %3788
        %3790 = vrot.lane.b32.xlu0 %v3208, 48
        %v3791 = vpop.permute.xlu0 %3790
        %3792 = vrot.lane.b32.xlu0 %v3209, 48
        %v3793 = vpop.permute.xlu0 %3792
        %3794 = vrot.lane.b32.xlu0 %v3210, 48
        %v3795 = vpop.permute.xlu0 %3794
        %3796 = vrot.lane.b32.xlu0 %v3211, 48
        %v3797 = vpop.permute.xlu0 %3796
        %3798 = vrot.lane.b32.xlu0 %v3212, 48
        %v3799 = vpop.permute.xlu0 %3798
        %3800 = vrot.lane.b32.xlu0 %v3213, 48
        %v3801 = vpop.permute.xlu0 %3800
        %3802 = vrot.lane.b32.xlu0 %v3214, 48
        %v3803 = vpop.permute.xlu0 %3802
        %3804 = vrot.lane.b32.xlu0 %v3215, 48
        %v3805 = vpop.permute.xlu0 %3804
        %3806 = vrot.lane.b32.xlu0 %v3216, 48
        %v3807 = vpop.permute.xlu0 %3806
        %3808 = vrot.lane.b32.xlu0 %v3217, 48
        %v3809 = vpop.permute.xlu0 %3808
        %3810 = vrot.lane.b32.xlu0 %v3218, 48
        %v3811 = vpop.permute.xlu0 %3810
        %3812 = vrot.lane.b32.xlu0 %v3219, 48
        %v3813 = vpop.permute.xlu0 %3812
        %3814 = vrot.lane.b32.xlu0 %v3220, 48
        %v3815 = vpop.permute.xlu0 %3814
        %3816 = vrot.lane.b32.xlu0 %v3221, 48
        %v3817 = vpop.permute.xlu0 %3816
        %3818 = vrot.lane.b32.xlu0 %v3222, 48
        %v3819 = vpop.permute.xlu0 %3818
        %3820 = vrot.lane.b32.xlu0 %v3223, 48
        %v3821 = vpop.permute.xlu0 %3820
        %3822 = vrot.lane.b32.xlu0 %v3224, 48
        %v3823 = vpop.permute.xlu0 %3822
        %3824 = vrot.lane.b32.xlu0 %v3225, 48
        %v3825 = vpop.permute.xlu0 %3824
        %3826 = vrot.lane.b32.xlu0 %v3226, 48
        %v3827 = vpop.permute.xlu0 %3826
        %3828 = vrot.lane.b32.xlu0 %v3227, 48
        %v3829 = vpop.permute.xlu0 %3828
        %3830 = vrot.lane.b32.xlu0 %v3228, 48
        %v3831 = vpop.permute.xlu0 %3830
        %3832 = vrot.lane.b32.xlu0 %v3229, 48
        %v3833 = vpop.permute.xlu0 %3832
        %3834 = vrot.lane.b32.xlu0 %v3230, 48
        %v3835 = vpop.permute.xlu0 %3834
        %3836 = vrot.lane.b32.xlu0 %v3231, 48
        %v3837 = vpop.permute.xlu0 %3836
        %3838 = vrot.lane.b32.xlu0 %v3232, 48
        %v3839 = vpop.permute.xlu0 %3838
        %3840 = vrot.lane.b32.xlu0 %v3233, 48
        %v3841 = vpop.permute.xlu0 %3840
        %3842 = vrot.lane.b32.xlu0 %v3234, 48
        %v3843 = vpop.permute.xlu0 %3842
        %3844 = vrot.lane.b32.xlu0 %v3235, 48
        %v3845 = vpop.permute.xlu0 %3844
        %3846 = vrot.lane.b32.xlu0 %v3236, 48
        %v3847 = vpop.permute.xlu0 %3846
        %3848 = vrot.lane.b32.xlu0 %v3237, 48
        %v3849 = vpop.permute.xlu0 %3848
        %3850 = vrot.lane.b32.xlu0 %v3238, 48
        %v3851 = vpop.permute.xlu0 %3850
        %3852 = vrot.lane.b32.xlu0 %v3239, 48
        %v3853 = vpop.permute.xlu0 %3852
        %3854 = vrot.lane.b32.xlu0 %v3240, 48
        %v3855 = vpop.permute.xlu0 %3854
        %3856 = vrot.lane.b32.xlu0 %v3241, 48
        %v3857 = vpop.permute.xlu0 %3856
        %3858 = vrot.lane.b32.xlu0 %v3242, 48
        %v3859 = vpop.permute.xlu0 %3858
        %3860 = vrot.lane.b32.xlu0 %v3243, 48
        %v3861 = vpop.permute.xlu0 %3860
        %3862 = vrot.lane.b32.xlu0 %v3244, 48
        %v3863 = vpop.permute.xlu0 %3862
        %3864 = vrot.lane.b32.xlu0 %v3245, 48
        %v3865 = vpop.permute.xlu0 %3864
        %3866 = vrot.lane.b32.xlu0 %v3246, 48
        %v3867 = vpop.permute.xlu0 %3866
        %v3917 = vrot.slane %v3244, 1
        %v3918 = vsel %vm496, %v3383, %v3917
        %v3919 = vrot.slane %v3245, 1
        %v3920 = vsel %vm496, %v3917, %v3919
        %v3921 = vrot.slane %v3246, 1
        %v3922 = vsel %vm496, %v3919, %v3921
        %3923 = vrot.lane.b32.xlu0 %v3295, 64
        %v3924 = vpop.permute.xlu0 %3923
        %3925 = vrot.lane.b32.xlu0 %v3298, 64
        %v3926 = vpop.permute.xlu0 %3925
        %3927 = vrot.lane.b32.xlu0 %v3300, 64
        %v3928 = vpop.permute.xlu0 %3927
        %3929 = vrot.lane.b32.xlu0 %v3302, 64
        %v3930 = vpop.permute.xlu0 %3929
        %3931 = vrot.lane.b32.xlu0 %v3304, 64
        %v3932 = vpop.permute.xlu0 %3931
        %3933 = vrot.lane.b32.xlu0 %v3306, 64
        %v3934 = vpop.permute.xlu0 %3933
        %3935 = vrot.lane.b32.xlu0 %v3308, 64
        %v3936 = vpop.permute.xlu0 %3935
        %3937 = vrot.lane.b32.xlu0 %v3310, 64
        %v3938 = vpop.permute.xlu0 %3937
        %3939 = vrot.lane.b32.xlu0 %v3312, 64
        %v3940 = vpop.permute.xlu0 %3939
        %3941 = vrot.lane.b32.xlu0 %v3314, 64
        %v3942 = vpop.permute.xlu0 %3941
        %3943 = vrot.lane.b32.xlu0 %v3316, 64
        %v3944 = vpop.permute.xlu0 %3943
        %3945 = vrot.lane.b32.xlu0 %v3318, 64
        %v3946 = vpop.permute.xlu0 %3945
        %3947 = vrot.lane.b32.xlu0 %v3320, 64
        %v3948 = vpop.permute.xlu0 %3947
        %3949 = vrot.lane.b32.xlu0 %v3322, 64
        %v3950 = vpop.permute.xlu0 %3949
        %3951 = vrot.lane.b32.xlu0 %v3324, 64
        %v3952 = vpop.permute.xlu0 %3951
        %3953 = vrot.lane.b32.xlu0 %v3326, 64
        %v3954 = vpop.permute.xlu0 %3953
        %3955 = vrot.lane.b32.xlu0 %v3328, 64
        %v3956 = vpop.permute.xlu0 %3955
        %3957 = vrot.lane.b32.xlu0 %v3330, 64
        %v3958 = vpop.permute.xlu0 %3957
        %3959 = vrot.lane.b32.xlu0 %v3332, 64
        %v3960 = vpop.permute.xlu0 %3959
        %3961 = vrot.lane.b32.xlu0 %v3334, 64
        %v3962 = vpop.permute.xlu0 %3961
        %3963 = vrot.lane.b32.xlu0 %v3336, 64
        %v3964 = vpop.permute.xlu0 %3963
        %3965 = vrot.lane.b32.xlu0 %v3338, 64
        %v3966 = vpop.permute.xlu0 %3965
        %3967 = vrot.lane.b32.xlu0 %v3340, 64
        %v3968 = vpop.permute.xlu0 %3967
        %3969 = vrot.lane.b32.xlu0 %v3342, 64
        %v3970 = vpop.permute.xlu0 %3969
        %3971 = vrot.lane.b32.xlu0 %v3344, 64
        %v3972 = vpop.permute.xlu0 %3971
        %3973 = vrot.lane.b32.xlu0 %v3346, 64
        %v3974 = vpop.permute.xlu0 %3973
        %3975 = vrot.lane.b32.xlu0 %v3348, 64
        %v3976 = vpop.permute.xlu0 %3975
        %3977 = vrot.lane.b32.xlu0 %v3350, 64
        %v3978 = vpop.permute.xlu0 %3977
        %3979 = vrot.lane.b32.xlu0 %v3352, 64
        %v3980 = vpop.permute.xlu0 %3979
        %3981 = vrot.lane.b32.xlu0 %v3354, 64
        %v3982 = vpop.permute.xlu0 %3981
        %3983 = vrot.lane.b32.xlu0 %v3356, 64
        %v3984 = vpop.permute.xlu0 %3983
        %3985 = vrot.lane.b32.xlu0 %v3358, 64
        %v3986 = vpop.permute.xlu0 %3985
        %3987 = vrot.lane.b32.xlu0 %v3360, 64
        %v3988 = vpop.permute.xlu0 %3987
        %3989 = vrot.lane.b32.xlu0 %v3362, 64
        %v3990 = vpop.permute.xlu0 %3989
        %3991 = vrot.lane.b32.xlu0 %v3364, 64
        %v3992 = vpop.permute.xlu0 %3991
        %3993 = vrot.lane.b32.xlu0 %v3366, 64
        %v3994 = vpop.permute.xlu0 %3993
        %3995 = vrot.lane.b32.xlu0 %v3368, 64
        %v3996 = vpop.permute.xlu0 %3995
        %3997 = vrot.lane.b32.xlu0 %v3370, 64
        %v3998 = vpop.permute.xlu0 %3997
        %3999 = vrot.lane.b32.xlu0 %v3372, 64
        %v4000 = vpop.permute.xlu0 %3999
        %4001 = vrot.lane.b32.xlu0 %v3374, 64
        %v4002 = vpop.permute.xlu0 %4001
        %4003 = vrot.lane.b32.xlu0 %v3376, 64
        %v4004 = vpop.permute.xlu0 %4003
        %4005 = vrot.lane.b32.xlu0 %v3378, 64
        %v4006 = vpop.permute.xlu0 %4005
        %4007 = vrot.lane.b32.xlu0 %v3380, 64
        %v4008 = vpop.permute.xlu0 %4007
        %4009 = vrot.lane.b32.xlu0 %v3382, 64
        %v4010 = vpop.permute.xlu0 %4009
        %4011 = vrot.lane.b32.xlu0 %v3384, 64
        %v4012 = vpop.permute.xlu0 %4011
        %4013 = vrot.lane.b32.xlu0 %v3918, 64
        %v4014 = vpop.permute.xlu0 %4013
        %4015 = vrot.lane.b32.xlu0 %v3920, 64
        %v4016 = vpop.permute.xlu0 %4015
        %4017 = vrot.lane.b32.xlu0 %v3922, 64
        %v4018 = vpop.permute.xlu0 %4017
        %4019 = vrot.lane.b32.xlu0 %v3921, 64
        %v4020 = vpop.permute.xlu0 %4019
        %v4070 = vrot.slane %v3245, 2
        %v4071 = vsel %vm740, %v3622, %v4070
        %v4072 = vrot.slane %v3246, 2
        %v4073 = vsel %vm740, %v4070, %v4072
        %v4074 = vsel %vm740, %v4072, %v3530
        %4075 = vrot.lane.b32.xlu0 %v3532, 80
        %v4076 = vpop.permute.xlu0 %4075
        %4077 = vrot.lane.b32.xlu0 %v3535, 80
        %v4078 = vpop.permute.xlu0 %4077
        %4079 = vrot.lane.b32.xlu0 %v3537, 80
        %v4080 = vpop.permute.xlu0 %4079
        %4081 = vrot.lane.b32.xlu0 %v3539, 80
        %v4082 = vpop.permute.xlu0 %4081
        %4083 = vrot.lane.b32.xlu0 %v3541, 80
        %v4084 = vpop.permute.xlu0 %4083
        %4085 = vrot.lane.b32.xlu0 %v3543, 80
        %v4086 = vpop.permute.xlu0 %4085
        %4087 = vrot.lane.b32.xlu0 %v3545, 80
        %v4088 = vpop.permute.xlu0 %4087
        %4089 = vrot.lane.b32.xlu0 %v3547, 80
        %v4090 = vpop.permute.xlu0 %4089
        %4091 = vrot.lane.b32.xlu0 %v3549, 80
        %v4092 = vpop.permute.xlu0 %4091
        %4093 = vrot.lane.b32.xlu0 %v3551, 80
        %v4094 = vpop.permute.xlu0 %4093
        %4095 = vrot.lane.b32.xlu0 %v3553, 80
        %v4096 = vpop.permute.xlu0 %4095
        %4097 = vrot.lane.b32.xlu0 %v3555, 80
        %v4098 = vpop.permute.xlu0 %4097
        %4099 = vrot.lane.b32.xlu0 %v3557, 80
        %v4100 = vpop.permute.xlu0 %4099
        %4101 = vrot.lane.b32.xlu0 %v3559, 80
        %v4102 = vpop.permute.xlu0 %4101
        %4103 = vrot.lane.b32.xlu0 %v3561, 80
        %v4104 = vpop.permute.xlu0 %4103
        %4105 = vrot.lane.b32.xlu0 %v3563, 80
        %v4106 = vpop.permute.xlu0 %4105
        %4107 = vrot.lane.b32.xlu0 %v3565, 80
        %v4108 = vpop.permute.xlu0 %4107
        %4109 = vrot.lane.b32.xlu0 %v3567, 80
        %v4110 = vpop.permute.xlu0 %4109
        %4111 = vrot.lane.b32.xlu0 %v3569, 80
        %v4112 = vpop.permute.xlu0 %4111
        %4113 = vrot.lane.b32.xlu0 %v3571, 80
        %v4114 = vpop.permute.xlu0 %4113
        %4115 = vrot.lane.b32.xlu0 %v3573, 80
        %v4116 = vpop.permute.xlu0 %4115
        %4117 = vrot.lane.b32.xlu0 %v3575, 80
        %v4118 = vpop.permute.xlu0 %4117
        %4119 = vrot.lane.b32.xlu0 %v3577, 80
        %v4120 = vpop.permute.xlu0 %4119
        %4121 = vrot.lane.b32.xlu0 %v3579, 80
        %v4122 = vpop.permute.xlu0 %4121
        %4123 = vrot.lane.b32.xlu0 %v3581, 80
        %v4124 = vpop.permute.xlu0 %4123
        %4125 = vrot.lane.b32.xlu0 %v3583, 80
        %v4126 = vpop.permute.xlu0 %4125
        %4127 = vrot.lane.b32.xlu0 %v3585, 80
        %v4128 = vpop.permute.xlu0 %4127
        %4129 = vrot.lane.b32.xlu0 %v3587, 80
        %v4130 = vpop.permute.xlu0 %4129
        %4131 = vrot.lane.b32.xlu0 %v3589, 80
        %v4132 = vpop.permute.xlu0 %4131
        %4133 = vrot.lane.b32.xlu0 %v3591, 80
        %v4134 = vpop.permute.xlu0 %4133
        %4135 = vrot.lane.b32.xlu0 %v3593, 80
        %v4136 = vpop.permute.xlu0 %4135
        %4137 = vrot.lane.b32.xlu0 %v3595, 80
        %v4138 = vpop.permute.xlu0 %4137
        %4139 = vrot.lane.b32.xlu0 %v3597, 80
        %v4140 = vpop.permute.xlu0 %4139
        %4141 = vrot.lane.b32.xlu0 %v3599, 80
        %v4142 = vpop.permute.xlu0 %4141
        %4143 = vrot.lane.b32.xlu0 %v3601, 80
        %v4144 = vpop.permute.xlu0 %4143
        %4145 = vrot.lane.b32.xlu0 %v3603, 80
        %v4146 = vpop.permute.xlu0 %4145
        %4147 = vrot.lane.b32.xlu0 %v3605, 80
        %v4148 = vpop.permute.xlu0 %4147
        %4149 = vrot.lane.b32.xlu0 %v3607, 80
        %v4150 = vpop.permute.xlu0 %4149
        %4151 = vrot.lane.b32.xlu0 %v3609, 80
        %v4152 = vpop.permute.xlu0 %4151
        %4153 = vrot.lane.b32.xlu0 %v3611, 80
        %v4154 = vpop.permute.xlu0 %4153
        %4155 = vrot.lane.b32.xlu0 %v3613, 80
        %v4156 = vpop.permute.xlu0 %4155
        %4157 = vrot.lane.b32.xlu0 %v3615, 80
        %v4158 = vpop.permute.xlu0 %4157
        %4159 = vrot.lane.b32.xlu0 %v3617, 80
        %v4160 = vpop.permute.xlu0 %4159
        %4161 = vrot.lane.b32.xlu0 %v3619, 80
        %v4162 = vpop.permute.xlu0 %4161
        %4163 = vrot.lane.b32.xlu0 %v3621, 80
        %v4164 = vpop.permute.xlu0 %4163
        %4165 = vrot.lane.b32.xlu0 %v3623, 80
        %v4166 = vpop.permute.xlu0 %4165
        %4167 = vrot.lane.b32.xlu0 %v4071, 80
        %v4168 = vpop.permute.xlu0 %4167
        %4169 = vrot.lane.b32.xlu0 %v4073, 80
        %v4170 = vpop.permute.xlu0 %4169
        %4171 = vrot.lane.b32.xlu0 %v4074, 80
        %v4172 = vpop.permute.xlu0 %4171
        %4222 = vrot.lane.b32.xlu0 %v3201, 96
        %v4223 = vpop.permute.xlu0 %4222
        %4224 = vrot.lane.b32.xlu0 %v3202, 96
        %v4225 = vpop.permute.xlu0 %4224
        %4226 = vrot.lane.b32.xlu0 %v3203, 96
        %v4227 = vpop.permute.xlu0 %4226
        %4228 = vrot.lane.b32.xlu0 %v3204, 96
        %v4229 = vpop.permute.xlu0 %4228
        %4230 = vrot.lane.b32.xlu0 %v3205, 96
        %v4231 = vpop.permute.xlu0 %4230
        %4232 = vrot.lane.b32.xlu0 %v3206, 96
        %v4233 = vpop.permute.xlu0 %4232
        %4234 = vrot.lane.b32.xlu0 %v3207, 96
        %v4235 = vpop.permute.xlu0 %4234
        %4236 = vrot.lane.b32.xlu0 %v3208, 96
        %v4237 = vpop.permute.xlu0 %4236
        %4238 = vrot.lane.b32.xlu0 %v3209, 96
        %v4239 = vpop.permute.xlu0 %4238
        %4240 = vrot.lane.b32.xlu0 %v3210, 96
        %v4241 = vpop.permute.xlu0 %4240
        %4242 = vrot.lane.b32.xlu0 %v3211, 96
        %v4243 = vpop.permute.xlu0 %4242
        %4244 = vrot.lane.b32.xlu0 %v3212, 96
        %v4245 = vpop.permute.xlu0 %4244
        %4246 = vrot.lane.b32.xlu0 %v3213, 96
        %v4247 = vpop.permute.xlu0 %4246
        %4248 = vrot.lane.b32.xlu0 %v3214, 96
        %v4249 = vpop.permute.xlu0 %4248
        %4250 = vrot.lane.b32.xlu0 %v3215, 96
        %v4251 = vpop.permute.xlu0 %4250
        %4252 = vrot.lane.b32.xlu0 %v3216, 96
        %v4253 = vpop.permute.xlu0 %4252
        %4254 = vrot.lane.b32.xlu0 %v3217, 96
        %v4255 = vpop.permute.xlu0 %4254
        %4256 = vrot.lane.b32.xlu0 %v3218, 96
        %v4257 = vpop.permute.xlu0 %4256
        %4258 = vrot.lane.b32.xlu0 %v3219, 96
        %v4259 = vpop.permute.xlu0 %4258
        %4260 = vrot.lane.b32.xlu0 %v3220, 96
        %v4261 = vpop.permute.xlu0 %4260
        %4262 = vrot.lane.b32.xlu0 %v3221, 96
        %v4263 = vpop.permute.xlu0 %4262
        %4264 = vrot.lane.b32.xlu0 %v3222, 96
        %v4265 = vpop.permute.xlu0 %4264
        %4266 = vrot.lane.b32.xlu0 %v3223, 96
        %v4267 = vpop.permute.xlu0 %4266
        %4268 = vrot.lane.b32.xlu0 %v3224, 96
        %v4269 = vpop.permute.xlu0 %4268
        %4270 = vrot.lane.b32.xlu0 %v3225, 96
        %v4271 = vpop.permute.xlu0 %4270
        %4272 = vrot.lane.b32.xlu0 %v3226, 96
        %v4273 = vpop.permute.xlu0 %4272
        %4274 = vrot.lane.b32.xlu0 %v3227, 96
        %v4275 = vpop.permute.xlu0 %4274
        %4276 = vrot.lane.b32.xlu0 %v3228, 96
        %v4277 = vpop.permute.xlu0 %4276
        %4278 = vrot.lane.b32.xlu0 %v3229, 96
        %v4279 = vpop.permute.xlu0 %4278
        %4280 = vrot.lane.b32.xlu0 %v3230, 96
        %v4281 = vpop.permute.xlu0 %4280
        %4282 = vrot.lane.b32.xlu0 %v3231, 96
        %v4283 = vpop.permute.xlu0 %4282
        %4284 = vrot.lane.b32.xlu0 %v3232, 96
        %v4285 = vpop.permute.xlu0 %4284
        %4286 = vrot.lane.b32.xlu0 %v3233, 96
        %v4287 = vpop.permute.xlu0 %4286
        %4288 = vrot.lane.b32.xlu0 %v3234, 96
        %v4289 = vpop.permute.xlu0 %4288
        %4290 = vrot.lane.b32.xlu0 %v3235, 96
        %v4291 = vpop.permute.xlu0 %4290
        %4292 = vrot.lane.b32.xlu0 %v3236, 96
        %v4293 = vpop.permute.xlu0 %4292
        %4294 = vrot.lane.b32.xlu0 %v3237, 96
        %v4295 = vpop.permute.xlu0 %4294
        %4296 = vrot.lane.b32.xlu0 %v3238, 96
        %v4297 = vpop.permute.xlu0 %4296
        %4298 = vrot.lane.b32.xlu0 %v3239, 96
        %v4299 = vpop.permute.xlu0 %4298
        %4300 = vrot.lane.b32.xlu0 %v3240, 96
        %v4301 = vpop.permute.xlu0 %4300
        %4302 = vrot.lane.b32.xlu0 %v3241, 96
        %v4303 = vpop.permute.xlu0 %4302
        %4304 = vrot.lane.b32.xlu0 %v3242, 96
        %v4305 = vpop.permute.xlu0 %4304
        %4306 = vrot.lane.b32.xlu0 %v3243, 96
        %v4307 = vpop.permute.xlu0 %4306
        %4308 = vrot.lane.b32.xlu0 %v3244, 96
        %v4309 = vpop.permute.xlu0 %4308
        %4310 = vrot.lane.b32.xlu0 %v3245, 96
        %v4311 = vpop.permute.xlu0 %4310
        %4312 = vrot.lane.b32.xlu0 %v3246, 96
        %v4313 = vpop.permute.xlu0 %4312
        %4314 = vrot.lane.b32.xlu0 0.0, 96
        %v4315 = vpop.permute.xlu0 %4314
        %v4363 = vsel %vm496, %v3921, %v3293
        %4364 = vrot.lane.b32.xlu0 %v3301, 112
        %v4365 = vpop.permute.xlu0 %4364
        %4366 = vrot.lane.b32.xlu0 %v3304, 112
        %v4367 = vpop.permute.xlu0 %4366
        %4368 = vrot.lane.b32.xlu0 %v3306, 112
        %v4369 = vpop.permute.xlu0 %4368
        %4370 = vrot.lane.b32.xlu0 %v3308, 112
        %v4371 = vpop.permute.xlu0 %4370
        %4372 = vrot.lane.b32.xlu0 %v3310, 112
        %v4373 = vpop.permute.xlu0 %4372
        %4374 = vrot.lane.b32.xlu0 %v3312, 112
        %v4375 = vpop.permute.xlu0 %4374
        %4376 = vrot.lane.b32.xlu0 %v3314, 112
        %v4377 = vpop.permute.xlu0 %4376
        %4378 = vrot.lane.b32.xlu0 %v3316, 112
        %v4379 = vpop.permute.xlu0 %4378
        %4380 = vrot.lane.b32.xlu0 %v3318, 112
        %v4381 = vpop.permute.xlu0 %4380
        %4382 = vrot.lane.b32.xlu0 %v3320, 112
        %v4383 = vpop.permute.xlu0 %4382
        %4384 = vrot.lane.b32.xlu0 %v3322, 112
        %v4385 = vpop.permute.xlu0 %4384
        %4386 = vrot.lane.b32.xlu0 %v3324, 112
        %v4387 = vpop.permute.xlu0 %4386
        %4388 = vrot.lane.b32.xlu0 %v3326, 112
        %v4389 = vpop.permute.xlu0 %4388
        %4390 = vrot.lane.b32.xlu0 %v3328, 112
        %v4391 = vpop.permute.xlu0 %4390
        %4392 = vrot.lane.b32.xlu0 %v3330, 112
        %v4393 = vpop.permute.xlu0 %4392
        %4394 = vrot.lane.b32.xlu0 %v3332, 112
        %v4395 = vpop.permute.xlu0 %4394
        %4396 = vrot.lane.b32.xlu0 %v3334, 112
        %v4397 = vpop.permute.xlu0 %4396
        %4398 = vrot.lane.b32.xlu0 %v3336, 112
        %v4399 = vpop.permute.xlu0 %4398
        %4400 = vrot.lane.b32.xlu0 %v3338, 112
        %v4401 = vpop.permute.xlu0 %4400
        %4402 = vrot.lane.b32.xlu0 %v3340, 112
        %v4403 = vpop.permute.xlu0 %4402
        %4404 = vrot.lane.b32.xlu0 %v3342, 112
        %v4405 = vpop.permute.xlu0 %4404
        %4406 = vrot.lane.b32.xlu0 %v3344, 112
        %v4407 = vpop.permute.xlu0 %4406
        %4408 = vrot.lane.b32.xlu0 %v3346, 112
        %v4409 = vpop.permute.xlu0 %4408
        %4410 = vrot.lane.b32.xlu0 %v3348, 112
        %v4411 = vpop.permute.xlu0 %4410
        %4412 = vrot.lane.b32.xlu0 %v3350, 112
        %v4413 = vpop.permute.xlu0 %4412
        %4414 = vrot.lane.b32.xlu0 %v3352, 112
        %v4415 = vpop.permute.xlu0 %4414
        %4416 = vrot.lane.b32.xlu0 %v3354, 112
        %v4417 = vpop.permute.xlu0 %4416
        %4418 = vrot.lane.b32.xlu0 %v3356, 112
        %v4419 = vpop.permute.xlu0 %4418
        %4420 = vrot.lane.b32.xlu0 %v3358, 112
        %v4421 = vpop.permute.xlu0 %4420
        %4422 = vrot.lane.b32.xlu0 %v3360, 112
        %v4423 = vpop.permute.xlu0 %4422
        %4424 = vrot.lane.b32.xlu0 %v3362, 112
        %v4425 = vpop.permute.xlu0 %4424
        %4426 = vrot.lane.b32.xlu0 %v3364, 112
        %v4427 = vpop.permute.xlu0 %4426
        %4428 = vrot.lane.b32.xlu0 %v3366, 112
        %v4429 = vpop.permute.xlu0 %4428
        %4430 = vrot.lane.b32.xlu0 %v3368, 112
        %v4431 = vpop.permute.xlu0 %4430
        %4432 = vrot.lane.b32.xlu0 %v3370, 112
        %v4433 = vpop.permute.xlu0 %4432
        %4434 = vrot.lane.b32.xlu0 %v3372, 112
        %v4435 = vpop.permute.xlu0 %4434
        %4436 = vrot.lane.b32.xlu0 %v3374, 112
        %v4437 = vpop.permute.xlu0 %4436
        %4438 = vrot.lane.b32.xlu0 %v3376, 112
        %v4439 = vpop.permute.xlu0 %4438
        %4440 = vrot.lane.b32.xlu0 %v3378, 112
        %v4441 = vpop.permute.xlu0 %4440
        %4442 = vrot.lane.b32.xlu0 %v3380, 112
        %v4443 = vpop.permute.xlu0 %4442
        %4444 = vrot.lane.b32.xlu0 %v3382, 112
        %v4445 = vpop.permute.xlu0 %4444
        %4446 = vrot.lane.b32.xlu0 %v3384, 112
        %v4447 = vpop.permute.xlu0 %4446
        %4448 = vrot.lane.b32.xlu0 %v3918, 112
        %v4449 = vpop.permute.xlu0 %4448
        %4450 = vrot.lane.b32.xlu0 %v3920, 112
        %v4451 = vpop.permute.xlu0 %4450
        %4452 = vrot.lane.b32.xlu0 %v3922, 112
        %v4453 = vpop.permute.xlu0 %4452
        %4454 = vrot.lane.b32.xlu0 %v4363, 112
        %v4455 = vpop.permute.xlu0 %4454
        %4456 = vrot.lane.b32.xlu0 %v3294, 112
        %v4457 = vpop.permute.xlu0 %4456
        %4458 = vrot.lane.b32.xlu0 %v3293, 112
        %v4459 = vpop.permute.xlu0 %4458
        %v4508 = vsel %vm2047, 0.0, %v3386
        %v4509 = vsel %vm2047, 0.0, %v3388
        %v4510 = vsel %vm2047, 0.0, %v3390
        %v4511 = vsel %vm2047, %v3199, %v3392
        %v4512 = vsel %vm2047, %v3200, %v3394
        %v4513 = vsel %vm2047, %v3201, %v3396
        %v4514 = vsel %vm2047, %v3202, %v3398
        %v4515 = vsel %vm2047, %v3203, %v3400
        %v4516 = vsel %vm2047, %v3204, %v3402
        %v4517 = vsel %vm2047, %v3205, %v3404
        %v4518 = vsel %vm2047, %v3206, %v3406
        %v4519 = vsel %vm2047, %v3207, %v3408
        %v4520 = vsel %vm2047, %v3208, %v3410
        %v4521 = vsel %vm2047, %v3209, %v3412
        %v4522 = vsel %vm2047, %v3210, %v3414
        %v4523 = vsel %vm2047, %v3211, %v3416
        %v4524 = vsel %vm2047, %v3212, %v3418
        %v4525 = vsel %vm2047, %v3213, %v3420
        %v4526 = vsel %vm2047, %v3214, %v3422
        %v4527 = vsel %vm2047, %v3215, %v3424
        %v4528 = vsel %vm2047, %v3216, %v3426
        %v4529 = vsel %vm2047, %v3217, %v3428
        %v4530 = vsel %vm2047, %v3218, %v3430
        %v4531 = vsel %vm2047, %v3219, %v3432
        %v4532 = vsel %vm2047, %v3220, %v3434
        %v4533 = vsel %vm2047, %v3221, %v3436
        %v4534 = vsel %vm2047, %v3222, %v3438
        %v4535 = vsel %vm2047, %v3223, %v3440
        %v4536 = vsel %vm2047, %v3224, %v3442
        %v4537 = vsel %vm2047, %v3225, %v3444
        %v4538 = vsel %vm2047, %v3226, %v3446
        %v4539 = vsel %vm2047, %v3227, %v3448
        %v4540 = vsel %vm2047, %v3228, %v3450
        %v4541 = vsel %vm2047, %v3229, %v3452
        %v4542 = vsel %vm2047, %v3230, %v3454
        %v4543 = vsel %vm2047, %v3231, %v3456
        %v4544 = vsel %vm2047, %v3232, %v3458
        %v4545 = vsel %vm2047, %v3233, %v3460
        %v4546 = vsel %vm2047, %v3234, %v3462
        %v4547 = vsel %vm2047, %v3235, %v3464
        %v4548 = vsel %vm2047, %v3236, %v3466
        %v4549 = vsel %vm2047, %v3237, %v3468
        %v4550 = vsel %vm2047, %v3238, %v3470
        %v4551 = vsel %vm2047, %v3239, %v3472
        %v4552 = vsel %vm2047, %v3240, %v3474
        %v4553 = vsel %vm2047, %v3241, %v3476
        %v4554 = vsel %vm2047, %v3242, %v3478
        %v4555 = vsel %vm2047, %v3243, %v3480
        %v4556 = vsel %vm2247, %v4508, %v3625
        %v4557 = vsel %vm2247, %v4509, %v3627
        %v4558 = vsel %vm2247, %v4510, %v3629
        %v4559 = vsel %vm2247, %v4511, %v3631
        %v4560 = vsel %vm2247, %v4512, %v3633
        %v4561 = vsel %vm2247, %v4513, %v3635
        %v4562 = vsel %vm2247, %v4514, %v3637
        %v4563 = vsel %vm2247, %v4515, %v3639
        %v4564 = vsel %vm2247, %v4516, %v3641
        %v4565 = vsel %vm2247, %v4517, %v3643
        %v4566 = vsel %vm2247, %v4518, %v3645
        %v4567 = vsel %vm2247, %v4519, %v3647
        %v4568 = vsel %vm2247, %v4520, %v3649
        %v4569 = vsel %vm2247, %v4521, %v3651
        %v4570 = vsel %vm2247, %v4522, %v3653
        %v4571 = vsel %vm2247, %v4523, %v3655
        %v4572 = vsel %vm2247, %v4524, %v3657
        %v4573 = vsel %vm2247, %v4525, %v3659
        %v4574 = vsel %vm2247, %v4526, %v3661
        %v4575 = vsel %vm2247, %v4527, %v3663
        %v4576 = vsel %vm2247, %v4528, %v3665
        %v4577 = vsel %vm2247, %v4529, %v3667
        %v4578 = vsel %vm2247, %v4530, %v3669
        %v4579 = vsel %vm2247, %v4531, %v3671
        %v4580 = vsel %vm2247, %v4532, %v3673
        %v4581 = vsel %vm2247, %v4533, %v3675
        %v4582 = vsel %vm2247, %v4534, %v3677
        %v4583 = vsel %vm2247, %v4535, %v3679
        %v4584 = vsel %vm2247, %v4536, %v3681
        %v4585 = vsel %vm2247, %v4537, %v3683
        %v4586 = vsel %vm2247, %v4538, %v3685
        %v4587 = vsel %vm2247, %v4539, %v3687
        %v4588 = vsel %vm2247, %v4540, %v3689
        %v4589 = vsel %vm2247, %v4541, %v3691
        %v4590 = vsel %vm2247, %v4542, %v3693
        %v4591 = vsel %vm2247, %v4543, %v3695
        %v4592 = vsel %vm2247, %v4544, %v3697
        %v4593 = vsel %vm2247, %v4545, %v3699
        %v4594 = vsel %vm2247, %v4546, %v3701
        %v4595 = vsel %vm2247, %v4547, %v3703
        %v4596 = vsel %vm2247, %v4548, %v3705
        %v4597 = vsel %vm2247, %v4549, %v3707
        %v4598 = vsel %vm2247, %v4550, %v3709
        %v4599 = vsel %vm2247, %v4551, %v3711
        %v4600 = vsel %vm2247, %v4552, %v3713
        %v4601 = vsel %vm2247, %v4553, %v3715
        %v4602 = vsel %vm2247, %v4554, %v3717
        %v4603 = vsel %vm2247, %v4555, %v3719
        %vm4604 = vcmask 392192
        %v4605 = vsel %vm4604, %v4556, %v3771
        %v4606 = vsel %vm4604, %v4557, %v3773
        %v4607 = vsel %vm4604, %v4557, %v3775
        %v4608 = vsel %vm4604, %v4558, %v3777
        %v4609 = vsel %vm4604, %v4559, %v3779
        %v4610 = vsel %vm4604, %v4560, %v3781
        %v4611 = vsel %vm4604, %v4561, %v3783
        %v4612 = vsel %vm4604, %v4562, %v3785
        %v4613 = vsel %vm4604, %v4563, %v3787
        %v4614 = vsel %vm4604, %v4564, %v3789
        %v4615 = vsel %vm4604, %v4565, %v3791
        %v4616 = vsel %vm4604, %v4566, %v3793
        %v4617 = vsel %vm4604, %v4567, %v3795
        %v4618 = vsel %vm4604, %v4568, %v3797
        %v4619 = vsel %vm4604, %v4569, %v3799
        %v4620 = vsel %vm4604, %v4570, %v3801
        %v4621 = vsel %vm4604, %v4571, %v3803
        %v4622 = vsel %vm4604, %v4572, %v3805
        %v4623 = vsel %vm4604, %v4573, %v3807
        %v4624 = vsel %vm4604, %v4574, %v3809
        %v4625 = vsel %vm4604, %v4575, %v3811
        %v4626 = vsel %vm4604, %v4576, %v3813
        %v4627 = vsel %vm4604, %v4577, %v3815
        %v4628 = vsel %vm4604, %v4578, %v3817
        %v4629 = vsel %vm4604, %v4579, %v3819
        %v4630 = vsel %vm4604, %v4580, %v3821
        %v4631 = vsel %vm4604, %v4581, %v3823
        %v4632 = vsel %vm4604, %v4582, %v3825
        %v4633 = vsel %vm4604, %v4583, %v3827
        %v4634 = vsel %vm4604, %v4584, %v3829
        %v4635 = vsel %vm4604, %v4585, %v3831
        %v4636 = vsel %vm4604, %v4586, %v3833
        %v4637 = vsel %vm4604, %v4587, %v3835
        %v4638 = vsel %vm4604, %v4588, %v3837
        %v4639 = vsel %vm4604, %v4589, %v3839
        %v4640 = vsel %vm4604, %v4590, %v3841
        %v4641 = vsel %vm4604, %v4591, %v3843
        %v4642 = vsel %vm4604, %v4592, %v3845
        %v4643 = vsel %vm4604, %v4593, %v3847
        %v4644 = vsel %vm4604, %v4594, %v3849
        %v4645 = vsel %vm4604, %v4595, %v3851
        %v4646 = vsel %vm4604, %v4596, %v3853
        %v4647 = vsel %vm4604, %v4597, %v3855
        %v4648 = vsel %vm4604, %v4598, %v3857
        %v4649 = vsel %vm4604, %v4599, %v3859
        %v4650 = vsel %vm4604, %v4600, %v3861
        %v4651 = vsel %vm4604, %v4601, %v3863
        %v4652 = vsel %vm4604, %v4602, %v3865
        %v4653 = vsel %vm4604, %v4603, %v3867
        %vm4654 = vcmask 523264
        %v4655 = vsel %vm4654, %v4605, %v3924
        %v4656 = vsel %vm4654, %v4606, %v3926
        %v4657 = vsel %vm4654, %v4607, %v3928
        %v4658 = vsel %vm4654, %v4608, %v3930
        %v4659 = vsel %vm4654, %v4609, %v3932
        %v4660 = vsel %vm4654, %v4610, %v3934
        %v4661 = vsel %vm4654, %v4611, %v3936
        %v4662 = vsel %vm4654, %v4612, %v3938
        %v4663 = vsel %vm4654, %v4613, %v3940
        %v4664 = vsel %vm4654, %v4614, %v3942
        %v4665 = vsel %vm4654, %v4615, %v3944
        %v4666 = vsel %vm4654, %v4616, %v3946
        %v4667 = vsel %vm4654, %v4617, %v3948
        %v4668 = vsel %vm4654, %v4618, %v3950
        %v4669 = vsel %vm4654, %v4619, %v3952
        %v4670 = vsel %vm4654, %v4620, %v3954
        %v4671 = vsel %vm4654, %v4621, %v3956
        %v4672 = vsel %vm4654, %v4622, %v3958
        %v4673 = vsel %vm4654, %v4623, %v3960
        %v4674 = vsel %vm4654, %v4624, %v3962
        %v4675 = vsel %vm4654, %v4625, %v3964
        %v4676 = vsel %vm4654, %v4626, %v3966
        %v4677 = vsel %vm4654, %v4627, %v3968
        %v4678 = vsel %vm4654, %v4628, %v3970
        %v4679 = vsel %vm4654, %v4629, %v3972
        %v4680 = vsel %vm4654, %v4630, %v3974
        %v4681 = vsel %vm4654, %v4631, %v3976
        %v4682 = vsel %vm4654, %v4632, %v3978
        %v4683 = vsel %vm4654, %v4633, %v3980
        %v4684 = vsel %vm4654, %v4634, %v3982
        %v4685 = vsel %vm4654, %v4635, %v3984
        %v4686 = vsel %vm4654, %v4636, %v3986
        %v4687 = vsel %vm4654, %v4637, %v3988
        %v4688 = vsel %vm4654, %v4638, %v3990
        %v4689 = vsel %vm4654, %v4639, %v3992
        %v4690 = vsel %vm4654, %v4640, %v3994
        %v4691 = vsel %vm4654, %v4641, %v3996
        %v4692 = vsel %vm4654, %v4642, %v3998
        %v4693 = vsel %vm4654, %v4643, %v4000
        %v4694 = vsel %vm4654, %v4644, %v4002
        %v4695 = vsel %vm4654, %v4645, %v4004
        %v4696 = vsel %vm4654, %v4646, %v4006
        %v4697 = vsel %vm4654, %v4647, %v4008
        %v4698 = vsel %vm4654, %v4648, %v4010
        %v4699 = vsel %vm4654, %v4649, %v4012
        %v4700 = vsel %vm4654, %v4650, %v4014
        %v4701 = vsel %vm4654, %v4651, %v4016
        %v4702 = vsel %vm4654, %v4652, %v4018
        %v4703 = vsel %vm4654, %v4653, %v4020
        %vm4704 = vcmask 654336
        %v4705 = vsel %vm4704, %v4655, %v4076
        %v4706 = vsel %vm4704, %v4656, %v4078
        %v4707 = vsel %vm4704, %v4657, %v4080
        %v4708 = vsel %vm4704, %v4658, %v4082
        %v4709 = vsel %vm4704, %v4659, %v4084
        %v4710 = vsel %vm4704, %v4660, %v4086
        %v4711 = vsel %vm4704, %v4661, %v4088
        %v4712 = vsel %vm4704, %v4662, %v4090
        %v4713 = vsel %vm4704, %v4663, %v4092
        %v4714 = vsel %vm4704, %v4664, %v4094
        %v4715 = vsel %vm4704, %v4665, %v4096
        %v4716 = vsel %vm4704, %v4666, %v4098
        %v4717 = vsel %vm4704, %v4667, %v4100
        %v4718 = vsel %vm4704, %v4668, %v4102
        %v4719 = vsel %vm4704, %v4669, %v4104
        %v4720 = vsel %vm4704, %v4670, %v4106
        %v4721 = vsel %vm4704, %v4671, %v4108
        %v4722 = vsel %vm4704, %v4672, %v4110
        %v4723 = vsel %vm4704, %v4673, %v4112
        %v4724 = vsel %vm4704, %v4674, %v4114
        %v4725 = vsel %vm4704, %v4675, %v4116
        %v4726 = vsel %vm4704, %v4676, %v4118
        %v4727 = vsel %vm4704, %v4677, %v4120
        %v4728 = vsel %vm4704, %v4678, %v4122
        %v4729 = vsel %vm4704, %v4679, %v4124
        %v4730 = vsel %vm4704, %v4680, %v4126
        %v4731 = vsel %vm4704, %v4681, %v4128
        %v4732 = vsel %vm4704, %v4682, %v4130
        %v4733 = vsel %vm4704, %v4683, %v4132
        %v4734 = vsel %vm4704, %v4684, %v4134
        %v4735 = vsel %vm4704, %v4685, %v4136
        %v4736 = vsel %vm4704, %v4686, %v4138
        %v4737 = vsel %vm4704, %v4687, %v4140
        %v4738 = vsel %vm4704, %v4688, %v4142
        %v4739 = vsel %vm4704, %v4689, %v4144
        %v4740 = vsel %vm4704, %v4690, %v4146
        %v4741 = vsel %vm4704, %v4691, %v4148
        %v4742 = vsel %vm4704, %v4692, %v4150
        %v4743 = vsel %vm4704, %v4693, %v4152
        %v4744 = vsel %vm4704, %v4694, %v4154
        %v4745 = vsel %vm4704, %v4695, %v4156
        %v4746 = vsel %vm4704, %v4696, %v4158
        %v4747 = vsel %vm4704, %v4697, %v4160
        %v4748 = vsel %vm4704, %v4698, %v4162
        %v4749 = vsel %vm4704, %v4699, %v4164
        %v4750 = vsel %vm4704, %v4700, %v4166
        %v4751 = vsel %vm4704, %v4701, %v4168
        %v4752 = vsel %vm4704, %v4702, %v4170
        %v4753 = vsel %vm4704, %v4703, %v4172
        %vm4754 = vcmask 785408
        %v4755 = vsel %vm4754, %v4705, %v4223
        %v4756 = vsel %vm4754, %v4706, %v4225
        %v4757 = vsel %vm4754, %v4707, %v4227
        %v4758 = vsel %vm4754, %v4708, %v4229
        %v4759 = vsel %vm4754, %v4709, %v4231
        %v4760 = vsel %vm4754, %v4710, %v4233
        %v4761 = vsel %vm4754, %v4711, %v4235
        %v4762 = vsel %vm4754, %v4712, %v4237
        %v4763 = vsel %vm4754, %v4713, %v4239
        %v4764 = vsel %vm4754, %v4714, %v4241
        %v4765 = vsel %vm4754, %v4715, %v4243
        %v4766 = vsel %vm4754, %v4716, %v4245
        %v4767 = vsel %vm4754, %v4717, %v4247
        %v4768 = vsel %vm4754, %v4718, %v4249
        %v4769 = vsel %vm4754, %v4719, %v4251
        %v4770 = vsel %vm4754, %v4720, %v4253
        %v4771 = vsel %vm4754, %v4721, %v4255
        %v4772 = vsel %vm4754, %v4722, %v4257
        %v4773 = vsel %vm4754, %v4723, %v4259
        %v4774 = vsel %vm4754, %v4724, %v4261
        %v4775 = vsel %vm4754, %v4725, %v4263
        %v4776 = vsel %vm4754, %v4726, %v4265
        %v4777 = vsel %vm4754, %v4727, %v4267
        %v4778 = vsel %vm4754, %v4728, %v4269
        %v4779 = vsel %vm4754, %v4729, %v4271
        %v4780 = vsel %vm4754, %v4730, %v4273
        %v4781 = vsel %vm4754, %v4731, %v4275
        %v4782 = vsel %vm4754, %v4732, %v4277
        %v4783 = vsel %vm4754, %v4733, %v4279
        %v4784 = vsel %vm4754, %v4734, %v4281
        %v4785 = vsel %vm4754, %v4735, %v4283
        %v4786 = vsel %vm4754, %v4736, %v4285
        %v4787 = vsel %vm4754, %v4737, %v4287
        %v4788 = vsel %vm4754, %v4738, %v4289
        %v4789 = vsel %vm4754, %v4739, %v4291
        %v4790 = vsel %vm4754, %v4740, %v4293
        %v4791 = vsel %vm4754, %v4741, %v4295
        %v4792 = vsel %vm4754, %v4742, %v4297
        %v4793 = vsel %vm4754, %v4743, %v4299
        %v4794 = vsel %vm4754, %v4744, %v4301
        %v4795 = vsel %vm4754, %v4745, %v4303
        %v4796 = vsel %vm4754, %v4746, %v4305
        %v4797 = vsel %vm4754, %v4747, %v4307
        %v4798 = vsel %vm4754, %v4748, %v4309
        %v4799 = vsel %vm4754, %v4749, %v4311
        %v4800 = vsel %vm4754, %v4750, %v4313
        %v4801 = vsel %vm4754, %v4751, %v4315
        %v4802 = vsel %vm4754, %v4752, %v4315
        %v4803 = vsel %vm4754, %v4753, %v4315
        %vm4804 = vcmask 916480
        %v4805 = vsel %vm4804, %v4755, %v4365
        %v4806 = vsel %vm4804, %v4756, %v4367
        %v4807 = vsel %vm4804, %v4757, %v4369
        %v4808 = vsel %vm4804, %v4758, %v4371
        %v4809 = vsel %vm4804, %v4759, %v4373
        %v4810 = vsel %vm4804, %v4760, %v4375
        %v4811 = vsel %vm4804, %v4761, %v4377
        %v4812 = vsel %vm4804, %v4762, %v4379
        %v4813 = vsel %vm4804, %v4763, %v4381
        %v4814 = vsel %vm4804, %v4764, %v4383
        %v4815 = vsel %vm4804, %v4765, %v4385
        %v4816 = vsel %vm4804, %v4766, %v4387
        %v4817 = vsel %vm4804, %v4767, %v4389
        %v4818 = vsel %vm4804, %v4768, %v4391
        %v4819 = vsel %vm4804, %v4769, %v4393
        %v4820 = vsel %vm4804, %v4770, %v4395
        %v4821 = vsel %vm4804, %v4771, %v4397
        %v4822 = vsel %vm4804, %v4772, %v4399
        %v4823 = vsel %vm4804, %v4773, %v4401
        %v4824 = vsel %vm4804, %v4774, %v4403
        %v4825 = vsel %vm4804, %v4775, %v4405
        %v4826 = vsel %vm4804, %v4776, %v4407
        %v4827 = vsel %vm4804, %v4777, %v4409
        %v4828 = vsel %vm4804, %v4778, %v4411
        %v4829 = vsel %vm4804, %v4779, %v4413
        %v4830 = vsel %vm4804, %v4780, %v4415
        %v4831 = vsel %vm4804, %v4781, %v4417
        %v4832 = vsel %vm4804, %v4782, %v4419
        %v4833 = vsel %vm4804, %v4783, %v4421
        %v4834 = vsel %vm4804, %v4784, %v4423
        %v4835 = vsel %vm4804, %v4785, %v4425
        %v4836 = vsel %vm4804, %v4786, %v4427
        %v4837 = vsel %vm4804, %v4787, %v4429
        %v4838 = vsel %vm4804, %v4788, %v4431
        %v4839 = vsel %vm4804, %v4789, %v4433
        %v4840 = vsel %vm4804, %v4790, %v4435
        %v4841 = vsel %vm4804, %v4791, %v4437
        %v4842 = vsel %vm4804, %v4792, %v4439
        %v4843 = vsel %vm4804, %v4793, %v4441
        %v4844 = vsel %vm4804, %v4794, %v4443
        %v4845 = vsel %vm4804, %v4795, %v4445
        %v4846 = vsel %vm4804, %v4796, %v4447
        %v4847 = vsel %vm4804, %v4797, %v4449
        %v4848 = vsel %vm4804, %v4798, %v4451
        %v4849 = vsel %vm4804, %v4799, %v4453
        %v4850 = vsel %vm4804, %v4800, %v4455
        %v4851 = vsel %vm4804, %v4801, %v4457
        %v4852 = vsel %vm4804, %v4802, %v4457
        %v4853 = vsel %vm4804, %v4803, %v4459
        %v4854 = vld [vmem:[%s3] sm:$0xff]
        %v4855 = vld [vmem:[%s3 + $0x8] sm:$0xff]
        %v4856 = vld [vmem:[%s3 + $0x10] sm:$0xff]
        %v4857 = vld [vmem:[%s3 + $0x18] sm:$0xff]
        %v4858 = vld [vmem:[%s3 + $0x20] sm:$0xff]
        %v4859 = vld [vmem:[%s3 + $0x28] sm:$0xff]
        %v4860 = vld [vmem:[%s3 + $0x30] sm:$0xff]
        %v4861 = vld [vmem:[%s3 + $0x38] sm:$0xff]
        %v4862 = vld [vmem:[%s3 + $0x40] sm:$0xff]
        %v4863 = vld [vmem:[%s3 + $0x48] sm:$0xff]
        %v4864 = vld [vmem:[%s3 + $0x50] sm:$0xff]
        %v4865 = vld [vmem:[%s3 + $0x58] sm:$0xff]
        %v4866 = vld [vmem:[%s3 + $0x60] sm:$0xff]
        %v4867 = vld [vmem:[%s3 + $0x68] sm:$0xff]
        %v4868 = vld [vmem:[%s3 + $0x70] sm:$0xff]
        %v4869 = vld [vmem:[%s3 + $0x78] sm:$0xff]
        %v4870 = vld [vmem:[%s3 + $0x80] sm:$0xff]
        %v4871 = vld [vmem:[%s3 + $0x88] sm:$0xff]
        %v4872 = vld [vmem:[#allocation4] sm:$0x1]
        %v4874 = vlaneseq
        %v4875 = vshrl.u32 %v4874, 7
        %v4876 = vsub.s32 0, %v4875
        %v4877 = vrot.slane %v4872, %v4876
        %v4928 = vrot.slane %v4805, 7
        %v4929 = vrot.slane %v4806, 7
        %v4930 = vsel %vm2407, %v4928, %v4929
        %v4931 = vrot.slane %v3538, 7
        %v4932 = vrot.slane %v3541, 7
        %v4933 = vsel %vm2407, %v4931, %v4932
        %v4934 = vrot.slane %v4807, 7
        %v4935 = vsel %vm2407, %v4929, %v4934
        %v4936 = vrot.slane %v3543, 7
        %v4937 = vsel %vm2407, %v4932, %v4936
        %v4938 = vrot.slane %v4808, 7
        %v4939 = vsel %vm2407, %v4934, %v4938
        %v4940 = vrot.slane %v3545, 7
        %v4941 = vsel %vm2407, %v4936, %v4940
        %v4942 = vrot.slane %v4809, 7
        %v4943 = vsel %vm2407, %v4938, %v4942
        %v4944 = vrot.slane %v3547, 7
        %v4945 = vsel %vm2407, %v4940, %v4944
        %v4946 = vrot.slane %v4810, 7
        %v4947 = vsel %vm2407, %v4942, %v4946
        %v4948 = vrot.slane %v3549, 7
        %v4949 = vsel %vm2407, %v4944, %v4948
        %v4950 = vrot.slane %v4811, 7
        %v4951 = vsel %vm2407, %v4946, %v4950
        %v4952 = vrot.slane %v3551, 7
        %v4953 = vsel %vm2407, %v4948, %v4952
        %v4954 = vrot.slane %v4812, 7
        %v4955 = vsel %vm2407, %v4950, %v4954
        %v4956 = vrot.slane %v3553, 7
        %v4957 = vsel %vm2407, %v4952, %v4956
        %v4958 = vrot.slane %v4813, 7
        %v4959 = vsel %vm2407, %v4954, %v4958
        %v4960 = vrot.slane %v3555, 7
        %v4961 = vsel %vm2407, %v4956, %v4960
        %v4962 = vrot.slane %v4814, 7
        %v4963 = vsel %vm2407, %v4958, %v4962
        %v4964 = vrot.slane %v3557, 7
        %v4965 = vsel %vm2407, %v4960, %v4964
        %v4966 = vrot.slane %v4815, 7
        %v4967 = vsel %vm2407, %v4962, %v4966
        %v4968 = vrot.slane %v3559, 7
        %v4969 = vsel %vm2407, %v4964, %v4968
        %v4970 = vrot.slane %v4816, 7
        %v4971 = vsel %vm2407, %v4966, %v4970
        %v4972 = vrot.slane %v3561, 7
        %v4973 = vsel %vm2407, %v4968, %v4972
        %v4974 = vrot.slane %v4817, 7
        %v4975 = vsel %vm2407, %v4970, %v4974
        %v4976 = vrot.slane %v3563, 7
        %v4977 = vsel %vm2407, %v4972, %v4976
        %v4978 = vrot.slane %v4818, 7
        %v4979 = vsel %vm2407, %v4974, %v4978
        %v4980 = vrot.slane %v3565, 7
        %v4981 = vsel %vm2407, %v4976, %v4980
        %v4982 = vrot.slane %v4819, 7
        %v4983 = vsel %vm2407, %v4978, %v4982
        %v4984 = vrot.slane %v3567, 7
        %v4985 = vsel %vm2407, %v4980, %v4984
        %v4986 = vrot.slane %v4820, 7
        %v4987 = vsel %vm2407, %v4982, %v4986
        %v4988 = vrot.slane %v3569, 7
        %v4989 = vsel %vm2407, %v4984, %v4988
        %v4990 = vrot.slane %v4821, 7
        %v4991 = vsel %vm2407, %v4986, %v4990
        %v4992 = vrot.slane %v3571, 7
        %v4993 = vsel %vm2407, %v4988, %v4992
        %v4994 = vrot.slane %v4822, 7
        %v4995 = vsel %vm2407, %v4990, %v4994
        %v4996 = vrot.slane %v3573, 7
        %v4997 = vsel %vm2407, %v4992, %v4996
        %v4998 = vrot.slane %v4823, 7
        %v4999 = vsel %vm2407, %v4994, %v4998
        %v5000 = vrot.slane %v3575, 7
        %v5001 = vsel %vm2407, %v4996, %v5000
        %v5002 = vrot.slane %v4824, 7
        %v5003 = vsel %vm2407, %v4998, %v5002
        %v5004 = vrot.slane %v3577, 7
        %v5005 = vsel %vm2407, %v5000, %v5004
        %v5006 = vrot.slane %v4825, 7
        %v5007 = vsel %vm2407, %v5002, %v5006
        %v5008 = vrot.slane %v3579, 7
        %v5009 = vsel %vm2407, %v5004, %v5008
        %v5010 = vrot.slane %v4826, 7
        %v5011 = vsel %vm2407, %v5006, %v5010
        %v5012 = vrot.slane %v3581, 7
        %v5013 = vsel %vm2407, %v5008, %v5012
        %v5014 = vrot.slane %v4827, 7
        %v5015 = vsel %vm2407, %v5010, %v5014
        %v5016 = vrot.slane %v3583, 7
        %v5017 = vsel %vm2407, %v5012, %v5016
        %v5018 = vrot.slane %v4828, 7
        %v5019 = vsel %vm2407, %v5014, %v5018
        %v5020 = vrot.slane %v3585, 7
        %v5021 = vsel %vm2407, %v5016, %v5020
        %v5022 = vrot.slane %v4829, 7
        %v5023 = vsel %vm2407, %v5018, %v5022
        %v5024 = vrot.slane %v3587, 7
        %v5025 = vsel %vm2407, %v5020, %v5024
        %v5026 = vrot.slane %v4830, 7
        %v5027 = vsel %vm2407, %v5022, %v5026
        %v5028 = vrot.slane %v3589, 7
        %v5029 = vsel %vm2407, %v5024, %v5028
        %v5030 = vrot.slane %v4831, 7
        %v5031 = vsel %vm2407, %v5026, %v5030
        %v5032 = vrot.slane %v3591, 7
        %v5033 = vsel %vm2407, %v5028, %v5032
        %v5034 = vrot.slane %v4832, 7
        %v5035 = vsel %vm2407, %v5030, %v5034
        %v5036 = vrot.slane %v3593, 7
        %v5037 = vsel %vm2407, %v5032, %v5036
        %v5038 = vrot.slane %v4833, 7
        %v5039 = vsel %vm2407, %v5034, %v5038
        %v5040 = vrot.slane %v3595, 7
        %v5041 = vsel %vm2407, %v5036, %v5040
        %v5042 = vrot.slane %v4834, 7
        %v5043 = vsel %vm2407, %v5038, %v5042
        %v5044 = vrot.slane %v3597, 7
        %v5045 = vsel %vm2407, %v5040, %v5044
        %v5046 = vrot.slane %v4835, 7
        %v5047 = vsel %vm2407, %v5042, %v5046
        %v5048 = vrot.slane %v3599, 7
        %v5049 = vsel %vm2407, %v5044, %v5048
        %v5050 = vrot.slane %v4836, 7
        %v5051 = vsel %vm2407, %v5046, %v5050
        %v5052 = vrot.slane %v3601, 7
        %v5053 = vsel %vm2407, %v5048, %v5052
        %v5054 = vrot.slane %v4837, 7
        %v5055 = vsel %vm2407, %v5050, %v5054
        %v5056 = vrot.slane %v3603, 7
        %v5057 = vsel %vm2407, %v5052, %v5056
        %v5058 = vrot.slane %v4838, 7
        %v5059 = vsel %vm2407, %v5054, %v5058
        %v5060 = vrot.slane %v3605, 7
        %v5061 = vsel %vm2407, %v5056, %v5060
        %v5062 = vrot.slane %v4839, 7
        %v5063 = vsel %vm2407, %v5058, %v5062
        %v5064 = vrot.slane %v3607, 7
        %v5065 = vsel %vm2407, %v5060, %v5064
        %v5066 = vrot.slane %v4840, 7
        %v5067 = vsel %vm2407, %v5062, %v5066
        %v5068 = vrot.slane %v3609, 7
        %v5069 = vsel %vm2407, %v5064, %v5068
        %v5070 = vrot.slane %v4841, 7
        %v5071 = vsel %vm2407, %v5066, %v5070
        %v5072 = vrot.slane %v3611, 7
        %v5073 = vsel %vm2407, %v5068, %v5072
        %v5074 = vrot.slane %v4842, 7
        %v5075 = vsel %vm2407, %v5070, %v5074
        %v5076 = vrot.slane %v3613, 7
        %v5077 = vsel %vm2407, %v5072, %v5076
        %v5078 = vrot.slane %v4843, 7
        %v5079 = vsel %vm2407, %v5074, %v5078
        %v5080 = vrot.slane %v3615, 7
        %v5081 = vsel %vm2407, %v5076, %v5080
        %v5082 = vrot.slane %v4844, 7
        %v5083 = vsel %vm2407, %v5078, %v5082
        %v5084 = vrot.slane %v3617, 7
        %v5085 = vsel %vm2407, %v5080, %v5084
        %v5086 = vrot.slane %v4845, 7
        %v5087 = vsel %vm2407, %v5082, %v5086
        %v5088 = vrot.slane %v3619, 7
        %v5089 = vsel %vm2407, %v5084, %v5088
        %v5090 = vrot.slane %v4846, 7
        %v5091 = vsel %vm2407, %v5086, %v5090
        %v5092 = vrot.slane %v3621, 7
        %v5093 = vsel %vm2407, %v5088, %v5092
        %v5094 = vrot.slane %v4847, 7
        %v5095 = vsel %vm2407, %v5090, %v5094
        %v5096 = vrot.slane %v3623, 7
        %v5097 = vsel %vm2407, %v5092, %v5096
        %v5098 = vrot.slane %v4848, 7
        %v5099 = vsel %vm2407, %v5094, %v5098
        %v5100 = vrot.slane %v4071, 7
        %v5101 = vsel %vm2407, %v5096, %v5100
        %v5102 = vrot.slane %v4849, 7
        %v5103 = vsel %vm2407, %v5098, %v5102
        %v5104 = vrot.slane %v4073, 7
        %v5105 = vsel %vm2407, %v5100, %v5104
        %v5106 = vrot.slane %v4850, 7
        %v5107 = vsel %vm2407, %v5102, %v5106
        %v5108 = vrot.slane %v4074, 7
        %v5109 = vsel %vm2407, %v5104, %v5108
        %v5110 = vrot.slane %v4851, 7
        %v5111 = vsel %vm2407, %v5106, %v5110
        %v5112 = vrot.slane %v3531, 7
        %v5113 = vsel %vm2407, %v5108, %v5112
        %v5114 = vrot.slane %v4852, 7
        %v5115 = vsel %vm2407, %v5110, %v5114
        %v5116 = vsel %vm2407, %v5112, %v5112
        %v5117 = vrot.slane %v4853, 7
        %v5118 = vsel %vm2407, %v5114, %v5117
        %v5167 = vsel %vm2047, %v4933, 0
        %v5169 = vsel %vm2047, %v4937, 0
        %v5171 = vsel %vm2047, %v4941, 0
        %v5173 = vsel %vm2047, %v4945, 0
        %v5175 = vsel %vm2047, %v4949, 0
        %v5177 = vsel %vm2047, %v4953, 0
        %v5179 = vsel %vm2047, %v4957, 0
        %v5181 = vsel %vm2047, %v4961, 0
        %v5183 = vsel %vm2047, %v4965, 0
        %v5185 = vsel %vm2047, %v4969, 0
        %v5187 = vsel %vm2047, %v4973, 0
        %v5189 = vsel %vm2047, %v4977, 0
        %v5191 = vsel %vm2047, %v4981, 0
        %v5193 = vsel %vm2047, %v4985, 0
        %v5195 = vsel %vm2047, %v4989, 0
        %v5197 = vsel %vm2047, %v4993, 0
        %v5199 = vsel %vm2047, %v4997, 0
        %v5201 = vsel %vm2047, %v5001, 0
        %v5203 = vsel %vm2047, %v5005, 0
        %v5205 = vsel %vm2047, %v5009, 0
        %v5207 = vsel %vm2047, %v5013, 0
        %v5209 = vsel %vm2047, %v5017, 0
        %v5211 = vsel %vm2047, %v5021, 0
        %v5213 = vsel %vm2047, %v5025, 0
        %v5215 = vsel %vm2047, %v5029, 0
        %v5217 = vsel %vm2047, %v5033, 0
        %v5219 = vsel %vm2047, %v5037, 0
        %v5221 = vsel %vm2047, %v5041, 0
        %v5223 = vsel %vm2047, %v5045, 0
        %v5225 = vsel %vm2047, %v5049, 0
        %v5227 = vsel %vm2047, %v5053, 0
        %v5229 = vsel %vm2047, %v5057, 0
        %v5231 = vsel %vm2047, %v5061, 0
        %v5233 = vsel %vm2047, %v5065, 0
        %v5235 = vsel %vm2047, %v5069, 0
        %v5237 = vsel %vm2047, %v5073, 0
        %v5239 = vsel %vm2047, %v5077, 0
        %v5241 = vsel %vm2047, %v5081, 0
        %v5243 = vsel %vm2047, %v5085, 0
        %v5245 = vsel %vm2047, %v5089, 0
        %v5247 = vsel %vm2047, %v5093, 0
        %v5249 = vsel %vm2047, %v5097, 0
        %v5251 = vsel %vm2047, %v5101, 0
        %v5253 = vsel %vm2047, %v5105, 0
        %v5255 = vsel %vm2047, %v5109, 0
        %v5257 = vsel %vm2047, %v5113, 0
        %v5259 = vsel %vm2047, %v5116, 0
        %5261 = vmatprep.subr.mxu0 0.0
        %5262 = vmatpush1.msra.mxu0 %v4854
        %5263 = vmatprep.subr.mxu0 0.0
        %5264 = vmatpush1.msra.mxu0 %v4855
        %5265 = vmatprep.subr.mxu0 0.0
        %5266 = vmatpush1.msra.mxu0 %v4856
        %5267 = vmatprep.subr.mxu0 0.0
        %5268 = vmatpush1.msra.mxu0 %v4857
        %5269 = vmatprep.subr.mxu0 0.0
        %5270 = vmatpush1.msra.mxu0 %v4858
        %5271 = vmatprep.subr.mxu0 0.0
        %5272 = vmatpush1.msra.mxu0 %v4859
        %5273 = vmatprep.subr.mxu0 0.0
        %5274 = vmatpush1.msra.mxu0 %v4860
        %5275 = vmatprep.subr.mxu0 0.0
        %5276 = vmatpush1.msra.mxu0 %v4861
        %5277 = vmatprep.subr.mxu0 0.0
        %5278 = vmatpush1.msra.mxu0 %v4862
        %5279 = vmatprep.subr.mxu0 0.0
        %5280 = vmatpush1.msra.mxu0 %v4863
        %5281 = vmatprep.subr.mxu0 0.0
        %5282 = vmatpush1.msra.mxu0 %v4864
        %5283 = vmatprep.subr.mxu0 0.0
        %5284 = vmatpush1.msra.mxu0 %v4865
        %5285 = vmatprep.subr.mxu0 0.0
        %5286 = vmatpush1.msra.mxu0 %v4866
        %5287 = vmatprep.subr.mxu0 0.0
        %5288 = vmatpush1.msra.mxu0 %v4867
        %5289 = vmatprep.subr.mxu0 0.0
        %5290 = vmatpush1.msra.mxu0 %v4868
        %5291 = vmatprep.subr.mxu0 0.0
        %5292 = vmatpush1.msra.mxu0 %v4869
        %5293 = vmatprep.subr.mxu0 0.0
        %5294 = vmatpush1.msra.mxu0 %v4870
        %5295 = vmatprep.subr.mxu0 0.0
        %5296 = vmatpush1.msra.mxu0 %v4871
        %5297 = vmatprep.subr.mxu0 0.0
        %5298 = vmatpush1.msra.mxu0 0.0
        %5299 = vmatprep.subr.mxu0 0.0
        %5300 = vmatpush1.msra.mxu0 0.0
        %5301 = vmatprep.subr.mxu0 0.0
        %5302 = vmatpush1.msra.mxu0 0.0
        %5303 = vmatprep.subr.mxu0 0.0
        %5304 = vmatpush1.msra.mxu0 0.0
        %5305 = vmatprep.subr.mxu0 0.0
        %5306 = vmatpush1.msra.mxu0 0.0
        %5307 = vmatprep.subr.mxu0 0.0
        %5308 = vmatpush1.msra.mxu0 0.0
        %5309 = vmatprep.subr.mxu0 0.0
        %5310 = vmatpush1.msra.mxu0 0.0
        %5311 = vmatprep.subr.mxu0 0.0
        %5312 = vmatpush1.msra.mxu0 0.0
        %5313 = vmatprep.subr.mxu0 0.0
        %5314 = vmatpush1.msra.mxu0 0.0
        %5315 = vmatprep.subr.mxu0 0.0
        %5316 = vmatpush1.msra.mxu0 0.0
        %5317 = vmatprep.subr.mxu0 0.0
        %5318 = vmatpush1.msra.mxu0 0.0
        %5319 = vmatprep.subr.mxu0 0.0
        %5320 = vmatpush1.msra.mxu0 0.0
        %5321 = vmatprep.subr.mxu0 0.0
        %5322 = vmatpush1.msra.mxu0 0.0
        %5323 = vmatprep.subr.mxu0 0.0
        %5324 = vmatpush1.msra.mxu0 0.0
        %5325 = vmatprep.mubr.f32.mxu0 %v5167
        %5326 = vmatmul.mubr.f32.gmra.mrb[0].mxu0 %v4930
        %v5327 = vpop.f32.mrb[0].mxu0
        %v5328 = vadd.f32 %v4877, %v5327
        %v5329 = vpop.f32.mrb[0].mxu0
        %5330 = vmatprep.mubr.f32.mxu0 %v5169
        %5331 = vmatmul.mubr.f32.gmra.mrb[0].mxu0 %v4935
        %v5332 = vpop.f32.mrb[0].mxu0
        %v5333 = vadd.f32 %v4877, %v5332
        %v5334 = vpop.f32.mrb[0].mxu0
        %5335 = vmatprep.mubr.f32.mxu0 %v5171
        %5336 = vmatmul.mubr.f32.gmra.mrb[0].mxu0 %v4939
        %v5337 = vpop.f32.mrb[0].mxu0
        %v5338 = vadd.f32 %v4877, %v5337
        %v5339 = vpop.f32.mrb[0].mxu0
        %5340 = vmatprep.mubr.f32.mxu0 %v5173
        %5341 = vmatmul.mubr.f32.gmra.mrb[0].mxu0 %v4943
        %v5342 = vpop.f32.mrb[0].mxu0
        %v5343 = vadd.f32 %v4877, %v5342
        %v5344 = vpop.f32.mrb[0].mxu0
        %5345 = vmatprep.mubr.f32.mxu0 %v5175
        %5346 = vmatmul.mubr.f32.gmra.mrb[0].mxu0 %v4947
        %v5347 = vpop.f32.mrb[0].mxu0
        %v5348 = vadd.f32 %v4877, %v5347
        %v5349 = vpop.f32.mrb[0].mxu0
        %5350 = vmatprep.mubr.f32.mxu0 %v5177
        %5351 = vmatmul.mubr.f32.gmra.mrb[0].mxu0 %v4951
        %v5352 = vpop.f32.mrb[0].mxu0
        %v5353 = vadd.f32 %v4877, %v5352
        %v5354 = vpop.f32.mrb[0].mxu0
        %5355 = vmatprep.mubr.f32.mxu0 %v5179
        %5356 = vmatmul.mubr.f32.gmra.mrb[0].mxu0 %v4955
        %v5357 = vpop.f32.mrb[0].mxu0
        %v5358 = vadd.f32 %v4877, %v5357
        %v5359 = vpop.f32.mrb[0].mxu0
        %5360 = vmatprep.mubr.f32.mxu0 %v5181
        %5361 = vmatmul.mubr.f32.gmra.mrb[0].mxu0 %v4959
        %v5362 = vpop.f32.mrb[0].mxu0
        %v5363 = vadd.f32 %v4877, %v5362
        %v5364 = vpop.f32.mrb[0].mxu0
        %5365 = vmatprep.mubr.f32.mxu0 %v5183
        %5366 = vmatmul.mubr.f32.gmra.mrb[0].mxu0 %v4963
        %v5367 = vpop.f32.mrb[0].mxu0
        %v5368 = vadd.f32 %v4877, %v5367
        %v5369 = vpop.f32.mrb[0].mxu0
        %5370 = vmatprep.mubr.f32.mxu0 %v5185
        %5371 = vmatmul.mubr.f32.gmra.mrb[0].mxu0 %v4967
        %v5372 = vpop.f32.mrb[0].mxu0
        %v5373 = vadd.f32 %v4877, %v5372
        %v5374 = vpop.f32.mrb[0].mxu0
        %5375 = vmatprep.mubr.f32.mxu0 %v5187
        %5376 = vmatmul.mubr.f32.gmra.mrb[0].mxu0 %v4971
        %v5377 = vpop.f32.mrb[0].mxu0
        %v5378 = vadd.f32 %v4877, %v5377
        %v5379 = vpop.f32.mrb[0].mxu0
        %5380 = vmatprep.mubr.f32.mxu0 %v5189
        %5381 = vmatmul.mubr.f32.gmra.mrb[0].mxu0 %v4975
        %v5382 = vpop.f32.mrb[0].mxu0
        %v5383 = vadd.f32 %v4877, %v5382
        %v5384 = vpop.f32.mrb[0].mxu0
        %5385 = vmatprep.mubr.f32.mxu0 %v5191
        %5386 = vmatmul.mubr.f32.gmra.mrb[0].mxu0 %v4979
        %v5387 = vpop.f32.mrb[0].mxu0
        %v5388 = vadd.f32 %v4877, %v5387
        %v5389 = vpop.f32.mrb[0].mxu0
        %5390 = vmatprep.mubr.f32.mxu0 %v5193
        %5391 = vmatmul.mubr.f32.gmra.mrb[0].mxu0 %v4983
        %v5392 = vpop.f32.mrb[0].mxu0
        %v5393 = vadd.f32 %v4877, %v5392
        %v5394 = vpop.f32.mrb[0].mxu0
        %5395 = vmatprep.mubr.f32.mxu0 %v5195
        %5396 = vmatmul.mubr.f32.gmra.mrb[0].mxu0 %v4987
        %v5397 = vpop.f32.mrb[0].mxu0
        %v5398 = vadd.f32 %v4877, %v5397
        %v5399 = vpop.f32.mrb[0].mxu0
        %5400 = vmatprep.mubr.f32.mxu0 %v5197
        %5401 = vmatmul.mubr.f32.gmra.mrb[0].mxu0 %v4991
        %v5402 = vpop.f32.mrb[0].mxu0
        %v5403 = vadd.f32 %v4877, %v5402
        %v5404 = vpop.f32.mrb[0].mxu0
        %5405 = vmatprep.mubr.f32.mxu0 %v5199
        %5406 = vmatmul.mubr.f32.gmra.mrb[0].mxu0 %v4995
        %v5407 = vpop.f32.mrb[0].mxu0
        %v5408 = vadd.f32 %v4877, %v5407
        %v5409 = vpop.f32.mrb[0].mxu0
        %5410 = vmatprep.mubr.f32.mxu0 %v5201
        %5411 = vmatmul.mubr.f32.gmra.mrb[0].mxu0 %v4999
        %v5412 = vpop.f32.mrb[0].mxu0
        %v5413 = vadd.f32 %v4877, %v5412
        %v5414 = vpop.f32.mrb[0].mxu0
        %5415 = vmatprep.mubr.f32.mxu0 %v5203
        %5416 = vmatmul.mubr.f32.gmra.mrb[0].mxu0 %v5003
        %v5417 = vpop.f32.mrb[0].mxu0
        %v5418 = vadd.f32 %v4877, %v5417
        %v5419 = vpop.f32.mrb[0].mxu0
        %5420 = vmatprep.mubr.f32.mxu0 %v5205
        %5421 = vmatmul.mubr.f32.gmra.mrb[0].mxu0 %v5007
        %v5422 = vpop.f32.mrb[0].mxu0
        %v5423 = vadd.f32 %v4877, %v5422
        %v5424 = vpop.f32.mrb[0].mxu0
        %5425 = vmatprep.mubr.f32.mxu0 %v5207
        %5426 = vmatmul.mubr.f32.gmra.mrb[0].mxu0 %v5011
        %v5427 = vpop.f32.mrb[0].mxu0
        %v5428 = vadd.f32 %v4877, %v5427
        %v5429 = vpop.f32.mrb[0].mxu0
        %5430 = vmatprep.mubr.f32.mxu0 %v5209
        %5431 = vmatmul.mubr.f32.gmra.mrb[0].mxu0 %v5015
        %v5432 = vpop.f32.mrb[0].mxu0
        %v5433 = vadd.f32 %v4877, %v5432
        %v5434 = vpop.f32.mrb[0].mxu0
        %5435 = vmatprep.mubr.f32.mxu0 %v5211
        %5436 = vmatmul.mubr.f32.gmra.mrb[0].mxu0 %v5019
        %v5437 = vpop.f32.mrb[0].mxu0
        %v5438 = vadd.f32 %v4877, %v5437
        %v5439 = vpop.f32.mrb[0].mxu0
        %5440 = vmatprep.mubr.f32.mxu0 %v5213
        %5441 = vmatmul.mubr.f32.gmra.mrb[0].mxu0 %v5023
        %v5442 = vpop.f32.mrb[0].mxu0
        %v5443 = vadd.f32 %v4877, %v5442
        %v5444 = vpop.f32.mrb[0].mxu0
        %5445 = vmatprep.mubr.f32.mxu0 %v5215
        %5446 = vmatmul.mubr.f32.gmra.mrb[0].mxu0 %v5027
        %v5447 = vpop.f32.mrb[0].mxu0
        %v5448 = vadd.f32 %v4877, %v5447
        %v5449 = vpop.f32.mrb[0].mxu0
        %5450 = vmatprep.mubr.f32.mxu0 %v5217
        %5451 = vmatmul.mubr.f32.gmra.mrb[0].mxu0 %v5031
        %v5452 = vpop.f32.mrb[0].mxu0
        %v5453 = vadd.f32 %v4877, %v5452
        %v5454 = vpop.f32.mrb[0].mxu0
        %5455 = vmatprep.mubr.f32.mxu0 %v5219
        %5456 = vmatmul.mubr.f32.gmra.mrb[0].mxu0 %v5035
        %v5457 = vpop.f32.mrb[0].mxu0
        %v5458 = vadd.f32 %v4877, %v5457
        %v5459 = vpop.f32.mrb[0].mxu0
        %5460 = vmatprep.mubr.f32.mxu0 %v5221
        %5461 = vmatmul.mubr.f32.gmra.mrb[0].mxu0 %v5039
        %v5462 = vpop.f32.mrb[0].mxu0
        %v5463 = vadd.f32 %v4877, %v5462
        %v5464 = vpop.f32.mrb[0].mxu0
        %5465 = vmatprep.mubr.f32.mxu0 %v5223
        %5466 = vmatmul.mubr.f32.gmra.mrb[0].mxu0 %v5043
        %v5467 = vpop.f32.mrb[0].mxu0
        %v5468 = vadd.f32 %v4877, %v5467
        %v5469 = vpop.f32.mrb[0].mxu0
        %5470 = vmatprep.mubr.f32.mxu0 %v5225
        %5471 = vmatmul.mubr.f32.gmra.mrb[0].mxu0 %v5047
        %v5472 = vpop.f32.mrb[0].mxu0
        %v5473 = vadd.f32 %v4877, %v5472
        %v5474 = vpop.f32.mrb[0].mxu0
        %5475 = vmatprep.mubr.f32.mxu0 %v5227
        %5476 = vmatmul.mubr.f32.gmra.mrb[0].mxu0 %v5051
        %v5477 = vpop.f32.mrb[0].mxu0
        %v5478 = vadd.f32 %v4877, %v5477
        %v5479 = vpop.f32.mrb[0].mxu0
        %5480 = vmatprep.mubr.f32.mxu0 %v5229
        %5481 = vmatmul.mubr.f32.gmra.mrb[0].mxu0 %v5055
        %v5482 = vpop.f32.mrb[0].mxu0
        %v5483 = vadd.f32 %v4877, %v5482
        %v5484 = vpop.f32.mrb[0].mxu0
        %5485 = vmatprep.mubr.f32.mxu0 %v5231
        %5486 = vmatmul.mubr.f32.gmra.mrb[0].mxu0 %v5059
        %v5487 = vpop.f32.mrb[0].mxu0
        %v5488 = vadd.f32 %v4877, %v5487
        %v5489 = vpop.f32.mrb[0].mxu0
        %5490 = vmatprep.mubr.f32.mxu0 %v5233
        %5491 = vmatmul.mubr.f32.gmra.mrb[0].mxu0 %v5063
        %v5492 = vpop.f32.mrb[0].mxu0
        %v5493 = vadd.f32 %v4877, %v5492
        %v5494 = vpop.f32.mrb[0].mxu0
        %5495 = vmatprep.mubr.f32.mxu0 %v5235
        %5496 = vmatmul.mubr.f32.gmra.mrb[0].mxu0 %v5067
        %v5497 = vpop.f32.mrb[0].mxu0
        %v5498 = vadd.f32 %v4877, %v5497
        %v5499 = vpop.f32.mrb[0].mxu0
        %5500 = vmatprep.mubr.f32.mxu0 %v5237
        %5501 = vmatmul.mubr.f32.gmra.mrb[0].mxu0 %v5071
        %v5502 = vpop.f32.mrb[0].mxu0
        %v5503 = vadd.f32 %v4877, %v5502
        %v5504 = vpop.f32.mrb[0].mxu0
        %5505 = vmatprep.mubr.f32.mxu0 %v5239
        %5506 = vmatmul.mubr.f32.gmra.mrb[0].mxu0 %v5075
        %v5507 = vpop.f32.mrb[0].mxu0
        %v5508 = vadd.f32 %v4877, %v5507
        %v5509 = vpop.f32.mrb[0].mxu0
        %5510 = vmatprep.mubr.f32.mxu0 %v5241
        %5511 = vmatmul.mubr.f32.gmra.mrb[0].mxu0 %v5079
        %v5512 = vpop.f32.mrb[0].mxu0
        %v5513 = vadd.f32 %v4877, %v5512
        %v5514 = vpop.f32.mrb[0].mxu0
        %5515 = vmatprep.mubr.f32.mxu0 %v5243
        %5516 = vmatmul.mubr.f32.gmra.mrb[0].mxu0 %v5083
        %v5517 = vpop.f32.mrb[0].mxu0
        %v5518 = vadd.f32 %v4877, %v5517
        %v5519 = vpop.f32.mrb[0].mxu0
        %5520 = vmatprep.mubr.f32.mxu0 %v5245
        %5521 = vmatmul.mubr.f32.gmra.mrb[0].mxu0 %v5087
        %v5522 = vpop.f32.mrb[0].mxu0
        %v5523 = vadd.f32 %v4877, %v5522
        %v5524 = vpop.f32.mrb[0].mxu0
        %5525 = vmatprep.mubr.f32.mxu0 %v5247
        %5526 = vmatmul.mubr.f32.gmra.mrb[0].mxu0 %v5091
        %v5527 = vpop.f32.mrb[0].mxu0
        %v5528 = vadd.f32 %v4877, %v5527
        %v5529 = vpop.f32.mrb[0].mxu0
        %5530 = vmatprep.mubr.f32.mxu0 %v5249
        %5531 = vmatmul.mubr.f32.gmra.mrb[0].mxu0 %v5095
        %v5532 = vpop.f32.mrb[0].mxu0
        %v5533 = vadd.f32 %v4877, %v5532
        %v5534 = vpop.f32.mrb[0].mxu0
        %5535 = vmatprep.mubr.f32.mxu0 %v5251
        %5536 = vmatmul.mubr.f32.gmra.mrb[0].mxu0 %v5099
        %v5537 = vpop.f32.mrb[0].mxu0
        %v5538 = vadd.f32 %v4877, %v5537
        %v5539 = vpop.f32.mrb[0].mxu0
        %5540 = vmatprep.mubr.f32.mxu0 %v5253
        %5541 = vmatmul.mubr.f32.gmra.mrb[0].mxu0 %v5103
        %v5542 = vpop.f32.mrb[0].mxu0
        %v5543 = vadd.f32 %v4877, %v5542
        %v5544 = vpop.f32.mrb[0].mxu0
        %5545 = vmatprep.mubr.f32.mxu0 %v5255
        %5546 = vmatmul.mubr.f32.gmra.mrb[0].mxu0 %v5107
        %v5547 = vpop.f32.mrb[0].mxu0
        %v5548 = vadd.f32 %v4877, %v5547
        %v5549 = vpop.f32.mrb[0].mxu0
        %5550 = vmatprep.mubr.f32.mxu0 %v5257
        %5551 = vmatmul.mubr.f32.gmra.mrb[0].mxu0 %v5111
        %v5552 = vpop.f32.mrb[0].mxu0
        %v5553 = vadd.f32 %v4877, %v5552
        %v5554 = vpop.f32.mrb[0].mxu0
        %5555 = vmatprep.mubr.f32.mxu0 %v5259
        %5556 = vmatmul.mubr.f32.gmra.mrb[0].mxu0 %v5115
        %v5557 = vpop.f32.mrb[0].mxu0
        %v5558 = vadd.f32 %v4877, %v5557
        %v5559 = vpop.f32.mrb[0].mxu0
        %5560 = vmatprep.mubr.f32.mxu0 %v5259
        %5561 = vmatmul.mubr.f32.gmra.mrb[0].mxu0 %v5118
        %v5562 = vpop.f32.mrb[0].mxu0
        %v5563 = vadd.f32 %v4877, %v5562
        %v5564 = vpop.f32.mrb[0].mxu0
        %5565 = vdwg.mxu0
        %v5566 = vmax.f32 %v5328, 0.0
        %v5567 = vmax.f32 %v5333, 0.0
        %v5568 = vmax.f32 %v5338, 0.0
        %v5569 = vmax.f32 %v5343, 0.0
        %v5570 = vmax.f32 %v5348, 0.0
        %v5571 = vmax.f32 %v5353, 0.0
        %v5572 = vmax.f32 %v5358, 0.0
        %v5573 = vmax.f32 %v5363, 0.0
        %v5574 = vmax.f32 %v5368, 0.0
        %v5575 = vmax.f32 %v5373, 0.0
        %v5576 = vmax.f32 %v5378, 0.0
        %v5577 = vmax.f32 %v5383, 0.0
        %v5578 = vmax.f32 %v5388, 0.0
        %v5579 = vmax.f32 %v5393, 0.0
        %v5580 = vmax.f32 %v5398, 0.0
        %v5581 = vmax.f32 %v5403, 0.0
        %v5582 = vmax.f32 %v5408, 0.0
        %v5583 = vmax.f32 %v5413, 0.0
        %v5584 = vmax.f32 %v5418, 0.0
        %v5585 = vmax.f32 %v5423, 0.0
        %v5586 = vmax.f32 %v5428, 0.0
        %v5587 = vmax.f32 %v5433, 0.0
        %v5588 = vmax.f32 %v5438, 0.0
        %v5589 = vmax.f32 %v5443, 0.0
        %v5590 = vmax.f32 %v5448, 0.0
        %v5591 = vmax.f32 %v5453, 0.0
        %v5592 = vmax.f32 %v5458, 0.0
        %v5593 = vmax.f32 %v5463, 0.0
        %v5594 = vmax.f32 %v5468, 0.0
        %v5595 = vmax.f32 %v5473, 0.0
        %v5596 = vmax.f32 %v5478, 0.0
        %v5597 = vmax.f32 %v5483, 0.0
        %v5598 = vmax.f32 %v5488, 0.0
        %v5599 = vmax.f32 %v5493, 0.0
        %v5600 = vmax.f32 %v5498, 0.0
        %v5601 = vmax.f32 %v5503, 0.0
        %v5602 = vmax.f32 %v5508, 0.0
        %v5603 = vmax.f32 %v5513, 0.0
        %v5604 = vmax.f32 %v5518, 0.0
        %v5605 = vmax.f32 %v5523, 0.0
        %v5606 = vmax.f32 %v5528, 0.0
        %v5607 = vmax.f32 %v5533, 0.0
        %v5608 = vmax.f32 %v5538, 0.0
        %v5609 = vmax.f32 %v5543, 0.0
        %v5610 = vmax.f32 %v5548, 0.0
        %v5611 = vmax.f32 %v5553, 0.0
        %v5612 = vmax.f32 %v5558, 0.0
        %v5613 = vmax.f32 %v5563, 0.0
        %v5614 = vmul.f32 %v5566, %v2962
        %v5615 = vmul.f32 %v5567, %v2967
        %v5616 = vmul.f32 %v5568, %v2972
        %v5617 = vmul.f32 %v5569, %v2977
        %v5618 = vmul.f32 %v5570, %v2982
        %v5619 = vmul.f32 %v5571, %v2987
        %v5620 = vmul.f32 %v5572, %v2992
        %v5621 = vmul.f32 %v5573, %v2997
        %v5622 = vmul.f32 %v5574, %v3002
        %v5623 = vmul.f32 %v5575, %v3007
        %v5624 = vmul.f32 %v5576, %v3012
        %v5625 = vmul.f32 %v5577, %v3017
        %v5626 = vmul.f32 %v5578, %v3022
        %v5627 = vmul.f32 %v5579, %v3027
        %v5628 = vmul.f32 %v5580, %v3032
        %v5629 = vmul.f32 %v5581, %v3037
        %v5630 = vmul.f32 %v5582, %v3042
        %v5631 = vmul.f32 %v5583, %v3047
        %v5632 = vmul.f32 %v5584, %v3052
        %v5633 = vmul.f32 %v5585, %v3057
        %v5634 = vmul.f32 %v5586, %v3062
        %v5635 = vmul.f32 %v5587, %v3067
        %v5636 = vmul.f32 %v5588, %v3072
        %v5637 = vmul.f32 %v5589, %v3077
        %v5638 = vmul.f32 %v5590, %v3082
        %v5639 = vmul.f32 %v5591, %v3087
        %v5640 = vmul.f32 %v5592, %v3092
        %v5641 = vmul.f32 %v5593, %v3097
        %v5642 = vmul.f32 %v5594, %v3102
        %v5643 = vmul.f32 %v5595, %v3107
        %v5644 = vmul.f32 %v5596, %v3112
        %v5645 = vmul.f32 %v5597, %v3117
        %v5646 = vmul.f32 %v5598, %v3122
        %v5647 = vmul.f32 %v5599, %v3127
        %v5648 = vmul.f32 %v5600, %v3132
        %v5649 = vmul.f32 %v5601, %v3137
        %v5650 = vmul.f32 %v5602, %v3142
        %v5651 = vmul.f32 %v5603, %v3147
        %v5652 = vmul.f32 %v5604, %v3152
        %v5653 = vmul.f32 %v5605, %v3157
        %v5654 = vmul.f32 %v5606, %v3162
        %v5655 = vmul.f32 %v5607, %v3167
        %v5656 = vmul.f32 %v5608, %v3172
        %v5657 = vmul.f32 %v5609, %v3177
        %v5658 = vmul.f32 %v5610, %v3182
        %v5659 = vmul.f32 %v5611, %v3187
        %v5660 = vmul.f32 %v5612, %v3192
        %v5661 = vmul.f32 %v5613, %v3197
        %v5707 = vrot.slane %v5614, 1
        %v5708 = vsel %vm496, %v3293, %v5707
        %v5709 = vrot.slane %v5615, 1
        %v5710 = vsel %vm496, %v5707, %v5709
        %v5711 = vrot.slane %v5616, 1
        %v5712 = vsel %vm496, %v5709, %v5711
        %v5713 = vrot.slane %v5617, 1
        %v5714 = vsel %vm496, %v5711, %v5713
        %v5715 = vrot.slane %v5618, 1
        %v5716 = vsel %vm496, %v5713, %v5715
        %v5717 = vrot.slane %v5619, 1
        %v5718 = vsel %vm496, %v5715, %v5717
        %v5719 = vrot.slane %v5620, 1
        %v5720 = vsel %vm496, %v5717, %v5719
        %v5721 = vrot.slane %v5621, 1
        %v5722 = vsel %vm496, %v5719, %v5721
        %v5723 = vrot.slane %v5622, 1
        %v5724 = vsel %vm496, %v5721, %v5723
        %v5725 = vrot.slane %v5623, 1
        %v5726 = vsel %vm496, %v5723, %v5725
        %v5727 = vrot.slane %v5624, 1
        %v5728 = vsel %vm496, %v5725, %v5727
        %v5729 = vrot.slane %v5625, 1
        %v5730 = vsel %vm496, %v5727, %v5729
        %v5731 = vrot.slane %v5626, 1
        %v5732 = vsel %vm496, %v5729, %v5731
        %v5733 = vrot.slane %v5627, 1
        %v5734 = vsel %vm496, %v5731, %v5733
        %v5735 = vrot.slane %v5628, 1
        %v5736 = vsel %vm496, %v5733, %v5735
        %v5737 = vrot.slane %v5629, 1
        %v5738 = vsel %vm496, %v5735, %v5737
        %v5739 = vrot.slane %v5630, 1
        %v5740 = vsel %vm496, %v5737, %v5739
        %v5741 = vrot.slane %v5631, 1
        %v5742 = vsel %vm496, %v5739, %v5741
        %v5743 = vrot.slane %v5632, 1
        %v5744 = vsel %vm496, %v5741, %v5743
        %v5745 = vrot.slane %v5633, 1
        %v5746 = vsel %vm496, %v5743, %v5745
        %v5747 = vrot.slane %v5634, 1
        %v5748 = vsel %vm496, %v5745, %v5747
        %v5749 = vrot.slane %v5635, 1
        %v5750 = vsel %vm496, %v5747, %v5749
        %v5751 = vrot.slane %v5636, 1
        %v5752 = vsel %vm496, %v5749, %v5751
        %v5753 = vrot.slane %v5637, 1
        %v5754 = vsel %vm496, %v5751, %v5753
        %v5755 = vrot.slane %v5638, 1
        %v5756 = vsel %vm496, %v5753, %v5755
        %v5757 = vrot.slane %v5639, 1
        %v5758 = vsel %vm496, %v5755, %v5757
        %v5759 = vrot.slane %v5640, 1
        %v5760 = vsel %vm496, %v5757, %v5759
        %v5761 = vrot.slane %v5641, 1
        %v5762 = vsel %vm496, %v5759, %v5761
        %v5763 = vrot.slane %v5642, 1
        %v5764 = vsel %vm496, %v5761, %v5763
        %v5765 = vrot.slane %v5643, 1
        %v5766 = vsel %vm496, %v5763, %v5765
        %v5767 = vrot.slane %v5644, 1
        %v5768 = vsel %vm496, %v5765, %v5767
        %v5769 = vrot.slane %v5645, 1
        %v5770 = vsel %vm496, %v5767, %v5769
        %v5771 = vrot.slane %v5646, 1
        %v5772 = vsel %vm496, %v5769, %v5771
        %v5773 = vrot.slane %v5647, 1
        %v5774 = vsel %vm496, %v5771, %v5773
        %v5775 = vrot.slane %v5648, 1
        %v5776 = vsel %vm496, %v5773, %v5775
        %v5777 = vrot.slane %v5649, 1
        %v5778 = vsel %vm496, %v5775, %v5777
        %v5779 = vrot.slane %v5650, 1
        %v5780 = vsel %vm496, %v5777, %v5779
        %v5781 = vrot.slane %v5651, 1
        %v5782 = vsel %vm496, %v5779, %v5781
        %v5783 = vrot.slane %v5652, 1
        %v5784 = vsel %vm496, %v5781, %v5783
        %v5785 = vrot.slane %v5653, 1
        %v5786 = vsel %vm496, %v5783, %v5785
        %v5787 = vrot.slane %v5654, 1
        %v5788 = vsel %vm496, %v5785, %v5787
        %v5789 = vrot.slane %v5655, 1
        %v5790 = vsel %vm496, %v5787, %v5789
        %v5791 = vrot.slane %v5656, 1
        %v5792 = vsel %vm496, %v5789, %v5791
        %v5793 = vrot.slane %v5657, 1
        %v5794 = vsel %vm496, %v5791, %v5793
        %v5795 = vrot.slane %v5658, 1
        %v5796 = vsel %vm496, %v5793, %v5795
        %5797 = vrot.lane.b32.xlu0 %v3293, 32
        %v5798 = vpop.permute.xlu0 %5797
        %5799 = vrot.lane.b32.xlu0 %v3294, 32
        %v5800 = vpop.permute.xlu0 %5799
        %5801 = vrot.lane.b32.xlu0 %v5708, 32
        %v5802 = vpop.permute.xlu0 %5801
        %5803 = vrot.lane.b32.xlu0 %v5710, 32
        %v5804 = vpop.permute.xlu0 %5803
        %5805 = vrot.lane.b32.xlu0 %v5712, 32
        %v5806 = vpop.permute.xlu0 %5805
        %5807 = vrot.lane.b32.xlu0 %v5714, 32
        %v5808 = vpop.permute.xlu0 %5807
        %5809 = vrot.lane.b32.xlu0 %v5716, 32
        %v5810 = vpop.permute.xlu0 %5809
        %5811 = vrot.lane.b32.xlu0 %v5718, 32
        %v5812 = vpop.permute.xlu0 %5811
        %5813 = vrot.lane.b32.xlu0 %v5720, 32
        %v5814 = vpop.permute.xlu0 %5813
        %5815 = vrot.lane.b32.xlu0 %v5722, 32
        %v5816 = vpop.permute.xlu0 %5815
        %5817 = vrot.lane.b32.xlu0 %v5724, 32
        %v5818 = vpop.permute.xlu0 %5817
        %5819 = vrot.lane.b32.xlu0 %v5726, 32
        %v5820 = vpop.permute.xlu0 %5819
        %5821 = vrot.lane.b32.xlu0 %v5728, 32
        %v5822 = vpop.permute.xlu0 %5821
        %5823 = vrot.lane.b32.xlu0 %v5730, 32
        %v5824 = vpop.permute.xlu0 %5823
        %5825 = vrot.lane.b32.xlu0 %v5732, 32
        %v5826 = vpop.permute.xlu0 %5825
        %5827 = vrot.lane.b32.xlu0 %v5734, 32
        %v5828 = vpop.permute.xlu0 %5827
        %5829 = vrot.lane.b32.xlu0 %v5736, 32
        %v5830 = vpop.permute.xlu0 %5829
        %5831 = vrot.lane.b32.xlu0 %v5738, 32
        %v5832 = vpop.permute.xlu0 %5831
        %5833 = vrot.lane.b32.xlu0 %v5740, 32
        %v5834 = vpop.permute.xlu0 %5833
        %5835 = vrot.lane.b32.xlu0 %v5742, 32
        %v5836 = vpop.permute.xlu0 %5835
        %5837 = vrot.lane.b32.xlu0 %v5744, 32
        %v5838 = vpop.permute.xlu0 %5837
        %5839 = vrot.lane.b32.xlu0 %v5746, 32
        %v5840 = vpop.permute.xlu0 %5839
        %5841 = vrot.lane.b32.xlu0 %v5748, 32
        %v5842 = vpop.permute.xlu0 %5841
        %5843 = vrot.lane.b32.xlu0 %v5750, 32
        %v5844 = vpop.permute.xlu0 %5843
        %5845 = vrot.lane.b32.xlu0 %v5752, 32
        %v5846 = vpop.permute.xlu0 %5845
        %5847 = vrot.lane.b32.xlu0 %v5754, 32
        %v5848 = vpop.permute.xlu0 %5847
        %5849 = vrot.lane.b32.xlu0 %v5756, 32
        %v5850 = vpop.permute.xlu0 %5849
        %5851 = vrot.lane.b32.xlu0 %v5758, 32
        %v5852 = vpop.permute.xlu0 %5851
        %5853 = vrot.lane.b32.xlu0 %v5760, 32
        %v5854 = vpop.permute.xlu0 %5853
        %5855 = vrot.lane.b32.xlu0 %v5762, 32
        %v5856 = vpop.permute.xlu0 %5855
        %5857 = vrot.lane.b32.xlu0 %v5764, 32
        %v5858 = vpop.permute.xlu0 %5857
        %5859 = vrot.lane.b32.xlu0 %v5766, 32
        %v5860 = vpop.permute.xlu0 %5859
        %5861 = vrot.lane.b32.xlu0 %v5768, 32
        %v5862 = vpop.permute.xlu0 %5861
        %5863 = vrot.lane.b32.xlu0 %v5770, 32
        %v5864 = vpop.permute.xlu0 %5863
        %5865 = vrot.lane.b32.xlu0 %v5772, 32
        %v5866 = vpop.permute.xlu0 %5865
        %5867 = vrot.lane.b32.xlu0 %v5774, 32
        %v5868 = vpop.permute.xlu0 %5867
        %5869 = vrot.lane.b32.xlu0 %v5776, 32
        %v5870 = vpop.permute.xlu0 %5869
        %5871 = vrot.lane.b32.xlu0 %v5778, 32
        %v5872 = vpop.permute.xlu0 %5871
        %5873 = vrot.lane.b32.xlu0 %v5780, 32
        %v5874 = vpop.permute.xlu0 %5873
        %5875 = vrot.lane.b32.xlu0 %v5782, 32
        %v5876 = vpop.permute.xlu0 %5875
        %5877 = vrot.lane.b32.xlu0 %v5784, 32
        %v5878 = vpop.permute.xlu0 %5877
        %5879 = vrot.lane.b32.xlu0 %v5786, 32
        %v5880 = vpop.permute.xlu0 %5879
        %5881 = vrot.lane.b32.xlu0 %v5788, 32
        %v5882 = vpop.permute.xlu0 %5881
        %5883 = vrot.lane.b32.xlu0 %v5790, 32
        %v5884 = vpop.permute.xlu0 %5883
        %5885 = vrot.lane.b32.xlu0 %v5792, 32
        %v5886 = vpop.permute.xlu0 %5885
        %5887 = vrot.lane.b32.xlu0 %v5794, 32
        %v5888 = vpop.permute.xlu0 %5887
        %5889 = vrot.lane.b32.xlu0 %v5796, 32
        %v5890 = vpop.permute.xlu0 %5889
        %5891 = vrot.lane.b32.xlu0 %v5795, 32
        %v5892 = vpop.permute.xlu0 %5891
        %v5942 = vrot.slane %v5614, 2
        %v5943 = vsel %vm740, %v3530, %v5942
        %v5944 = vrot.slane %v5615, 2
        %v5945 = vsel %vm740, %v5942, %v5944
        %v5946 = vrot.slane %v5616, 2
        %v5947 = vsel %vm740, %v5944, %v5946
        %v5948 = vrot.slane %v5617, 2
        %v5949 = vsel %vm740, %v5946, %v5948
        %v5950 = vrot.slane %v5618, 2
        %v5951 = vsel %vm740, %v5948, %v5950
        %v5952 = vrot.slane %v5619, 2
        %v5953 = vsel %vm740, %v5950, %v5952
        %v5954 = vrot.slane %v5620, 2
        %v5955 = vsel %vm740, %v5952, %v5954
        %v5956 = vrot.slane %v5621, 2
        %v5957 = vsel %vm740, %v5954, %v5956
        %v5958 = vrot.slane %v5622, 2
        %v5959 = vsel %vm740, %v5956, %v5958
        %v5960 = vrot.slane %v5623, 2
        %v5961 = vsel %vm740, %v5958, %v5960
        %v5962 = vrot.slane %v5624, 2
        %v5963 = vsel %vm740, %v5960, %v5962
        %v5964 = vrot.slane %v5625, 2
        %v5965 = vsel %vm740, %v5962, %v5964
        %v5966 = vrot.slane %v5626, 2
        %v5967 = vsel %vm740, %v5964, %v5966
        %v5968 = vrot.slane %v5627, 2
        %v5969 = vsel %vm740, %v5966, %v5968
        %v5970 = vrot.slane %v5628, 2
        %v5971 = vsel %vm740, %v5968, %v5970
        %v5972 = vrot.slane %v5629, 2
        %v5973 = vsel %vm740, %v5970, %v5972
        %v5974 = vrot.slane %v5630, 2
        %v5975 = vsel %vm740, %v5972, %v5974
        %v5976 = vrot.slane %v5631, 2
        %v5977 = vsel %vm740, %v5974, %v5976
        %v5978 = vrot.slane %v5632, 2
        %v5979 = vsel %vm740, %v5976, %v5978
        %v5980 = vrot.slane %v5633, 2
        %v5981 = vsel %vm740, %v5978, %v5980
        %v5982 = vrot.slane %v5634, 2
        %v5983 = vsel %vm740, %v5980, %v5982
        %v5984 = vrot.slane %v5635, 2
        %v5985 = vsel %vm740, %v5982, %v5984
        %v5986 = vrot.slane %v5636, 2
        %v5987 = vsel %vm740, %v5984, %v5986
        %v5988 = vrot.slane %v5637, 2
        %v5989 = vsel %vm740, %v5986, %v5988
        %v5990 = vrot.slane %v5638, 2
        %v5991 = vsel %vm740, %v5988, %v5990
        %v5992 = vrot.slane %v5639, 2
        %v5993 = vsel %vm740, %v5990, %v5992
        %v5994 = vrot.slane %v5640, 2
        %v5995 = vsel %vm740, %v5992, %v5994
        %v5996 = vrot.slane %v5641, 2
        %v5997 = vsel %vm740, %v5994, %v5996
        %v5998 = vrot.slane %v5642, 2
        %v5999 = vsel %vm740, %v5996, %v5998
        %v6000 = vrot.slane %v5643, 2
        %v6001 = vsel %vm740, %v5998, %v6000
        %v6002 = vrot.slane %v5644, 2
        %v6003 = vsel %vm740, %v6000, %v6002
        %v6004 = vrot.slane %v5645, 2
        %v6005 = vsel %vm740, %v6002, %v6004
        %v6006 = vrot.slane %v5646, 2
        %v6007 = vsel %vm740, %v6004, %v6006
        %v6008 = vrot.slane %v5647, 2
        %v6009 = vsel %vm740, %v6006, %v6008
        %v6010 = vrot.slane %v5648, 2
        %v6011 = vsel %vm740, %v6008, %v6010
        %v6012 = vrot.slane %v5649, 2
        %v6013 = vsel %vm740, %v6010, %v6012
        %v6014 = vrot.slane %v5650, 2
        %v6015 = vsel %vm740, %v6012, %v6014
        %v6016 = vrot.slane %v5651, 2
        %v6017 = vsel %vm740, %v6014, %v6016
        %v6018 = vrot.slane %v5652, 2
        %v6019 = vsel %vm740, %v6016, %v6018
        %v6020 = vrot.slane %v5653, 2
        %v6021 = vsel %vm740, %v6018, %v6020
        %v6022 = vrot.slane %v5654, 2
        %v6023 = vsel %vm740, %v6020, %v6022
        %v6024 = vrot.slane %v5655, 2
        %v6025 = vsel %vm740, %v6022, %v6024
        %v6026 = vrot.slane %v5656, 2
        %v6027 = vsel %vm740, %v6024, %v6026
        %v6028 = vrot.slane %v5657, 2
        %v6029 = vsel %vm740, %v6026, %v6028
        %v6030 = vrot.slane %v5658, 2
        %v6031 = vsel %vm740, %v6028, %v6030
        %v6032 = vrot.slane %v5659, 2
        %v6033 = vsel %vm740, %v6030, %v6032
        %6034 = vrot.lane.b32.xlu0 %v3530, 64
        %v6035 = vpop.permute.xlu0 %6034
        %6036 = vrot.lane.b32.xlu0 %v3531, 64
        %v6037 = vpop.permute.xlu0 %6036
        %6038 = vrot.lane.b32.xlu0 %v5943, 64
        %v6039 = vpop.permute.xlu0 %6038
        %6040 = vrot.lane.b32.xlu0 %v5945, 64
        %v6041 = vpop.permute.xlu0 %6040
        %6042 = vrot.lane.b32.xlu0 %v5947, 64
        %v6043 = vpop.permute.xlu0 %6042
        %6044 = vrot.lane.b32.xlu0 %v5949, 64
        %v6045 = vpop.permute.xlu0 %6044
        %6046 = vrot.lane.b32.xlu0 %v5951, 64
        %v6047 = vpop.permute.xlu0 %6046
        %6048 = vrot.lane.b32.xlu0 %v5953, 64
        %v6049 = vpop.permute.xlu0 %6048
        %6050 = vrot.lane.b32.xlu0 %v5955, 64
        %v6051 = vpop.permute.xlu0 %6050
        %6052 = vrot.lane.b32.xlu0 %v5957, 64
        %v6053 = vpop.permute.xlu0 %6052
        %6054 = vrot.lane.b32.xlu0 %v5959, 64
        %v6055 = vpop.permute.xlu0 %6054
        %6056 = vrot.lane.b32.xlu0 %v5961, 64
        %v6057 = vpop.permute.xlu0 %6056
        %6058 = vrot.lane.b32.xlu0 %v5963, 64
        %v6059 = vpop.permute.xlu0 %6058
        %6060 = vrot.lane.b32.xlu0 %v5965, 64
        %v6061 = vpop.permute.xlu0 %6060
        %6062 = vrot.lane.b32.xlu0 %v5967, 64
        %v6063 = vpop.permute.xlu0 %6062
        %6064 = vrot.lane.b32.xlu0 %v5969, 64
        %v6065 = vpop.permute.xlu0 %6064
        %6066 = vrot.lane.b32.xlu0 %v5971, 64
        %v6067 = vpop.permute.xlu0 %6066
        %6068 = vrot.lane.b32.xlu0 %v5973, 64
        %v6069 = vpop.permute.xlu0 %6068
        %6070 = vrot.lane.b32.xlu0 %v5975, 64
        %v6071 = vpop.permute.xlu0 %6070
        %6072 = vrot.lane.b32.xlu0 %v5977, 64
        %v6073 = vpop.permute.xlu0 %6072
        %6074 = vrot.lane.b32.xlu0 %v5979, 64
        %v6075 = vpop.permute.xlu0 %6074
        %6076 = vrot.lane.b32.xlu0 %v5981, 64
        %v6077 = vpop.permute.xlu0 %6076
        %6078 = vrot.lane.b32.xlu0 %v5983, 64
        %v6079 = vpop.permute.xlu0 %6078
        %6080 = vrot.lane.b32.xlu0 %v5985, 64
        %v6081 = vpop.permute.xlu0 %6080
        %6082 = vrot.lane.b32.xlu0 %v5987, 64
        %v6083 = vpop.permute.xlu0 %6082
        %6084 = vrot.lane.b32.xlu0 %v5989, 64
        %v6085 = vpop.permute.xlu0 %6084
        %6086 = vrot.lane.b32.xlu0 %v5991, 64
        %v6087 = vpop.permute.xlu0 %6086
        %6088 = vrot.lane.b32.xlu0 %v5993, 64
        %v6089 = vpop.permute.xlu0 %6088
        %6090 = vrot.lane.b32.xlu0 %v5995, 64
        %v6091 = vpop.permute.xlu0 %6090
        %6092 = vrot.lane.b32.xlu0 %v5997, 64
        %v6093 = vpop.permute.xlu0 %6092
        %6094 = vrot.lane.b32.xlu0 %v5999, 64
        %v6095 = vpop.permute.xlu0 %6094
        %6096 = vrot.lane.b32.xlu0 %v6001, 64
        %v6097 = vpop.permute.xlu0 %6096
        %6098 = vrot.lane.b32.xlu0 %v6003, 64
        %v6099 = vpop.permute.xlu0 %6098
        %6100 = vrot.lane.b32.xlu0 %v6005, 64
        %v6101 = vpop.permute.xlu0 %6100
        %6102 = vrot.lane.b32.xlu0 %v6007, 64
        %v6103 = vpop.permute.xlu0 %6102
        %6104 = vrot.lane.b32.xlu0 %v6009, 64
        %v6105 = vpop.permute.xlu0 %6104
        %6106 = vrot.lane.b32.xlu0 %v6011, 64
        %v6107 = vpop.permute.xlu0 %6106
        %6108 = vrot.lane.b32.xlu0 %v6013, 64
        %v6109 = vpop.permute.xlu0 %6108
        %6110 = vrot.lane.b32.xlu0 %v6015, 64
        %v6111 = vpop.permute.xlu0 %6110
        %6112 = vrot.lane.b32.xlu0 %v6017, 64
        %v6113 = vpop.permute.xlu0 %6112
        %6114 = vrot.lane.b32.xlu0 %v6019, 64
        %v6115 = vpop.permute.xlu0 %6114
        %6116 = vrot.lane.b32.xlu0 %v6021, 64
        %v6117 = vpop.permute.xlu0 %6116
        %6118 = vrot.lane.b32.xlu0 %v6023, 64
        %v6119 = vpop.permute.xlu0 %6118
        %6120 = vrot.lane.b32.xlu0 %v6025, 64
        %v6121 = vpop.permute.xlu0 %6120
        %6122 = vrot.lane.b32.xlu0 %v6027, 64
        %v6123 = vpop.permute.xlu0 %6122
        %6124 = vrot.lane.b32.xlu0 %v6029, 64
        %v6125 = vpop.permute.xlu0 %6124
        %6126 = vrot.lane.b32.xlu0 %v6031, 64
        %v6127 = vpop.permute.xlu0 %6126
        %6128 = vrot.lane.b32.xlu0 %v6033, 64
        %v6129 = vpop.permute.xlu0 %6128
        %6180 = vrot.lane.b32.xlu0 %v5614, 96
        %v6181 = vpop.permute.xlu0 %6180
        %6182 = vrot.lane.b32.xlu0 %v5615, 96
        %v6183 = vpop.permute.xlu0 %6182
        %6184 = vrot.lane.b32.xlu0 %v5616, 96
        %v6185 = vpop.permute.xlu0 %6184
        %6186 = vrot.lane.b32.xlu0 %v5617, 96
        %v6187 = vpop.permute.xlu0 %6186
        %6188 = vrot.lane.b32.xlu0 %v5618, 96
        %v6189 = vpop.permute.xlu0 %6188
        %6190 = vrot.lane.b32.xlu0 %v5619, 96
        %v6191 = vpop.permute.xlu0 %6190
        %6192 = vrot.lane.b32.xlu0 %v5620, 96
        %v6193 = vpop.permute.xlu0 %6192
        %6194 = vrot.lane.b32.xlu0 %v5621, 96
        %v6195 = vpop.permute.xlu0 %6194
        %6196 = vrot.lane.b32.xlu0 %v5622, 96
        %v6197 = vpop.permute.xlu0 %6196
        %6198 = vrot.lane.b32.xlu0 %v5623, 96
        %v6199 = vpop.permute.xlu0 %6198
        %6200 = vrot.lane.b32.xlu0 %v5624, 96
        %v6201 = vpop.permute.xlu0 %6200
        %6202 = vrot.lane.b32.xlu0 %v5625, 96
        %v6203 = vpop.permute.xlu0 %6202
        %6204 = vrot.lane.b32.xlu0 %v5626, 96
        %v6205 = vpop.permute.xlu0 %6204
        %6206 = vrot.lane.b32.xlu0 %v5627, 96
        %v6207 = vpop.permute.xlu0 %6206
        %6208 = vrot.lane.b32.xlu0 %v5628, 96
        %v6209 = vpop.permute.xlu0 %6208
        %6210 = vrot.lane.b32.xlu0 %v5629, 96
        %v6211 = vpop.permute.xlu0 %6210
        %6212 = vrot.lane.b32.xlu0 %v5630, 96
        %v6213 = vpop.permute.xlu0 %6212
        %6214 = vrot.lane.b32.xlu0 %v5631, 96
        %v6215 = vpop.permute.xlu0 %6214
        %6216 = vrot.lane.b32.xlu0 %v5632, 96
        %v6217 = vpop.permute.xlu0 %6216
        %6218 = vrot.lane.b32.xlu0 %v5633, 96
        %v6219 = vpop.permute.xlu0 %6218
        %6220 = vrot.lane.b32.xlu0 %v5634, 96
        %v6221 = vpop.permute.xlu0 %6220
        %6222 = vrot.lane.b32.xlu0 %v5635, 96
        %v6223 = vpop.permute.xlu0 %6222
        %6224 = vrot.lane.b32.xlu0 %v5636, 96
        %v6225 = vpop.permute.xlu0 %6224
        %6226 = vrot.lane.b32.xlu0 %v5637, 96
        %v6227 = vpop.permute.xlu0 %6226
        %6228 = vrot.lane.b32.xlu0 %v5638, 96
        %v6229 = vpop.permute.xlu0 %6228
        %6230 = vrot.lane.b32.xlu0 %v5639, 96
        %v6231 = vpop.permute.xlu0 %6230
        %6232 = vrot.lane.b32.xlu0 %v5640, 96
        %v6233 = vpop.permute.xlu0 %6232
        %6234 = vrot.lane.b32.xlu0 %v5641, 96
        %v6235 = vpop.permute.xlu0 %6234
        %6236 = vrot.lane.b32.xlu0 %v5642, 96
        %v6237 = vpop.permute.xlu0 %6236
        %6238 = vrot.lane.b32.xlu0 %v5643, 96
        %v6239 = vpop.permute.xlu0 %6238
        %6240 = vrot.lane.b32.xlu0 %v5644, 96
        %v6241 = vpop.permute.xlu0 %6240
        %6242 = vrot.lane.b32.xlu0 %v5645, 96
        %v6243 = vpop.permute.xlu0 %6242
        %6244 = vrot.lane.b32.xlu0 %v5646, 96
        %v6245 = vpop.permute.xlu0 %6244
        %6246 = vrot.lane.b32.xlu0 %v5647, 96
        %v6247 = vpop.permute.xlu0 %6246
        %6248 = vrot.lane.b32.xlu0 %v5648, 96
        %v6249 = vpop.permute.xlu0 %6248
        %6250 = vrot.lane.b32.xlu0 %v5649, 96
        %v6251 = vpop.permute.xlu0 %6250
        %6252 = vrot.lane.b32.xlu0 %v5650, 96
        %v6253 = vpop.permute.xlu0 %6252
        %6254 = vrot.lane.b32.xlu0 %v5651, 96
        %v6255 = vpop.permute.xlu0 %6254
        %6256 = vrot.lane.b32.xlu0 %v5652, 96
        %v6257 = vpop.permute.xlu0 %6256
        %6258 = vrot.lane.b32.xlu0 %v5653, 96
        %v6259 = vpop.permute.xlu0 %6258
        %6260 = vrot.lane.b32.xlu0 %v5654, 96
        %v6261 = vpop.permute.xlu0 %6260
        %6262 = vrot.lane.b32.xlu0 %v5655, 96
        %v6263 = vpop.permute.xlu0 %6262
        %6264 = vrot.lane.b32.xlu0 %v5656, 96
        %v6265 = vpop.permute.xlu0 %6264
        %6266 = vrot.lane.b32.xlu0 %v5657, 96
        %v6267 = vpop.permute.xlu0 %6266
        %6268 = vrot.lane.b32.xlu0 %v5658, 96
        %v6269 = vpop.permute.xlu0 %6268
        %6270 = vrot.lane.b32.xlu0 %v5659, 96
        %v6271 = vpop.permute.xlu0 %6270
        %6272 = vrot.lane.b32.xlu0 %v5660, 96
        %v6273 = vpop.permute.xlu0 %6272
        %6274 = vrot.lane.b32.xlu0 %v5661, 96
        %v6275 = vpop.permute.xlu0 %6274
        %v6324 = vrot.slane %v5659, 1
        %v6325 = vsel %vm496, %v5795, %v6324
        %v6326 = vrot.slane %v5660, 1
        %v6327 = vsel %vm496, %v6324, %v6326
        %v6328 = vrot.slane %v5661, 1
        %v6329 = vsel %vm496, %v6326, %v6328
        %v6379 = vrot.slane %v5660, 2
        %v6380 = vsel %vm740, %v6032, %v6379
        %v6381 = vrot.slane %v5661, 2
        %v6382 = vsel %vm740, %v6379, %v6381
        %v6383 = vsel %vm740, %v6381, %v3530
        %6384 = vrot.lane.b32.xlu0 %v5942, 32
        %v6385 = vpop.permute.xlu0 %6384
        %6386 = vrot.lane.b32.xlu0 %v5945, 32
        %v6387 = vpop.permute.xlu0 %6386
        %6388 = vrot.lane.b32.xlu0 %v5947, 32
        %v6389 = vpop.permute.xlu0 %6388
        %6390 = vrot.lane.b32.xlu0 %v5949, 32
        %v6391 = vpop.permute.xlu0 %6390
        %6392 = vrot.lane.b32.xlu0 %v5951, 32
        %v6393 = vpop.permute.xlu0 %6392
        %6394 = vrot.lane.b32.xlu0 %v5953, 32
        %v6395 = vpop.permute.xlu0 %6394
        %6396 = vrot.lane.b32.xlu0 %v5955, 32
        %v6397 = vpop.permute.xlu0 %6396
        %6398 = vrot.lane.b32.xlu0 %v5957, 32
        %v6399 = vpop.permute.xlu0 %6398
        %6400 = vrot.lane.b32.xlu0 %v5959, 32
        %v6401 = vpop.permute.xlu0 %6400
        %6402 = vrot.lane.b32.xlu0 %v5961, 32
        %v6403 = vpop.permute.xlu0 %6402
        %6404 = vrot.lane.b32.xlu0 %v5963, 32
        %v6405 = vpop.permute.xlu0 %6404
        %6406 = vrot.lane.b32.xlu0 %v5965, 32
        %v6407 = vpop.permute.xlu0 %6406
        %6408 = vrot.lane.b32.xlu0 %v5967, 32
        %v6409 = vpop.permute.xlu0 %6408
        %6410 = vrot.lane.b32.xlu0 %v5969, 32
        %v6411 = vpop.permute.xlu0 %6410
        %6412 = vrot.lane.b32.xlu0 %v5971, 32
        %v6413 = vpop.permute.xlu0 %6412
        %6414 = vrot.lane.b32.xlu0 %v5973, 32
        %v6415 = vpop.permute.xlu0 %6414
        %6416 = vrot.lane.b32.xlu0 %v5975, 32
        %v6417 = vpop.permute.xlu0 %6416
        %6418 = vrot.lane.b32.xlu0 %v5977, 32
        %v6419 = vpop.permute.xlu0 %6418
        %6420 = vrot.lane.b32.xlu0 %v5979, 32
        %v6421 = vpop.permute.xlu0 %6420
        %6422 = vrot.lane.b32.xlu0 %v5981, 32
        %v6423 = vpop.permute.xlu0 %6422
        %6424 = vrot.lane.b32.xlu0 %v5983, 32
        %v6425 = vpop.permute.xlu0 %6424
        %6426 = vrot.lane.b32.xlu0 %v5985, 32
        %v6427 = vpop.permute.xlu0 %6426
        %6428 = vrot.lane.b32.xlu0 %v5987, 32
        %v6429 = vpop.permute.xlu0 %6428
        %6430 = vrot.lane.b32.xlu0 %v5989, 32
        %v6431 = vpop.permute.xlu0 %6430
        %6432 = vrot.lane.b32.xlu0 %v5991, 32
        %v6433 = vpop.permute.xlu0 %6432
        %6434 = vrot.lane.b32.xlu0 %v5993, 32
        %v6435 = vpop.permute.xlu0 %6434
        %6436 = vrot.lane.b32.xlu0 %v5995, 32
        %v6437 = vpop.permute.xlu0 %6436
        %6438 = vrot.lane.b32.xlu0 %v5997, 32
        %v6439 = vpop.permute.xlu0 %6438
        %6440 = vrot.lane.b32.xlu0 %v5999, 32
        %v6441 = vpop.permute.xlu0 %6440
        %6442 = vrot.lane.b32.xlu0 %v6001, 32
        %v6443 = vpop.permute.xlu0 %6442
        %6444 = vrot.lane.b32.xlu0 %v6003, 32
        %v6445 = vpop.permute.xlu0 %6444
        %6446 = vrot.lane.b32.xlu0 %v6005, 32
        %v6447 = vpop.permute.xlu0 %6446
        %6448 = vrot.lane.b32.xlu0 %v6007, 32
        %v6449 = vpop.permute.xlu0 %6448
        %6450 = vrot.lane.b32.xlu0 %v6009, 32
        %v6451 = vpop.permute.xlu0 %6450
        %6452 = vrot.lane.b32.xlu0 %v6011, 32
        %v6453 = vpop.permute.xlu0 %6452
        %6454 = vrot.lane.b32.xlu0 %v6013, 32
        %v6455 = vpop.permute.xlu0 %6454
        %6456 = vrot.lane.b32.xlu0 %v6015, 32
        %v6457 = vpop.permute.xlu0 %6456
        %6458 = vrot.lane.b32.xlu0 %v6017, 32
        %v6459 = vpop.permute.xlu0 %6458
        %6460 = vrot.lane.b32.xlu0 %v6019, 32
        %v6461 = vpop.permute.xlu0 %6460
        %6462 = vrot.lane.b32.xlu0 %v6021, 32
        %v6463 = vpop.permute.xlu0 %6462
        %6464 = vrot.lane.b32.xlu0 %v6023, 32
        %v6465 = vpop.permute.xlu0 %6464
        %6466 = vrot.lane.b32.xlu0 %v6025, 32
        %v6467 = vpop.permute.xlu0 %6466
        %6468 = vrot.lane.b32.xlu0 %v6027, 32
        %v6469 = vpop.permute.xlu0 %6468
        %6470 = vrot.lane.b32.xlu0 %v6029, 32
        %v6471 = vpop.permute.xlu0 %6470
        %6472 = vrot.lane.b32.xlu0 %v6031, 32
        %v6473 = vpop.permute.xlu0 %6472
        %6474 = vrot.lane.b32.xlu0 %v6033, 32
        %v6475 = vpop.permute.xlu0 %6474
        %6476 = vrot.lane.b32.xlu0 %v6380, 32
        %v6477 = vpop.permute.xlu0 %6476
        %6478 = vrot.lane.b32.xlu0 %v6382, 32
        %v6479 = vpop.permute.xlu0 %6478
        %6480 = vrot.lane.b32.xlu0 %v6383, 32
        %v6481 = vpop.permute.xlu0 %6480
        %6531 = vrot.lane.b32.xlu0 %v5616, 64
        %v6532 = vpop.permute.xlu0 %6531
        %6533 = vrot.lane.b32.xlu0 %v5617, 64
        %v6534 = vpop.permute.xlu0 %6533
        %6535 = vrot.lane.b32.xlu0 %v5618, 64
        %v6536 = vpop.permute.xlu0 %6535
        %6537 = vrot.lane.b32.xlu0 %v5619, 64
        %v6538 = vpop.permute.xlu0 %6537
        %6539 = vrot.lane.b32.xlu0 %v5620, 64
        %v6540 = vpop.permute.xlu0 %6539
        %6541 = vrot.lane.b32.xlu0 %v5621, 64
        %v6542 = vpop.permute.xlu0 %6541
        %6543 = vrot.lane.b32.xlu0 %v5622, 64
        %v6544 = vpop.permute.xlu0 %6543
        %6545 = vrot.lane.b32.xlu0 %v5623, 64
        %v6546 = vpop.permute.xlu0 %6545
        %6547 = vrot.lane.b32.xlu0 %v5624, 64
        %v6548 = vpop.permute.xlu0 %6547
        %6549 = vrot.lane.b32.xlu0 %v5625, 64
        %v6550 = vpop.permute.xlu0 %6549
        %6551 = vrot.lane.b32.xlu0 %v5626, 64
        %v6552 = vpop.permute.xlu0 %6551
        %6553 = vrot.lane.b32.xlu0 %v5627, 64
        %v6554 = vpop.permute.xlu0 %6553
        %6555 = vrot.lane.b32.xlu0 %v5628, 64
        %v6556 = vpop.permute.xlu0 %6555
        %6557 = vrot.lane.b32.xlu0 %v5629, 64
        %v6558 = vpop.permute.xlu0 %6557
        %6559 = vrot.lane.b32.xlu0 %v5630, 64
        %v6560 = vpop.permute.xlu0 %6559
        %6561 = vrot.lane.b32.xlu0 %v5631, 64
        %v6562 = vpop.permute.xlu0 %6561
        %6563 = vrot.lane.b32.xlu0 %v5632, 64
        %v6564 = vpop.permute.xlu0 %6563
        %6565 = vrot.lane.b32.xlu0 %v5633, 64
        %v6566 = vpop.permute.xlu0 %6565
        %6567 = vrot.lane.b32.xlu0 %v5634, 64
        %v6568 = vpop.permute.xlu0 %6567
        %6569 = vrot.lane.b32.xlu0 %v5635, 64
        %v6570 = vpop.permute.xlu0 %6569
        %6571 = vrot.lane.b32.xlu0 %v5636, 64
        %v6572 = vpop.permute.xlu0 %6571
        %6573 = vrot.lane.b32.xlu0 %v5637, 64
        %v6574 = vpop.permute.xlu0 %6573
        %6575 = vrot.lane.b32.xlu0 %v5638, 64
        %v6576 = vpop.permute.xlu0 %6575
        %6577 = vrot.lane.b32.xlu0 %v5639, 64
        %v6578 = vpop.permute.xlu0 %6577
        %6579 = vrot.lane.b32.xlu0 %v5640, 64
        %v6580 = vpop.permute.xlu0 %6579
        %6581 = vrot.lane.b32.xlu0 %v5641, 64
        %v6582 = vpop.permute.xlu0 %6581
        %6583 = vrot.lane.b32.xlu0 %v5642, 64
        %v6584 = vpop.permute.xlu0 %6583
        %6585 = vrot.lane.b32.xlu0 %v5643, 64
        %v6586 = vpop.permute.xlu0 %6585
        %6587 = vrot.lane.b32.xlu0 %v5644, 64
        %v6588 = vpop.permute.xlu0 %6587
        %6589 = vrot.lane.b32.xlu0 %v5645, 64
        %v6590 = vpop.permute.xlu0 %6589
        %6591 = vrot.lane.b32.xlu0 %v5646, 64
        %v6592 = vpop.permute.xlu0 %6591
        %6593 = vrot.lane.b32.xlu0 %v5647, 64
        %v6594 = vpop.permute.xlu0 %6593
        %6595 = vrot.lane.b32.xlu0 %v5648, 64
        %v6596 = vpop.permute.xlu0 %6595
        %6597 = vrot.lane.b32.xlu0 %v5649, 64
        %v6598 = vpop.permute.xlu0 %6597
        %6599 = vrot.lane.b32.xlu0 %v5650, 64
        %v6600 = vpop.permute.xlu0 %6599
        %6601 = vrot.lane.b32.xlu0 %v5651, 64
        %v6602 = vpop.permute.xlu0 %6601
        %6603 = vrot.lane.b32.xlu0 %v5652, 64
        %v6604 = vpop.permute.xlu0 %6603
        %6605 = vrot.lane.b32.xlu0 %v5653, 64
        %v6606 = vpop.permute.xlu0 %6605
        %6607 = vrot.lane.b32.xlu0 %v5654, 64
        %v6608 = vpop.permute.xlu0 %6607
        %6609 = vrot.lane.b32.xlu0 %v5655, 64
        %v6610 = vpop.permute.xlu0 %6609
        %6611 = vrot.lane.b32.xlu0 %v5656, 64
        %v6612 = vpop.permute.xlu0 %6611
        %6613 = vrot.lane.b32.xlu0 %v5657, 64
        %v6614 = vpop.permute.xlu0 %6613
        %6615 = vrot.lane.b32.xlu0 %v5658, 64
        %v6616 = vpop.permute.xlu0 %6615
        %6617 = vrot.lane.b32.xlu0 %v5659, 64
        %v6618 = vpop.permute.xlu0 %6617
        %6619 = vrot.lane.b32.xlu0 %v5660, 64
        %v6620 = vpop.permute.xlu0 %6619
        %6621 = vrot.lane.b32.xlu0 %v5661, 64
        %v6622 = vpop.permute.xlu0 %6621
        %6623 = vrot.lane.b32.xlu0 0.0, 64
        %v6624 = vpop.permute.xlu0 %6623
        %v6672 = vsel %vm496, %v6328, %v3293
        %6673 = vrot.lane.b32.xlu0 %v5713, 96
        %v6674 = vpop.permute.xlu0 %6673
        %6675 = vrot.lane.b32.xlu0 %v5716, 96
        %v6676 = vpop.permute.xlu0 %6675
        %6677 = vrot.lane.b32.xlu0 %v5718, 96
        %v6678 = vpop.permute.xlu0 %6677
        %6679 = vrot.lane.b32.xlu0 %v5720, 96
        %v6680 = vpop.permute.xlu0 %6679
        %6681 = vrot.lane.b32.xlu0 %v5722, 96
        %v6682 = vpop.permute.xlu0 %6681
        %6683 = vrot.lane.b32.xlu0 %v5724, 96
        %v6684 = vpop.permute.xlu0 %6683
        %6685 = vrot.lane.b32.xlu0 %v5726, 96
        %v6686 = vpop.permute.xlu0 %6685
        %6687 = vrot.lane.b32.xlu0 %v5728, 96
        %v6688 = vpop.permute.xlu0 %6687
        %6689 = vrot.lane.b32.xlu0 %v5730, 96
        %v6690 = vpop.permute.xlu0 %6689
        %6691 = vrot.lane.b32.xlu0 %v5732, 96
        %v6692 = vpop.permute.xlu0 %6691
        %6693 = vrot.lane.b32.xlu0 %v5734, 96
        %v6694 = vpop.permute.xlu0 %6693
        %6695 = vrot.lane.b32.xlu0 %v5736, 96
        %v6696 = vpop.permute.xlu0 %6695
        %6697 = vrot.lane.b32.xlu0 %v5738, 96
        %v6698 = vpop.permute.xlu0 %6697
        %6699 = vrot.lane.b32.xlu0 %v5740, 96
        %v6700 = vpop.permute.xlu0 %6699
        %6701 = vrot.lane.b32.xlu0 %v5742, 96
        %v6702 = vpop.permute.xlu0 %6701
        %6703 = vrot.lane.b32.xlu0 %v5744, 96
        %v6704 = vpop.permute.xlu0 %6703
        %6705 = vrot.lane.b32.xlu0 %v5746, 96
        %v6706 = vpop.permute.xlu0 %6705
        %6707 = vrot.lane.b32.xlu0 %v5748, 96
        %v6708 = vpop.permute.xlu0 %6707
        %6709 = vrot.lane.b32.xlu0 %v5750, 96
        %v6710 = vpop.permute.xlu0 %6709
        %6711 = vrot.lane.b32.xlu0 %v5752, 96
        %v6712 = vpop.permute.xlu0 %6711
        %6713 = vrot.lane.b32.xlu0 %v5754, 96
        %v6714 = vpop.permute.xlu0 %6713
        %6715 = vrot.lane.b32.xlu0 %v5756, 96
        %v6716 = vpop.permute.xlu0 %6715
        %6717 = vrot.lane.b32.xlu0 %v5758, 96
        %v6718 = vpop.permute.xlu0 %6717
        %6719 = vrot.lane.b32.xlu0 %v5760, 96
        %v6720 = vpop.permute.xlu0 %6719
        %6721 = vrot.lane.b32.xlu0 %v5762, 96
        %v6722 = vpop.permute.xlu0 %6721
        %6723 = vrot.lane.b32.xlu0 %v5764, 96
        %v6724 = vpop.permute.xlu0 %6723
        %6725 = vrot.lane.b32.xlu0 %v5766, 96
        %v6726 = vpop.permute.xlu0 %6725
        %6727 = vrot.lane.b32.xlu0 %v5768, 96
        %v6728 = vpop.permute.xlu0 %6727
        %6729 = vrot.lane.b32.xlu0 %v5770, 96
        %v6730 = vpop.permute.xlu0 %6729
        %6731 = vrot.lane.b32.xlu0 %v5772, 96
        %v6732 = vpop.permute.xlu0 %6731
        %6733 = vrot.lane.b32.xlu0 %v5774, 96
        %v6734 = vpop.permute.xlu0 %6733
        %6735 = vrot.lane.b32.xlu0 %v5776, 96
        %v6736 = vpop.permute.xlu0 %6735
        %6737 = vrot.lane.b32.xlu0 %v5778, 96
        %v6738 = vpop.permute.xlu0 %6737
        %6739 = vrot.lane.b32.xlu0 %v5780, 96
        %v6740 = vpop.permute.xlu0 %6739
        %6741 = vrot.lane.b32.xlu0 %v5782, 96
        %v6742 = vpop.permute.xlu0 %6741
        %6743 = vrot.lane.b32.xlu0 %v5784, 96
        %v6744 = vpop.permute.xlu0 %6743
        %6745 = vrot.lane.b32.xlu0 %v5786, 96
        %v6746 = vpop.permute.xlu0 %6745
        %6747 = vrot.lane.b32.xlu0 %v5788, 96
        %v6748 = vpop.permute.xlu0 %6747
        %6749 = vrot.lane.b32.xlu0 %v5790, 96
        %v6750 = vpop.permute.xlu0 %6749
        %6751 = vrot.lane.b32.xlu0 %v5792, 96
        %v6752 = vpop.permute.xlu0 %6751
        %6753 = vrot.lane.b32.xlu0 %v5794, 96
        %v6754 = vpop.permute.xlu0 %6753
        %6755 = vrot.lane.b32.xlu0 %v5796, 96
        %v6756 = vpop.permute.xlu0 %6755
        %6757 = vrot.lane.b32.xlu0 %v6325, 96
        %v6758 = vpop.permute.xlu0 %6757
        %6759 = vrot.lane.b32.xlu0 %v6327, 96
        %v6760 = vpop.permute.xlu0 %6759
        %6761 = vrot.lane.b32.xlu0 %v6329, 96
        %v6762 = vpop.permute.xlu0 %6761
        %6763 = vrot.lane.b32.xlu0 %v6672, 96
        %v6764 = vpop.permute.xlu0 %6763
        %6765 = vrot.lane.b32.xlu0 %v3294, 96
        %v6766 = vpop.permute.xlu0 %6765
        %6767 = vrot.lane.b32.xlu0 %v3293, 96
        %v6768 = vpop.permute.xlu0 %6767
        %v6817 = vsel %vm2247, 0.0, %v5798
        %v6818 = vsel %vm2247, 0.0, %v5800
        %v6819 = vsel %vm2247, 0.0, %v5802
        %v6820 = vsel %vm2247, %v5614, %v5804
        %v6821 = vsel %vm2247, %v5615, %v5806
        %v6822 = vsel %vm2247, %v5616, %v5808
        %v6823 = vsel %vm2247, %v5617, %v5810
        %v6824 = vsel %vm2247, %v5618, %v5812
        %v6825 = vsel %vm2247, %v5619, %v5814
        %v6826 = vsel %vm2247, %v5620, %v5816
        %v6827 = vsel %vm2247, %v5621, %v5818
        %v6828 = vsel %vm2247, %v5622, %v5820
        %v6829 = vsel %vm2247, %v5623, %v5822
        %v6830 = vsel %vm2247, %v5624, %v5824
        %v6831 = vsel %vm2247, %v5625, %v5826
        %v6832 = vsel %vm2247, %v5626, %v5828
        %v6833 = vsel %vm2247, %v5627, %v5830
        %v6834 = vsel %vm2247, %v5628, %v5832
        %v6835 = vsel %vm2247, %v5629, %v5834
        %v6836 = vsel %vm2247, %v5630, %v5836
        %v6837 = vsel %vm2247, %v5631, %v5838
        %v6838 = vsel %vm2247, %v5632, %v5840
        %v6839 = vsel %vm2247, %v5633, %v5842
        %v6840 = vsel %vm2247, %v5634, %v5844
        %v6841 = vsel %vm2247, %v5635, %v5846
        %v6842 = vsel %vm2247, %v5636, %v5848
        %v6843 = vsel %vm2247, %v5637, %v5850
        %v6844 = vsel %vm2247, %v5638, %v5852
        %v6845 = vsel %vm2247, %v5639, %v5854
        %v6846 = vsel %vm2247, %v5640, %v5856
        %v6847 = vsel %vm2247, %v5641, %v5858
        %v6848 = vsel %vm2247, %v5642, %v5860
        %v6849 = vsel %vm2247, %v5643, %v5862
        %v6850 = vsel %vm2247, %v5644, %v5864
        %v6851 = vsel %vm2247, %v5645, %v5866
        %v6852 = vsel %vm2247, %v5646, %v5868
        %v6853 = vsel %vm2247, %v5647, %v5870
        %v6854 = vsel %vm2247, %v5648, %v5872
        %v6855 = vsel %vm2247, %v5649, %v5874
        %v6856 = vsel %vm2247, %v5650, %v5876
        %v6857 = vsel %vm2247, %v5651, %v5878
        %v6858 = vsel %vm2247, %v5652, %v5880
        %v6859 = vsel %vm2247, %v5653, %v5882
        %v6860 = vsel %vm2247, %v5654, %v5884
        %v6861 = vsel %vm2247, %v5655, %v5886
        %v6862 = vsel %vm2247, %v5656, %v5888
        %v6863 = vsel %vm2247, %v5657, %v5890
        %v6864 = vsel %vm2247, %v5658, %v5892
        %v6865 = vsel %vm4654, %v6817, %v6035
        %v6866 = vsel %vm4654, %v6818, %v6037
        %v6867 = vsel %vm4654, %v6819, %v6039
        %v6868 = vsel %vm4654, %v6820, %v6041
        %v6869 = vsel %vm4654, %v6821, %v6043
        %v6870 = vsel %vm4654, %v6822, %v6045
        %v6871 = vsel %vm4654, %v6823, %v6047
        %v6872 = vsel %vm4654, %v6824, %v6049
        %v6873 = vsel %vm4654, %v6825, %v6051
        %v6874 = vsel %vm4654, %v6826, %v6053
        %v6875 = vsel %vm4654, %v6827, %v6055
        %v6876 = vsel %vm4654, %v6828, %v6057
        %v6877 = vsel %vm4654, %v6829, %v6059
        %v6878 = vsel %vm4654, %v6830, %v6061
        %v6879 = vsel %vm4654, %v6831, %v6063
        %v6880 = vsel %vm4654, %v6832, %v6065
        %v6881 = vsel %vm4654, %v6833, %v6067
        %v6882 = vsel %vm4654, %v6834, %v6069
        %v6883 = vsel %vm4654, %v6835, %v6071
        %v6884 = vsel %vm4654, %v6836, %v6073
        %v6885 = vsel %vm4654, %v6837, %v6075
        %v6886 = vsel %vm4654, %v6838, %v6077
        %v6887 = vsel %vm4654, %v6839, %v6079
        %v6888 = vsel %vm4654, %v6840, %v6081
        %v6889 = vsel %vm4654, %v6841, %v6083
        %v6890 = vsel %vm4654, %v6842, %v6085
        %v6891 = vsel %vm4654, %v6843, %v6087
        %v6892 = vsel %vm4654, %v6844, %v6089
        %v6893 = vsel %vm4654, %v6845, %v6091
        %v6894 = vsel %vm4654, %v6846, %v6093
        %v6895 = vsel %vm4654, %v6847, %v6095
        %v6896 = vsel %vm4654, %v6848, %v6097
        %v6897 = vsel %vm4654, %v6849, %v6099
        %v6898 = vsel %vm4654, %v6850, %v6101
        %v6899 = vsel %vm4654, %v6851, %v6103
        %v6900 = vsel %vm4654, %v6852, %v6105
        %v6901 = vsel %vm4654, %v6853, %v6107
        %v6902 = vsel %vm4654, %v6854, %v6109
        %v6903 = vsel %vm4654, %v6855, %v6111
        %v6904 = vsel %vm4654, %v6856, %v6113
        %v6905 = vsel %vm4654, %v6857, %v6115
        %v6906 = vsel %vm4654, %v6858, %v6117
        %v6907 = vsel %vm4654, %v6859, %v6119
        %v6908 = vsel %vm4654, %v6860, %v6121
        %v6909 = vsel %vm4654, %v6861, %v6123
        %v6910 = vsel %vm4654, %v6862, %v6125
        %v6911 = vsel %vm4654, %v6863, %v6127
        %v6912 = vsel %vm4654, %v6864, %v6129
        %v6913 = vsel %vm4754, %v6865, %v4315
        %v6914 = vsel %vm4754, %v6866, %v6181
        %v6915 = vsel %vm4754, %v6866, %v6183
        %v6916 = vsel %vm4754, %v6867, %v6185
        %v6917 = vsel %vm4754, %v6868, %v6187
        %v6918 = vsel %vm4754, %v6869, %v6189
        %v6919 = vsel %vm4754, %v6870, %v6191
        %v6920 = vsel %vm4754, %v6871, %v6193
        %v6921 = vsel %vm4754, %v6872, %v6195
        %v6922 = vsel %vm4754, %v6873, %v6197
        %v6923 = vsel %vm4754, %v6874, %v6199
        %v6924 = vsel %vm4754, %v6875, %v6201
        %v6925 = vsel %vm4754, %v6876, %v6203
        %v6926 = vsel %vm4754, %v6877, %v6205
        %v6927 = vsel %vm4754, %v6878, %v6207
        %v6928 = vsel %vm4754, %v6879, %v6209
        %v6929 = vsel %vm4754, %v6880, %v6211
        %v6930 = vsel %vm4754, %v6881, %v6213
        %v6931 = vsel %vm4754, %v6882, %v6215
        %v6932 = vsel %vm4754, %v6883, %v6217
        %v6933 = vsel %vm4754, %v6884, %v6219
        %v6934 = vsel %vm4754, %v6885, %v6221
        %v6935 = vsel %vm4754, %v6886, %v6223
        %v6936 = vsel %vm4754, %v6887, %v6225
        %v6937 = vsel %vm4754, %v6888, %v6227
        %v6938 = vsel %vm4754, %v6889, %v6229
        %v6939 = vsel %vm4754, %v6890, %v6231
        %v6940 = vsel %vm4754, %v6891, %v6233
        %v6941 = vsel %vm4754, %v6892, %v6235
        %v6942 = vsel %vm4754, %v6893, %v6237
        %v6943 = vsel %vm4754, %v6894, %v6239
        %v6944 = vsel %vm4754, %v6895, %v6241
        %v6945 = vsel %vm4754, %v6896, %v6243
        %v6946 = vsel %vm4754, %v6897, %v6245
        %v6947 = vsel %vm4754, %v6898, %v6247
        %v6948 = vsel %vm4754, %v6899, %v6249
        %v6949 = vsel %vm4754, %v6900, %v6251
        %v6950 = vsel %vm4754, %v6901, %v6253
        %v6951 = vsel %vm4754, %v6902, %v6255
        %v6952 = vsel %vm4754, %v6903, %v6257
        %v6953 = vsel %vm4754, %v6904, %v6259
        %v6954 = vsel %vm4754, %v6905, %v6261
        %v6955 = vsel %vm4754, %v6906, %v6263
        %v6956 = vsel %vm4754, %v6907, %v6265
        %v6957 = vsel %vm4754, %v6908, %v6267
        %v6958 = vsel %vm4754, %v6909, %v6269
        %v6959 = vsel %vm4754, %v6910, %v6271
        %v6960 = vsel %vm4754, %v6911, %v6273
        %v6961 = vsel %vm4754, %v6912, %v6275
        %v6962 = vsel %vm2247, %v5707, %v6385
        %v6963 = vsel %vm2247, %v5710, %v6387
        %v6964 = vsel %vm2247, %v5712, %v6389
        %v6965 = vsel %vm2247, %v5714, %v6391
        %v6966 = vsel %vm2247, %v5716, %v6393
        %v6967 = vsel %vm2247, %v5718, %v6395
        %v6968 = vsel %vm2247, %v5720, %v6397
        %v6969 = vsel %vm2247, %v5722, %v6399
        %v6970 = vsel %vm2247, %v5724, %v6401
        %v6971 = vsel %vm2247, %v5726, %v6403
        %v6972 = vsel %vm2247, %v5728, %v6405
        %v6973 = vsel %vm2247, %v5730, %v6407
        %v6974 = vsel %vm2247, %v5732, %v6409
        %v6975 = vsel %vm2247, %v5734, %v6411
        %v6976 = vsel %vm2247, %v5736, %v6413
        %v6977 = vsel %vm2247, %v5738, %v6415
        %v6978 = vsel %vm2247, %v5740, %v6417
        %v6979 = vsel %vm2247, %v5742, %v6419
        %v6980 = vsel %vm2247, %v5744, %v6421
        %v6981 = vsel %vm2247, %v5746, %v6423
        %v6982 = vsel %vm2247, %v5748, %v6425
        %v6983 = vsel %vm2247, %v5750, %v6427
        %v6984 = vsel %vm2247, %v5752, %v6429
        %v6985 = vsel %vm2247, %v5754, %v6431
        %v6986 = vsel %vm2247, %v5756, %v6433
        %v6987 = vsel %vm2247, %v5758, %v6435
        %v6988 = vsel %vm2247, %v5760, %v6437
        %v6989 = vsel %vm2247, %v5762, %v6439
        %v6990 = vsel %vm2247, %v5764, %v6441
        %v6991 = vsel %vm2247, %v5766, %v6443
        %v6992 = vsel %vm2247, %v5768, %v6445
        %v6993 = vsel %vm2247, %v5770, %v6447
        %v6994 = vsel %vm2247, %v5772, %v6449
        %v6995 = vsel %vm2247, %v5774, %v6451
        %v6996 = vsel %vm2247, %v5776, %v6453
        %v6997 = vsel %vm2247, %v5778, %v6455
        %v6998 = vsel %vm2247, %v5780, %v6457
        %v6999 = vsel %vm2247, %v5782, %v6459
        %v7000 = vsel %vm2247, %v5784, %v6461
        %v7001 = vsel %vm2247, %v5786, %v6463
        %v7002 = vsel %vm2247, %v5788, %v6465
        %v7003 = vsel %vm2247, %v5790, %v6467
        %v7004 = vsel %vm2247, %v5792, %v6469
        %v7005 = vsel %vm2247, %v5794, %v6471
        %v7006 = vsel %vm2247, %v5796, %v6473
        %v7007 = vsel %vm2247, %v6325, %v6475
        %v7008 = vsel %vm2247, %v6327, %v6477
        %v7009 = vsel %vm2247, %v6329, %v6479
        %v7010 = vsel %vm2247, %v6328, %v6481
        %v7011 = vsel %vm4654, %v6962, %v6532
        %v7012 = vsel %vm4654, %v6963, %v6534
        %v7013 = vsel %vm4654, %v6964, %v6536
        %v7014 = vsel %vm4654, %v6965, %v6538
        %v7015 = vsel %vm4654, %v6966, %v6540
        %v7016 = vsel %vm4654, %v6967, %v6542
        %v7017 = vsel %vm4654, %v6968, %v6544
        %v7018 = vsel %vm4654, %v6969, %v6546
        %v7019 = vsel %vm4654, %v6970, %v6548
        %v7020 = vsel %vm4654, %v6971, %v6550
        %v7021 = vsel %vm4654, %v6972, %v6552
        %v7022 = vsel %vm4654, %v6973, %v6554
        %v7023 = vsel %vm4654, %v6974, %v6556
        %v7024 = vsel %vm4654, %v6975, %v6558
        %v7025 = vsel %vm4654, %v6976, %v6560
        %v7026 = vsel %vm4654, %v6977, %v6562
        %v7027 = vsel %vm4654, %v6978, %v6564
        %v7028 = vsel %vm4654, %v6979, %v6566
        %v7029 = vsel %vm4654, %v6980, %v6568
        %v7030 = vsel %vm4654, %v6981, %v6570
        %v7031 = vsel %vm4654, %v6982, %v6572
        %v7032 = vsel %vm4654, %v6983, %v6574
        %v7033 = vsel %vm4654, %v6984, %v6576
        %v7034 = vsel %vm4654, %v6985, %v6578
        %v7035 = vsel %vm4654, %v6986, %v6580
        %v7036 = vsel %vm4654, %v6987, %v6582
        %v7037 = vsel %vm4654, %v6988, %v6584
        %v7038 = vsel %vm4654, %v6989, %v6586
        %v7039 = vsel %vm4654, %v6990, %v6588
        %v7040 = vsel %vm4654, %v6991, %v6590
        %v7041 = vsel %vm4654, %v6992, %v6592
        %v7042 = vsel %vm4654, %v6993, %v6594
        %v7043 = vsel %vm4654, %v6994, %v6596
        %v7044 = vsel %vm4654, %v6995, %v6598
        %v7045 = vsel %vm4654, %v6996, %v6600
        %v7046 = vsel %vm4654, %v6997, %v6602
        %v7047 = vsel %vm4654, %v6998, %v6604
        %v7048 = vsel %vm4654, %v6999, %v6606
        %v7049 = vsel %vm4654, %v7000, %v6608
        %v7050 = vsel %vm4654, %v7001, %v6610
        %v7051 = vsel %vm4654, %v7002, %v6612
        %v7052 = vsel %vm4654, %v7003, %v6614
        %v7053 = vsel %vm4654, %v7004, %v6616
        %v7054 = vsel %vm4654, %v7005, %v6618
        %v7055 = vsel %vm4654, %v7006, %v6620
        %v7056 = vsel %vm4654, %v7007, %v6622
        %v7057 = vsel %vm4654, %v7008, %v6624
        %v7058 = vsel %vm4654, %v7009, %v6624
        %v7059 = vsel %vm4654, %v7010, %v6624
        %v7060 = vsel %vm4754, %v7011, %v6674
        %v7061 = vsel %vm4754, %v7012, %v6676
        %v7062 = vsel %vm4754, %v7013, %v6678
        %v7063 = vsel %vm4754, %v7014, %v6680
        %v7064 = vsel %vm4754, %v7015, %v6682
        %v7065 = vsel %vm4754, %v7016, %v6684
        %v7066 = vsel %vm4754, %v7017, %v6686
        %v7067 = vsel %vm4754, %v7018, %v6688
        %v7068 = vsel %vm4754, %v7019, %v6690
        %v7069 = vsel %vm4754, %v7020, %v6692
        %v7070 = vsel %vm4754, %v7021, %v6694
        %v7071 = vsel %vm4754, %v7022, %v6696
        %v7072 = vsel %vm4754, %v7023, %v6698
        %v7073 = vsel %vm4754, %v7024, %v6700
        %v7074 = vsel %vm4754, %v7025, %v6702
        %v7075 = vsel %vm4754, %v7026, %v6704
        %v7076 = vsel %vm4754, %v7027, %v6706
        %v7077 = vsel %vm4754, %v7028, %v6708
        %v7078 = vsel %vm4754, %v7029, %v6710
        %v7079 = vsel %vm4754, %v7030, %v6712
        %v7080 = vsel %vm4754, %v7031, %v6714
        %v7081 = vsel %vm4754, %v7032, %v6716
        %v7082 = vsel %vm4754, %v7033, %v6718
        %v7083 = vsel %vm4754, %v7034, %v6720
        %v7084 = vsel %vm4754, %v7035, %v6722
        %v7085 = vsel %vm4754, %v7036, %v6724
        %v7086 = vsel %vm4754, %v7037, %v6726
        %v7087 = vsel %vm4754, %v7038, %v6728
        %v7088 = vsel %vm4754, %v7039, %v6730
        %v7089 = vsel %vm4754, %v7040, %v6732
        %v7090 = vsel %vm4754, %v7041, %v6734
        %v7091 = vsel %vm4754, %v7042, %v6736
        %v7092 = vsel %vm4754, %v7043, %v6738
        %v7093 = vsel %vm4754, %v7044, %v6740
        %v7094 = vsel %vm4754, %v7045, %v6742
        %v7095 = vsel %vm4754, %v7046, %v6744
        %v7096 = vsel %vm4754, %v7047, %v6746
        %v7097 = vsel %vm4754, %v7048, %v6748
        %v7098 = vsel %vm4754, %v7049, %v6750
        %v7099 = vsel %vm4754, %v7050, %v6752
        %v7100 = vsel %vm4754, %v7051, %v6754
        %v7101 = vsel %vm4754, %v7052, %v6756
        %v7102 = vsel %vm4754, %v7053, %v6758
        %v7103 = vsel %vm4754, %v7054, %v6760
        %v7104 = vsel %vm4754, %v7055, %v6762
        %v7105 = vsel %vm4754, %v7056, %v6764
        %v7106 = vsel %vm4754, %v7057, %v6766
        %v7107 = vsel %vm4754, %v7058, %v6766
        %v7108 = vsel %vm4754, %v7059, %v6768
        %v7109 = vld [vmem:[%s5] sm:$0xff]
        %v7110 = vld [vmem:[%s5 + $0x8] sm:$0xff]
        %v7111 = vld [vmem:[%s5 + $0x10] sm:$0xff]
        %v7112 = vld [vmem:[%s5 + $0x18] sm:$0xff]
        %v7113 = vld [vmem:[%s5 + $0x20] sm:$0xff]
        %v7114 = vld [vmem:[%s5 + $0x28] sm:$0xff]
        %v7115 = vld [vmem:[%s5 + $0x30] sm:$0xff]
        %v7116 = vld [vmem:[%s5 + $0x38] sm:$0xff]
        %v7117 = vld [vmem:[%s5 + $0x40] sm:$0xff]
        %v7118 = vld [vmem:[%s5 + $0x48] sm:$0xff]
        %v7119 = vld [vmem:[%s5 + $0x50] sm:$0xff]
        %v7120 = vld [vmem:[%s5 + $0x58] sm:$0xff]
        %v7121 = vld [vmem:[%s5 + $0x60] sm:$0xff]
        %v7122 = vld [vmem:[%s5 + $0x68] sm:$0xff]
        %v7123 = vld [vmem:[%s5 + $0x70] sm:$0xff]
        %v7124 = vld [vmem:[%s5 + $0x78] sm:$0xff]
        %v7125 = vld [vmem:[%s5 + $0x80] sm:$0xff]
        %v7126 = vld [vmem:[%s5 + $0x88] sm:$0xff]
        %v7127 = vld [vmem:[%s5 + $0x90] sm:$0xff]
        %v7128 = vld [vmem:[%s5 + $0x98] sm:$0xff]
        %v7129 = vld [vmem:[%s5 + $0xa0] sm:$0xff]
        %v7130 = vld [vmem:[%s5 + $0xa8] sm:$0xff]
        %v7131 = vld [vmem:[%s5 + $0xb0] sm:$0xff]
        %v7132 = vld [vmem:[%s5 + $0xb8] sm:$0xff]
        %v7133 = vld [vmem:[%s5 + $0xc0] sm:$0xff]
        %v7134 = vld [vmem:[%s5 + $0xc8] sm:$0xff]
        %v7135 = vld [vmem:[%s5 + $0xd0] sm:$0xff]
        %v7136 = vld [vmem:[%s5 + $0xd8] sm:$0xff]
        %v7137 = vld [vmem:[%s5 + $0xe0] sm:$0xff]
        %v7138 = vld [vmem:[%s5 + $0xe8] sm:$0xff]
        %v7139 = vld [vmem:[%s5 + $0xf0] sm:$0xff]
        %v7140 = vld [vmem:[%s5 + $0xf8] sm:$0xff]
        %v7141 = vld [vmem:[%s5 + $0x100] sm:$0xff]
        %v7142 = vld [vmem:[%s5 + $0x108] sm:$0xff]
        %v7143 = vld [vmem:[%s5 + $0x110] sm:$0xff]
        %v7144 = vld [vmem:[%s5 + $0x118] sm:$0xff]
        %v7145 = vld [vmem:[#allocation6] sm:$0x1]
        %v7147 = vlaneseq
        %v7148 = vshrl.u32 %v7147, 7
        %v7149 = vsub.s32 0, %v7148
        %v7150 = vrot.slane %v7145, %v7149
        %v7250 = vrot.slane %v6913, 7
        %v7251 = vrot.slane %v6914, 7
        %v7252 = vsel %vm2407, %v7250, %v7251
        %v7253 = vrot.slane %v7060, 7
        %v7254 = vrot.slane %v7061, 7
        %v7255 = vsel %vm2407, %v7253, %v7254
        %v7256 = vrot.slane %v5948, 7
        %v7257 = vrot.slane %v5951, 7
        %v7258 = vsel %vm2407, %v7256, %v7257
        %v7259 = vrot.slane %v6915, 7
        %v7260 = vsel %vm2407, %v7251, %v7259
        %v7261 = vrot.slane %v7062, 7
        %v7262 = vsel %vm2407, %v7254, %v7261
        %v7263 = vrot.slane %v5953, 7
        %v7264 = vsel %vm2407, %v7257, %v7263
        %v7265 = vrot.slane %v6916, 7
        %v7266 = vsel %vm2407, %v7259, %v7265
        %v7267 = vrot.slane %v7063, 7
        %v7268 = vsel %vm2407, %v7261, %v7267
        %v7269 = vrot.slane %v5955, 7
        %v7270 = vsel %vm2407, %v7263, %v7269
        %v7271 = vrot.slane %v6917, 7
        %v7272 = vsel %vm2407, %v7265, %v7271
        %v7273 = vrot.slane %v7064, 7
        %v7274 = vsel %vm2407, %v7267, %v7273
        %v7275 = vrot.slane %v5957, 7
        %v7276 = vsel %vm2407, %v7269, %v7275
        %v7277 = vrot.slane %v6918, 7
        %v7278 = vsel %vm2407, %v7271, %v7277
        %v7279 = vrot.slane %v7065, 7
        %v7280 = vsel %vm2407, %v7273, %v7279
        %v7281 = vrot.slane %v5959, 7
        %v7282 = vsel %vm2407, %v7275, %v7281
        %v7283 = vrot.slane %v6919, 7
        %v7284 = vsel %vm2407, %v7277, %v7283
        %v7285 = vrot.slane %v7066, 7
        %v7286 = vsel %vm2407, %v7279, %v7285
        %v7287 = vrot.slane %v5961, 7
        %v7288 = vsel %vm2407, %v7281, %v7287
        %v7289 = vrot.slane %v6920, 7
        %v7290 = vsel %vm2407, %v7283, %v7289
        %v7291 = vrot.slane %v7067, 7
        %v7292 = vsel %vm2407, %v7285, %v7291
        %v7293 = vrot.slane %v5963, 7
        %v7294 = vsel %vm2407, %v7287, %v7293
        %v7295 = vrot.slane %v6921, 7
        %v7296 = vsel %vm2407, %v7289, %v7295
        %v7297 = vrot.slane %v7068, 7
        %v7298 = vsel %vm2407, %v7291, %v7297
        %v7299 = vrot.slane %v5965, 7
        %v7300 = vsel %vm2407, %v7293, %v7299
        %v7301 = vrot.slane %v6922, 7
        %v7302 = vsel %vm2407, %v7295, %v7301
        %v7303 = vrot.slane %v7069, 7
        %v7304 = vsel %vm2407, %v7297, %v7303
        %v7305 = vrot.slane %v5967, 7
        %v7306 = vsel %vm2407, %v7299, %v7305
        %v7307 = vrot.slane %v6923, 7
        %v7308 = vsel %vm2407, %v7301, %v7307
        %v7309 = vrot.slane %v7070, 7
        %v7310 = vsel %vm2407, %v7303, %v7309
        %v7311 = vrot.slane %v5969, 7
        %v7312 = vsel %vm2407, %v7305, %v7311
        %v7313 = vrot.slane %v6924, 7
        %v7314 = vsel %vm2407, %v7307, %v7313
        %v7315 = vrot.slane %v7071, 7
        %v7316 = vsel %vm2407, %v7309, %v7315
        %v7317 = vrot.slane %v5971, 7
        %v7318 = vsel %vm2407, %v7311, %v7317
        %v7319 = vrot.slane %v6925, 7
        %v7320 = vsel %vm2407, %v7313, %v7319
        %v7321 = vrot.slane %v7072, 7
        %v7322 = vsel %vm2407, %v7315, %v7321
        %v7323 = vrot.slane %v5973, 7
        %v7324 = vsel %vm2407, %v7317, %v7323
        %v7325 = vrot.slane %v6926, 7
        %v7326 = vsel %vm2407, %v7319, %v7325
        %v7327 = vrot.slane %v7073, 7
        %v7328 = vsel %vm2407, %v7321, %v7327
        %v7329 = vrot.slane %v5975, 7
        %v7330 = vsel %vm2407, %v7323, %v7329
        %v7331 = vrot.slane %v6927, 7
        %v7332 = vsel %vm2407, %v7325, %v7331
        %v7333 = vrot.slane %v7074, 7
        %v7334 = vsel %vm2407, %v7327, %v7333
        %v7335 = vrot.slane %v5977, 7
        %v7336 = vsel %vm2407, %v7329, %v7335
        %v7337 = vrot.slane %v6928, 7
        %v7338 = vsel %vm2407, %v7331, %v7337
        %v7339 = vrot.slane %v7075, 7
        %v7340 = vsel %vm2407, %v7333, %v7339
        %v7341 = vrot.slane %v5979, 7
        %v7342 = vsel %vm2407, %v7335, %v7341
        %v7343 = vrot.slane %v6929, 7
        %v7344 = vsel %vm2407, %v7337, %v7343
        %v7345 = vrot.slane %v7076, 7
        %v7346 = vsel %vm2407, %v7339, %v7345
        %v7347 = vrot.slane %v5981, 7
        %v7348 = vsel %vm2407, %v7341, %v7347
        %v7349 = vrot.slane %v6930, 7
        %v7350 = vsel %vm2407, %v7343, %v7349
        %v7351 = vrot.slane %v7077, 7
        %v7352 = vsel %vm2407, %v7345, %v7351
        %v7353 = vrot.slane %v5983, 7
        %v7354 = vsel %vm2407, %v7347, %v7353
        %v7355 = vrot.slane %v6931, 7
        %v7356 = vsel %vm2407, %v7349, %v7355
        %v7357 = vrot.slane %v7078, 7
        %v7358 = vsel %vm2407, %v7351, %v7357
        %v7359 = vrot.slane %v5985, 7
        %v7360 = vsel %vm2407, %v7353, %v7359
        %v7361 = vrot.slane %v6932, 7
        %v7362 = vsel %vm2407, %v7355, %v7361
        %v7363 = vrot.slane %v7079, 7
        %v7364 = vsel %vm2407, %v7357, %v7363
        %v7365 = vrot.slane %v5987, 7
        %v7366 = vsel %vm2407, %v7359, %v7365
        %v7367 = vrot.slane %v6933, 7
        %v7368 = vsel %vm2407, %v7361, %v7367
        %v7369 = vrot.slane %v7080, 7
        %v7370 = vsel %vm2407, %v7363, %v7369
        %v7371 = vrot.slane %v5989, 7
        %v7372 = vsel %vm2407, %v7365, %v7371
        %v7373 = vrot.slane %v6934, 7
        %v7374 = vsel %vm2407, %v7367, %v7373
        %v7375 = vrot.slane %v7081, 7
        %v7376 = vsel %vm2407, %v7369, %v7375
        %v7377 = vrot.slane %v5991, 7
        %v7378 = vsel %vm2407, %v7371, %v7377
        %v7379 = vrot.slane %v6935, 7
        %v7380 = vsel %vm2407, %v7373, %v7379
        %v7381 = vrot.slane %v7082, 7
        %v7382 = vsel %vm2407, %v7375, %v7381
        %v7383 = vrot.slane %v5993, 7
        %v7384 = vsel %vm2407, %v7377, %v7383
        %v7385 = vrot.slane %v6936, 7
        %v7386 = vsel %vm2407, %v7379, %v7385
        %v7387 = vrot.slane %v7083, 7
        %v7388 = vsel %vm2407, %v7381, %v7387
        %v7389 = vrot.slane %v5995, 7
        %v7390 = vsel %vm2407, %v7383, %v7389
        %v7391 = vrot.slane %v6937, 7
        %v7392 = vsel %vm2407, %v7385, %v7391
        %v7393 = vrot.slane %v7084, 7
        %v7394 = vsel %vm2407, %v7387, %v7393
        %v7395 = vrot.slane %v5997, 7
        %v7396 = vsel %vm2407, %v7389, %v7395
        %v7397 = vrot.slane %v6938, 7
        %v7398 = vsel %vm2407, %v7391, %v7397
        %v7399 = vrot.slane %v7085, 7
        %v7400 = vsel %vm2407, %v7393, %v7399
        %v7401 = vrot.slane %v5999, 7
        %v7402 = vsel %vm2407, %v7395, %v7401
        %v7403 = vrot.slane %v6939, 7
        %v7404 = vsel %vm2407, %v7397, %v7403
        %v7405 = vrot.slane %v7086, 7
        %v7406 = vsel %vm2407, %v7399, %v7405
        %v7407 = vrot.slane %v6001, 7
        %v7408 = vsel %vm2407, %v7401, %v7407
        %v7409 = vrot.slane %v6940, 7
        %v7410 = vsel %vm2407, %v7403, %v7409
        %v7411 = vrot.slane %v7087, 7
        %v7412 = vsel %vm2407, %v7405, %v7411
        %v7413 = vrot.slane %v6003, 7
        %v7414 = vsel %vm2407, %v7407, %v7413
        %v7415 = vrot.slane %v6941, 7
        %v7416 = vsel %vm2407, %v7409, %v7415
        %v7417 = vrot.slane %v7088, 7
        %v7418 = vsel %vm2407, %v7411, %v7417
        %v7419 = vrot.slane %v6005, 7
        %v7420 = vsel %vm2407, %v7413, %v7419
        %v7421 = vrot.slane %v6942, 7
        %v7422 = vsel %vm2407, %v7415, %v7421
        %v7423 = vrot.slane %v7089, 7
        %v7424 = vsel %vm2407, %v7417, %v7423
        %v7425 = vrot.slane %v6007, 7
        %v7426 = vsel %vm2407, %v7419, %v7425
        %v7427 = vrot.slane %v6943, 7
        %v7428 = vsel %vm2407, %v7421, %v7427
        %v7429 = vrot.slane %v7090, 7
        %v7430 = vsel %vm2407, %v7423, %v7429
        %v7431 = vrot.slane %v6009, 7
        %v7432 = vsel %vm2407, %v7425, %v7431
        %v7433 = vrot.slane %v6944, 7
        %v7434 = vsel %vm2407, %v7427, %v7433
        %v7435 = vrot.slane %v7091, 7
        %v7436 = vsel %vm2407, %v7429, %v7435
        %v7437 = vrot.slane %v6011, 7
        %v7438 = vsel %vm2407, %v7431, %v7437
        %v7439 = vrot.slane %v6945, 7
        %v7440 = vsel %vm2407, %v7433, %v7439
        %v7441 = vrot.slane %v7092, 7
        %v7442 = vsel %vm2407, %v7435, %v7441
        %v7443 = vrot.slane %v6013, 7
        %v7444 = vsel %vm2407, %v7437, %v7443
        %v7445 = vrot.slane %v6946, 7
        %v7446 = vsel %vm2407, %v7439, %v7445
        %v7447 = vrot.slane %v7093, 7
        %v7448 = vsel %vm2407, %v7441, %v7447
        %v7449 = vrot.slane %v6015, 7
        %v7450 = vsel %vm2407, %v7443, %v7449
        %v7451 = vrot.slane %v6947, 7
        %v7452 = vsel %vm2407, %v7445, %v7451
        %v7453 = vrot.slane %v7094, 7
        %v7454 = vsel %vm2407, %v7447, %v7453
        %v7455 = vrot.slane %v6017, 7
        %v7456 = vsel %vm2407, %v7449, %v7455
        %v7457 = vrot.slane %v6948, 7
        %v7458 = vsel %vm2407, %v7451, %v7457
        %v7459 = vrot.slane %v7095, 7
        %v7460 = vsel %vm2407, %v7453, %v7459
        %v7461 = vrot.slane %v6019, 7
        %v7462 = vsel %vm2407, %v7455, %v7461
        %v7463 = vrot.slane %v6949, 7
        %v7464 = vsel %vm2407, %v7457, %v7463
        %v7465 = vrot.slane %v7096, 7
        %v7466 = vsel %vm2407, %v7459, %v7465
        %v7467 = vrot.slane %v6021, 7
        %v7468 = vsel %vm2407, %v7461, %v7467
        %v7469 = vrot.slane %v6950, 7
        %v7470 = vsel %vm2407, %v7463, %v7469
        %v7471 = vrot.slane %v7097, 7
        %v7472 = vsel %vm2407, %v7465, %v7471
        %v7473 = vrot.slane %v6023, 7
        %v7474 = vsel %vm2407, %v7467, %v7473
        %v7475 = vrot.slane %v6951, 7
        %v7476 = vsel %vm2407, %v7469, %v7475
        %v7477 = vrot.slane %v7098, 7
        %v7478 = vsel %vm2407, %v7471, %v7477
        %v7479 = vrot.slane %v6025, 7
        %v7480 = vsel %vm2407, %v7473, %v7479
        %v7481 = vrot.slane %v6952, 7
        %v7482 = vsel %vm2407, %v7475, %v7481
        %v7483 = vrot.slane %v7099, 7
        %v7484 = vsel %vm2407, %v7477, %v7483
        %v7485 = vrot.slane %v6027, 7
        %v7486 = vsel %vm2407, %v7479, %v7485
        %v7487 = vrot.slane %v6953, 7
        %v7488 = vsel %vm2407, %v7481, %v7487
        %v7489 = vrot.slane %v7100, 7
        %v7490 = vsel %vm2407, %v7483, %v7489
        %v7491 = vrot.slane %v6029, 7
        %v7492 = vsel %vm2407, %v7485, %v7491
        %v7493 = vrot.slane %v6954, 7
        %v7494 = vsel %vm2407, %v7487, %v7493
        %v7495 = vrot.slane %v7101, 7
        %v7496 = vsel %vm2407, %v7489, %v7495
        %v7497 = vrot.slane %v6031, 7
        %v7498 = vsel %vm2407, %v7491, %v7497
        %v7499 = vrot.slane %v6955, 7
        %v7500 = vsel %vm2407, %v7493, %v7499
        %v7501 = vrot.slane %v7102, 7
        %v7502 = vsel %vm2407, %v7495, %v7501
        %v7503 = vrot.slane %v6033, 7
        %v7504 = vsel %vm2407, %v7497, %v7503
        %v7505 = vrot.slane %v6956, 7
        %v7506 = vsel %vm2407, %v7499, %v7505
        %v7507 = vrot.slane %v7103, 7
        %v7508 = vsel %vm2407, %v7501, %v7507
        %v7509 = vrot.slane %v6380, 7
        %v7510 = vsel %vm2407, %v7503, %v7509
        %v7511 = vrot.slane %v6957, 7
        %v7512 = vsel %vm2407, %v7505, %v7511
        %v7513 = vrot.slane %v7104, 7
        %v7514 = vsel %vm2407, %v7507, %v7513
        %v7515 = vrot.slane %v6382, 7
        %v7516 = vsel %vm2407, %v7509, %v7515
        %v7517 = vrot.slane %v6958, 7
        %v7518 = vsel %vm2407, %v7511, %v7517
        %v7519 = vrot.slane %v7105, 7
        %v7520 = vsel %vm2407, %v7513, %v7519
        %v7521 = vrot.slane %v6383, 7
        %v7522 = vsel %vm2407, %v7515, %v7521
        %v7523 = vrot.slane %v6959, 7
        %v7524 = vsel %vm2407, %v7517, %v7523
        %v7525 = vrot.slane %v7106, 7
        %v7526 = vsel %vm2407, %v7519, %v7525
        %v7527 = vsel %vm2407, %v7521, %v5112
        %v7528 = vrot.slane %v6960, 7
        %v7529 = vsel %vm2407, %v7523, %v7528
        %v7530 = vrot.slane %v7107, 7
        %v7531 = vsel %vm2407, %v7525, %v7530
        %v7532 = vrot.slane %v6961, 7
        %v7533 = vsel %vm2407, %v7528, %v7532
        %v7534 = vrot.slane %v7108, 7
        %v7535 = vsel %vm2407, %v7530, %v7534
        %v7632 = vsel %vm2247, %v7258, 0
        %v7634 = vsel %vm2247, %v7264, 0
        %v7636 = vsel %vm2247, %v7270, 0
        %v7638 = vsel %vm2247, %v7276, 0
        %v7640 = vsel %vm2247, %v7282, 0
        %v7642 = vsel %vm2247, %v7288, 0
        %v7644 = vsel %vm2247, %v7294, 0
        %v7646 = vsel %vm2247, %v7300, 0
        %v7648 = vsel %vm2247, %v7306, 0
        %v7650 = vsel %vm2247, %v7312, 0
        %v7652 = vsel %vm2247, %v7318, 0
        %v7654 = vsel %vm2247, %v7324, 0
        %v7656 = vsel %vm2247, %v7330, 0
        %v7658 = vsel %vm2247, %v7336, 0
        %v7660 = vsel %vm2247, %v7342, 0
        %v7662 = vsel %vm2247, %v7348, 0
        %v7664 = vsel %vm2247, %v7354, 0
        %v7666 = vsel %vm2247, %v7360, 0
        %v7668 = vsel %vm2247, %v7366, 0
        %v7670 = vsel %vm2247, %v7372, 0
        %v7672 = vsel %vm2247, %v7378, 0
        %v7674 = vsel %vm2247, %v7384, 0
        %v7676 = vsel %vm2247, %v7390, 0
        %v7678 = vsel %vm2247, %v7396, 0
        %v7680 = vsel %vm2247, %v7402, 0
        %v7682 = vsel %vm2247, %v7408, 0
        %v7684 = vsel %vm2247, %v7414, 0
        %v7686 = vsel %vm2247, %v7420, 0
        %v7688 = vsel %vm2247, %v7426, 0
        %v7690 = vsel %vm2247, %v7432, 0
        %v7692 = vsel %vm2247, %v7438, 0
        %v7694 = vsel %vm2247, %v7444, 0
        %v7696 = vsel %vm2247, %v7450, 0
        %v7698 = vsel %vm2247, %v7456, 0
        %v7700 = vsel %vm2247, %v7462, 0
        %v7702 = vsel %vm2247, %v7468, 0
        %v7704 = vsel %vm2247, %v7474, 0
        %v7706 = vsel %vm2247, %v7480, 0
        %v7708 = vsel %vm2247, %v7486, 0
        %v7710 = vsel %vm2247, %v7492, 0
        %v7712 = vsel %vm2247, %v7498, 0
        %v7714 = vsel %vm2247, %v7504, 0
        %v7716 = vsel %vm2247, %v7510, 0
        %v7718 = vsel %vm2247, %v7516, 0
        %v7720 = vsel %vm2247, %v7522, 0
        %v7722 = vsel %vm2247, %v7527, 0
        %v7724 = vsel %vm2247, %v5116, 0
        %7726 = vmatprep.subr.mxu0 0.0
        %7727 = vmatpush1.msra.mxu0 %v7109
        %7728 = vmatprep.subr.mxu0 0.0
        %7729 = vmatpush1.msra.mxu0 %v7110
        %7730 = vmatprep.subr.mxu0 0.0
        %7731 = vmatpush1.msra.mxu0 %v7111
        %7732 = vmatprep.subr.mxu0 0.0
        %7733 = vmatpush1.msra.mxu0 %v7112
        %7734 = vmatprep.subr.mxu0 0.0
        %7735 = vmatpush1.msra.mxu0 %v7113
        %7736 = vmatprep.subr.mxu0 0.0
        %7737 = vmatpush1.msra.mxu0 %v7114
        %7738 = vmatprep.subr.mxu0 0.0
        %7739 = vmatpush1.msra.mxu0 %v7115
        %7740 = vmatprep.subr.mxu0 0.0
        %7741 = vmatpush1.msra.mxu0 %v7116
        %7742 = vmatprep.subr.mxu0 0.0
        %7743 = vmatpush1.msra.mxu0 %v7117
        %7744 = vmatprep.subr.mxu0 0.0
        %7745 = vmatpush1.msra.mxu0 %v7118
        %7746 = vmatprep.subr.mxu0 0.0
        %7747 = vmatpush1.msra.mxu0 %v7119
        %7748 = vmatprep.subr.mxu0 0.0
        %7749 = vmatpush1.msra.mxu0 %v7120
        %7750 = vmatprep.subr.mxu0 0.0
        %7751 = vmatpush1.msra.mxu0 %v7121
        %7752 = vmatprep.subr.mxu0 0.0
        %7753 = vmatpush1.msra.mxu0 %v7122
        %7754 = vmatprep.subr.mxu0 0.0
        %7755 = vmatpush1.msra.mxu0 %v7123
        %7756 = vmatprep.subr.mxu0 0.0
        %7757 = vmatpush1.msra.mxu0 %v7124
        %7758 = vmatprep.subr.mxu0 0.0
        %7759 = vmatpush1.msra.mxu0 %v7125
        %7760 = vmatprep.subr.mxu0 0.0
        %7761 = vmatpush1.msra.mxu0 %v7126
        %7762 = vmatprep.subr.mxu0 0.0
        %7763 = vmatpush1.msra.mxu0 %v7127
        %7764 = vmatprep.subr.mxu0 0.0
        %7765 = vmatpush1.msra.mxu0 %v7128
        %7766 = vmatprep.subr.mxu0 0.0
        %7767 = vmatpush1.msra.mxu0 %v7129
        %7768 = vmatprep.subr.mxu0 0.0
        %7769 = vmatpush1.msra.mxu0 %v7130
        %7770 = vmatprep.subr.mxu0 0.0
        %7771 = vmatpush1.msra.mxu0 %v7131
        %7772 = vmatprep.subr.mxu0 0.0
        %7773 = vmatpush1.msra.mxu0 %v7132
        %7774 = vmatprep.subr.mxu0 0.0
        %7775 = vmatpush1.msra.mxu0 %v7133
        %7776 = vmatprep.subr.mxu0 0.0
        %7777 = vmatpush1.msra.mxu0 %v7134
        %7778 = vmatprep.subr.mxu0 0.0
        %7779 = vmatpush1.msra.mxu0 %v7135
        %7780 = vmatprep.subr.mxu0 0.0
        %7781 = vmatpush1.msra.mxu0 %v7136
        %7782 = vmatprep.subr.mxu0 0.0
        %7783 = vmatpush1.msra.mxu0 %v7137
        %7784 = vmatprep.subr.mxu0 0.0
        %7785 = vmatpush1.msra.mxu0 %v7138
        %7786 = vmatprep.subr.mxu0 0.0
        %7787 = vmatpush1.msra.mxu0 %v7139
        %7788 = vmatprep.subr.mxu0 0.0
        %7789 = vmatpush1.msra.mxu0 %v7140
        %7790 = vmatprep.mubr.f32.mxu0 %v7255
        %7791 = vmatmul.mubr.f32.gmra.mrb[0].mxu0 %v7252
        %v7792 = vpop.f32.mrb[0].mxu0
        %v7793 = vadd.f32 %v7150, %v7792
        %v7794 = vpop.f32.mrb[0].mxu0
        %7795 = vmatprep.mubr.f32.mxu0 %v7262
        %7796 = vmatmul.mubr.f32.gmra.mrb[0].mxu0 %v7260
        %v7797 = vpop.f32.mrb[0].mxu0
        %v7798 = vadd.f32 %v7150, %v7797
        %v7799 = vpop.f32.mrb[0].mxu0
        %7800 = vmatprep.mubr.f32.mxu0 %v7268
        %7801 = vmatmul.mubr.f32.gmra.mrb[0].mxu0 %v7266
        %v7802 = vpop.f32.mrb[0].mxu0
        %v7803 = vadd.f32 %v7150, %v7802
        %v7804 = vpop.f32.mrb[0].mxu0
        %7805 = vmatprep.mubr.f32.mxu0 %v7274
        %7806 = vmatmul.mubr.f32.gmra.mrb[0].mxu0 %v7272
        %v7807 = vpop.f32.mrb[0].mxu0
        %v7808 = vadd.f32 %v7150, %v7807
        %v7809 = vpop.f32.mrb[0].mxu0
        %7810 = vmatprep.mubr.f32.mxu0 %v7280
        %7811 = vmatmul.mubr.f32.gmra.mrb[0].mxu0 %v7278
        %v7812 = vpop.f32.mrb[0].mxu0
        %v7813 = vadd.f32 %v7150, %v7812
        %v7814 = vpop.f32.mrb[0].mxu0
        %7815 = vmatprep.mubr.f32.mxu0 %v7286
        %7816 = vmatmul.mubr.f32.gmra.mrb[0].mxu0 %v7284
        %v7817 = vpop.f32.mrb[0].mxu0
        %v7818 = vadd.f32 %v7150, %v7817
        %v7819 = vpop.f32.mrb[0].mxu0
        %7820 = vmatprep.mubr.f32.mxu0 %v7292
        %7821 = vmatmul.mubr.f32.gmra.mrb[0].mxu0 %v7290
        %v7822 = vpop.f32.mrb[0].mxu0
        %v7823 = vadd.f32 %v7150, %v7822
        %v7824 = vpop.f32.mrb[0].mxu0
        %7825 = vmatprep.mubr.f32.mxu0 %v7298
        %7826 = vmatmul.mubr.f32.gmra.mrb[0].mxu0 %v7296
        %v7827 = vpop.f32.mrb[0].mxu0
        %v7828 = vadd.f32 %v7150, %v7827
        %v7829 = vpop.f32.mrb[0].mxu0
        %7830 = vmatprep.mubr.f32.mxu0 %v7304
        %7831 = vmatmul.mubr.f32.gmra.mrb[0].mxu0 %v7302
        %v7832 = vpop.f32.mrb[0].mxu0
        %v7833 = vadd.f32 %v7150, %v7832
        %v7834 = vpop.f32.mrb[0].mxu0
        %7835 = vmatprep.mubr.f32.mxu0 %v7310
        %7836 = vmatmul.mubr.f32.gmra.mrb[0].mxu0 %v7308
        %v7837 = vpop.f32.mrb[0].mxu0
        %v7838 = vadd.f32 %v7150, %v7837
        %v7839 = vpop.f32.mrb[0].mxu0
        %7840 = vmatprep.mubr.f32.mxu0 %v7316
        %7841 = vmatmul.mubr.f32.gmra.mrb[0].mxu0 %v7314
        %v7842 = vpop.f32.mrb[0].mxu0
        %v7843 = vadd.f32 %v7150, %v7842
        %v7844 = vpop.f32.mrb[0].mxu0
        %7845 = vmatprep.mubr.f32.mxu0 %v7322
        %7846 = vmatmul.mubr.f32.gmra.mrb[0].mxu0 %v7320
        %v7847 = vpop.f32.mrb[0].mxu0
        %v7848 = vadd.f32 %v7150, %v7847
        %v7849 = vpop.f32.mrb[0].mxu0
        %7850 = vmatprep.mubr.f32.mxu0 %v7328
        %7851 = vmatmul.mubr.f32.gmra.mrb[0].mxu0 %v7326
        %v7852 = vpop.f32.mrb[0].mxu0
        %v7853 = vadd.f32 %v7150, %v7852
        %v7854 = vpop.f32.mrb[0].mxu0
        %7855 = vmatprep.mubr.f32.mxu0 %v7334
        %7856 = vmatmul.mubr.f32.gmra.mrb[0].mxu0 %v7332
        %v7857 = vpop.f32.mrb[0].mxu0
        %v7858 = vadd.f32 %v7150, %v7857
        %v7859 = vpop.f32.mrb[0].mxu0
        %7860 = vmatprep.mubr.f32.mxu0 %v7340
        %7861 = vmatmul.mubr.f32.gmra.mrb[0].mxu0 %v7338
        %v7862 = vpop.f32.mrb[0].mxu0
        %v7863 = vadd.f32 %v7150, %v7862
        %v7864 = vpop.f32.mrb[0].mxu0
        %7865 = vmatprep.mubr.f32.mxu0 %v7346
        %7866 = vmatmul.mubr.f32.gmra.mrb[0].mxu0 %v7344
        %v7867 = vpop.f32.mrb[0].mxu0
        %v7868 = vadd.f32 %v7150, %v7867
        %v7869 = vpop.f32.mrb[0].mxu0
        %7870 = vmatprep.mubr.f32.mxu0 %v7352
        %7871 = vmatmul.mubr.f32.gmra.mrb[0].mxu0 %v7350
        %v7872 = vpop.f32.mrb[0].mxu0
        %v7873 = vadd.f32 %v7150, %v7872
        %v7874 = vpop.f32.mrb[0].mxu0
        %7875 = vmatprep.mubr.f32.mxu0 %v7358
        %7876 = vmatmul.mubr.f32.gmra.mrb[0].mxu0 %v7356
        %v7877 = vpop.f32.mrb[0].mxu0
        %v7878 = vadd.f32 %v7150, %v7877
        %v7879 = vpop.f32.mrb[0].mxu0
        %7880 = vmatprep.mubr.f32.mxu0 %v7364
        %7881 = vmatmul.mubr.f32.gmra.mrb[0].mxu0 %v7362
        %v7882 = vpop.f32.mrb[0].mxu0
        %v7883 = vadd.f32 %v7150, %v7882
        %v7884 = vpop.f32.mrb[0].mxu0
        %7885 = vmatprep.mubr.f32.mxu0 %v7370
        %7886 = vmatmul.mubr.f32.gmra.mrb[0].mxu0 %v7368
        %v7887 = vpop.f32.mrb[0].mxu0
        %v7888 = vadd.f32 %v7150, %v7887
        %v7889 = vpop.f32.mrb[0].mxu0
        %7890 = vmatprep.mubr.f32.mxu0 %v7376
        %7891 = vmatmul.mubr.f32.gmra.mrb[0].mxu0 %v7374
        %v7892 = vpop.f32.mrb[0].mxu0
        %v7893 = vadd.f32 %v7150, %v7892
        %v7894 = vpop.f32.mrb[0].mxu0
        %7895 = vmatprep.mubr.f32.mxu0 %v7382
        %7896 = vmatmul.mubr.f32.gmra.mrb[0].mxu0 %v7380
        %v7897 = vpop.f32.mrb[0].mxu0
        %v7898 = vadd.f32 %v7150, %v7897
        %v7899 = vpop.f32.mrb[0].mxu0
        %7900 = vmatprep.mubr.f32.mxu0 %v7388
        %7901 = vmatmul.mubr.f32.gmra.mrb[0].mxu0 %v7386
        %v7902 = vpop.f32.mrb[0].mxu0
        %v7903 = vadd.f32 %v7150, %v7902
        %v7904 = vpop.f32.mrb[0].mxu0
        %7905 = vmatprep.mubr.f32.mxu0 %v7394
        %7906 = vmatmul.mubr.f32.gmra.mrb[0].mxu0 %v7392
        %v7907 = vpop.f32.mrb[0].mxu0
        %v7908 = vadd.f32 %v7150, %v7907
        %v7909 = vpop.f32.mrb[0].mxu0
        %7910 = vmatprep.mubr.f32.mxu0 %v7400
        %7911 = vmatmul.mubr.f32.gmra.mrb[0].mxu0 %v7398
        %v7912 = vpop.f32.mrb[0].mxu0
        %v7913 = vadd.f32 %v7150, %v7912
        %v7914 = vpop.f32.mrb[0].mxu0
        %7915 = vmatprep.mubr.f32.mxu0 %v7406
        %7916 = vmatmul.mubr.f32.gmra.mrb[0].mxu0 %v7404
        %v7917 = vpop.f32.mrb[0].mxu0
        %v7918 = vadd.f32 %v7150, %v7917
        %v7919 = vpop.f32.mrb[0].mxu0
        %7920 = vmatprep.mubr.f32.mxu0 %v7412
        %7921 = vmatmul.mubr.f32.gmra.mrb[0].mxu0 %v7410
        %v7922 = vpop.f32.mrb[0].mxu0
        %v7923 = vadd.f32 %v7150, %v7922
        %v7924 = vpop.f32.mrb[0].mxu0
        %7925 = vmatprep.mubr.f32.mxu0 %v7418
        %7926 = vmatmul.mubr.f32.gmra.mrb[0].mxu0 %v7416
        %v7927 = vpop.f32.mrb[0].mxu0
        %v7928 = vadd.f32 %v7150, %v7927
        %v7929 = vpop.f32.mrb[0].mxu0
        %7930 = vmatprep.mubr.f32.mxu0 %v7424
        %7931 = vmatmul.mubr.f32.gmra.mrb[0].mxu0 %v7422
        %v7932 = vpop.f32.mrb[0].mxu0
        %v7933 = vadd.f32 %v7150, %v7932
        %v7934 = vpop.f32.mrb[0].mxu0
        %7935 = vmatprep.mubr.f32.mxu0 %v7430
        %7936 = vmatmul.mubr.f32.gmra.mrb[0].mxu0 %v7428
        %v7937 = vpop.f32.mrb[0].mxu0
        %v7938 = vadd.f32 %v7150, %v7937
        %v7939 = vpop.f32.mrb[0].mxu0
        %7940 = vmatprep.mubr.f32.mxu0 %v7436
        %7941 = vmatmul.mubr.f32.gmra.mrb[0].mxu0 %v7434
        %v7942 = vpop.f32.mrb[0].mxu0
        %v7943 = vadd.f32 %v7150, %v7942
        %v7944 = vpop.f32.mrb[0].mxu0
        %7945 = vmatprep.mubr.f32.mxu0 %v7442
        %7946 = vmatmul.mubr.f32.gmra.mrb[0].mxu0 %v7440
        %v7947 = vpop.f32.mrb[0].mxu0
        %v7948 = vadd.f32 %v7150, %v7947
        %v7949 = vpop.f32.mrb[0].mxu0
        %7950 = vmatprep.mubr.f32.mxu0 %v7448
        %7951 = vmatmul.mubr.f32.gmra.mrb[0].mxu0 %v7446
        %v7952 = vpop.f32.mrb[0].mxu0
        %v7953 = vadd.f32 %v7150, %v7952
        %v7954 = vpop.f32.mrb[0].mxu0
        %7955 = vmatprep.mubr.f32.mxu0 %v7454
        %7956 = vmatmul.mubr.f32.gmra.mrb[0].mxu0 %v7452
        %v7957 = vpop.f32.mrb[0].mxu0
        %v7958 = vadd.f32 %v7150, %v7957
        %v7959 = vpop.f32.mrb[0].mxu0
        %7960 = vmatprep.mubr.f32.mxu0 %v7460
        %7961 = vmatmul.mubr.f32.gmra.mrb[0].mxu0 %v7458
        %v7962 = vpop.f32.mrb[0].mxu0
        %v7963 = vadd.f32 %v7150, %v7962
        %v7964 = vpop.f32.mrb[0].mxu0
        %7965 = vmatprep.mubr.f32.mxu0 %v7466
        %7966 = vmatmul.mubr.f32.gmra.mrb[0].mxu0 %v7464
        %v7967 = vpop.f32.mrb[0].mxu0
        %v7968 = vadd.f32 %v7150, %v7967
        %v7969 = vpop.f32.mrb[0].mxu0
        %7970 = vmatprep.mubr.f32.mxu0 %v7472
        %7971 = vmatmul.mubr.f32.gmra.mrb[0].mxu0 %v7470
        %v7972 = vpop.f32.mrb[0].mxu0
        %v7973 = vadd.f32 %v7150, %v7972
        %v7974 = vpop.f32.mrb[0].mxu0
        %7975 = vmatprep.mubr.f32.mxu0 %v7478
        %7976 = vmatmul.mubr.f32.gmra.mrb[0].mxu0 %v7476
        %v7977 = vpop.f32.mrb[0].mxu0
        %v7978 = vadd.f32 %v7150, %v7977
        %v7979 = vpop.f32.mrb[0].mxu0
        %7980 = vmatprep.mubr.f32.mxu0 %v7484
        %7981 = vmatmul.mubr.f32.gmra.mrb[0].mxu0 %v7482
        %v7982 = vpop.f32.mrb[0].mxu0
        %v7983 = vadd.f32 %v7150, %v7982
        %v7984 = vpop.f32.mrb[0].mxu0
        %7985 = vmatprep.mubr.f32.mxu0 %v7490
        %7986 = vmatmul.mubr.f32.gmra.mrb[0].mxu0 %v7488
        %v7987 = vpop.f32.mrb[0].mxu0
        %v7988 = vadd.f32 %v7150, %v7987
        %v7989 = vpop.f32.mrb[0].mxu0
        %7990 = vmatprep.mubr.f32.mxu0 %v7496
        %7991 = vmatmul.mubr.f32.gmra.mrb[0].mxu0 %v7494
        %v7992 = vpop.f32.mrb[0].mxu0
        %v7993 = vadd.f32 %v7150, %v7992
        %v7994 = vpop.f32.mrb[0].mxu0
        %7995 = vmatprep.mubr.f32.mxu0 %v7502
        %7996 = vmatmul.mubr.f32.gmra.mrb[0].mxu0 %v7500
        %v7997 = vpop.f32.mrb[0].mxu0
        %v7998 = vadd.f32 %v7150, %v7997
        %v7999 = vpop.f32.mrb[0].mxu0
        %8000 = vmatprep.mubr.f32.mxu0 %v7508
        %8001 = vmatmul.mubr.f32.gmra.mrb[0].mxu0 %v7506
        %v8002 = vpop.f32.mrb[0].mxu0
        %v8003 = vadd.f32 %v7150, %v8002
        %v8004 = vpop.f32.mrb[0].mxu0
        %8005 = vmatprep.mubr.f32.mxu0 %v7514
        %8006 = vmatmul.mubr.f32.gmra.mrb[0].mxu0 %v7512
        %v8007 = vpop.f32.mrb[0].mxu0
        %v8008 = vadd.f32 %v7150, %v8007
        %v8009 = vpop.f32.mrb[0].mxu0
        %8010 = vmatprep.mubr.f32.mxu0 %v7520
        %8011 = vmatmul.mubr.f32.gmra.mrb[0].mxu0 %v7518
        %v8012 = vpop.f32.mrb[0].mxu0
        %v8013 = vadd.f32 %v7150, %v8012
        %v8014 = vpop.f32.mrb[0].mxu0
        %8015 = vmatprep.mubr.f32.mxu0 %v7526
        %8016 = vmatmul.mubr.f32.gmra.mrb[0].mxu0 %v7524
        %v8017 = vpop.f32.mrb[0].mxu0
        %v8018 = vadd.f32 %v7150, %v8017
        %v8019 = vpop.f32.mrb[0].mxu0
        %8020 = vmatprep.mubr.f32.mxu0 %v7531
        %8021 = vmatmul.mubr.f32.gmra.mrb[0].mxu0 %v7529
        %v8022 = vpop.f32.mrb[0].mxu0
        %v8023 = vadd.f32 %v7150, %v8022
        %v8024 = vpop.f32.mrb[0].mxu0
        %8025 = vmatprep.mubr.f32.mxu0 %v7535
        %8026 = vmatmul.mubr.f32.gmra.mrb[0].mxu0 %v7533
        %v8027 = vpop.f32.mrb[0].mxu0
        %v8028 = vadd.f32 %v7150, %v8027
        %v8029 = vpop.f32.mrb[0].mxu0
        %8030 = vdwg.mxu0
        %8031 = vmatprep.subr.mxu0 0.0
        %8032 = vmatpush1.msra.mxu0 %v7141
        %8033 = vmatprep.subr.mxu0 0.0
        %8034 = vmatpush1.msra.mxu0 %v7142
        %8035 = vmatprep.subr.mxu0 0.0
        %8036 = vmatpush1.msra.mxu0 %v7143
        %8037 = vmatprep.subr.mxu0 0.0
        %8038 = vmatpush1.msra.mxu0 %v7144
        %8039 = vmatprep.subr.mxu0 0.0
        %8040 = vmatpush1.msra.mxu0 0.0
        %8041 = vmatprep.subr.mxu0 0.0
        %8042 = vmatpush1.msra.mxu0 0.0
        %8043 = vmatprep.subr.mxu0 0.0
        %8044 = vmatpush1.msra.mxu0 0.0
        %8045 = vmatprep.subr.mxu0 0.0
        %8046 = vmatpush1.msra.mxu0 0.0
        %8047 = vmatprep.subr.mxu0 0.0
        %8048 = vmatpush1.msra.mxu0 0.0
        %8049 = vmatprep.subr.mxu0 0.0
        %8050 = vmatpush1.msra.mxu0 0.0
        %8051 = vmatprep.subr.mxu0 0.0
        %8052 = vmatpush1.msra.mxu0 0.0
        %8053 = vmatprep.subr.mxu0 0.0
        %8054 = vmatpush1.msra.mxu0 0.0
        %8055 = vmatprep.subr.mxu0 0.0
        %8056 = vmatpush1.msra.mxu0 0.0
        %8057 = vmatprep.subr.mxu0 0.0
        %8058 = vmatpush1.msra.mxu0 0.0
        %8059 = vmatprep.subr.mxu0 0.0
        %8060 = vmatpush1.msra.mxu0 0.0
        %8061 = vmatprep.subr.mxu0 0.0
        %8062 = vmatpush1.msra.mxu0 0.0
        %8063 = vmatprep.subr.mxu0 0.0
        %8064 = vmatpush1.msra.mxu0 0.0
        %8065 = vmatprep.subr.mxu0 0.0
        %8066 = vmatpush1.msra.mxu0 0.0
        %8067 = vmatprep.subr.mxu0 0.0
        %8068 = vmatpush1.msra.mxu0 0.0
        %8069 = vmatprep.subr.mxu0 0.0
        %8070 = vmatpush1.msra.mxu0 0.0
        %8071 = vmatprep.subr.mxu0 0.0
        %8072 = vmatpush1.msra.mxu0 0.0
        %8073 = vmatprep.subr.mxu0 0.0
        %8074 = vmatpush1.msra.mxu0 0.0
        %8075 = vmatprep.subr.mxu0 0.0
        %8076 = vmatpush1.msra.mxu0 0.0
        %8077 = vmatprep.subr.mxu0 0.0
        %8078 = vmatpush1.msra.mxu0 0.0
        %8079 = vmatprep.subr.mxu0 0.0
        %8080 = vmatpush1.msra.mxu0 0.0
        %8081 = vmatprep.subr.mxu0 0.0
        %8082 = vmatpush1.msra.mxu0 0.0
        %8083 = vmatprep.subr.mxu0 0.0
        %8084 = vmatpush1.msra.mxu0 0.0
        %8085 = vmatprep.subr.mxu0 0.0
        %8086 = vmatpush1.msra.mxu0 0.0
        %8087 = vmatprep.subr.mxu0 0.0
        %8088 = vmatpush1.msra.mxu0 0.0
        %8089 = vmatprep.subr.mxu0 0.0
        %8090 = vmatpush1.msra.mxu0 0.0
        %8091 = vmatprep.subr.mxu0 0.0
        %8092 = vmatpush1.msra.mxu0 0.0
        %8093 = vmatprep.subr.mxu0 0.0
        %8094 = vmatpush1.msra.mxu0 0.0
        %8095 = vmatprep.mubr.f32.mxu0 0.0
        %8096 = vmatmul.mubr.f32.gmra.mrb[0].mxu0 %v7632
        %v8097 = vpop.f32.mrb[0].mxu0
        %v8098 = vadd.f32 %v7793, %v8097
        %v8099 = vpop.f32.mrb[0].mxu0
        %8100 = vmatprep.mubr.f32.mxu0 0.0
        %8101 = vmatmul.mubr.f32.gmra.mrb[0].mxu0 %v7634
        %v8102 = vpop.f32.mrb[0].mxu0
        %v8103 = vadd.f32 %v7798, %v8102
        %v8104 = vpop.f32.mrb[0].mxu0
        %8105 = vmatprep.mubr.f32.mxu0 0.0
        %8106 = vmatmul.mubr.f32.gmra.mrb[0].mxu0 %v7636
        %v8107 = vpop.f32.mrb[0].mxu0
        %v8108 = vadd.f32 %v7803, %v8107
        %v8109 = vpop.f32.mrb[0].mxu0
        %8110 = vmatprep.mubr.f32.mxu0 0.0
        %8111 = vmatmul.mubr.f32.gmra.mrb[0].mxu0 %v7638
        %v8112 = vpop.f32.mrb[0].mxu0
        %v8113 = vadd.f32 %v7808, %v8112
        %v8114 = vpop.f32.mrb[0].mxu0
        %8115 = vmatprep.mubr.f32.mxu0 0.0
        %8116 = vmatmul.mubr.f32.gmra.mrb[0].mxu0 %v7640
        %v8117 = vpop.f32.mrb[0].mxu0
        %v8118 = vadd.f32 %v7813, %v8117
        %v8119 = vpop.f32.mrb[0].mxu0
        %8120 = vmatprep.mubr.f32.mxu0 0.0
        %8121 = vmatmul.mubr.f32.gmra.mrb[0].mxu0 %v7642
        %v8122 = vpop.f32.mrb[0].mxu0
        %v8123 = vadd.f32 %v7818, %v8122
        %v8124 = vpop.f32.mrb[0].mxu0
        %8125 = vmatprep.mubr.f32.mxu0 0.0
        %8126 = vmatmul.mubr.f32.gmra.mrb[0].mxu0 %v7644
        %v8127 = vpop.f32.mrb[0].mxu0
        %v8128 = vadd.f32 %v7823, %v8127
        %v8129 = vpop.f32.mrb[0].mxu0
        %8130 = vmatprep.mubr.f32.mxu0 0.0
        %8131 = vmatmul.mubr.f32.gmra.mrb[0].mxu0 %v7646
        %v8132 = vpop.f32.mrb[0].mxu0
        %v8133 = vadd.f32 %v7828, %v8132
        %v8134 = vpop.f32.mrb[0].mxu0
        %8135 = vmatprep.mubr.f32.mxu0 0.0
        %8136 = vmatmul.mubr.f32.gmra.mrb[0].mxu0 %v7648
        %v8137 = vpop.f32.mrb[0].mxu0
        %v8138 = vadd.f32 %v7833, %v8137
        %v8139 = vpop.f32.mrb[0].mxu0
        %8140 = vmatprep.mubr.f32.mxu0 0.0
        %8141 = vmatmul.mubr.f32.gmra.mrb[0].mxu0 %v7650
        %v8142 = vpop.f32.mrb[0].mxu0
        %v8143 = vadd.f32 %v7838, %v8142
        %v8144 = vpop.f32.mrb[0].mxu0
        %8145 = vmatprep.mubr.f32.mxu0 0.0
        %8146 = vmatmul.mubr.f32.gmra.mrb[0].mxu0 %v7652
        %v8147 = vpop.f32.mrb[0].mxu0
        %v8148 = vadd.f32 %v7843, %v8147
        %v8149 = vpop.f32.mrb[0].mxu0
        %8150 = vmatprep.mubr.f32.mxu0 0.0
        %8151 = vmatmul.mubr.f32.gmra.mrb[0].mxu0 %v7654
        %v8152 = vpop.f32.mrb[0].mxu0
        %v8153 = vadd.f32 %v7848, %v8152
        %v8154 = vpop.f32.mrb[0].mxu0
        %8155 = vmatprep.mubr.f32.mxu0 0.0
        %8156 = vmatmul.mubr.f32.gmra.mrb[0].mxu0 %v7656
        %v8157 = vpop.f32.mrb[0].mxu0
        %v8158 = vadd.f32 %v7853, %v8157
        %v8159 = vpop.f32.mrb[0].mxu0
        %8160 = vmatprep.mubr.f32.mxu0 0.0
        %8161 = vmatmul.mubr.f32.gmra.mrb[0].mxu0 %v7658
        %v8162 = vpop.f32.mrb[0].mxu0
        %v8163 = vadd.f32 %v7858, %v8162
        %v8164 = vpop.f32.mrb[0].mxu0
        %8165 = vmatprep.mubr.f32.mxu0 0.0
        %8166 = vmatmul.mubr.f32.gmra.mrb[0].mxu0 %v7660
        %v8167 = vpop.f32.mrb[0].mxu0
        %v8168 = vadd.f32 %v7863, %v8167
        %v8169 = vpop.f32.mrb[0].mxu0
        %8170 = vmatprep.mubr.f32.mxu0 0.0
        %8171 = vmatmul.mubr.f32.gmra.mrb[0].mxu0 %v7662
        %v8172 = vpop.f32.mrb[0].mxu0
        %v8173 = vadd.f32 %v7868, %v8172
        %v8174 = vpop.f32.mrb[0].mxu0
        %8175 = vmatprep.mubr.f32.mxu0 0.0
        %8176 = vmatmul.mubr.f32.gmra.mrb[0].mxu0 %v7664
        %v8177 = vpop.f32.mrb[0].mxu0
        %v8178 = vadd.f32 %v7873, %v8177
        %v8179 = vpop.f32.mrb[0].mxu0
        %8180 = vmatprep.mubr.f32.mxu0 0.0
        %8181 = vmatmul.mubr.f32.gmra.mrb[0].mxu0 %v7666
        %v8182 = vpop.f32.mrb[0].mxu0
        %v8183 = vadd.f32 %v7878, %v8182
        %v8184 = vpop.f32.mrb[0].mxu0
        %8185 = vmatprep.mubr.f32.mxu0 0.0
        %8186 = vmatmul.mubr.f32.gmra.mrb[0].mxu0 %v7668
        %v8187 = vpop.f32.mrb[0].mxu0
        %v8188 = vadd.f32 %v7883, %v8187
        %v8189 = vpop.f32.mrb[0].mxu0
        %8190 = vmatprep.mubr.f32.mxu0 0.0
        %8191 = vmatmul.mubr.f32.gmra.mrb[0].mxu0 %v7670
        %v8192 = vpop.f32.mrb[0].mxu0
        %v8193 = vadd.f32 %v7888, %v8192
        %v8194 = vpop.f32.mrb[0].mxu0
        %8195 = vmatprep.mubr.f32.mxu0 0.0
        %8196 = vmatmul.mubr.f32.gmra.mrb[0].mxu0 %v7672
        %v8197 = vpop.f32.mrb[0].mxu0
        %v8198 = vadd.f32 %v7893, %v8197
        %v8199 = vpop.f32.mrb[0].mxu0
        %8200 = vmatprep.mubr.f32.mxu0 0.0
        %8201 = vmatmul.mubr.f32.gmra.mrb[0].mxu0 %v7674
        %v8202 = vpop.f32.mrb[0].mxu0
        %v8203 = vadd.f32 %v7898, %v8202
        %v8204 = vpop.f32.mrb[0].mxu0
        %8205 = vmatprep.mubr.f32.mxu0 0.0
        %8206 = vmatmul.mubr.f32.gmra.mrb[0].mxu0 %v7676
        %v8207 = vpop.f32.mrb[0].mxu0
        %v8208 = vadd.f32 %v7903, %v8207
        %v8209 = vpop.f32.mrb[0].mxu0
        %8210 = vmatprep.mubr.f32.mxu0 0.0
        %8211 = vmatmul.mubr.f32.gmra.mrb[0].mxu0 %v7678
        %v8212 = vpop.f32.mrb[0].mxu0
        %v8213 = vadd.f32 %v7908, %v8212
        %v8214 = vpop.f32.mrb[0].mxu0
        %8215 = vmatprep.mubr.f32.mxu0 0.0
        %8216 = vmatmul.mubr.f32.gmra.mrb[0].mxu0 %v7680
        %v8217 = vpop.f32.mrb[0].mxu0
        %v8218 = vadd.f32 %v7913, %v8217
        %v8219 = vpop.f32.mrb[0].mxu0
        %8220 = vmatprep.mubr.f32.mxu0 0.0
        %8221 = vmatmul.mubr.f32.gmra.mrb[0].mxu0 %v7682
        %v8222 = vpop.f32.mrb[0].mxu0
        %v8223 = vadd.f32 %v7918, %v8222
        %v8224 = vpop.f32.mrb[0].mxu0
        %8225 = vmatprep.mubr.f32.mxu0 0.0
        %8226 = vmatmul.mubr.f32.gmra.mrb[0].mxu0 %v7684
        %v8227 = vpop.f32.mrb[0].mxu0
        %v8228 = vadd.f32 %v7923, %v8227
        %v8229 = vpop.f32.mrb[0].mxu0
        %8230 = vmatprep.mubr.f32.mxu0 0.0
        %8231 = vmatmul.mubr.f32.gmra.mrb[0].mxu0 %v7686
        %v8232 = vpop.f32.mrb[0].mxu0
        %v8233 = vadd.f32 %v7928, %v8232
        %v8234 = vpop.f32.mrb[0].mxu0
        %8235 = vmatprep.mubr.f32.mxu0 0.0
        %8236 = vmatmul.mubr.f32.gmra.mrb[0].mxu0 %v7688
        %v8237 = vpop.f32.mrb[0].mxu0
        %v8238 = vadd.f32 %v7933, %v8237
        %v8239 = vpop.f32.mrb[0].mxu0
        %8240 = vmatprep.mubr.f32.mxu0 0.0
        %8241 = vmatmul.mubr.f32.gmra.mrb[0].mxu0 %v7690
        %v8242 = vpop.f32.mrb[0].mxu0
        %v8243 = vadd.f32 %v7938, %v8242
        %v8244 = vpop.f32.mrb[0].mxu0
        %8245 = vmatprep.mubr.f32.mxu0 0.0
        %8246 = vmatmul.mubr.f32.gmra.mrb[0].mxu0 %v7692
        %v8247 = vpop.f32.mrb[0].mxu0
        %v8248 = vadd.f32 %v7943, %v8247
        %v8249 = vpop.f32.mrb[0].mxu0
        %8250 = vmatprep.mubr.f32.mxu0 0.0
        %8251 = vmatmul.mubr.f32.gmra.mrb[0].mxu0 %v7694
        %v8252 = vpop.f32.mrb[0].mxu0
        %v8253 = vadd.f32 %v7948, %v8252
        %v8254 = vpop.f32.mrb[0].mxu0
        %8255 = vmatprep.mubr.f32.mxu0 0.0
        %8256 = vmatmul.mubr.f32.gmra.mrb[0].mxu0 %v7696
        %v8257 = vpop.f32.mrb[0].mxu0
        %v8258 = vadd.f32 %v7953, %v8257
        %v8259 = vpop.f32.mrb[0].mxu0
        %8260 = vmatprep.mubr.f32.mxu0 0.0
        %8261 = vmatmul.mubr.f32.gmra.mrb[0].mxu0 %v7698
        %v8262 = vpop.f32.mrb[0].mxu0
        %v8263 = vadd.f32 %v7958, %v8262
        %v8264 = vpop.f32.mrb[0].mxu0
        %8265 = vmatprep.mubr.f32.mxu0 0.0
        %8266 = vmatmul.mubr.f32.gmra.mrb[0].mxu0 %v7700
        %v8267 = vpop.f32.mrb[0].mxu0
        %v8268 = vadd.f32 %v7963, %v8267
        %v8269 = vpop.f32.mrb[0].mxu0
        %8270 = vmatprep.mubr.f32.mxu0 0.0
        %8271 = vmatmul.mubr.f32.gmra.mrb[0].mxu0 %v7702
        %v8272 = vpop.f32.mrb[0].mxu0
        %v8273 = vadd.f32 %v7968, %v8272
        %v8274 = vpop.f32.mrb[0].mxu0
        %8275 = vmatprep.mubr.f32.mxu0 0.0
        %8276 = vmatmul.mubr.f32.gmra.mrb[0].mxu0 %v7704
        %v8277 = vpop.f32.mrb[0].mxu0
        %v8278 = vadd.f32 %v7973, %v8277
        %v8279 = vpop.f32.mrb[0].mxu0
        %8280 = vmatprep.mubr.f32.mxu0 0.0
        %8281 = vmatmul.mubr.f32.gmra.mrb[0].mxu0 %v7706
        %v8282 = vpop.f32.mrb[0].mxu0
        %v8283 = vadd.f32 %v7978, %v8282
        %v8284 = vpop.f32.mrb[0].mxu0
        %8285 = vmatprep.mubr.f32.mxu0 0.0
        %8286 = vmatmul.mubr.f32.gmra.mrb[0].mxu0 %v7708
        %v8287 = vpop.f32.mrb[0].mxu0
        %v8288 = vadd.f32 %v7983, %v8287
        %v8289 = vpop.f32.mrb[0].mxu0
        %8290 = vmatprep.mubr.f32.mxu0 0.0
        %8291 = vmatmul.mubr.f32.gmra.mrb[0].mxu0 %v7710
        %v8292 = vpop.f32.mrb[0].mxu0
        %v8293 = vadd.f32 %v7988, %v8292
        %v8294 = vpop.f32.mrb[0].mxu0
        %8295 = vmatprep.mubr.f32.mxu0 0.0
        %8296 = vmatmul.mubr.f32.gmra.mrb[0].mxu0 %v7712
        %v8297 = vpop.f32.mrb[0].mxu0
        %v8298 = vadd.f32 %v7993, %v8297
        %v8299 = vpop.f32.mrb[0].mxu0
        %8300 = vmatprep.mubr.f32.mxu0 0.0
        %8301 = vmatmul.mubr.f32.gmra.mrb[0].mxu0 %v7714
        %v8302 = vpop.f32.mrb[0].mxu0
        %v8303 = vadd.f32 %v7998, %v8302
        %v8304 = vpop.f32.mrb[0].mxu0
        %8305 = vmatprep.mubr.f32.mxu0 0.0
        %8306 = vmatmul.mubr.f32.gmra.mrb[0].mxu0 %v7716
        %v8307 = vpop.f32.mrb[0].mxu0
        %v8308 = vadd.f32 %v8003, %v8307
        %v8309 = vpop.f32.mrb[0].mxu0
        %8310 = vmatprep.mubr.f32.mxu0 0.0
        %8311 = vmatmul.mubr.f32.gmra.mrb[0].mxu0 %v7718
        %v8312 = vpop.f32.mrb[0].mxu0
        %v8313 = vadd.f32 %v8008, %v8312
        %v8314 = vpop.f32.mrb[0].mxu0
        %8315 = vmatprep.mubr.f32.mxu0 0.0
        %8316 = vmatmul.mubr.f32.gmra.mrb[0].mxu0 %v7720
        %v8317 = vpop.f32.mrb[0].mxu0
        %v8318 = vadd.f32 %v8013, %v8317
        %v8319 = vpop.f32.mrb[0].mxu0
        %8320 = vmatprep.mubr.f32.mxu0 0.0
        %8321 = vmatmul.mubr.f32.gmra.mrb[0].mxu0 %v7722
        %v8322 = vpop.f32.mrb[0].mxu0
        %v8323 = vadd.f32 %v8018, %v8322
        %v8324 = vpop.f32.mrb[0].mxu0
        %8325 = vmatprep.mubr.f32.mxu0 0.0
        %8326 = vmatmul.mubr.f32.gmra.mrb[0].mxu0 %v7724
        %v8327 = vpop.f32.mrb[0].mxu0
        %v8328 = vadd.f32 %v8023, %v8327
        %v8329 = vpop.f32.mrb[0].mxu0
        %8330 = vmatprep.mubr.f32.mxu0 0.0
        %8331 = vmatmul.mubr.f32.gmra.mrb[0].mxu0 %v7724
        %v8332 = vpop.f32.mrb[0].mxu0
        %v8333 = vadd.f32 %v8028, %v8332
        %v8334 = vpop.f32.mrb[0].mxu0
        %8335 = vdwg.mxu0
        %v8336 = vmax.f32 %v8098, 0.0
        %v8337 = vmax.f32 %v8103, 0.0
        %v8338 = vmax.f32 %v8108, 0.0
        %v8339 = vmax.f32 %v8113, 0.0
        %v8340 = vmax.f32 %v8118, 0.0
        %v8341 = vmax.f32 %v8123, 0.0
        %v8342 = vmax.f32 %v8128, 0.0
        %v8343 = vmax.f32 %v8133, 0.0
        %v8344 = vmax.f32 %v8138, 0.0
        %v8345 = vmax.f32 %v8143, 0.0
        %v8346 = vmax.f32 %v8148, 0.0
        %v8347 = vmax.f32 %v8153, 0.0
        %v8348 = vmax.f32 %v8158, 0.0
        %v8349 = vmax.f32 %v8163, 0.0
        %v8350 = vmax.f32 %v8168, 0.0
        %v8351 = vmax.f32 %v8173, 0.0
        %v8352 = vmax.f32 %v8178, 0.0
        %v8353 = vmax.f32 %v8183, 0.0
        %v8354 = vmax.f32 %v8188, 0.0
        %v8355 = vmax.f32 %v8193, 0.0
        %v8356 = vmax.f32 %v8198, 0.0
        %v8357 = vmax.f32 %v8203, 0.0
        %v8358 = vmax.f32 %v8208, 0.0
        %v8359 = vmax.f32 %v8213, 0.0
        %v8360 = vmax.f32 %v8218, 0.0
        %v8361 = vmax.f32 %v8223, 0.0
        %v8362 = vmax.f32 %v8228, 0.0
        %v8363 = vmax.f32 %v8233, 0.0
        %v8364 = vmax.f32 %v8238, 0.0
        %v8365 = vmax.f32 %v8243, 0.0
        %v8366 = vmax.f32 %v8248, 0.0
        %v8367 = vmax.f32 %v8253, 0.0
        %v8368 = vmax.f32 %v8258, 0.0
        %v8369 = vmax.f32 %v8263, 0.0
        %v8370 = vmax.f32 %v8268, 0.0
        %v8371 = vmax.f32 %v8273, 0.0
        %v8372 = vmax.f32 %v8278, 0.0
        %v8373 = vmax.f32 %v8283, 0.0
        %v8374 = vmax.f32 %v8288, 0.0
        %v8375 = vmax.f32 %v8293, 0.0
        %v8376 = vmax.f32 %v8298, 0.0
        %v8377 = vmax.f32 %v8303, 0.0
        %v8378 = vmax.f32 %v8308, 0.0
        %v8379 = vmax.f32 %v8313, 0.0
        %v8380 = vmax.f32 %v8318, 0.0
        %v8381 = vmax.f32 %v8323, 0.0
        %v8382 = vmax.f32 %v8328, 0.0
        %v8383 = vmax.f32 %v8333, 0.0
        %8384 = vst.msk [vmem:[%s343] sm:$0xff] %vm2247, %v8336
        %8385 = vst.msk [vmem:[%s343 + $0x8] sm:$0xff] %vm2247, %v8337
        %8386 = vst.msk [vmem:[%s343 + $0x10] sm:$0xff] %vm2247, %v8338
        %8387 = vst.msk [vmem:[%s343 + $0x18] sm:$0xff] %vm2247, %v8339
        %8388 = vst.msk [vmem:[%s343 + $0x20] sm:$0xff] %vm2247, %v8340
        %8389 = vst.msk [vmem:[%s343 + $0x28] sm:$0xff] %vm2247, %v8341
        %8390 = vst.msk [vmem:[%s343 + $0x30] sm:$0xff] %vm2247, %v8342
        %8391 = vst.msk [vmem:[%s343 + $0x38] sm:$0xff] %vm2247, %v8343
        %8392 = vst.msk [vmem:[%s343 + $0x40] sm:$0xff] %vm2247, %v8344
        %8393 = vst.msk [vmem:[%s343 + $0x48] sm:$0xff] %vm2247, %v8345
        %8394 = vst.msk [vmem:[%s343 + $0x50] sm:$0xff] %vm2247, %v8346
        %8395 = vst.msk [vmem:[%s343 + $0x58] sm:$0xff] %vm2247, %v8347
        %8396 = vst.msk [vmem:[%s343 + $0x60] sm:$0xff] %vm2247, %v8348
        %8397 = vst.msk [vmem:[%s343 + $0x68] sm:$0xff] %vm2247, %v8349
        %8398 = vst.msk [vmem:[%s343 + $0x70] sm:$0xff] %vm2247, %v8350
        %8399 = vst.msk [vmem:[%s343 + $0x78] sm:$0xff] %vm2247, %v8351
        %8400 = vst.msk [vmem:[%s343 + $0x80] sm:$0xff] %vm2247, %v8352
        %8401 = vst.msk [vmem:[%s343 + $0x88] sm:$0xff] %vm2247, %v8353
        %8402 = vst.msk [vmem:[%s343 + $0x90] sm:$0xff] %vm2247, %v8354
        %8403 = vst.msk [vmem:[%s343 + $0x98] sm:$0xff] %vm2247, %v8355
        %8404 = vst.msk [vmem:[%s343 + $0xa0] sm:$0xff] %vm2247, %v8356
        %8405 = vst.msk [vmem:[%s343 + $0xa8] sm:$0xff] %vm2247, %v8357
        %8406 = vst.msk [vmem:[%s343 + $0xb0] sm:$0xff] %vm2247, %v8358
        %8407 = vst.msk [vmem:[%s343 + $0xb8] sm:$0xff] %vm2247, %v8359
        %8408 = vst.msk [vmem:[%s343 + $0xc0] sm:$0xff] %vm2247, %v8360
        %8409 = vst.msk [vmem:[%s343 + $0xc8] sm:$0xff] %vm2247, %v8361
        %8410 = vst.msk [vmem:[%s343 + $0xd0] sm:$0xff] %vm2247, %v8362
        %8411 = vst.msk [vmem:[%s343 + $0xd8] sm:$0xff] %vm2247, %v8363
        %8412 = vst.msk [vmem:[%s343 + $0xe0] sm:$0xff] %vm2247, %v8364
        %8413 = vst.msk [vmem:[%s343 + $0xe8] sm:$0xff] %vm2247, %v8365
        %8414 = vst.msk [vmem:[%s343 + $0xf0] sm:$0xff] %vm2247, %v8366
        %8415 = vst.msk [vmem:[%s343 + $0xf8] sm:$0xff] %vm2247, %v8367
        %8416 = vst.msk [vmem:[%s343 + $0x100] sm:$0xff] %vm2247, %v8368
        %8417 = vst.msk [vmem:[%s343 + $0x108] sm:$0xff] %vm2247, %v8369
        %8418 = vst.msk [vmem:[%s343 + $0x110] sm:$0xff] %vm2247, %v8370
        %8419 = vst.msk [vmem:[%s343 + $0x118] sm:$0xff] %vm2247, %v8371
        %8420 = vst.msk [vmem:[%s343 + $0x120] sm:$0xff] %vm2247, %v8372
        %8421 = vst.msk [vmem:[%s343 + $0x128] sm:$0xff] %vm2247, %v8373
        %8422 = vst.msk [vmem:[%s343 + $0x130] sm:$0xff] %vm2247, %v8374
        %8423 = vst.msk [vmem:[%s343 + $0x138] sm:$0xff] %vm2247, %v8375
        %8424 = vst.msk [vmem:[%s343 + $0x140] sm:$0xff] %vm2247, %v8376
        %8425 = vst.msk [vmem:[%s343 + $0x148] sm:$0xff] %vm2247, %v8377
        %8426 = vst.msk [vmem:[%s343 + $0x150] sm:$0xff] %vm2247, %v8378
        %8427 = vst.msk [vmem:[%s343 + $0x158] sm:$0xff] %vm2247, %v8379
        %8428 = vst.msk [vmem:[%s343 + $0x160] sm:$0xff] %vm2247, %v8380
        %8429 = vst.msk [vmem:[%s343 + $0x168] sm:$0xff] %vm2247, %v8381
        %8430 = vst.msk [vmem:[%s343 + $0x170] sm:$0xff] %vm2247, %v8382
        %8431 = vst.msk [vmem:[%s343 + $0x178] sm:$0xff] %vm2247, %v8383
        %p8432 = scmp.lt.s32.totalorder %s21, 1
        %s8433 = scalar_select %p8432, %s21, 1
        %s8434 = smul.addr %s8433, 48
        %s8435 = smul.addr %s8434, 8
        %s8436 = scalar_lea.vmem %s8, %s8435
        // Predicated region
        $region65: #{dqn_forward.2} parent=51 // pred_check
          %p8437 = pneg %p212
        $region66: #{dqn_forward.2} parent=51 // pred_check_branch
          %8439 = sbr.rel (%p8437) target = $region68
        $region67: #{dqn_forward.2} parent=51 // pred_region
          _
        $region68: #{dqn_forward.2} parent=51 // pred_fallthru
          _
      $region52: #{dqn_forward.2} parent=5 // pred_fallthru
        _
      %p8440 = scmp.le.s32.totalorder 2, %s16
      // Predicated region
      $region69: #{dqn_forward.2} parent=5 // pred_check
        %p8441 = pneg %p8440
      $region70: #{dqn_forward.2} parent=5 // pred_check_branch
        %8443 = sbr.rel (%p8441) target = $region72
      $region71: #{dqn_forward.2} parent=5 // pred_region
        %s8444 = ssub.s32 %s16, 2
        // Predicated region
        $region73: #{dqn_forward.2} parent=71 // pred_check
          %p8445 = pneg %p218
        $region74: #{dqn_forward.2} parent=71 // pred_check_branch
          %8447 = sbr.rel (%p8445) target = $region76
        $region75: #{dqn_forward.2} parent=71 // pred_region
          %p8448 = scmp.lt.s32.totalorder %s22, 1
          %s8449 = scalar_select %p8448, %s22, 1
          %s8450 = smul.addr %s8449, 48
          %s8451 = smul.addr %s8450, 8
          %s8452 = scalar_lea.vmem %s8, %s8451
        $region76: #{dqn_forward.2} parent=71 // pred_fallthru
          _
      $region72: #{dqn_forward.2} parent=5 // pred_fallthru
        _
    $region6: #{dqn_forward.2} parent=1 // loop_footer
      %s20 = sadd.s32 1, %s16
    $region7: #{dqn_forward.2} parent=1 // loop_footer_branch
      %15 = sbr.rel target = $region3
    $region8: #{dqn_forward.2} parent=1 // loop_exit
      _
    %8453 = vsyncpa [#allocation3], 1
    %s8454 = scalar_lea.sflag [#allocation3], 1
    %8455 = vsyncpa %s8454, 1
    %8456 = vsyncpa [#allocation5], 1

</llo_original>
